<compile_context>
chip_gen: v7x
topology: tpu7x:2x2x1
jax: 0.10.0
libtpu: 0.0.40
codegen_flags: <defaults>
</compile_context>

<pallas_src>
import math

import jax
import jax.numpy as jnp
from jax.experimental import pallas as pl
from jax.experimental.pallas import tpu as pltpu

LEAKY_SLOPE = 0.01   # F.leaky_relu default
BN_EPS = 1e-5
EMB_DIM = 256


# ----------------------------------------------------------------------------
# Fused kernel
# ----------------------------------------------------------------------------
def _bn_train(y, gamma, beta):
    """Single-pass training-mode BatchNorm over rows (batch*spatial), f32."""
    mean = jnp.mean(y, axis=0, keepdims=True)
    msq = jnp.mean(y * y, axis=0, keepdims=True)
    var = jnp.maximum(msq - mean * mean, 0.0)
    scale = gamma * jax.lax.rsqrt(var + BN_EPS)
    return y * scale + (beta - mean * scale)


def _make_fused_kernel(B):
    """Builds the fused forward kernel for a static batch size B.

    All row-group offsets (49 rows / image in the 7x7 stage, 9 rows / image in
    the 3x3 stage) are static, so the per-image time adds and the im2col
    gathers unroll into a small number of static slice copies (O(B) of them).
    """

    def kernel(emb_ref, p1_ref,
               time_w_ref, time_b_ref, tall_w_ref, tall_b_ref,
               w1_ref, b1_ref,
               w2_ref, bn2_g_ref, bn2_b_ref,
               w3_ref, bn3_g_ref, bn3_b_ref,
               w4_ref, b4_ref,
               fc1a_ref, fc1b_ref, fc1_b_ref,
               fc2_w_ref, fc2_b_ref,
               out_ref,
               a49_ref, x2_ref, p3_ref, y3_ref, p4_ref):

        def mm(a, w_ref):
            # bf16 x bf16 MXU matmul with f32 accumulation.
            return jnp.dot(a.astype(jnp.bfloat16), w_ref[...],
                           preferred_element_type=jnp.float32)

        def leaky(v):
            return jnp.maximum(v, LEAKY_SLOPE * v)

        # ---- time_mlp (Linear 256->256 + ReLU) + the 3 fused time projections
        t = jnp.maximum(mm(emb_ref[...], time_w_ref) + time_b_ref[...], 0.0)
        t_all = mm(t, tall_w_ref) + tall_b_ref[...]            # (B, 320)
        t1 = t_all[:, 0:128]     # t1 tiled 4x (matches block-diag c1 layout)
        t3 = t_all[:, 128:256]   # (B, 128)
        t2 = t_all[:, 256:320]   # (B, 64)

        # ---- c1: Conv2d(1,32,2,s2) as block-diag matmul -> leaky -> + t1 ----
        y = leaky(mm(p1_ref[...], w1_ref) + b1_ref[...])       # (B*49, 128) f32
        a49_ref[...] = y
        for b in range(B):                                     # O(B) broadcast add
            sl = slice(b * 49, (b + 1) * 49)
            a49_ref[sl, :] = a49_ref[sl, :] + t1[b:b + 1, :]

        # ---- c2: Conv2d(32,64,2,s2); rows of a49 ARE its im2col patches -----
        y = mm(a49_ref[...], w2_ref)                           # (B*49, 64); bias folded into BN
        y = leaky(_bn_train(y, bn2_g_ref[...], bn2_b_ref[...]))
        x2_ref[...] = y
        for b in range(B):
            sl = slice(b * 49, (b + 1) * 49)
            x2_ref[sl, :] = x2_ref[sl, :] + t2[b:b + 1, :]

        # ---- c3: Conv2d(64,128,3,s2) as ONE wide-K matmul --------------------
        # Assemble the (B*9, 576) im2col patch matrix with static strided
        # sublane reads (3 output columns j3 at a time: source stride 2).
        for b in range(B):
            for i3 in range(3):
                dst = b * 9 + 3 * i3
                for kh in range(3):
                    for kw in range(3):
                        src = b * 49 + (2 * i3 + kh) * 7 + kw
                        col = (kh * 3 + kw) * 64
                        p3_ref[dst:dst + 3, col:col + 64] = \
                            x2_ref[pl.ds(src, 3, stride=2), :]
        y = mm(p3_ref[...], w3_ref)                            # (B*9, 128)
        y = leaky(_bn_train(y, bn3_g_ref[...], bn3_b_ref[...]))
        y3_ref[...] = y
        for b in range(B):
            sl = slice(b * 9, (b + 1) * 9)
            y3_ref[sl, :] = y3_ref[sl, :] + t3[b:b + 1, :]

        # ---- c: Conv2d(128,256,3,s1) over the whole 3x3 map (== flatten) -----
        # 9 strided gathers (position p of every image) into lane blocks of a
        # (B, 1152) scratch, then ONE wide-K matmul.
        for p in range(9):
            p4_ref[:, p * 128:(p + 1) * 128] = y3_ref[pl.ds(p, B, stride=9), :]
        y4 = leaky(mm(p4_ref[...], w4_ref) + b4_ref[...])      # (B, 256)

        # ---- cat([x, t]) + fc1 + ReLU + fc2 (concat via split fc1 weights) ---
        h = mm(y4, fc1a_ref) + mm(t, fc1b_ref) + fc1_b_ref[...]
        h = jnp.maximum(h, 0.0)
        out_ref[...] = mm(h, fc2_w_ref) + fc2_b_ref[...]

    return kernel


# ----------------------------------------------------------------------------
# Host-side helpers (plain JAX; one transpose on the input, no O(B^2) constants)
# ----------------------------------------------------------------------------
def sinusoidal_embedding(t, dim=EMB_DIM):
    half = dim // 2
    freqs = jnp.exp(-math.log(10000.0) * jnp.arange(half, dtype=jnp.float32) / (half - 1))
    args = t.astype(jnp.float32)[:, None] * freqs[None, :]
    return jnp.concatenate([jnp.sin(args), jnp.cos(args)], axis=-1)   # (B, dim)


# ----------------------------------------------------------------------------
# Parameters (deterministic, synthetic).  Conv weights are stored in im2col
# matmul layout (kh*kw*Cin, Cout) == torch weight.transpose(2,3,1,0).reshape(-1,Cout).
# ----------------------------------------------------------------------------
def init_params(key):
    ks = jax.random.split(key, 20)

    def w(k, fan_in, fan_out):
        return jax.random.normal(k, (fan_in, fan_out), jnp.float32) / math.sqrt(fan_in)

    def b(k, fan_out):
        return jax.random.normal(k, (1, fan_out), jnp.float32) * 0.01

    p = {}
    p["time_w"], p["time_b"] = w(ks[0], 256, 256), b(ks[1], 256)
    p["t1_w"], p["t1_b"] = w(ks[2], 256, 32), b(ks[3], 32)
    p["t2_w"], p["t2_b"] = w(ks[4], 256, 64), b(ks[5], 64)
    p["t3_w"], p["t3_b"] = w(ks[6], 256, 128), b(ks[7], 128)
    p["c1_w"], p["c1_b"] = w(ks[8], 2 * 2 * 1, 32), b(ks[9], 32)
    p["c2_w"], p["c2_b"] = w(ks[10], 2 * 2 * 32, 64), b(ks[11], 64)
    p["bn2_g"], p["bn2_b"] = jnp.ones((1, 64), jnp.float32), jnp.zeros((1, 64), jnp.float32)
    p["c3_w"], p["c3_b"] = w(ks[12], 3 * 3 * 64, 128), b(ks[13], 128)
    p["bn3_g"], p["bn3_b"] = jnp.ones((1, 128), jnp.float32), jnp.zeros((1, 128), jnp.float32)
    p["c4_w"], p["c4_b"] = w(ks[14], 3 * 3 * 128, 256), b(ks[15], 256)
    p["fc1_w"], p["fc1_b"] = w(ks[16], 512, 256), b(ks[17], 256)
    p["fc2_w"], p["fc2_b"] = w(ks[18], 256, 10), b(ks[19], 10)
    return p


def prepare_params(p):
    """One-time re-layout of the raw parameters into the kernel's matmul layouts.

    All matmul weights are cast to bfloat16 (f32 accumulation in the kernel);
    biases and BatchNorm affine parameters stay in f32.
    """
    bf = jnp.bfloat16
    # c1: 4-way block-diagonal copy so its output is lane-dense (..,128) and is
    # directly c2's im2col patch matrix.
    w1_blk = jnp.zeros((16, 128), jnp.float32)
    for q in range(4):
        w1_blk = w1_blk.at[4 * q:4 * q + 4, 32 * q:32 * q + 32].set(p["c1_w"])
    b1_blk = jnp.tile(p["c1_b"], (1, 4))
    # all three time projections fused into one lane-dense matmul; t1 is tiled
    # 4x to match the block-diagonal c1 output layout; layout [t1(128), t3(128),
    # t2(64)] keeps every in-kernel lane slice 128-aligned.
    tall_w = jnp.concatenate([jnp.tile(p["t1_w"], (1, 4)), p["t3_w"], p["t2_w"]], axis=1)
    tall_b = jnp.concatenate([jnp.tile(p["t1_b"], (1, 4)), p["t3_b"], p["t2_b"]], axis=1)
    return dict(
        time_w=p["time_w"].astype(bf), time_b=p["time_b"],
        tall_w=tall_w.astype(bf), tall_b=tall_b,
        w1=w1_blk.astype(bf), b1=b1_blk,
        # c2_b / c3_b are intentionally dropped: a pre-BN per-channel constant is
        # exactly cancelled by the batch-stat mean subtraction.
        w2=p["c2_w"].astype(bf), bn2_g=p["bn2_g"], bn2_b=p["bn2_b"],
        w3=p["c3_w"].astype(bf),                   # (576, 128) wide-K c3 weight
        bn3_g=p["bn3_g"], bn3_b=p["bn3_b"],
        w4=p["c4_w"].astype(bf),                   # (1152, 256) wide-K c weight
        b4=p["c4_b"],
        fc1a=p["fc1_w"][:256].astype(bf), fc1b=p["fc1_w"][256:].astype(bf),
        fc1_b=p["fc1_b"],
        fc2_w=p["fc2_w"].astype(bf), fc2_b=p["fc2_b"],
    )


# ----------------------------------------------------------------------------
# Forward pass: single fused pallas_call
# ----------------------------------------------------------------------------
@jax.jit
def discriminator_forward(prep, x_nchw, t):
    B = x_nchw.shape[0]
    x = x_nchw[:, 0, :, :].astype(jnp.float32)                    # (B, 28, 28)
    # double space-to-depth: rows (b, i2, j2) of the 7x7 c2-output grid,
    # 16 columns ordered (kh2, kw2, kh1, kw1)  -> one transpose, no 4-way concat.
    p1 = (x.reshape(B, 7, 2, 2, 7, 2, 2)
           .transpose(0, 1, 4, 2, 5, 3, 6)
           .reshape(B * 49, 16))
    emb = sinusoidal_embedding(t)                                 # (B, 256)

    args = (emb, p1,
            prep["time_w"], prep["time_b"], prep["tall_w"], prep["tall_b"],
            prep["w1"], prep["b1"],
            prep["w2"], prep["bn2_g"], prep["bn2_b"],
            prep["w3"], prep["bn3_g"], prep["bn3_b"],
            prep["w4"], prep["b4"],
            prep["fc1a"], prep["fc1b"], prep["fc1_b"],
            prep["fc2_w"], prep["fc2_b"])

    vmem = pl.BlockSpec(memory_space=pltpu.MemorySpace.VMEM)
    return pl.pallas_call(
        _make_fused_kernel(B),
        out_shape=jax.ShapeDtypeStruct((B, 10), jnp.float32),
        in_specs=[vmem] * len(args),
        out_specs=vmem,
        scratch_shapes=[
            pltpu.VMEM((B * 49, 128), jnp.float32),   # a49: c1 output (+t1)
            pltpu.VMEM((B * 49, 64), jnp.float32),    # x2:  c2 output (+t2), c3 gather src
            pltpu.VMEM((B * 9, 576), jnp.float32),    # p3:  c3 im2col patches
            pltpu.VMEM((B * 9, 128), jnp.float32),    # y3:  c3 output (+t3), c4 gather src
            pltpu.VMEM((B, 1152), jnp.float32),       # p4:  c4 im2col / flatten
        ],
        compiler_params=pltpu.CompilerParams(vmem_limit_bytes=32 * 1024 * 1024),
    )(*args)


# ----------------------------------------------------------------------------
if __name__ == "__main__":
    key = jax.random.PRNGKey(0)
    kx, kt, kp = jax.random.split(key, 3)

    # B=2 keeps shapes small for the check; for throughput use a multiple of 8
    # (the whole batch still fits in VMEM — activations are only ~60 KB * B).
    B = 2
    # The architecture's flatten/fc1 sizes force 1x28x28 inputs (Fashion-MNIST).
    x = jax.random.normal(kx, (B, 1, 28, 28), jnp.float32)
    t = jax.random.randint(kt, (B,), 0, 1000).astype(jnp.float32)

    params = init_params(kp)
    prep = prepare_params(params)

    logits = discriminator_forward(prep, x, t)
    logits = jax.block_until_ready(logits)

    assert logits.shape == (B, 10), logits.shape
    assert bool(jnp.all(jnp.isfinite(logits)))
    print("KERNEL_OK")
</pallas_src>

<mosaic_0001>
module attributes {stable_mosaic.version = 11 : i64} {
  func.func @kernel(%arg0: memref<2x256xf32, #tpu.memory_space<vmem>>, %arg1: memref<98x16xf32, #tpu.memory_space<vmem>>, %arg2: memref<256x256xbf16, #tpu.memory_space<vmem>>, %arg3: memref<1x256xf32, #tpu.memory_space<vmem>>, %arg4: memref<256x320xbf16, #tpu.memory_space<vmem>>, %arg5: memref<1x320xf32, #tpu.memory_space<vmem>>, %arg6: memref<16x128xbf16, #tpu.memory_space<vmem>>, %arg7: memref<1x128xf32, #tpu.memory_space<vmem>>, %arg8: memref<128x64xbf16, #tpu.memory_space<vmem>>, %arg9: memref<1x64xf32, #tpu.memory_space<vmem>>, %arg10: memref<1x64xf32, #tpu.memory_space<vmem>>, %arg11: memref<576x128xbf16, #tpu.memory_space<vmem>>, %arg12: memref<1x128xf32, #tpu.memory_space<vmem>>, %arg13: memref<1x128xf32, #tpu.memory_space<vmem>>, %arg14: memref<1152x256xbf16, #tpu.memory_space<vmem>>, %arg15: memref<1x256xf32, #tpu.memory_space<vmem>>, %arg16: memref<256x256xbf16, #tpu.memory_space<vmem>>, %arg17: memref<256x256xbf16, #tpu.memory_space<vmem>>, %arg18: memref<1x256xf32, #tpu.memory_space<vmem>>, %arg19: memref<256x10xbf16, #tpu.memory_space<vmem>>, %arg20: memref<1x10xf32, #tpu.memory_space<vmem>>, %arg21: memref<2x10xf32, #tpu.memory_space<vmem>>, %arg22: memref<98x128xf32, #tpu.memory_space<vmem>>, %arg23: memref<98x64xf32, #tpu.memory_space<vmem>>, %arg24: memref<18x576xf32, #tpu.memory_space<vmem>>, %arg25: memref<18x128xf32, #tpu.memory_space<vmem>>, %arg26: memref<2x1152xf32, #tpu.memory_space<vmem>>) attributes {dimension_semantics = [], scalar_prefetch = 0 : i64, scratch_operands = 5 : i64, tpu.core_type = #tpu.core_type<tc>} {
    %c0 = arith.constant 0 : index
    %c0_0 = arith.constant 0 : index
    %0 = vector.load %arg0[%c0, %c0_0] : memref<2x256xf32, #tpu.memory_space<vmem>>, vector<2x256xf32>
    %1 = arith.truncf %0 : vector<2x256xf32> to vector<2x256xbf16>
    %c0_1 = arith.constant 0 : index
    %c0_2 = arith.constant 0 : index
    %2 = vector.load %arg2[%c0_1, %c0_2] : memref<256x256xbf16, #tpu.memory_space<vmem>>, vector<256x256xbf16>
    %cst = arith.constant dense<0.000000e+00> : vector<2x256xf32>
    %3 = tpu.matmul %1, %2, %cst {dimension_numbers = #tpu.dot_dimension_numbers<[1], [0], [0], [1], [0, 0, 1, 1], [], []>} : vector<2x256xbf16>, vector<256x256xbf16>, vector<2x256xf32> -> vector<2x256xf32>
    %c0_3 = arith.constant 0 : index
    %c0_4 = arith.constant 0 : index
    %4 = vector.load %arg3[%c0_3, %c0_4] : memref<1x256xf32, #tpu.memory_space<vmem>>, vector<1x256xf32>
    %5 = vector.broadcast %4 : vector<1x256xf32> to vector<2x256xf32>
    %6 = arith.addf %3, %5 : vector<2x256xf32>
    %cst_5 = arith.constant 0.000000e+00 : f32
    %7 = vector.broadcast %cst_5 : f32 to vector<2x256xf32>
    %8 = arith.maximumf %6, %7 : vector<2x256xf32>
    %9 = arith.truncf %8 : vector<2x256xf32> to vector<2x256xbf16>
    %c0_6 = arith.constant 0 : index
    %c0_7 = arith.constant 0 : index
    %10 = vector.load %arg4[%c0_6, %c0_7] : memref<256x320xbf16, #tpu.memory_space<vmem>>, vector<256x320xbf16>
    %cst_8 = arith.constant dense<0.000000e+00> : vector<2x320xf32>
    %11 = tpu.matmul %9, %10, %cst_8 {dimension_numbers = #tpu.dot_dimension_numbers<[1], [0], [0], [1], [0, 0, 1, 1], [], []>} : vector<2x256xbf16>, vector<256x320xbf16>, vector<2x320xf32> -> vector<2x320xf32>
    %c0_9 = arith.constant 0 : index
    %c0_10 = arith.constant 0 : index
    %12 = vector.load %arg5[%c0_9, %c0_10] : memref<1x320xf32, #tpu.memory_space<vmem>>, vector<1x320xf32>
    %13 = vector.broadcast %12 : vector<1x320xf32> to vector<2x320xf32>
    %14 = arith.addf %11, %13 : vector<2x320xf32>
    %15 = vector.extract_strided_slice %14 {offsets = [0, 0], sizes = [2, 128], strides = [1, 1]} : vector<2x320xf32> to vector<2x128xf32>
    %16 = vector.extract_strided_slice %14 {offsets = [0, 128], sizes = [2, 128], strides = [1, 1]} : vector<2x320xf32> to vector<2x128xf32>
    %17 = vector.extract_strided_slice %14 {offsets = [0, 256], sizes = [2, 64], strides = [1, 1]} : vector<2x320xf32> to vector<2x64xf32>
    %c0_11 = arith.constant 0 : index
    %c0_12 = arith.constant 0 : index
    %18 = vector.load %arg1[%c0_11, %c0_12] : memref<98x16xf32, #tpu.memory_space<vmem>>, vector<98x16xf32>
    %19 = arith.truncf %18 : vector<98x16xf32> to vector<98x16xbf16>
    %c0_13 = arith.constant 0 : index
    %c0_14 = arith.constant 0 : index
    %20 = vector.load %arg6[%c0_13, %c0_14] : memref<16x128xbf16, #tpu.memory_space<vmem>>, vector<16x128xbf16>
    %cst_15 = arith.constant dense<0.000000e+00> : vector<98x128xf32>
    %21 = tpu.matmul %19, %20, %cst_15 {dimension_numbers = #tpu.dot_dimension_numbers<[1], [0], [0], [1], [0, 0, 1, 1], [], []>} : vector<98x16xbf16>, vector<16x128xbf16>, vector<98x128xf32> -> vector<98x128xf32>
    %c0_16 = arith.constant 0 : index
    %c0_17 = arith.constant 0 : index
    %22 = vector.load %arg7[%c0_16, %c0_17] : memref<1x128xf32, #tpu.memory_space<vmem>>, vector<1x128xf32>
    %23 = vector.broadcast %22 : vector<1x128xf32> to vector<98x128xf32>
    %24 = arith.addf %21, %23 : vector<98x128xf32>
    %cst_18 = arith.constant 0.00999999977 : f32
    %25 = vector.broadcast %cst_18 : f32 to vector<98x128xf32>
    %26 = arith.mulf %25, %24 : vector<98x128xf32>
    %27 = arith.maximumf %24, %26 : vector<98x128xf32>
    %c0_19 = arith.constant 0 : index
    %c0_20 = arith.constant 0 : index
    %28 = vector.load %arg22[%c0_19, %c0_20] : memref<98x128xf32, #tpu.memory_space<vmem>>, vector<98x128xf32>
    tpu.vector_store %arg22[%c0_19, %c0_20], %27 {strides = array<i32>} : memref<98x128xf32, #tpu.memory_space<vmem>>, vector<98x128xf32>,
    %c0_21 = arith.constant 0 : index
    %c0_22 = arith.constant 0 : index
    %29 = vector.load %arg22[%c0_21, %c0_22] : memref<98x128xf32, #tpu.memory_space<vmem>>, vector<49x128xf32>
    %30 = vector.extract_strided_slice %15 {offsets = [0, 0], sizes = [1, 128], strides = [1, 1]} : vector<2x128xf32> to vector<1x128xf32>
    %31 = vector.broadcast %30 : vector<1x128xf32> to vector<49x128xf32>
    %32 = arith.addf %29, %31 : vector<49x128xf32>
    %c0_23 = arith.constant 0 : index
    %c0_24 = arith.constant 0 : index
    %33 = vector.load %arg22[%c0_23, %c0_24] : memref<98x128xf32, #tpu.memory_space<vmem>>, vector<49x128xf32>
    tpu.vector_store %arg22[%c0_23, %c0_24], %32 {strides = array<i32>} : memref<98x128xf32, #tpu.memory_space<vmem>>, vector<49x128xf32>,
    %c49 = arith.constant 49 : index
    %c0_25 = arith.constant 0 : index
    %34 = vector.load %arg22[%c49, %c0_25] : memref<98x128xf32, #tpu.memory_space<vmem>>, vector<49x128xf32>
    %35 = vector.extract_strided_slice %15 {offsets = [1, 0], sizes = [1, 128], strides = [1, 1]} : vector<2x128xf32> to vector<1x128xf32>
    %36 = vector.broadcast %35 : vector<1x128xf32> to vector<49x128xf32>
    %37 = arith.addf %34, %36 : vector<49x128xf32>
    %c49_26 = arith.constant 49 : index
    %c0_27 = arith.constant 0 : index
    %38 = vector.load %arg22[%c49_26, %c0_27] : memref<98x128xf32, #tpu.memory_space<vmem>>, vector<49x128xf32>
    tpu.vector_store %arg22[%c49_26, %c0_27], %37 {strides = array<i32>} : memref<98x128xf32, #tpu.memory_space<vmem>>, vector<49x128xf32>,
    %c0_28 = arith.constant 0 : index
    %c0_29 = arith.constant 0 : index
    %39 = vector.load %arg22[%c0_28, %c0_29] : memref<98x128xf32, #tpu.memory_space<vmem>>, vector<98x128xf32>
    %40 = arith.truncf %39 : vector<98x128xf32> to vector<98x128xbf16>
    %c0_30 = arith.constant 0 : index
    %c0_31 = arith.constant 0 : index
    %41 = vector.load %arg8[%c0_30, %c0_31] : memref<128x64xbf16, #tpu.memory_space<vmem>>, vector<128x64xbf16>
    %cst_32 = arith.constant dense<0.000000e+00> : vector<98x64xf32>
    %42 = tpu.matmul %40, %41, %cst_32 {dimension_numbers = #tpu.dot_dimension_numbers<[1], [0], [0], [1], [0, 0, 1, 1], [], []>} : vector<98x128xbf16>, vector<128x64xbf16>, vector<98x64xf32> -> vector<98x64xf32>
    %c0_33 = arith.constant 0 : index
    %c0_34 = arith.constant 0 : index
    %43 = vector.load %arg9[%c0_33, %c0_34] : memref<1x64xf32, #tpu.memory_space<vmem>>, vector<1x64xf32>
    %c0_35 = arith.constant 0 : index
    %c0_36 = arith.constant 0 : index
    %44 = vector.load %arg10[%c0_35, %c0_36] : memref<1x64xf32, #tpu.memory_space<vmem>>, vector<1x64xf32>
    %cst_37 = arith.constant dense<0.000000e+00> : vector<64xf32>
    %45 = vector.multi_reduction <add>, %42, %cst_37 [0] : vector<98x64xf32> to vector<64xf32>
    %46 = vector.shape_cast %45 : vector<64xf32> to vector<1x64xf32>
    %cst_38 = arith.constant 9.800000e+01 : f32
    %47 = vector.broadcast %cst_38 : f32 to vector<1x64xf32>
    %48 = arith.divf %46, %47 : vector<1x64xf32>
    %49 = arith.mulf %42, %42 : vector<98x64xf32>
    %cst_39 = arith.constant dense<0.000000e+00> : vector<64xf32>
    %50 = vector.multi_reduction <add>, %49, %cst_39 [0] : vector<98x64xf32> to vector<64xf32>
    %51 = vector.shape_cast %50 : vector<64xf32> to vector<1x64xf32>
    %cst_40 = arith.constant 9.800000e+01 : f32
    %52 = vector.broadcast %cst_40 : f32 to vector<1x64xf32>
    %53 = arith.divf %51, %52 : vector<1x64xf32>
    %54 = arith.mulf %48, %48 : vector<1x64xf32>
    %55 = arith.subf %53, %54 : vector<1x64xf32>
    %cst_41 = arith.constant 0.000000e+00 : f32
    %56 = vector.broadcast %cst_41 : f32 to vector<1x64xf32>
    %57 = arith.maximumf %55, %56 : vector<1x64xf32>
    %cst_42 = arith.constant 9.99999974E-6 : f32
    %58 = vector.broadcast %cst_42 : f32 to vector<1x64xf32>
    %59 = arith.addf %57, %58 : vector<1x64xf32>
    %60 = math.rsqrt %59 : vector<1x64xf32>
    %61 = arith.mulf %43, %60 : vector<1x64xf32>
    %62 = vector.broadcast %61 : vector<1x64xf32> to vector<98x64xf32>
    %63 = arith.mulf %42, %62 : vector<98x64xf32>
    %64 = arith.mulf %48, %61 : vector<1x64xf32>
    %65 = arith.subf %44, %64 : vector<1x64xf32>
    %66 = vector.broadcast %65 : vector<1x64xf32> to vector<98x64xf32>
    %67 = arith.addf %63, %66 : vector<98x64xf32>
    %cst_43 = arith.constant 0.00999999977 : f32
    %68 = vector.broadcast %cst_43 : f32 to vector<98x64xf32>
    %69 = arith.mulf %68, %67 : vector<98x64xf32>
    %70 = arith.maximumf %67, %69 : vector<98x64xf32>
    %c0_44 = arith.constant 0 : index
    %c0_45 = arith.constant 0 : index
    %71 = vector.load %arg23[%c0_44, %c0_45] : memref<98x64xf32, #tpu.memory_space<vmem>>, vector<98x64xf32>
    tpu.vector_store %arg23[%c0_44, %c0_45], %70 {strides = array<i32>} : memref<98x64xf32, #tpu.memory_space<vmem>>, vector<98x64xf32>,
    %c0_46 = arith.constant 0 : index
    %c0_47 = arith.constant 0 : index
    %72 = vector.load %arg23[%c0_46, %c0_47] : memref<98x64xf32, #tpu.memory_space<vmem>>, vector<49x64xf32>
    %73 = vector.extract_strided_slice %17 {offsets = [0, 0], sizes = [1, 64], strides = [1, 1]} : vector<2x64xf32> to vector<1x64xf32>
    %74 = vector.broadcast %73 : vector<1x64xf32> to vector<49x64xf32>
    %75 = arith.addf %72, %74 : vector<49x64xf32>
    %c0_48 = arith.constant 0 : index
    %c0_49 = arith.constant 0 : index
    %76 = vector.load %arg23[%c0_48, %c0_49] : memref<98x64xf32, #tpu.memory_space<vmem>>, vector<49x64xf32>
    tpu.vector_store %arg23[%c0_48, %c0_49], %75 {strides = array<i32>} : memref<98x64xf32, #tpu.memory_space<vmem>>, vector<49x64xf32>,
    %c49_50 = arith.constant 49 : index
    %c0_51 = arith.constant 0 : index
    %77 = vector.load %arg23[%c49_50, %c0_51] : memref<98x64xf32, #tpu.memory_space<vmem>>, vector<49x64xf32>
    %78 = vector.extract_strided_slice %17 {offsets = [1, 0], sizes = [1, 64], strides = [1, 1]} : vector<2x64xf32> to vector<1x64xf32>
    %79 = vector.broadcast %78 : vector<1x64xf32> to vector<49x64xf32>
    %80 = arith.addf %77, %79 : vector<49x64xf32>
    %c49_52 = arith.constant 49 : index
    %c0_53 = arith.constant 0 : index
    %81 = vector.load %arg23[%c49_52, %c0_53] : memref<98x64xf32, #tpu.memory_space<vmem>>, vector<49x64xf32>
    tpu.vector_store %arg23[%c49_52, %c0_53], %80 {strides = array<i32>} : memref<98x64xf32, #tpu.memory_space<vmem>>, vector<49x64xf32>,
    %c0_54 = arith.constant 0 : index
    %c0_55 = arith.constant 0 : index
    %82 = tpu.strided_load %arg23[%c0_54, %c0_55] {strides = array<i32: 2, 1>} : memref<98x64xf32, #tpu.memory_space<vmem>>, vector<3x64xf32>
    %c0_56 = arith.constant 0 : index
    %c0_57 = arith.constant 0 : index
    %83 = vector.load %arg24[%c0_56, %c0_57] : memref<18x576xf32, #tpu.memory_space<vmem>>, vector<3x64xf32>
    tpu.vector_store %arg24[%c0_56, %c0_57], %82 {strides = array<i32>} : memref<18x576xf32, #tpu.memory_space<vmem>>, vector<3x64xf32>,
    %c1 = arith.constant 1 : index
    %c0_58 = arith.constant 0 : index
    %84 = tpu.strided_load %arg23[%c1, %c0_58] {strides = array<i32: 2, 1>} : memref<98x64xf32, #tpu.memory_space<vmem>>, vector<3x64xf32>
    %c0_59 = arith.constant 0 : index
    %c64 = arith.constant 64 : index
    %85 = vector.load %arg24[%c0_59, %c64] : memref<18x576xf32, #tpu.memory_space<vmem>>, vector<3x64xf32>
    tpu.vector_store %arg24[%c0_59, %c64], %84 {strides = array<i32>} : memref<18x576xf32, #tpu.memory_space<vmem>>, vector<3x64xf32>,
    %c2 = arith.constant 2 : index
    %c0_60 = arith.constant 0 : index
    %86 = tpu.strided_load %arg23[%c2, %c0_60] {strides = array<i32: 2, 1>} : memref<98x64xf32, #tpu.memory_space<vmem>>, vector<3x64xf32>
    %c0_61 = arith.constant 0 : index
    %c128 = arith.constant 128 : index
    %87 = vector.load %arg24[%c0_61, %c128] : memref<18x576xf32, #tpu.memory_space<vmem>>, vector<3x64xf32>
    tpu.vector_store %arg24[%c0_61, %c128], %86 {strides = array<i32>} : memref<18x576xf32, #tpu.memory_space<vmem>>, vector<3x64xf32>,
    %c7 = arith.constant 7 : index
    %c0_62 = arith.constant 0 : index
    %88 = tpu.strided_load %arg23[%c7, %c0_62] {strides = array<i32: 2, 1>} : memref<98x64xf32, #tpu.memory_space<vmem>>, vector<3x64xf32>
    %c0_63 = arith.constant 0 : index
    %c192 = arith.constant 192 : index
    %89 = vector.load %arg24[%c0_63, %c192] : memref<18x576xf32, #tpu.memory_space<vmem>>, vector<3x64xf32>
    tpu.vector_store %arg24[%c0_63, %c192], %88 {strides = array<i32>} : memref<18x576xf32, #tpu.memory_space<vmem>>, vector<3x64xf32>,
    %c8 = arith.constant 8 : index
    %c0_64 = arith.constant 0 : index
    %90 = tpu.strided_load %arg23[%c8, %c0_64] {strides = array<i32: 2, 1>} : memref<98x64xf32, #tpu.memory_space<vmem>>, vector<3x64xf32>
    %c0_65 = arith.constant 0 : index
    %c256 = arith.constant 256 : index
    %91 = vector.load %arg24[%c0_65, %c256] : memref<18x576xf32, #tpu.memory_space<vmem>>, vector<3x64xf32>
    tpu.vector_store %arg24[%c0_65, %c256], %90 {strides = array<i32>} : memref<18x576xf32, #tpu.memory_space<vmem>>, vector<3x64xf32>,
    %c9 = arith.constant 9 : index
    %c0_66 = arith.constant 0 : index
    %92 = tpu.strided_load %arg23[%c9, %c0_66] {strides = array<i32: 2, 1>} : memref<98x64xf32, #tpu.memory_space<vmem>>, vector<3x64xf32>
    %c0_67 = arith.constant 0 : index
    %c320 = arith.constant 320 : index
    %93 = vector.load %arg24[%c0_67, %c320] : memref<18x576xf32, #tpu.memory_space<vmem>>, vector<3x64xf32>
    tpu.vector_store %arg24[%c0_67, %c320], %92 {strides = array<i32>} : memref<18x576xf32, #tpu.memory_space<vmem>>, vector<3x64xf32>,
    %c14 = arith.constant 14 : index
    %c0_68 = arith.constant 0 : index
    %94 = tpu.strided_load %arg23[%c14, %c0_68] {strides = array<i32: 2, 1>} : memref<98x64xf32, #tpu.memory_space<vmem>>, vector<3x64xf32>
    %c0_69 = arith.constant 0 : index
    %c384 = arith.constant 384 : index
    %95 = vector.load %arg24[%c0_69, %c384] : memref<18x576xf32, #tpu.memory_space<vmem>>, vector<3x64xf32>
    tpu.vector_store %arg24[%c0_69, %c384], %94 {strides = array<i32>} : memref<18x576xf32, #tpu.memory_space<vmem>>, vector<3x64xf32>,
    %c15 = arith.constant 15 : index
    %c0_70 = arith.constant 0 : index
    %96 = tpu.strided_load %arg23[%c15, %c0_70] {strides = array<i32: 2, 1>} : memref<98x64xf32, #tpu.memory_space<vmem>>, vector<3x64xf32>
    %c0_71 = arith.constant 0 : index
    %c448 = arith.constant 448 : index
    %97 = vector.load %arg24[%c0_71, %c448] : memref<18x576xf32, #tpu.memory_space<vmem>>, vector<3x64xf32>
    tpu.vector_store %arg24[%c0_71, %c448], %96 {strides = array<i32>} : memref<18x576xf32, #tpu.memory_space<vmem>>, vector<3x64xf32>,
    %c16 = arith.constant 16 : index
    %c0_72 = arith.constant 0 : index
    %98 = tpu.strided_load %arg23[%c16, %c0_72] {strides = array<i32: 2, 1>} : memref<98x64xf32, #tpu.memory_space<vmem>>, vector<3x64xf32>
    %c0_73 = arith.constant 0 : index
    %c512 = arith.constant 512 : index
    %99 = vector.load %arg24[%c0_73, %c512] : memref<18x576xf32, #tpu.memory_space<vmem>>, vector<3x64xf32>
    tpu.vector_store %arg24[%c0_73, %c512], %98 {strides = array<i32>} : memref<18x576xf32, #tpu.memory_space<vmem>>, vector<3x64xf32>,
    %c14_74 = arith.constant 14 : index
    %c0_75 = arith.constant 0 : index
    %100 = tpu.strided_load %arg23[%c14_74, %c0_75] {strides = array<i32: 2, 1>} : memref<98x64xf32, #tpu.memory_space<vmem>>, vector<3x64xf32>
    %c3 = arith.constant 3 : index
    %c0_76 = arith.constant 0 : index
    %101 = vector.load %arg24[%c3, %c0_76] : memref<18x576xf32, #tpu.memory_space<vmem>>, vector<3x64xf32>
    tpu.vector_store %arg24[%c3, %c0_76], %100 {strides = array<i32>} : memref<18x576xf32, #tpu.memory_space<vmem>>, vector<3x64xf32>,
    %c15_77 = arith.constant 15 : index
    %c0_78 = arith.constant 0 : index
    %102 = tpu.strided_load %arg23[%c15_77, %c0_78] {strides = array<i32: 2, 1>} : memref<98x64xf32, #tpu.memory_space<vmem>>, vector<3x64xf32>
    %c3_79 = arith.constant 3 : index
    %c64_80 = arith.constant 64 : index
    %103 = vector.load %arg24[%c3_79, %c64_80] : memref<18x576xf32, #tpu.memory_space<vmem>>, vector<3x64xf32>
    tpu.vector_store %arg24[%c3_79, %c64_80], %102 {strides = array<i32>} : memref<18x576xf32, #tpu.memory_space<vmem>>, vector<3x64xf32>,
    %c16_81 = arith.constant 16 : index
    %c0_82 = arith.constant 0 : index
    %104 = tpu.strided_load %arg23[%c16_81, %c0_82] {strides = array<i32: 2, 1>} : memref<98x64xf32, #tpu.memory_space<vmem>>, vector<3x64xf32>
    %c3_83 = arith.constant 3 : index
    %c128_84 = arith.constant 128 : index
    %105 = vector.load %arg24[%c3_83, %c128_84] : memref<18x576xf32, #tpu.memory_space<vmem>>, vector<3x64xf32>
    tpu.vector_store %arg24[%c3_83, %c128_84], %104 {strides = array<i32>} : memref<18x576xf32, #tpu.memory_space<vmem>>, vector<3x64xf32>,
    %c21 = arith.constant 21 : index
    %c0_85 = arith.constant 0 : index
    %106 = tpu.strided_load %arg23[%c21, %c0_85] {strides = array<i32: 2, 1>} : memref<98x64xf32, #tpu.memory_space<vmem>>, vector<3x64xf32>
    %c3_86 = arith.constant 3 : index
    %c192_87 = arith.constant 192 : index
    %107 = vector.load %arg24[%c3_86, %c192_87] : memref<18x576xf32, #tpu.memory_space<vmem>>, vector<3x64xf32>
    tpu.vector_store %arg24[%c3_86, %c192_87], %106 {strides = array<i32>} : memref<18x576xf32, #tpu.memory_space<vmem>>, vector<3x64xf32>,
    %c22 = arith.constant 22 : index
    %c0_88 = arith.constant 0 : index
    %108 = tpu.strided_load %arg23[%c22, %c0_88] {strides = array<i32: 2, 1>} : memref<98x64xf32, #tpu.memory_space<vmem>>, vector<3x64xf32>
    %c3_89 = arith.constant 3 : index
    %c256_90 = arith.constant 256 : index
    %109 = vector.load %arg24[%c3_89, %c256_90] : memref<18x576xf32, #tpu.memory_space<vmem>>, vector<3x64xf32>
    tpu.vector_store %arg24[%c3_89, %c256_90], %108 {strides = array<i32>} : memref<18x576xf32, #tpu.memory_space<vmem>>, vector<3x64xf32>,
    %c23 = arith.constant 23 : index
    %c0_91 = arith.constant 0 : index
    %110 = tpu.strided_load %arg23[%c23, %c0_91] {strides = array<i32: 2, 1>} : memref<98x64xf32, #tpu.memory_space<vmem>>, vector<3x64xf32>
    %c3_92 = arith.constant 3 : index
    %c320_93 = arith.constant 320 : index
    %111 = vector.load %arg24[%c3_92, %c320_93] : memref<18x576xf32, #tpu.memory_space<vmem>>, vector<3x64xf32>
    tpu.vector_store %arg24[%c3_92, %c320_93], %110 {strides = array<i32>} : memref<18x576xf32, #tpu.memory_space<vmem>>, vector<3x64xf32>,
    %c28 = arith.constant 28 : index
    %c0_94 = arith.constant 0 : index
    %112 = tpu.strided_load %arg23[%c28, %c0_94] {strides = array<i32: 2, 1>} : memref<98x64xf32, #tpu.memory_space<vmem>>, vector<3x64xf32>
    %c3_95 = arith.constant 3 : index
    %c384_96 = arith.constant 384 : index
    %113 = vector.load %arg24[%c3_95, %c384_96] : memref<18x576xf32, #tpu.memory_space<vmem>>, vector<3x64xf32>
    tpu.vector_store %arg24[%c3_95, %c384_96], %112 {strides = array<i32>} : memref<18x576xf32, #tpu.memory_space<vmem>>, vector<3x64xf32>,
    %c29 = arith.constant 29 : index
    %c0_97 = arith.constant 0 : index
    %114 = tpu.strided_load %arg23[%c29, %c0_97] {strides = array<i32: 2, 1>} : memref<98x64xf32, #tpu.memory_space<vmem>>, vector<3x64xf32>
    %c3_98 = arith.constant 3 : index
    %c448_99 = arith.constant 448 : index
    %115 = vector.load %arg24[%c3_98, %c448_99] : memref<18x576xf32, #tpu.memory_space<vmem>>, vector<3x64xf32>
    tpu.vector_store %arg24[%c3_98, %c448_99], %114 {strides = array<i32>} : memref<18x576xf32, #tpu.memory_space<vmem>>, vector<3x64xf32>,
    %c30 = arith.constant 30 : index
    %c0_100 = arith.constant 0 : index
    %116 = tpu.strided_load %arg23[%c30, %c0_100] {strides = array<i32: 2, 1>} : memref<98x64xf32, #tpu.memory_space<vmem>>, vector<3x64xf32>
    %c3_101 = arith.constant 3 : index
    %c512_102 = arith.constant 512 : index
    %117 = vector.load %arg24[%c3_101, %c512_102] : memref<18x576xf32, #tpu.memory_space<vmem>>, vector<3x64xf32>
    tpu.vector_store %arg24[%c3_101, %c512_102], %116 {strides = array<i32>} : memref<18x576xf32, #tpu.memory_space<vmem>>, vector<3x64xf32>,
    %c28_103 = arith.constant 28 : index
    %c0_104 = arith.constant 0 : index
    %118 = tpu.strided_load %arg23[%c28_103, %c0_104] {strides = array<i32: 2, 1>} : memref<98x64xf32, #tpu.memory_space<vmem>>, vector<3x64xf32>
    %c6 = arith.constant 6 : index
    %c0_105 = arith.constant 0 : index
    %119 = vector.load %arg24[%c6, %c0_105] : memref<18x576xf32, #tpu.memory_space<vmem>>, vector<3x64xf32>
    tpu.vector_store %arg24[%c6, %c0_105], %118 {strides = array<i32>} : memref<18x576xf32, #tpu.memory_space<vmem>>, vector<3x64xf32>,
    %c29_106 = arith.constant 29 : index
    %c0_107 = arith.constant 0 : index
    %120 = tpu.strided_load %arg23[%c29_106, %c0_107] {strides = array<i32: 2, 1>} : memref<98x64xf32, #tpu.memory_space<vmem>>, vector<3x64xf32>
    %c6_108 = arith.constant 6 : index
    %c64_109 = arith.constant 64 : index
    %121 = vector.load %arg24[%c6_108, %c64_109] : memref<18x576xf32, #tpu.memory_space<vmem>>, vector<3x64xf32>
    tpu.vector_store %arg24[%c6_108, %c64_109], %120 {strides = array<i32>} : memref<18x576xf32, #tpu.memory_space<vmem>>, vector<3x64xf32>,
    %c30_110 = arith.constant 30 : index
    %c0_111 = arith.constant 0 : index
    %122 = tpu.strided_load %arg23[%c30_110, %c0_111] {strides = array<i32: 2, 1>} : memref<98x64xf32, #tpu.memory_space<vmem>>, vector<3x64xf32>
    %c6_112 = arith.constant 6 : index
    %c128_113 = arith.constant 128 : index
    %123 = vector.load %arg24[%c6_112, %c128_113] : memref<18x576xf32, #tpu.memory_space<vmem>>, vector<3x64xf32>
    tpu.vector_store %arg24[%c6_112, %c128_113], %122 {strides = array<i32>} : memref<18x576xf32, #tpu.memory_space<vmem>>, vector<3x64xf32>,
    %c35 = arith.constant 35 : index
    %c0_114 = arith.constant 0 : index
    %124 = tpu.strided_load %arg23[%c35, %c0_114] {strides = array<i32: 2, 1>} : memref<98x64xf32, #tpu.memory_space<vmem>>, vector<3x64xf32>
    %c6_115 = arith.constant 6 : index
    %c192_116 = arith.constant 192 : index
    %125 = vector.load %arg24[%c6_115, %c192_116] : memref<18x576xf32, #tpu.memory_space<vmem>>, vector<3x64xf32>
    tpu.vector_store %arg24[%c6_115, %c192_116], %124 {strides = array<i32>} : memref<18x576xf32, #tpu.memory_space<vmem>>, vector<3x64xf32>,
    %c36 = arith.constant 36 : index
    %c0_117 = arith.constant 0 : index
    %126 = tpu.strided_load %arg23[%c36, %c0_117] {strides = array<i32: 2, 1>} : memref<98x64xf32, #tpu.memory_space<vmem>>, vector<3x64xf32>
    %c6_118 = arith.constant 6 : index
    %c256_119 = arith.constant 256 : index
    %127 = vector.load %arg24[%c6_118, %c256_119] : memref<18x576xf32, #tpu.memory_space<vmem>>, vector<3x64xf32>
    tpu.vector_store %arg24[%c6_118, %c256_119], %126 {strides = array<i32>} : memref<18x576xf32, #tpu.memory_space<vmem>>, vector<3x64xf32>,
    %c37 = arith.constant 37 : index
    %c0_120 = arith.constant 0 : index
    %128 = tpu.strided_load %arg23[%c37, %c0_120] {strides = array<i32: 2, 1>} : memref<98x64xf32, #tpu.memory_space<vmem>>, vector<3x64xf32>
    %c6_121 = arith.constant 6 : index
    %c320_122 = arith.constant 320 : index
    %129 = vector.load %arg24[%c6_121, %c320_122] : memref<18x576xf32, #tpu.memory_space<vmem>>, vector<3x64xf32>
    tpu.vector_store %arg24[%c6_121, %c320_122], %128 {strides = array<i32>} : memref<18x576xf32, #tpu.memory_space<vmem>>, vector<3x64xf32>,
    %c42 = arith.constant 42 : index
    %c0_123 = arith.constant 0 : index
    %130 = tpu.strided_load %arg23[%c42, %c0_123] {strides = array<i32: 2, 1>} : memref<98x64xf32, #tpu.memory_space<vmem>>, vector<3x64xf32>
    %c6_124 = arith.constant 6 : index
    %c384_125 = arith.constant 384 : index
    %131 = vector.load %arg24[%c6_124, %c384_125] : memref<18x576xf32, #tpu.memory_space<vmem>>, vector<3x64xf32>
    tpu.vector_store %arg24[%c6_124, %c384_125], %130 {strides = array<i32>} : memref<18x576xf32, #tpu.memory_space<vmem>>, vector<3x64xf32>,
    %c43 = arith.constant 43 : index
    %c0_126 = arith.constant 0 : index
    %132 = tpu.strided_load %arg23[%c43, %c0_126] {strides = array<i32: 2, 1>} : memref<98x64xf32, #tpu.memory_space<vmem>>, vector<3x64xf32>
    %c6_127 = arith.constant 6 : index
    %c448_128 = arith.constant 448 : index
    %133 = vector.load %arg24[%c6_127, %c448_128] : memref<18x576xf32, #tpu.memory_space<vmem>>, vector<3x64xf32>
    tpu.vector_store %arg24[%c6_127, %c448_128], %132 {strides = array<i32>} : memref<18x576xf32, #tpu.memory_space<vmem>>, vector<3x64xf32>,
    %c44 = arith.constant 44 : index
    %c0_129 = arith.constant 0 : index
    %134 = tpu.strided_load %arg23[%c44, %c0_129] {strides = array<i32: 2, 1>} : memref<98x64xf32, #tpu.memory_space<vmem>>, vector<3x64xf32>
    %c6_130 = arith.constant 6 : index
    %c512_131 = arith.constant 512 : index
    %135 = vector.load %arg24[%c6_130, %c512_131] : memref<18x576xf32, #tpu.memory_space<vmem>>, vector<3x64xf32>
    tpu.vector_store %arg24[%c6_130, %c512_131], %134 {strides = array<i32>} : memref<18x576xf32, #tpu.memory_space<vmem>>, vector<3x64xf32>,
    %c49_132 = arith.constant 49 : index
    %c0_133 = arith.constant 0 : index
    %136 = tpu.strided_load %arg23[%c49_132, %c0_133] {strides = array<i32: 2, 1>} : memref<98x64xf32, #tpu.memory_space<vmem>>, vector<3x64xf32>
    %c9_134 = arith.constant 9 : index
    %c0_135 = arith.constant 0 : index
    %137 = vector.load %arg24[%c9_134, %c0_135] : memref<18x576xf32, #tpu.memory_space<vmem>>, vector<3x64xf32>
    tpu.vector_store %arg24[%c9_134, %c0_135], %136 {strides = array<i32>} : memref<18x576xf32, #tpu.memory_space<vmem>>, vector<3x64xf32>,
    %c50 = arith.constant 50 : index
    %c0_136 = arith.constant 0 : index
    %138 = tpu.strided_load %arg23[%c50, %c0_136] {strides = array<i32: 2, 1>} : memref<98x64xf32, #tpu.memory_space<vmem>>, vector<3x64xf32>
    %c9_137 = arith.constant 9 : index
    %c64_138 = arith.constant 64 : index
    %139 = vector.load %arg24[%c9_137, %c64_138] : memref<18x576xf32, #tpu.memory_space<vmem>>, vector<3x64xf32>
    tpu.vector_store %arg24[%c9_137, %c64_138], %138 {strides = array<i32>} : memref<18x576xf32, #tpu.memory_space<vmem>>, vector<3x64xf32>,
    %c51 = arith.constant 51 : index
    %c0_139 = arith.constant 0 : index
    %140 = tpu.strided_load %arg23[%c51, %c0_139] {strides = array<i32: 2, 1>} : memref<98x64xf32, #tpu.memory_space<vmem>>, vector<3x64xf32>
    %c9_140 = arith.constant 9 : index
    %c128_141 = arith.constant 128 : index
    %141 = vector.load %arg24[%c9_140, %c128_141] : memref<18x576xf32, #tpu.memory_space<vmem>>, vector<3x64xf32>
    tpu.vector_store %arg24[%c9_140, %c128_141], %140 {strides = array<i32>} : memref<18x576xf32, #tpu.memory_space<vmem>>, vector<3x64xf32>,
    %c56 = arith.constant 56 : index
    %c0_142 = arith.constant 0 : index
    %142 = tpu.strided_load %arg23[%c56, %c0_142] {strides = array<i32: 2, 1>} : memref<98x64xf32, #tpu.memory_space<vmem>>, vector<3x64xf32>
    %c9_143 = arith.constant 9 : index
    %c192_144 = arith.constant 192 : index
    %143 = vector.load %arg24[%c9_143, %c192_144] : memref<18x576xf32, #tpu.memory_space<vmem>>, vector<3x64xf32>
    tpu.vector_store %arg24[%c9_143, %c192_144], %142 {strides = array<i32>} : memref<18x576xf32, #tpu.memory_space<vmem>>, vector<3x64xf32>,
    %c57 = arith.constant 57 : index
    %c0_145 = arith.constant 0 : index
    %144 = tpu.strided_load %arg23[%c57, %c0_145] {strides = array<i32: 2, 1>} : memref<98x64xf32, #tpu.memory_space<vmem>>, vector<3x64xf32>
    %c9_146 = arith.constant 9 : index
    %c256_147 = arith.constant 256 : index
    %145 = vector.load %arg24[%c9_146, %c256_147] : memref<18x576xf32, #tpu.memory_space<vmem>>, vector<3x64xf32>
    tpu.vector_store %arg24[%c9_146, %c256_147], %144 {strides = array<i32>} : memref<18x576xf32, #tpu.memory_space<vmem>>, vector<3x64xf32>,
    %c58 = arith.constant 58 : index
    %c0_148 = arith.constant 0 : index
    %146 = tpu.strided_load %arg23[%c58, %c0_148] {strides = array<i32: 2, 1>} : memref<98x64xf32, #tpu.memory_space<vmem>>, vector<3x64xf32>
    %c9_149 = arith.constant 9 : index
    %c320_150 = arith.constant 320 : index
    %147 = vector.load %arg24[%c9_149, %c320_150] : memref<18x576xf32, #tpu.memory_space<vmem>>, vector<3x64xf32>
    tpu.vector_store %arg24[%c9_149, %c320_150], %146 {strides = array<i32>} : memref<18x576xf32, #tpu.memory_space<vmem>>, vector<3x64xf32>,
    %c63 = arith.constant 63 : index
    %c0_151 = arith.constant 0 : index
    %148 = tpu.strided_load %arg23[%c63, %c0_151] {strides = array<i32: 2, 1>} : memref<98x64xf32, #tpu.memory_space<vmem>>, vector<3x64xf32>
    %c9_152 = arith.constant 9 : index
    %c384_153 = arith.constant 384 : index
    %149 = vector.load %arg24[%c9_152, %c384_153] : memref<18x576xf32, #tpu.memory_space<vmem>>, vector<3x64xf32>
    tpu.vector_store %arg24[%c9_152, %c384_153], %148 {strides = array<i32>} : memref<18x576xf32, #tpu.memory_space<vmem>>, vector<3x64xf32>,
    %c64_154 = arith.constant 64 : index
    %c0_155 = arith.constant 0 : index
    %150 = tpu.strided_load %arg23[%c64_154, %c0_155] {strides = array<i32: 2, 1>} : memref<98x64xf32, #tpu.memory_space<vmem>>, vector<3x64xf32>
    %c9_156 = arith.constant 9 : index
    %c448_157 = arith.constant 448 : index
    %151 = vector.load %arg24[%c9_156, %c448_157] : memref<18x576xf32, #tpu.memory_space<vmem>>, vector<3x64xf32>
    tpu.vector_store %arg24[%c9_156, %c448_157], %150 {strides = array<i32>} : memref<18x576xf32, #tpu.memory_space<vmem>>, vector<3x64xf32>,
    %c65 = arith.constant 65 : index
    %c0_158 = arith.constant 0 : index
    %152 = tpu.strided_load %arg23[%c65, %c0_158] {strides = array<i32: 2, 1>} : memref<98x64xf32, #tpu.memory_space<vmem>>, vector<3x64xf32>
    %c9_159 = arith.constant 9 : index
    %c512_160 = arith.constant 512 : index
    %153 = vector.load %arg24[%c9_159, %c512_160] : memref<18x576xf32, #tpu.memory_space<vmem>>, vector<3x64xf32>
    tpu.vector_store %arg24[%c9_159, %c512_160], %152 {strides = array<i32>} : memref<18x576xf32, #tpu.memory_space<vmem>>, vector<3x64xf32>,
    %c63_161 = arith.constant 63 : index
    %c0_162 = arith.constant 0 : index
    %154 = tpu.strided_load %arg23[%c63_161, %c0_162] {strides = array<i32: 2, 1>} : memref<98x64xf32, #tpu.memory_space<vmem>>, vector<3x64xf32>
    %c12 = arith.constant 12 : index
    %c0_163 = arith.constant 0 : index
    %155 = vector.load %arg24[%c12, %c0_163] : memref<18x576xf32, #tpu.memory_space<vmem>>, vector<3x64xf32>
    tpu.vector_store %arg24[%c12, %c0_163], %154 {strides = array<i32>} : memref<18x576xf32, #tpu.memory_space<vmem>>, vector<3x64xf32>,
    %c64_164 = arith.constant 64 : index
    %c0_165 = arith.constant 0 : index
    %156 = tpu.strided_load %arg23[%c64_164, %c0_165] {strides = array<i32: 2, 1>} : memref<98x64xf32, #tpu.memory_space<vmem>>, vector<3x64xf32>
    %c12_166 = arith.constant 12 : index
    %c64_167 = arith.constant 64 : index
    %157 = vector.load %arg24[%c12_166, %c64_167] : memref<18x576xf32, #tpu.memory_space<vmem>>, vector<3x64xf32>
    tpu.vector_store %arg24[%c12_166, %c64_167], %156 {strides = array<i32>} : memref<18x576xf32, #tpu.memory_space<vmem>>, vector<3x64xf32>,
    %c65_168 = arith.constant 65 : index
    %c0_169 = arith.constant 0 : index
    %158 = tpu.strided_load %arg23[%c65_168, %c0_169] {strides = array<i32: 2, 1>} : memref<98x64xf32, #tpu.memory_space<vmem>>, vector<3x64xf32>
    %c12_170 = arith.constant 12 : index
    %c128_171 = arith.constant 128 : index
    %159 = vector.load %arg24[%c12_170, %c128_171] : memref<18x576xf32, #tpu.memory_space<vmem>>, vector<3x64xf32>
    tpu.vector_store %arg24[%c12_170, %c128_171], %158 {strides = array<i32>} : memref<18x576xf32, #tpu.memory_space<vmem>>, vector<3x64xf32>,
    %c70 = arith.constant 70 : index
    %c0_172 = arith.constant 0 : index
    %160 = tpu.strided_load %arg23[%c70, %c0_172] {strides = array<i32: 2, 1>} : memref<98x64xf32, #tpu.memory_space<vmem>>, vector<3x64xf32>
    %c12_173 = arith.constant 12 : index
    %c192_174 = arith.constant 192 : index
    %161 = vector.load %arg24[%c12_173, %c192_174] : memref<18x576xf32, #tpu.memory_space<vmem>>, vector<3x64xf32>
    tpu.vector_store %arg24[%c12_173, %c192_174], %160 {strides = array<i32>} : memref<18x576xf32, #tpu.memory_space<vmem>>, vector<3x64xf32>,
    %c71 = arith.constant 71 : index
    %c0_175 = arith.constant 0 : index
    %162 = tpu.strided_load %arg23[%c71, %c0_175] {strides = array<i32: 2, 1>} : memref<98x64xf32, #tpu.memory_space<vmem>>, vector<3x64xf32>
    %c12_176 = arith.constant 12 : index
    %c256_177 = arith.constant 256 : index
    %163 = vector.load %arg24[%c12_176, %c256_177] : memref<18x576xf32, #tpu.memory_space<vmem>>, vector<3x64xf32>
    tpu.vector_store %arg24[%c12_176, %c256_177], %162 {strides = array<i32>} : memref<18x576xf32, #tpu.memory_space<vmem>>, vector<3x64xf32>,
    %c72 = arith.constant 72 : index
    %c0_178 = arith.constant 0 : index
    %164 = tpu.strided_load %arg23[%c72, %c0_178] {strides = array<i32: 2, 1>} : memref<98x64xf32, #tpu.memory_space<vmem>>, vector<3x64xf32>
    %c12_179 = arith.constant 12 : index
    %c320_180 = arith.constant 320 : index
    %165 = vector.load %arg24[%c12_179, %c320_180] : memref<18x576xf32, #tpu.memory_space<vmem>>, vector<3x64xf32>
    tpu.vector_store %arg24[%c12_179, %c320_180], %164 {strides = array<i32>} : memref<18x576xf32, #tpu.memory_space<vmem>>, vector<3x64xf32>,
    %c77 = arith.constant 77 : index
    %c0_181 = arith.constant 0 : index
    %166 = tpu.strided_load %arg23[%c77, %c0_181] {strides = array<i32: 2, 1>} : memref<98x64xf32, #tpu.memory_space<vmem>>, vector<3x64xf32>
    %c12_182 = arith.constant 12 : index
    %c384_183 = arith.constant 384 : index
    %167 = vector.load %arg24[%c12_182, %c384_183] : memref<18x576xf32, #tpu.memory_space<vmem>>, vector<3x64xf32>
    tpu.vector_store %arg24[%c12_182, %c384_183], %166 {strides = array<i32>} : memref<18x576xf32, #tpu.memory_space<vmem>>, vector<3x64xf32>,
    %c78 = arith.constant 78 : index
    %c0_184 = arith.constant 0 : index
    %168 = tpu.strided_load %arg23[%c78, %c0_184] {strides = array<i32: 2, 1>} : memref<98x64xf32, #tpu.memory_space<vmem>>, vector<3x64xf32>
    %c12_185 = arith.constant 12 : index
    %c448_186 = arith.constant 448 : index
    %169 = vector.load %arg24[%c12_185, %c448_186] : memref<18x576xf32, #tpu.memory_space<vmem>>, vector<3x64xf32>
    tpu.vector_store %arg24[%c12_185, %c448_186], %168 {strides = array<i32>} : memref<18x576xf32, #tpu.memory_space<vmem>>, vector<3x64xf32>,
    %c79 = arith.constant 79 : index
    %c0_187 = arith.constant 0 : index
    %170 = tpu.strided_load %arg23[%c79, %c0_187] {strides = array<i32: 2, 1>} : memref<98x64xf32, #tpu.memory_space<vmem>>, vector<3x64xf32>
    %c12_188 = arith.constant 12 : index
    %c512_189 = arith.constant 512 : index
    %171 = vector.load %arg24[%c12_188, %c512_189] : memref<18x576xf32, #tpu.memory_space<vmem>>, vector<3x64xf32>
    tpu.vector_store %arg24[%c12_188, %c512_189], %170 {strides = array<i32>} : memref<18x576xf32, #tpu.memory_space<vmem>>, vector<3x64xf32>,
    %c77_190 = arith.constant 77 : index
    %c0_191 = arith.constant 0 : index
    %172 = tpu.strided_load %arg23[%c77_190, %c0_191] {strides = array<i32: 2, 1>} : memref<98x64xf32, #tpu.memory_space<vmem>>, vector<3x64xf32>
    %c15_192 = arith.constant 15 : index
    %c0_193 = arith.constant 0 : index
    %173 = vector.load %arg24[%c15_192, %c0_193] : memref<18x576xf32, #tpu.memory_space<vmem>>, vector<3x64xf32>
    tpu.vector_store %arg24[%c15_192, %c0_193], %172 {strides = array<i32>} : memref<18x576xf32, #tpu.memory_space<vmem>>, vector<3x64xf32>,
    %c78_194 = arith.constant 78 : index
    %c0_195 = arith.constant 0 : index
    %174 = tpu.strided_load %arg23[%c78_194, %c0_195] {strides = array<i32: 2, 1>} : memref<98x64xf32, #tpu.memory_space<vmem>>, vector<3x64xf32>
    %c15_196 = arith.constant 15 : index
    %c64_197 = arith.constant 64 : index
    %175 = vector.load %arg24[%c15_196, %c64_197] : memref<18x576xf32, #tpu.memory_space<vmem>>, vector<3x64xf32>
    tpu.vector_store %arg24[%c15_196, %c64_197], %174 {strides = array<i32>} : memref<18x576xf32, #tpu.memory_space<vmem>>, vector<3x64xf32>,
    %c79_198 = arith.constant 79 : index
    %c0_199 = arith.constant 0 : index
    %176 = tpu.strided_load %arg23[%c79_198, %c0_199] {strides = array<i32: 2, 1>} : memref<98x64xf32, #tpu.memory_space<vmem>>, vector<3x64xf32>
    %c15_200 = arith.constant 15 : index
    %c128_201 = arith.constant 128 : index
    %177 = vector.load %arg24[%c15_200, %c128_201] : memref<18x576xf32, #tpu.memory_space<vmem>>, vector<3x64xf32>
    tpu.vector_store %arg24[%c15_200, %c128_201], %176 {strides = array<i32>} : memref<18x576xf32, #tpu.memory_space<vmem>>, vector<3x64xf32>,
    %c84 = arith.constant 84 : index
    %c0_202 = arith.constant 0 : index
    %178 = tpu.strided_load %arg23[%c84, %c0_202] {strides = array<i32: 2, 1>} : memref<98x64xf32, #tpu.memory_space<vmem>>, vector<3x64xf32>
    %c15_203 = arith.constant 15 : index
    %c192_204 = arith.constant 192 : index
    %179 = vector.load %arg24[%c15_203, %c192_204] : memref<18x576xf32, #tpu.memory_space<vmem>>, vector<3x64xf32>
    tpu.vector_store %arg24[%c15_203, %c192_204], %178 {strides = array<i32>} : memref<18x576xf32, #tpu.memory_space<vmem>>, vector<3x64xf32>,
    %c85 = arith.constant 85 : index
    %c0_205 = arith.constant 0 : index
    %180 = tpu.strided_load %arg23[%c85, %c0_205] {strides = array<i32: 2, 1>} : memref<98x64xf32, #tpu.memory_space<vmem>>, vector<3x64xf32>
    %c15_206 = arith.constant 15 : index
    %c256_207 = arith.constant 256 : index
    %181 = vector.load %arg24[%c15_206, %c256_207] : memref<18x576xf32, #tpu.memory_space<vmem>>, vector<3x64xf32>
    tpu.vector_store %arg24[%c15_206, %c256_207], %180 {strides = array<i32>} : memref<18x576xf32, #tpu.memory_space<vmem>>, vector<3x64xf32>,
    %c86 = arith.constant 86 : index
    %c0_208 = arith.constant 0 : index
    %182 = tpu.strided_load %arg23[%c86, %c0_208] {strides = array<i32: 2, 1>} : memref<98x64xf32, #tpu.memory_space<vmem>>, vector<3x64xf32>
    %c15_209 = arith.constant 15 : index
    %c320_210 = arith.constant 320 : index
    %183 = vector.load %arg24[%c15_209, %c320_210] : memref<18x576xf32, #tpu.memory_space<vmem>>, vector<3x64xf32>
    tpu.vector_store %arg24[%c15_209, %c320_210], %182 {strides = array<i32>} : memref<18x576xf32, #tpu.memory_space<vmem>>, vector<3x64xf32>,
    %c91 = arith.constant 91 : index
    %c0_211 = arith.constant 0 : index
    %184 = tpu.strided_load %arg23[%c91, %c0_211] {strides = array<i32: 2, 1>} : memref<98x64xf32, #tpu.memory_space<vmem>>, vector<3x64xf32>
    %c15_212 = arith.constant 15 : index
    %c384_213 = arith.constant 384 : index
    %185 = vector.load %arg24[%c15_212, %c384_213] : memref<18x576xf32, #tpu.memory_space<vmem>>, vector<3x64xf32>
    tpu.vector_store %arg24[%c15_212, %c384_213], %184 {strides = array<i32>} : memref<18x576xf32, #tpu.memory_space<vmem>>, vector<3x64xf32>,
    %c92 = arith.constant 92 : index
    %c0_214 = arith.constant 0 : index
    %186 = tpu.strided_load %arg23[%c92, %c0_214] {strides = array<i32: 2, 1>} : memref<98x64xf32, #tpu.memory_space<vmem>>, vector<3x64xf32>
    %c15_215 = arith.constant 15 : index
    %c448_216 = arith.constant 448 : index
    %187 = vector.load %arg24[%c15_215, %c448_216] : memref<18x576xf32, #tpu.memory_space<vmem>>, vector<3x64xf32>
    tpu.vector_store %arg24[%c15_215, %c448_216], %186 {strides = array<i32>} : memref<18x576xf32, #tpu.memory_space<vmem>>, vector<3x64xf32>,
    %c93 = arith.constant 93 : index
    %c0_217 = arith.constant 0 : index
    %188 = tpu.strided_load %arg23[%c93, %c0_217] {strides = array<i32: 2, 1>} : memref<98x64xf32, #tpu.memory_space<vmem>>, vector<3x64xf32>
    %c15_218 = arith.constant 15 : index
    %c512_219 = arith.constant 512 : index
    %189 = vector.load %arg24[%c15_218, %c512_219] : memref<18x576xf32, #tpu.memory_space<vmem>>, vector<3x64xf32>
    tpu.vector_store %arg24[%c15_218, %c512_219], %188 {strides = array<i32>} : memref<18x576xf32, #tpu.memory_space<vmem>>, vector<3x64xf32>,
    %c0_220 = arith.constant 0 : index
    %c0_221 = arith.constant 0 : index
    %190 = vector.load %arg24[%c0_220, %c0_221] : memref<18x576xf32, #tpu.memory_space<vmem>>, vector<18x576xf32>
    %191 = arith.truncf %190 : vector<18x576xf32> to vector<18x576xbf16>
    %c0_222 = arith.constant 0 : index
    %c0_223 = arith.constant 0 : index
    %192 = vector.load %arg11[%c0_222, %c0_223] : memref<576x128xbf16, #tpu.memory_space<vmem>>, vector<576x128xbf16>
    %cst_224 = arith.constant dense<0.000000e+00> : vector<18x128xf32>
    %193 = tpu.matmul %191, %192, %cst_224 {dimension_numbers = #tpu.dot_dimension_numbers<[1], [0], [0], [1], [0, 0, 1, 1], [], []>} : vector<18x576xbf16>, vector<576x128xbf16>, vector<18x128xf32> -> vector<18x128xf32>
    %c0_225 = arith.constant 0 : index
    %c0_226 = arith.constant 0 : index
    %194 = vector.load %arg12[%c0_225, %c0_226] : memref<1x128xf32, #tpu.memory_space<vmem>>, vector<1x128xf32>
    %c0_227 = arith.constant 0 : index
    %c0_228 = arith.constant 0 : index
    %195 = vector.load %arg13[%c0_227, %c0_228] : memref<1x128xf32, #tpu.memory_space<vmem>>, vector<1x128xf32>
    %cst_229 = arith.constant dense<0.000000e+00> : vector<128xf32>
    %196 = vector.multi_reduction <add>, %193, %cst_229 [0] : vector<18x128xf32> to vector<128xf32>
    %197 = vector.shape_cast %196 : vector<128xf32> to vector<1x128xf32>
    %cst_230 = arith.constant 1.800000e+01 : f32
    %198 = vector.broadcast %cst_230 : f32 to vector<1x128xf32>
    %199 = arith.divf %197, %198 : vector<1x128xf32>
    %200 = arith.mulf %193, %193 : vector<18x128xf32>
    %cst_231 = arith.constant dense<0.000000e+00> : vector<128xf32>
    %201 = vector.multi_reduction <add>, %200, %cst_231 [0] : vector<18x128xf32> to vector<128xf32>
    %202 = vector.shape_cast %201 : vector<128xf32> to vector<1x128xf32>
    %cst_232 = arith.constant 1.800000e+01 : f32
    %203 = vector.broadcast %cst_232 : f32 to vector<1x128xf32>
    %204 = arith.divf %202, %203 : vector<1x128xf32>
    %205 = arith.mulf %199, %199 : vector<1x128xf32>
    %206 = arith.subf %204, %205 : vector<1x128xf32>
    %cst_233 = arith.constant 0.000000e+00 : f32
    %207 = vector.broadcast %cst_233 : f32 to vector<1x128xf32>
    %208 = arith.maximumf %206, %207 : vector<1x128xf32>
    %cst_234 = arith.constant 9.99999974E-6 : f32
    %209 = vector.broadcast %cst_234 : f32 to vector<1x128xf32>
    %210 = arith.addf %208, %209 : vector<1x128xf32>
    %211 = math.rsqrt %210 : vector<1x128xf32>
    %212 = arith.mulf %194, %211 : vector<1x128xf32>
    %213 = vector.broadcast %212 : vector<1x128xf32> to vector<18x128xf32>
    %214 = arith.mulf %193, %213 : vector<18x128xf32>
    %215 = arith.mulf %199, %212 : vector<1x128xf32>
    %216 = arith.subf %195, %215 : vector<1x128xf32>
    %217 = vector.broadcast %216 : vector<1x128xf32> to vector<18x128xf32>
    %218 = arith.addf %214, %217 : vector<18x128xf32>
    %cst_235 = arith.constant 0.00999999977 : f32
    %219 = vector.broadcast %cst_235 : f32 to vector<18x128xf32>
    %220 = arith.mulf %219, %218 : vector<18x128xf32>
    %221 = arith.maximumf %218, %220 : vector<18x128xf32>
    %c0_236 = arith.constant 0 : index
    %c0_237 = arith.constant 0 : index
    %222 = vector.load %arg25[%c0_236, %c0_237] : memref<18x128xf32, #tpu.memory_space<vmem>>, vector<18x128xf32>
    tpu.vector_store %arg25[%c0_236, %c0_237], %221 {strides = array<i32>} : memref<18x128xf32, #tpu.memory_space<vmem>>, vector<18x128xf32>,
    %c0_238 = arith.constant 0 : index
    %c0_239 = arith.constant 0 : index
    %223 = vector.load %arg25[%c0_238, %c0_239] : memref<18x128xf32, #tpu.memory_space<vmem>>, vector<9x128xf32>
    %224 = vector.extract_strided_slice %16 {offsets = [0, 0], sizes = [1, 128], strides = [1, 1]} : vector<2x128xf32> to vector<1x128xf32>
    %225 = vector.broadcast %224 : vector<1x128xf32> to vector<9x128xf32>
    %226 = arith.addf %223, %225 : vector<9x128xf32>
    %c0_240 = arith.constant 0 : index
    %c0_241 = arith.constant 0 : index
    %227 = vector.load %arg25[%c0_240, %c0_241] : memref<18x128xf32, #tpu.memory_space<vmem>>, vector<9x128xf32>
    tpu.vector_store %arg25[%c0_240, %c0_241], %226 {strides = array<i32>} : memref<18x128xf32, #tpu.memory_space<vmem>>, vector<9x128xf32>,
    %c9_242 = arith.constant 9 : index
    %c0_243 = arith.constant 0 : index
    %228 = vector.load %arg25[%c9_242, %c0_243] : memref<18x128xf32, #tpu.memory_space<vmem>>, vector<9x128xf32>
    %229 = vector.extract_strided_slice %16 {offsets = [1, 0], sizes = [1, 128], strides = [1, 1]} : vector<2x128xf32> to vector<1x128xf32>
    %230 = vector.broadcast %229 : vector<1x128xf32> to vector<9x128xf32>
    %231 = arith.addf %228, %230 : vector<9x128xf32>
    %c9_244 = arith.constant 9 : index
    %c0_245 = arith.constant 0 : index
    %232 = vector.load %arg25[%c9_244, %c0_245] : memref<18x128xf32, #tpu.memory_space<vmem>>, vector<9x128xf32>
    tpu.vector_store %arg25[%c9_244, %c0_245], %231 {strides = array<i32>} : memref<18x128xf32, #tpu.memory_space<vmem>>, vector<9x128xf32>,
    %c0_246 = arith.constant 0 : index
    %c0_247 = arith.constant 0 : index
    %233 = tpu.strided_load %arg25[%c0_246, %c0_247] {strides = array<i32: 9, 1>} : memref<18x128xf32, #tpu.memory_space<vmem>>, vector<2x128xf32>
    %c0_248 = arith.constant 0 : index
    %c0_249 = arith.constant 0 : index
    %234 = vector.load %arg26[%c0_248, %c0_249] : memref<2x1152xf32, #tpu.memory_space<vmem>>, vector<2x128xf32>
    tpu.vector_store %arg26[%c0_248, %c0_249], %233 {strides = array<i32>} : memref<2x1152xf32, #tpu.memory_space<vmem>>, vector<2x128xf32>,
    %c1_250 = arith.constant 1 : index
    %c0_251 = arith.constant 0 : index
    %235 = tpu.strided_load %arg25[%c1_250, %c0_251] {strides = array<i32: 9, 1>} : memref<18x128xf32, #tpu.memory_space<vmem>>, vector<2x128xf32>
    %c0_252 = arith.constant 0 : index
    %c128_253 = arith.constant 128 : index
    %236 = vector.load %arg26[%c0_252, %c128_253] : memref<2x1152xf32, #tpu.memory_space<vmem>>, vector<2x128xf32>
    tpu.vector_store %arg26[%c0_252, %c128_253], %235 {strides = array<i32>} : memref<2x1152xf32, #tpu.memory_space<vmem>>, vector<2x128xf32>,
    %c2_254 = arith.constant 2 : index
    %c0_255 = arith.constant 0 : index
    %237 = tpu.strided_load %arg25[%c2_254, %c0_255] {strides = array<i32: 9, 1>} : memref<18x128xf32, #tpu.memory_space<vmem>>, vector<2x128xf32>
    %c0_256 = arith.constant 0 : index
    %c256_257 = arith.constant 256 : index
    %238 = vector.load %arg26[%c0_256, %c256_257] : memref<2x1152xf32, #tpu.memory_space<vmem>>, vector<2x128xf32>
    tpu.vector_store %arg26[%c0_256, %c256_257], %237 {strides = array<i32>} : memref<2x1152xf32, #tpu.memory_space<vmem>>, vector<2x128xf32>,
    %c3_258 = arith.constant 3 : index
    %c0_259 = arith.constant 0 : index
    %239 = tpu.strided_load %arg25[%c3_258, %c0_259] {strides = array<i32: 9, 1>} : memref<18x128xf32, #tpu.memory_space<vmem>>, vector<2x128xf32>
    %c0_260 = arith.constant 0 : index
    %c384_261 = arith.constant 384 : index
    %240 = vector.load %arg26[%c0_260, %c384_261] : memref<2x1152xf32, #tpu.memory_space<vmem>>, vector<2x128xf32>
    tpu.vector_store %arg26[%c0_260, %c384_261], %239 {strides = array<i32>} : memref<2x1152xf32, #tpu.memory_space<vmem>>, vector<2x128xf32>,
    %c4 = arith.constant 4 : index
    %c0_262 = arith.constant 0 : index
    %241 = tpu.strided_load %arg25[%c4, %c0_262] {strides = array<i32: 9, 1>} : memref<18x128xf32, #tpu.memory_space<vmem>>, vector<2x128xf32>
    %c0_263 = arith.constant 0 : index
    %c512_264 = arith.constant 512 : index
    %242 = vector.load %arg26[%c0_263, %c512_264] : memref<2x1152xf32, #tpu.memory_space<vmem>>, vector<2x128xf32>
    tpu.vector_store %arg26[%c0_263, %c512_264], %241 {strides = array<i32>} : memref<2x1152xf32, #tpu.memory_space<vmem>>, vector<2x128xf32>,
    %c5 = arith.constant 5 : index
    %c0_265 = arith.constant 0 : index
    %243 = tpu.strided_load %arg25[%c5, %c0_265] {strides = array<i32: 9, 1>} : memref<18x128xf32, #tpu.memory_space<vmem>>, vector<2x128xf32>
    %c0_266 = arith.constant 0 : index
    %c640 = arith.constant 640 : index
    %244 = vector.load %arg26[%c0_266, %c640] : memref<2x1152xf32, #tpu.memory_space<vmem>>, vector<2x128xf32>
    tpu.vector_store %arg26[%c0_266, %c640], %243 {strides = array<i32>} : memref<2x1152xf32, #tpu.memory_space<vmem>>, vector<2x128xf32>,
    %c6_267 = arith.constant 6 : index
    %c0_268 = arith.constant 0 : index
    %245 = tpu.strided_load %arg25[%c6_267, %c0_268] {strides = array<i32: 9, 1>} : memref<18x128xf32, #tpu.memory_space<vmem>>, vector<2x128xf32>
    %c0_269 = arith.constant 0 : index
    %c768 = arith.constant 768 : index
    %246 = vector.load %arg26[%c0_269, %c768] : memref<2x1152xf32, #tpu.memory_space<vmem>>, vector<2x128xf32>
    tpu.vector_store %arg26[%c0_269, %c768], %245 {strides = array<i32>} : memref<2x1152xf32, #tpu.memory_space<vmem>>, vector<2x128xf32>,
    %c7_270 = arith.constant 7 : index
    %c0_271 = arith.constant 0 : index
    %247 = tpu.strided_load %arg25[%c7_270, %c0_271] {strides = array<i32: 9, 1>} : memref<18x128xf32, #tpu.memory_space<vmem>>, vector<2x128xf32>
    %c0_272 = arith.constant 0 : index
    %c896 = arith.constant 896 : index
    %248 = vector.load %arg26[%c0_272, %c896] : memref<2x1152xf32, #tpu.memory_space<vmem>>, vector<2x128xf32>
    tpu.vector_store %arg26[%c0_272, %c896], %247 {strides = array<i32>} : memref<2x1152xf32, #tpu.memory_space<vmem>>, vector<2x128xf32>,
    %c8_273 = arith.constant 8 : index
    %c0_274 = arith.constant 0 : index
    %249 = tpu.strided_load %arg25[%c8_273, %c0_274] {strides = array<i32: 9, 1>} : memref<18x128xf32, #tpu.memory_space<vmem>>, vector<2x128xf32>
    %c0_275 = arith.constant 0 : index
    %c1024 = arith.constant 1024 : index
    %250 = vector.load %arg26[%c0_275, %c1024] : memref<2x1152xf32, #tpu.memory_space<vmem>>, vector<2x128xf32>
    tpu.vector_store %arg26[%c0_275, %c1024], %249 {strides = array<i32>} : memref<2x1152xf32, #tpu.memory_space<vmem>>, vector<2x128xf32>,
    %c0_276 = arith.constant 0 : index
    %c0_277 = arith.constant 0 : index
    %251 = vector.load %arg26[%c0_276, %c0_277] : memref<2x1152xf32, #tpu.memory_space<vmem>>, vector<2x1152xf32>
    %252 = arith.truncf %251 : vector<2x1152xf32> to vector<2x1152xbf16>
    %c0_278 = arith.constant 0 : index
    %c0_279 = arith.constant 0 : index
    %253 = vector.load %arg14[%c0_278, %c0_279] : memref<1152x256xbf16, #tpu.memory_space<vmem>>, vector<1152x256xbf16>
    %cst_280 = arith.constant dense<0.000000e+00> : vector<2x256xf32>
    %254 = tpu.matmul %252, %253, %cst_280 {dimension_numbers = #tpu.dot_dimension_numbers<[1], [0], [0], [1], [0, 0, 1, 1], [], []>} : vector<2x1152xbf16>, vector<1152x256xbf16>, vector<2x256xf32> -> vector<2x256xf32>
    %c0_281 = arith.constant 0 : index
    %c0_282 = arith.constant 0 : index
    %255 = vector.load %arg15[%c0_281, %c0_282] : memref<1x256xf32, #tpu.memory_space<vmem>>, vector<1x256xf32>
    %256 = vector.broadcast %255 : vector<1x256xf32> to vector<2x256xf32>
    %257 = arith.addf %254, %256 : vector<2x256xf32>
    %cst_283 = arith.constant 0.00999999977 : f32
    %258 = vector.broadcast %cst_283 : f32 to vector<2x256xf32>
    %259 = arith.mulf %258, %257 : vector<2x256xf32>
    %260 = arith.maximumf %257, %259 : vector<2x256xf32>
    %261 = arith.truncf %260 : vector<2x256xf32> to vector<2x256xbf16>
    %c0_284 = arith.constant 0 : index
    %c0_285 = arith.constant 0 : index
    %262 = vector.load %arg16[%c0_284, %c0_285] : memref<256x256xbf16, #tpu.memory_space<vmem>>, vector<256x256xbf16>
    %cst_286 = arith.constant dense<0.000000e+00> : vector<2x256xf32>
    %263 = tpu.matmul %261, %262, %cst_286 {dimension_numbers = #tpu.dot_dimension_numbers<[1], [0], [0], [1], [0, 0, 1, 1], [], []>} : vector<2x256xbf16>, vector<256x256xbf16>, vector<2x256xf32> -> vector<2x256xf32>
    %264 = arith.truncf %8 : vector<2x256xf32> to vector<2x256xbf16>
    %c0_287 = arith.constant 0 : index
    %c0_288 = arith.constant 0 : index
    %265 = vector.load %arg17[%c0_287, %c0_288] : memref<256x256xbf16, #tpu.memory_space<vmem>>, vector<256x256xbf16>
    %cst_289 = arith.constant dense<0.000000e+00> : vector<2x256xf32>
    %266 = tpu.matmul %264, %265, %cst_289 {dimension_numbers = #tpu.dot_dimension_numbers<[1], [0], [0], [1], [0, 0, 1, 1], [], []>} : vector<2x256xbf16>, vector<256x256xbf16>, vector<2x256xf32> -> vector<2x256xf32>
    %267 = arith.addf %263, %266 : vector<2x256xf32>
    %c0_290 = arith.constant 0 : index
    %c0_291 = arith.constant 0 : index
    %268 = vector.load %arg18[%c0_290, %c0_291] : memref<1x256xf32, #tpu.memory_space<vmem>>, vector<1x256xf32>
    %269 = vector.broadcast %268 : vector<1x256xf32> to vector<2x256xf32>
    %270 = arith.addf %267, %269 : vector<2x256xf32>
    %cst_292 = arith.constant 0.000000e+00 : f32
    %271 = vector.broadcast %cst_292 : f32 to vector<2x256xf32>
    %272 = arith.maximumf %270, %271 : vector<2x256xf32>
    %273 = arith.truncf %272 : vector<2x256xf32> to vector<2x256xbf16>
    %c0_293 = arith.constant 0 : index
    %c0_294 = arith.constant 0 : index
    %274 = vector.load %arg19[%c0_293, %c0_294] : memref<256x10xbf16, #tpu.memory_space<vmem>>, vector<256x10xbf16>
    %cst_295 = arith.constant dense<0.000000e+00> : vector<2x10xf32>
    %275 = tpu.matmul %273, %274, %cst_295 {dimension_numbers = #tpu.dot_dimension_numbers<[1], [0], [0], [1], [0, 0, 1, 1], [], []>} : vector<2x256xbf16>, vector<256x10xbf16>, vector<2x10xf32> -> vector<2x10xf32>
    %c0_296 = arith.constant 0 : index
    %c0_297 = arith.constant 0 : index
    %276 = vector.load %arg20[%c0_296, %c0_297] : memref<1x10xf32, #tpu.memory_space<vmem>>, vector<1x10xf32>
    %277 = vector.broadcast %276 : vector<1x10xf32> to vector<2x10xf32>
    %278 = arith.addf %275, %277 : vector<2x10xf32>
    %c0_298 = arith.constant 0 : index
    %c0_299 = arith.constant 0 : index
    %279 = vector.load %arg21[%c0_298, %c0_299] : memref<2x10xf32, #tpu.memory_space<vmem>>, vector<2x10xf32>
    tpu.vector_store %arg21[%c0_298, %c0_299], %278 {strides = array<i32>} : memref<2x10xf32, #tpu.memory_space<vmem>>, vector<2x10xf32>,
    return
  }
}

</mosaic_0001>

<llo_original>
// kernel: squeeze.1
$region0: #{squeeze.1}
  %s0 = inlined_call_operand.vmem [shape: f32[2,1,28,28], index: 0, kind: input, shape index: {}]
  %s1 = inlined_call_operand.vmem [shape: f32[2,7,2,2,7,2,2], index: 1, kind: output, shape index: {}]
  $region1: #{squeeze.1} parent=0
    #allocation0 [shape = 'u8[1605632]{0}', space=vmem, size = 0x188000, scoped, tag = 'scoped mem for output reshape']
    #allocation1 [shape = 'u8[114688]{0}', space=vmem, size = 0x1c000, scoped, tag = 'scoped mem for input reshape']
    %s3 = sshllo.u32 0, 2
    %s4 = smul.addr 2, 27
    %s5 = scalar_lea.vmem %s0, %s4
    %v6 = vld [vmem:[%s5] sm:%s3]
    %s7 = scalar_lea.vmem [#allocation1], 216
    %8 = vst [vmem:[%s7] sm:%s3] %v6
    %s9 = smul.addr 2, 26
    %s10 = scalar_lea.vmem %s0, %s9
    %v11 = vld [vmem:[%s10] sm:%s3]
    %s12 = scalar_lea.vmem [#allocation1], 208
    %13 = vst [vmem:[%s12] sm:%s3] %v11
    %s14 = smul.addr 2, 25
    %s15 = scalar_lea.vmem %s0, %s14
    %v16 = vld [vmem:[%s15] sm:%s3]
    %s17 = scalar_lea.vmem [#allocation1], 200
    %18 = vst [vmem:[%s17] sm:%s3] %v16
    %s19 = smul.addr 2, 24
    %s20 = scalar_lea.vmem %s0, %s19
    %v21 = vld [vmem:[%s20] sm:%s3]
    %s22 = scalar_lea.vmem [#allocation1], 192
    %23 = vst [vmem:[%s22] sm:%s3] %v21
    %s24 = smul.addr 2, 23
    %s25 = scalar_lea.vmem %s0, %s24
    %v26 = vld [vmem:[%s25] sm:%s3]
    %s27 = scalar_lea.vmem [#allocation1], 184
    %28 = vst [vmem:[%s27] sm:%s3] %v26
    %s29 = smul.addr 2, 22
    %s30 = scalar_lea.vmem %s0, %s29
    %v31 = vld [vmem:[%s30] sm:%s3]
    %s32 = scalar_lea.vmem [#allocation1], 176
    %33 = vst [vmem:[%s32] sm:%s3] %v31
    %s34 = smul.addr 2, 21
    %s35 = scalar_lea.vmem %s0, %s34
    %v36 = vld [vmem:[%s35] sm:%s3]
    %s37 = scalar_lea.vmem [#allocation1], 168
    %38 = vst [vmem:[%s37] sm:%s3] %v36
    %s39 = smul.addr 2, 20
    %s40 = scalar_lea.vmem %s0, %s39
    %v41 = vld [vmem:[%s40] sm:%s3]
    %s42 = scalar_lea.vmem [#allocation1], 160
    %43 = vst [vmem:[%s42] sm:%s3] %v41
    %s44 = smul.addr 2, 19
    %s45 = scalar_lea.vmem %s0, %s44
    %v46 = vld [vmem:[%s45] sm:%s3]
    %s47 = scalar_lea.vmem [#allocation1], 152
    %48 = vst [vmem:[%s47] sm:%s3] %v46
    %s49 = smul.addr 2, 18
    %s50 = scalar_lea.vmem %s0, %s49
    %v51 = vld [vmem:[%s50] sm:%s3]
    %s52 = scalar_lea.vmem [#allocation1], 144
    %53 = vst [vmem:[%s52] sm:%s3] %v51
    %s54 = smul.addr 2, 17
    %s55 = scalar_lea.vmem %s0, %s54
    %v56 = vld [vmem:[%s55] sm:%s3]
    %s57 = scalar_lea.vmem [#allocation1], 136
    %58 = vst [vmem:[%s57] sm:%s3] %v56
    %s59 = smul.addr 2, 16
    %s60 = scalar_lea.vmem %s0, %s59
    %v61 = vld [vmem:[%s60] sm:%s3]
    %s62 = scalar_lea.vmem [#allocation1], 128
    %63 = vst [vmem:[%s62] sm:%s3] %v61
    %s64 = smul.addr 2, 15
    %s65 = scalar_lea.vmem %s0, %s64
    %v66 = vld [vmem:[%s65] sm:%s3]
    %s67 = scalar_lea.vmem [#allocation1], 120
    %68 = vst [vmem:[%s67] sm:%s3] %v66
    %s69 = smul.addr 2, 14
    %s70 = scalar_lea.vmem %s0, %s69
    %v71 = vld [vmem:[%s70] sm:%s3]
    %s72 = scalar_lea.vmem [#allocation1], 112
    %73 = vst [vmem:[%s72] sm:%s3] %v71
    %s74 = smul.addr 2, 13
    %s75 = scalar_lea.vmem %s0, %s74
    %v76 = vld [vmem:[%s75] sm:%s3]
    %s77 = scalar_lea.vmem [#allocation1], 104
    %78 = vst [vmem:[%s77] sm:%s3] %v76
    %s79 = smul.addr 2, 12
    %s80 = scalar_lea.vmem %s0, %s79
    %v81 = vld [vmem:[%s80] sm:%s3]
    %s82 = scalar_lea.vmem [#allocation1], 96
    %83 = vst [vmem:[%s82] sm:%s3] %v81
    %s84 = smul.addr 2, 11
    %s85 = scalar_lea.vmem %s0, %s84
    %v86 = vld [vmem:[%s85] sm:%s3]
    %s87 = scalar_lea.vmem [#allocation1], 88
    %88 = vst [vmem:[%s87] sm:%s3] %v86
    %s89 = smul.addr 2, 10
    %s90 = scalar_lea.vmem %s0, %s89
    %v91 = vld [vmem:[%s90] sm:%s3]
    %s92 = scalar_lea.vmem [#allocation1], 80
    %93 = vst [vmem:[%s92] sm:%s3] %v91
    %s94 = smul.addr 2, 9
    %s95 = scalar_lea.vmem %s0, %s94
    %v96 = vld [vmem:[%s95] sm:%s3]
    %s97 = scalar_lea.vmem [#allocation1], 72
    %98 = vst [vmem:[%s97] sm:%s3] %v96
    %s99 = smul.addr 2, 8
    %s100 = scalar_lea.vmem %s0, %s99
    %v101 = vld [vmem:[%s100] sm:%s3]
    %s102 = scalar_lea.vmem [#allocation1], 64
    %103 = vst [vmem:[%s102] sm:%s3] %v101
    %s104 = smul.addr 2, 7
    %s105 = scalar_lea.vmem %s0, %s104
    %v106 = vld [vmem:[%s105] sm:%s3]
    %s107 = scalar_lea.vmem [#allocation1], 56
    %108 = vst [vmem:[%s107] sm:%s3] %v106
    %s109 = smul.addr 2, 6
    %s110 = scalar_lea.vmem %s0, %s109
    %v111 = vld [vmem:[%s110] sm:%s3]
    %s112 = scalar_lea.vmem [#allocation1], 48
    %113 = vst [vmem:[%s112] sm:%s3] %v111
    %s114 = smul.addr 2, 5
    %s115 = scalar_lea.vmem %s0, %s114
    %v116 = vld [vmem:[%s115] sm:%s3]
    %s117 = scalar_lea.vmem [#allocation1], 40
    %118 = vst [vmem:[%s117] sm:%s3] %v116
    %s119 = smul.addr 2, 4
    %s120 = scalar_lea.vmem %s0, %s119
    %v121 = vld [vmem:[%s120] sm:%s3]
    %s122 = scalar_lea.vmem [#allocation1], 32
    %123 = vst [vmem:[%s122] sm:%s3] %v121
    %s124 = smul.addr 2, 3
    %s125 = scalar_lea.vmem %s0, %s124
    %v126 = vld [vmem:[%s125] sm:%s3]
    %s127 = scalar_lea.vmem [#allocation1], 24
    %128 = vst [vmem:[%s127] sm:%s3] %v126
    %s129 = smul.addr 2, 2
    %s130 = scalar_lea.vmem %s0, %s129
    %v131 = vld [vmem:[%s130] sm:%s3]
    %s132 = scalar_lea.vmem [#allocation1], 16
    %133 = vst [vmem:[%s132] sm:%s3] %v131
    %s134 = scalar_lea.vmem %s0, 2
    %v135 = vld [vmem:[%s134] sm:%s3]
    %s136 = scalar_lea.vmem [#allocation1], 8
    %137 = vst [vmem:[%s136] sm:%s3] %v135
    %v138 = vld [vmem:[%s0] sm:%s3]
    %139 = vst [vmem:[#allocation1] sm:%s3] %v138
    %v140 = vld [vmem:[#allocation1] sm:$0x3]
    %vm141 = vcmask 15360
    %142 = vst.msk [vmem:[#allocation0] ss:$56 sm:$0x3] %vm141, %v140
    %s143 = scalar_lea.vmem [#allocation1], 8
    %v144 = vld [vmem:[%s143] sm:$0x3]
    %vm145 = vcmask 15360
    %s146 = scalar_lea.vmem [#allocation0], 112
    %147 = vst.msk [vmem:[%s146] ss:$56 sm:$0x3] %vm145, %v144
    %s148 = scalar_lea.vmem [#allocation1], 16
    %v149 = vld [vmem:[%s148] sm:$0x3]
    %vm150 = vcmask 15360
    %s151 = scalar_lea.vmem [#allocation0], 224
    %152 = vst.msk [vmem:[%s151] ss:$56 sm:$0x3] %vm150, %v149
    %s153 = scalar_lea.vmem [#allocation1], 24
    %v154 = vld [vmem:[%s153] sm:$0x3]
    %vm155 = vcmask 15360
    %s156 = scalar_lea.vmem [#allocation0], 336
    %157 = vst.msk [vmem:[%s156] ss:$56 sm:$0x3] %vm155, %v154
    %s158 = scalar_lea.vmem [#allocation1], 32
    %v159 = vld [vmem:[%s158] sm:$0x3]
    %vm160 = vcmask 15360
    %s161 = scalar_lea.vmem [#allocation0], 448
    %162 = vst.msk [vmem:[%s161] ss:$56 sm:$0x3] %vm160, %v159
    %s163 = scalar_lea.vmem [#allocation1], 40
    %v164 = vld [vmem:[%s163] sm:$0x3]
    %vm165 = vcmask 15360
    %s166 = scalar_lea.vmem [#allocation0], 560
    %167 = vst.msk [vmem:[%s166] ss:$56 sm:$0x3] %vm165, %v164
    %s168 = scalar_lea.vmem [#allocation1], 48
    %v169 = vld [vmem:[%s168] sm:$0x3]
    %vm170 = vcmask 15360
    %s171 = scalar_lea.vmem [#allocation0], 672
    %172 = vst.msk [vmem:[%s171] ss:$56 sm:$0x3] %vm170, %v169
    %s173 = scalar_lea.vmem [#allocation1], 56
    %v174 = vld [vmem:[%s173] sm:$0x3]
    %vm175 = vcmask 15360
    %s176 = scalar_lea.vmem [#allocation0], 784
    %177 = vst.msk [vmem:[%s176] ss:$56 sm:$0x3] %vm175, %v174
    %s178 = scalar_lea.vmem [#allocation1], 64
    %v179 = vld [vmem:[%s178] sm:$0x3]
    %vm180 = vcmask 15360
    %s181 = scalar_lea.vmem [#allocation0], 896
    %182 = vst.msk [vmem:[%s181] ss:$56 sm:$0x3] %vm180, %v179
    %s183 = scalar_lea.vmem [#allocation1], 72
    %v184 = vld [vmem:[%s183] sm:$0x3]
    %vm185 = vcmask 15360
    %s186 = scalar_lea.vmem [#allocation0], 1008
    %187 = vst.msk [vmem:[%s186] ss:$56 sm:$0x3] %vm185, %v184
    %s188 = scalar_lea.vmem [#allocation1], 80
    %v189 = vld [vmem:[%s188] sm:$0x3]
    %vm190 = vcmask 15360
    %s191 = scalar_lea.vmem [#allocation0], 1120
    %192 = vst.msk [vmem:[%s191] ss:$56 sm:$0x3] %vm190, %v189
    %s193 = scalar_lea.vmem [#allocation1], 88
    %v194 = vld [vmem:[%s193] sm:$0x3]
    %vm195 = vcmask 15360
    %s196 = scalar_lea.vmem [#allocation0], 1232
    %197 = vst.msk [vmem:[%s196] ss:$56 sm:$0x3] %vm195, %v194
    %s198 = scalar_lea.vmem [#allocation1], 96
    %v199 = vld [vmem:[%s198] sm:$0x3]
    %vm200 = vcmask 15360
    %s201 = scalar_lea.vmem [#allocation0], 1344
    %202 = vst.msk [vmem:[%s201] ss:$56 sm:$0x3] %vm200, %v199
    %s203 = scalar_lea.vmem [#allocation1], 104
    %v204 = vld [vmem:[%s203] sm:$0x3]
    %vm205 = vcmask 15360
    %s206 = scalar_lea.vmem [#allocation0], 1456
    %207 = vst.msk [vmem:[%s206] ss:$56 sm:$0x3] %vm205, %v204
    %s208 = scalar_lea.vmem [#allocation1], 112
    %v209 = vld [vmem:[%s208] sm:$0x3]
    %vm210 = vcmask 15360
    %s211 = scalar_lea.vmem [#allocation0], 1568
    %212 = vst.msk [vmem:[%s211] ss:$56 sm:$0x3] %vm210, %v209
    %s213 = scalar_lea.vmem [#allocation1], 120
    %v214 = vld [vmem:[%s213] sm:$0x3]
    %vm215 = vcmask 15360
    %s216 = scalar_lea.vmem [#allocation0], 1680
    %217 = vst.msk [vmem:[%s216] ss:$56 sm:$0x3] %vm215, %v214
    %s218 = scalar_lea.vmem [#allocation1], 128
    %v219 = vld [vmem:[%s218] sm:$0x3]
    %vm220 = vcmask 15360
    %s221 = scalar_lea.vmem [#allocation0], 1792
    %222 = vst.msk [vmem:[%s221] ss:$56 sm:$0x3] %vm220, %v219
    %s223 = scalar_lea.vmem [#allocation1], 136
    %v224 = vld [vmem:[%s223] sm:$0x3]
    %vm225 = vcmask 15360
    %s226 = scalar_lea.vmem [#allocation0], 1904
    %227 = vst.msk [vmem:[%s226] ss:$56 sm:$0x3] %vm225, %v224
    %s228 = scalar_lea.vmem [#allocation1], 144
    %v229 = vld [vmem:[%s228] sm:$0x3]
    %vm230 = vcmask 15360
    %s231 = scalar_lea.vmem [#allocation0], 2016
    %232 = vst.msk [vmem:[%s231] ss:$56 sm:$0x3] %vm230, %v229
    %s233 = scalar_lea.vmem [#allocation1], 152
    %v234 = vld [vmem:[%s233] sm:$0x3]
    %vm235 = vcmask 15360
    %s236 = scalar_lea.vmem [#allocation0], 2128
    %237 = vst.msk [vmem:[%s236] ss:$56 sm:$0x3] %vm235, %v234
    %s238 = scalar_lea.vmem [#allocation1], 160
    %v239 = vld [vmem:[%s238] sm:$0x3]
    %vm240 = vcmask 15360
    %s241 = scalar_lea.vmem [#allocation0], 2240
    %242 = vst.msk [vmem:[%s241] ss:$56 sm:$0x3] %vm240, %v239
    %s243 = scalar_lea.vmem [#allocation1], 168
    %v244 = vld [vmem:[%s243] sm:$0x3]
    %vm245 = vcmask 15360
    %s246 = scalar_lea.vmem [#allocation0], 2352
    %247 = vst.msk [vmem:[%s246] ss:$56 sm:$0x3] %vm245, %v244
    %s248 = scalar_lea.vmem [#allocation1], 176
    %v249 = vld [vmem:[%s248] sm:$0x3]
    %vm250 = vcmask 15360
    %s251 = scalar_lea.vmem [#allocation0], 2464
    %252 = vst.msk [vmem:[%s251] ss:$56 sm:$0x3] %vm250, %v249
    %s253 = scalar_lea.vmem [#allocation1], 184
    %v254 = vld [vmem:[%s253] sm:$0x3]
    %vm255 = vcmask 15360
    %s256 = scalar_lea.vmem [#allocation0], 2576
    %257 = vst.msk [vmem:[%s256] ss:$56 sm:$0x3] %vm255, %v254
    %s258 = scalar_lea.vmem [#allocation1], 192
    %v259 = vld [vmem:[%s258] sm:$0x3]
    %vm260 = vcmask 15360
    %s261 = scalar_lea.vmem [#allocation0], 2688
    %262 = vst.msk [vmem:[%s261] ss:$56 sm:$0x3] %vm260, %v259
    %s263 = scalar_lea.vmem [#allocation1], 200
    %v264 = vld [vmem:[%s263] sm:$0x3]
    %vm265 = vcmask 15360
    %s266 = scalar_lea.vmem [#allocation0], 2800
    %267 = vst.msk [vmem:[%s266] ss:$56 sm:$0x3] %vm265, %v264
    %s268 = scalar_lea.vmem [#allocation1], 208
    %v269 = vld [vmem:[%s268] sm:$0x3]
    %vm270 = vcmask 15360
    %s271 = scalar_lea.vmem [#allocation0], 2912
    %272 = vst.msk [vmem:[%s271] ss:$56 sm:$0x3] %vm270, %v269
    %s273 = scalar_lea.vmem [#allocation1], 216
    %v274 = vld [vmem:[%s273] sm:$0x3]
    %vm275 = vcmask 15360
    %s276 = scalar_lea.vmem [#allocation0], 3024
    %277 = vst.msk [vmem:[%s276] ss:$56 sm:$0x3] %vm275, %v274
    %v278 = vld.sshfl [vmem:[#allocation1] sm:$0xff pattern:$0x11111890]
    %s279 = scalar_lea.vmem [#allocation1], 16
    %v280 = vld.sshfl [vmem:[%s279] sm:$0xff pattern:$0x18900000]
    %vm281 = vcmask 1047556
    %v282 = vsel %vm281, %v280, %v278
    %283 = vrot.lane.b32.xlu0 %v282, 126
    %v284 = vpop.permute.xlu0 %283
    %vm285 = vcmask 15360
    %s286 = scalar_lea.vmem [#allocation0], 1
    %287 = vst.msk [vmem:[%s286] ss:$168 sm:$0x3] %vm285, %v284
    %s288 = scalar_lea.vmem [#allocation0], 225
    %289 = vst.msk [vmem:[%s288] ss:$-56 sm:$0xc] %vm285, %v284
    %s290 = scalar_lea.vmem [#allocation0], 4294966849
    %291 = vst.msk [vmem:[%s290] ss:$168 sm:$0x30] %vm285, %v284
    %s292 = scalar_lea.vmem [#allocation0], 673
    %293 = vst.msk [vmem:[%s292] ss:$-56 sm:$0xc0] %vm285, %v284
    %s294 = scalar_lea.vmem [#allocation1], 32
    %v295 = vld.sshfl [vmem:[%s294] sm:$0xff pattern:$0x11111890]
    %s296 = scalar_lea.vmem [#allocation1], 48
    %v297 = vld.sshfl [vmem:[%s296] sm:$0xff pattern:$0x18900000]
    %vm298 = vcmask 1047556
    %v299 = vsel %vm298, %v297, %v295
    %300 = vrot.lane.b32.xlu0 %v299, 126
    %v301 = vpop.permute.xlu0 %300
    %vm302 = vcmask 15360
    %s303 = scalar_lea.vmem [#allocation0], 449
    %304 = vst.msk [vmem:[%s303] ss:$168 sm:$0x3] %vm302, %v301
    %s305 = scalar_lea.vmem [#allocation0], 673
    %306 = vst.msk [vmem:[%s305] ss:$-56 sm:$0xc] %vm302, %v301
    %s307 = scalar_lea.vmem [#allocation0], 1
    %308 = vst.msk [vmem:[%s307] ss:$168 sm:$0x30] %vm302, %v301
    %s309 = scalar_lea.vmem [#allocation0], 1121
    %310 = vst.msk [vmem:[%s309] ss:$-56 sm:$0xc0] %vm302, %v301
    %s311 = scalar_lea.vmem [#allocation1], 64
    %v312 = vld.sshfl [vmem:[%s311] sm:$0xff pattern:$0x11111890]
    %s313 = scalar_lea.vmem [#allocation1], 80
    %v314 = vld.sshfl [vmem:[%s313] sm:$0xff pattern:$0x18900000]
    %vm315 = vcmask 1047556
    %v316 = vsel %vm315, %v314, %v312
    %317 = vrot.lane.b32.xlu0 %v316, 126
    %v318 = vpop.permute.xlu0 %317
    %vm319 = vcmask 15360
    %s320 = scalar_lea.vmem [#allocation0], 897
    %321 = vst.msk [vmem:[%s320] ss:$168 sm:$0x3] %vm319, %v318
    %s322 = scalar_lea.vmem [#allocation0], 1121
    %323 = vst.msk [vmem:[%s322] ss:$-56 sm:$0xc] %vm319, %v318
    %s324 = scalar_lea.vmem [#allocation0], 449
    %325 = vst.msk [vmem:[%s324] ss:$168 sm:$0x30] %vm319, %v318
    %s326 = scalar_lea.vmem [#allocation0], 1569
    %327 = vst.msk [vmem:[%s326] ss:$-56 sm:$0xc0] %vm319, %v318
    %s328 = scalar_lea.vmem [#allocation1], 96
    %v329 = vld.sshfl [vmem:[%s328] sm:$0xff pattern:$0x11111890]
    %s330 = scalar_lea.vmem [#allocation1], 112
    %v331 = vld.sshfl [vmem:[%s330] sm:$0xff pattern:$0x18900000]
    %vm332 = vcmask 1047556
    %v333 = vsel %vm332, %v331, %v329
    %334 = vrot.lane.b32.xlu0 %v333, 126
    %v335 = vpop.permute.xlu0 %334
    %vm336 = vcmask 15360
    %s337 = scalar_lea.vmem [#allocation0], 1345
    %338 = vst.msk [vmem:[%s337] ss:$168 sm:$0x3] %vm336, %v335
    %s339 = scalar_lea.vmem [#allocation0], 1569
    %340 = vst.msk [vmem:[%s339] ss:$-56 sm:$0xc] %vm336, %v335
    %s341 = scalar_lea.vmem [#allocation0], 897
    %342 = vst.msk [vmem:[%s341] ss:$168 sm:$0x30] %vm336, %v335
    %s343 = scalar_lea.vmem [#allocation0], 2017
    %344 = vst.msk [vmem:[%s343] ss:$-56 sm:$0xc0] %vm336, %v335
    %s345 = scalar_lea.vmem [#allocation1], 128
    %v346 = vld.sshfl [vmem:[%s345] sm:$0xff pattern:$0x11111890]
    %s347 = scalar_lea.vmem [#allocation1], 144
    %v348 = vld.sshfl [vmem:[%s347] sm:$0xff pattern:$0x18900000]
    %vm349 = vcmask 1047556
    %v350 = vsel %vm349, %v348, %v346
    %351 = vrot.lane.b32.xlu0 %v350, 126
    %v352 = vpop.permute.xlu0 %351
    %vm353 = vcmask 15360
    %s354 = scalar_lea.vmem [#allocation0], 1793
    %355 = vst.msk [vmem:[%s354] ss:$168 sm:$0x3] %vm353, %v352
    %s356 = scalar_lea.vmem [#allocation0], 2017
    %357 = vst.msk [vmem:[%s356] ss:$-56 sm:$0xc] %vm353, %v352
    %s358 = scalar_lea.vmem [#allocation0], 1345
    %359 = vst.msk [vmem:[%s358] ss:$168 sm:$0x30] %vm353, %v352
    %s360 = scalar_lea.vmem [#allocation0], 2465
    %361 = vst.msk [vmem:[%s360] ss:$-56 sm:$0xc0] %vm353, %v352
    %s362 = scalar_lea.vmem [#allocation1], 160
    %v363 = vld.sshfl [vmem:[%s362] sm:$0xff pattern:$0x11111890]
    %s364 = scalar_lea.vmem [#allocation1], 176
    %v365 = vld.sshfl [vmem:[%s364] sm:$0xff pattern:$0x18900000]
    %vm366 = vcmask 1047556
    %v367 = vsel %vm366, %v365, %v363
    %368 = vrot.lane.b32.xlu0 %v367, 126
    %v369 = vpop.permute.xlu0 %368
    %vm370 = vcmask 15360
    %s371 = scalar_lea.vmem [#allocation0], 2241
    %372 = vst.msk [vmem:[%s371] ss:$168 sm:$0x3] %vm370, %v369
    %s373 = scalar_lea.vmem [#allocation0], 2465
    %374 = vst.msk [vmem:[%s373] ss:$-56 sm:$0xc] %vm370, %v369
    %s375 = scalar_lea.vmem [#allocation0], 1793
    %376 = vst.msk [vmem:[%s375] ss:$168 sm:$0x30] %vm370, %v369
    %s377 = scalar_lea.vmem [#allocation0], 2913
    %378 = vst.msk [vmem:[%s377] ss:$-56 sm:$0xc0] %vm370, %v369
    %s379 = scalar_lea.vmem [#allocation1], 192
    %v380 = vld.sshfl [vmem:[%s379] sm:$0xff pattern:$0x11111890]
    %s381 = scalar_lea.vmem [#allocation1], 208
    %v382 = vld.sshfl [vmem:[%s381] sm:$0xff pattern:$0x18900000]
    %vm383 = vcmask 1047556
    %v384 = vsel %vm383, %v382, %v380
    %385 = vrot.lane.b32.xlu0 %v384, 126
    %v386 = vpop.permute.xlu0 %385
    %vm387 = vcmask 15360
    %s388 = scalar_lea.vmem [#allocation0], 2689
    %389 = vst.msk [vmem:[%s388] ss:$168 sm:$0x3] %vm387, %v386
    %s390 = scalar_lea.vmem [#allocation0], 2913
    %391 = vst.msk [vmem:[%s390] ss:$-56 sm:$0xc] %vm387, %v386
    %s392 = scalar_lea.vmem [#allocation0], 2241
    %393 = vst.msk [vmem:[%s392] ss:$168 sm:$0x30] %vm387, %v386
    %s394 = scalar_lea.vmem [#allocation0], 3361
    %395 = vst.msk [vmem:[%s394] ss:$-56 sm:$0xc0] %vm387, %v386
    %v396 = vld.sshfl [vmem:[#allocation1] sm:$0xff pattern:$0x88888901]
    %s397 = scalar_lea.vmem [#allocation1], 16
    %v398 = vld.sshfl [vmem:[%s397] sm:$0xff pattern:$0x89011111]
    %vm399 = vcmask 1047556
    %v400 = vsel %vm399, %v398, %v396
    %401 = vrot.lane.b32.xlu0 %v400, 124
    %v402 = vpop.permute.xlu0 %401
    %vm403 = vcmask 15360
    %s404 = scalar_lea.vmem [#allocation0], 64
    %405 = vst.msk [vmem:[%s404] ss:$-56 sm:$0x3] %vm403, %v402
    %s406 = scalar_lea.vmem [#allocation0], 288
    %407 = vst.msk [vmem:[%s406] ss:$-56 sm:$0xc] %vm403, %v402
    %s408 = scalar_lea.vmem [#allocation0], 512
    %409 = vst.msk [vmem:[%s408] ss:$-56 sm:$0x30] %vm403, %v402
    %s410 = scalar_lea.vmem [#allocation0], 736
    %411 = vst.msk [vmem:[%s410] ss:$-56 sm:$0xc0] %vm403, %v402
    %s412 = scalar_lea.vmem [#allocation1], 32
    %v413 = vld.sshfl [vmem:[%s412] sm:$0xff pattern:$0x88888901]
    %s414 = scalar_lea.vmem [#allocation1], 48
    %v415 = vld.sshfl [vmem:[%s414] sm:$0xff pattern:$0x89011111]
    %vm416 = vcmask 1047556
    %v417 = vsel %vm416, %v415, %v413
    %418 = vrot.lane.b32.xlu0 %v417, 124
    %v419 = vpop.permute.xlu0 %418
    %vm420 = vcmask 15360
    %s421 = scalar_lea.vmem [#allocation0], 512
    %422 = vst.msk [vmem:[%s421] ss:$-56 sm:$0x3] %vm420, %v419
    %s423 = scalar_lea.vmem [#allocation0], 736
    %424 = vst.msk [vmem:[%s423] ss:$-56 sm:$0xc] %vm420, %v419
    %s425 = scalar_lea.vmem [#allocation0], 960
    %426 = vst.msk [vmem:[%s425] ss:$-56 sm:$0x30] %vm420, %v419
    %s427 = scalar_lea.vmem [#allocation0], 1184
    %428 = vst.msk [vmem:[%s427] ss:$-56 sm:$0xc0] %vm420, %v419
    %s429 = scalar_lea.vmem [#allocation1], 64
    %v430 = vld.sshfl [vmem:[%s429] sm:$0xff pattern:$0x88888901]
    %s431 = scalar_lea.vmem [#allocation1], 80
    %v432 = vld.sshfl [vmem:[%s431] sm:$0xff pattern:$0x89011111]
    %vm433 = vcmask 1047556
    %v434 = vsel %vm433, %v432, %v430
    %435 = vrot.lane.b32.xlu0 %v434, 124
    %v436 = vpop.permute.xlu0 %435
    %vm437 = vcmask 15360
    %s438 = scalar_lea.vmem [#allocation0], 960
    %439 = vst.msk [vmem:[%s438] ss:$-56 sm:$0x3] %vm437, %v436
    %s440 = scalar_lea.vmem [#allocation0], 1184
    %441 = vst.msk [vmem:[%s440] ss:$-56 sm:$0xc] %vm437, %v436
    %s442 = scalar_lea.vmem [#allocation0], 1408
    %443 = vst.msk [vmem:[%s442] ss:$-56 sm:$0x30] %vm437, %v436
    %s444 = scalar_lea.vmem [#allocation0], 1632
    %445 = vst.msk [vmem:[%s444] ss:$-56 sm:$0xc0] %vm437, %v436
    %s446 = scalar_lea.vmem [#allocation1], 96
    %v447 = vld.sshfl [vmem:[%s446] sm:$0xff pattern:$0x88888901]
    %s448 = scalar_lea.vmem [#allocation1], 112
    %v449 = vld.sshfl [vmem:[%s448] sm:$0xff pattern:$0x89011111]
    %vm450 = vcmask 1047556
    %v451 = vsel %vm450, %v449, %v447
    %452 = vrot.lane.b32.xlu0 %v451, 124
    %v453 = vpop.permute.xlu0 %452
    %vm454 = vcmask 15360
    %s455 = scalar_lea.vmem [#allocation0], 1408
    %456 = vst.msk [vmem:[%s455] ss:$-56 sm:$0x3] %vm454, %v453
    %s457 = scalar_lea.vmem [#allocation0], 1632
    %458 = vst.msk [vmem:[%s457] ss:$-56 sm:$0xc] %vm454, %v453
    %s459 = scalar_lea.vmem [#allocation0], 1856
    %460 = vst.msk [vmem:[%s459] ss:$-56 sm:$0x30] %vm454, %v453
    %s461 = scalar_lea.vmem [#allocation0], 2080
    %462 = vst.msk [vmem:[%s461] ss:$-56 sm:$0xc0] %vm454, %v453
    %s463 = scalar_lea.vmem [#allocation1], 128
    %v464 = vld.sshfl [vmem:[%s463] sm:$0xff pattern:$0x88888901]
    %s465 = scalar_lea.vmem [#allocation1], 144
    %v466 = vld.sshfl [vmem:[%s465] sm:$0xff pattern:$0x89011111]
    %vm467 = vcmask 1047556
    %v468 = vsel %vm467, %v466, %v464
    %469 = vrot.lane.b32.xlu0 %v468, 124
    %v470 = vpop.permute.xlu0 %469
    %vm471 = vcmask 15360
    %s472 = scalar_lea.vmem [#allocation0], 1856
    %473 = vst.msk [vmem:[%s472] ss:$-56 sm:$0x3] %vm471, %v470
    %s474 = scalar_lea.vmem [#allocation0], 2080
    %475 = vst.msk [vmem:[%s474] ss:$-56 sm:$0xc] %vm471, %v470
    %s476 = scalar_lea.vmem [#allocation0], 2304
    %477 = vst.msk [vmem:[%s476] ss:$-56 sm:$0x30] %vm471, %v470
    %s478 = scalar_lea.vmem [#allocation0], 2528
    %479 = vst.msk [vmem:[%s478] ss:$-56 sm:$0xc0] %vm471, %v470
    %s480 = scalar_lea.vmem [#allocation1], 160
    %v481 = vld.sshfl [vmem:[%s480] sm:$0xff pattern:$0x88888901]
    %s482 = scalar_lea.vmem [#allocation1], 176
    %v483 = vld.sshfl [vmem:[%s482] sm:$0xff pattern:$0x89011111]
    %vm484 = vcmask 1047556
    %v485 = vsel %vm484, %v483, %v481
    %486 = vrot.lane.b32.xlu0 %v485, 124
    %v487 = vpop.permute.xlu0 %486
    %vm488 = vcmask 15360
    %s489 = scalar_lea.vmem [#allocation0], 2304
    %490 = vst.msk [vmem:[%s489] ss:$-56 sm:$0x3] %vm488, %v487
    %s491 = scalar_lea.vmem [#allocation0], 2528
    %492 = vst.msk [vmem:[%s491] ss:$-56 sm:$0xc] %vm488, %v487
    %s493 = scalar_lea.vmem [#allocation0], 2752
    %494 = vst.msk [vmem:[%s493] ss:$-56 sm:$0x30] %vm488, %v487
    %s495 = scalar_lea.vmem [#allocation0], 2976
    %496 = vst.msk [vmem:[%s495] ss:$-56 sm:$0xc0] %vm488, %v487
    %s497 = scalar_lea.vmem [#allocation1], 192
    %v498 = vld.sshfl [vmem:[%s497] sm:$0xff pattern:$0x88888901]
    %s499 = scalar_lea.vmem [#allocation1], 208
    %v500 = vld.sshfl [vmem:[%s499] sm:$0xff pattern:$0x89011111]
    %vm501 = vcmask 1047556
    %v502 = vsel %vm501, %v500, %v498
    %503 = vrot.lane.b32.xlu0 %v502, 124
    %v504 = vpop.permute.xlu0 %503
    %vm505 = vcmask 15360
    %s506 = scalar_lea.vmem [#allocation0], 2752
    %507 = vst.msk [vmem:[%s506] ss:$-56 sm:$0x3] %vm505, %v504
    %s508 = scalar_lea.vmem [#allocation0], 2976
    %509 = vst.msk [vmem:[%s508] ss:$-56 sm:$0xc] %vm505, %v504
    %s510 = scalar_lea.vmem [#allocation0], 3200
    %511 = vst.msk [vmem:[%s510] ss:$-56 sm:$0x30] %vm505, %v504
    %s512 = scalar_lea.vmem [#allocation0], 3424
    %513 = vst.msk [vmem:[%s512] ss:$-56 sm:$0xc0] %vm505, %v504
    %v514 = vld.sshfl [vmem:[#allocation1] sm:$0xff pattern:$0x88888901]
    %s515 = scalar_lea.vmem [#allocation1], 16
    %v516 = vld.sshfl [vmem:[%s515] sm:$0xff pattern:$0x89011111]
    %vm517 = vcmask 1047556
    %v518 = vsel %vm517, %v516, %v514
    %519 = vrot.lane.b32.xlu0 %v518, 122
    %v520 = vpop.permute.xlu0 %519
    %vm521 = vcmask 15360
    %s522 = scalar_lea.vmem [#allocation0], 65
    %523 = vst.msk [vmem:[%s522] ss:$-56 sm:$0x3] %vm521, %v520
    %s524 = scalar_lea.vmem [#allocation0], 289
    %525 = vst.msk [vmem:[%s524] ss:$-56 sm:$0xc] %vm521, %v520
    %s526 = scalar_lea.vmem [#allocation0], 513
    %527 = vst.msk [vmem:[%s526] ss:$-56 sm:$0x30] %vm521, %v520
    %s528 = scalar_lea.vmem [#allocation0], 737
    %529 = vst.msk [vmem:[%s528] ss:$-56 sm:$0xc0] %vm521, %v520
    %s530 = scalar_lea.vmem [#allocation1], 32
    %v531 = vld.sshfl [vmem:[%s530] sm:$0xff pattern:$0x88888901]
    %s532 = scalar_lea.vmem [#allocation1], 48
    %v533 = vld.sshfl [vmem:[%s532] sm:$0xff pattern:$0x89011111]
    %vm534 = vcmask 1047556
    %v535 = vsel %vm534, %v533, %v531
    %536 = vrot.lane.b32.xlu0 %v535, 122
    %v537 = vpop.permute.xlu0 %536
    %vm538 = vcmask 15360
    %s539 = scalar_lea.vmem [#allocation0], 513
    %540 = vst.msk [vmem:[%s539] ss:$-56 sm:$0x3] %vm538, %v537
    %s541 = scalar_lea.vmem [#allocation0], 737
    %542 = vst.msk [vmem:[%s541] ss:$-56 sm:$0xc] %vm538, %v537
    %s543 = scalar_lea.vmem [#allocation0], 961
    %544 = vst.msk [vmem:[%s543] ss:$-56 sm:$0x30] %vm538, %v537
    %s545 = scalar_lea.vmem [#allocation0], 1185
    %546 = vst.msk [vmem:[%s545] ss:$-56 sm:$0xc0] %vm538, %v537
    %s547 = scalar_lea.vmem [#allocation1], 64
    %v548 = vld.sshfl [vmem:[%s547] sm:$0xff pattern:$0x88888901]
    %s549 = scalar_lea.vmem [#allocation1], 80
    %v550 = vld.sshfl [vmem:[%s549] sm:$0xff pattern:$0x89011111]
    %vm551 = vcmask 1047556
    %v552 = vsel %vm551, %v550, %v548
    %553 = vrot.lane.b32.xlu0 %v552, 122
    %v554 = vpop.permute.xlu0 %553
    %vm555 = vcmask 15360
    %s556 = scalar_lea.vmem [#allocation0], 961
    %557 = vst.msk [vmem:[%s556] ss:$-56 sm:$0x3] %vm555, %v554
    %s558 = scalar_lea.vmem [#allocation0], 1185
    %559 = vst.msk [vmem:[%s558] ss:$-56 sm:$0xc] %vm555, %v554
    %s560 = scalar_lea.vmem [#allocation0], 1409
    %561 = vst.msk [vmem:[%s560] ss:$-56 sm:$0x30] %vm555, %v554
    %s562 = scalar_lea.vmem [#allocation0], 1633
    %563 = vst.msk [vmem:[%s562] ss:$-56 sm:$0xc0] %vm555, %v554
    %s564 = scalar_lea.vmem [#allocation1], 96
    %v565 = vld.sshfl [vmem:[%s564] sm:$0xff pattern:$0x88888901]
    %s566 = scalar_lea.vmem [#allocation1], 112
    %v567 = vld.sshfl [vmem:[%s566] sm:$0xff pattern:$0x89011111]
    %vm568 = vcmask 1047556
    %v569 = vsel %vm568, %v567, %v565
    %570 = vrot.lane.b32.xlu0 %v569, 122
    %v571 = vpop.permute.xlu0 %570
    %vm572 = vcmask 15360
    %s573 = scalar_lea.vmem [#allocation0], 1409
    %574 = vst.msk [vmem:[%s573] ss:$-56 sm:$0x3] %vm572, %v571
    %s575 = scalar_lea.vmem [#allocation0], 1633
    %576 = vst.msk [vmem:[%s575] ss:$-56 sm:$0xc] %vm572, %v571
    %s577 = scalar_lea.vmem [#allocation0], 1857
    %578 = vst.msk [vmem:[%s577] ss:$-56 sm:$0x30] %vm572, %v571
    %s579 = scalar_lea.vmem [#allocation0], 2081
    %580 = vst.msk [vmem:[%s579] ss:$-56 sm:$0xc0] %vm572, %v571
    %s581 = scalar_lea.vmem [#allocation1], 128
    %v582 = vld.sshfl [vmem:[%s581] sm:$0xff pattern:$0x88888901]
    %s583 = scalar_lea.vmem [#allocation1], 144
    %v584 = vld.sshfl [vmem:[%s583] sm:$0xff pattern:$0x89011111]
    %vm585 = vcmask 1047556
    %v586 = vsel %vm585, %v584, %v582
    %587 = vrot.lane.b32.xlu0 %v586, 122
    %v588 = vpop.permute.xlu0 %587
    %vm589 = vcmask 15360
    %s590 = scalar_lea.vmem [#allocation0], 1857
    %591 = vst.msk [vmem:[%s590] ss:$-56 sm:$0x3] %vm589, %v588
    %s592 = scalar_lea.vmem [#allocation0], 2081
    %593 = vst.msk [vmem:[%s592] ss:$-56 sm:$0xc] %vm589, %v588
    %s594 = scalar_lea.vmem [#allocation0], 2305
    %595 = vst.msk [vmem:[%s594] ss:$-56 sm:$0x30] %vm589, %v588
    %s596 = scalar_lea.vmem [#allocation0], 2529
    %597 = vst.msk [vmem:[%s596] ss:$-56 sm:$0xc0] %vm589, %v588
    %s598 = scalar_lea.vmem [#allocation1], 160
    %v599 = vld.sshfl [vmem:[%s598] sm:$0xff pattern:$0x88888901]
    %s600 = scalar_lea.vmem [#allocation1], 176
    %v601 = vld.sshfl [vmem:[%s600] sm:$0xff pattern:$0x89011111]
    %vm602 = vcmask 1047556
    %v603 = vsel %vm602, %v601, %v599
    %604 = vrot.lane.b32.xlu0 %v603, 122
    %v605 = vpop.permute.xlu0 %604
    %vm606 = vcmask 15360
    %s607 = scalar_lea.vmem [#allocation0], 2305
    %608 = vst.msk [vmem:[%s607] ss:$-56 sm:$0x3] %vm606, %v605
    %s609 = scalar_lea.vmem [#allocation0], 2529
    %610 = vst.msk [vmem:[%s609] ss:$-56 sm:$0xc] %vm606, %v605
    %s611 = scalar_lea.vmem [#allocation0], 2753
    %612 = vst.msk [vmem:[%s611] ss:$-56 sm:$0x30] %vm606, %v605
    %s613 = scalar_lea.vmem [#allocation0], 2977
    %614 = vst.msk [vmem:[%s613] ss:$-56 sm:$0xc0] %vm606, %v605
    %s615 = scalar_lea.vmem [#allocation1], 192
    %v616 = vld.sshfl [vmem:[%s615] sm:$0xff pattern:$0x88888901]
    %s617 = scalar_lea.vmem [#allocation1], 208
    %v618 = vld.sshfl [vmem:[%s617] sm:$0xff pattern:$0x89011111]
    %vm619 = vcmask 1047556
    %v620 = vsel %vm619, %v618, %v616
    %621 = vrot.lane.b32.xlu0 %v620, 122
    %v622 = vpop.permute.xlu0 %621
    %vm623 = vcmask 15360
    %s624 = scalar_lea.vmem [#allocation0], 2753
    %625 = vst.msk [vmem:[%s624] ss:$-56 sm:$0x3] %vm623, %v622
    %s626 = scalar_lea.vmem [#allocation0], 2977
    %627 = vst.msk [vmem:[%s626] ss:$-56 sm:$0xc] %vm623, %v622
    %s628 = scalar_lea.vmem [#allocation0], 3201
    %629 = vst.msk [vmem:[%s628] ss:$-56 sm:$0x30] %vm623, %v622
    %s630 = scalar_lea.vmem [#allocation0], 3425
    %631 = vst.msk [vmem:[%s630] ss:$-56 sm:$0xc0] %vm623, %v622
    %v632 = vld.sshfl [vmem:[#allocation1] sm:$0xff pattern:$0x99999018]
    %s633 = scalar_lea.vmem [#allocation1], 16
    %v634 = vld.sshfl [vmem:[%s633] sm:$0xff pattern:$0x90188888]
    %vm635 = vcmask 1047556
    %v636 = vsel %vm635, %v634, %v632
    %637 = vrot.lane.b32.xlu0 %v636, 120
    %v638 = vpop.permute.xlu0 %637
    %vm639 = vcmask 15360
    %s640 = scalar_lea.vmem [#allocation0], 128
    %641 = vst.msk [vmem:[%s640] ss:$-56 sm:$0x7] %vm639, %v638
    %s642 = scalar_lea.vmem [#allocation0], 4294966976
    %643 = vst.msk [vmem:[%s642] ss:$168 sm:$0x18] %vm639, %v638
    %s644 = scalar_lea.vmem [#allocation0], 576
    %645 = vst.msk [vmem:[%s644] ss:$-56 sm:$0x60] %vm639, %v638
    %s646 = scalar_lea.vmem [#allocation0], 401
    %647 = vst.msk [vmem:[%s646] sm:$0x80] %vm639, %v638
    %s648 = scalar_lea.vmem [#allocation1], 32
    %v649 = vld.sshfl [vmem:[%s648] sm:$0xff pattern:$0x99999018]
    %s650 = scalar_lea.vmem [#allocation1], 48
    %v651 = vld.sshfl [vmem:[%s650] sm:$0xff pattern:$0x90188888]
    %vm652 = vcmask 1047556
    %v653 = vsel %vm652, %v651, %v649
    %654 = vrot.lane.b32.xlu0 %v653, 120
    %v655 = vpop.permute.xlu0 %654
    %vm656 = vcmask 15360
    %s657 = scalar_lea.vmem [#allocation0], 576
    %658 = vst.msk [vmem:[%s657] ss:$-56 sm:$0x7] %vm656, %v655
    %s659 = scalar_lea.vmem [#allocation0], 128
    %660 = vst.msk [vmem:[%s659] ss:$168 sm:$0x18] %vm656, %v655
    %s661 = scalar_lea.vmem [#allocation0], 1024
    %662 = vst.msk [vmem:[%s661] ss:$-56 sm:$0x60] %vm656, %v655
    %s663 = scalar_lea.vmem [#allocation0], 849
    %664 = vst.msk [vmem:[%s663] sm:$0x80] %vm656, %v655
    %s665 = scalar_lea.vmem [#allocation1], 64
    %v666 = vld.sshfl [vmem:[%s665] sm:$0xff pattern:$0x99999018]
    %s667 = scalar_lea.vmem [#allocation1], 80
    %v668 = vld.sshfl [vmem:[%s667] sm:$0xff pattern:$0x90188888]
    %vm669 = vcmask 1047556
    %v670 = vsel %vm669, %v668, %v666
    %671 = vrot.lane.b32.xlu0 %v670, 120
    %v672 = vpop.permute.xlu0 %671
    %vm673 = vcmask 15360
    %s674 = scalar_lea.vmem [#allocation0], 1024
    %675 = vst.msk [vmem:[%s674] ss:$-56 sm:$0x7] %vm673, %v672
    %s676 = scalar_lea.vmem [#allocation0], 576
    %677 = vst.msk [vmem:[%s676] ss:$168 sm:$0x18] %vm673, %v672
    %s678 = scalar_lea.vmem [#allocation0], 1472
    %679 = vst.msk [vmem:[%s678] ss:$-56 sm:$0x60] %vm673, %v672
    %s680 = scalar_lea.vmem [#allocation0], 1297
    %681 = vst.msk [vmem:[%s680] sm:$0x80] %vm673, %v672
    %s682 = scalar_lea.vmem [#allocation1], 96
    %v683 = vld.sshfl [vmem:[%s682] sm:$0xff pattern:$0x99999018]
    %s684 = scalar_lea.vmem [#allocation1], 112
    %v685 = vld.sshfl [vmem:[%s684] sm:$0xff pattern:$0x90188888]
    %vm686 = vcmask 1047556
    %v687 = vsel %vm686, %v685, %v683
    %688 = vrot.lane.b32.xlu0 %v687, 120
    %v689 = vpop.permute.xlu0 %688
    %vm690 = vcmask 15360
    %s691 = scalar_lea.vmem [#allocation0], 1472
    %692 = vst.msk [vmem:[%s691] ss:$-56 sm:$0x7] %vm690, %v689
    %s693 = scalar_lea.vmem [#allocation0], 1024
    %694 = vst.msk [vmem:[%s693] ss:$168 sm:$0x18] %vm690, %v689
    %s695 = scalar_lea.vmem [#allocation0], 1920
    %696 = vst.msk [vmem:[%s695] ss:$-56 sm:$0x60] %vm690, %v689
    %s697 = scalar_lea.vmem [#allocation0], 1745
    %698 = vst.msk [vmem:[%s697] sm:$0x80] %vm690, %v689
    %s699 = scalar_lea.vmem [#allocation1], 128
    %v700 = vld.sshfl [vmem:[%s699] sm:$0xff pattern:$0x99999018]
    %s701 = scalar_lea.vmem [#allocation1], 144
    %v702 = vld.sshfl [vmem:[%s701] sm:$0xff pattern:$0x90188888]
    %vm703 = vcmask 1047556
    %v704 = vsel %vm703, %v702, %v700
    %705 = vrot.lane.b32.xlu0 %v704, 120
    %v706 = vpop.permute.xlu0 %705
    %vm707 = vcmask 15360
    %s708 = scalar_lea.vmem [#allocation0], 1920
    %709 = vst.msk [vmem:[%s708] ss:$-56 sm:$0x7] %vm707, %v706
    %s710 = scalar_lea.vmem [#allocation0], 1472
    %711 = vst.msk [vmem:[%s710] ss:$168 sm:$0x18] %vm707, %v706
    %s712 = scalar_lea.vmem [#allocation0], 2368
    %713 = vst.msk [vmem:[%s712] ss:$-56 sm:$0x60] %vm707, %v706
    %s714 = scalar_lea.vmem [#allocation0], 2193
    %715 = vst.msk [vmem:[%s714] sm:$0x80] %vm707, %v706
    %s716 = scalar_lea.vmem [#allocation1], 160
    %v717 = vld.sshfl [vmem:[%s716] sm:$0xff pattern:$0x99999018]
    %s718 = scalar_lea.vmem [#allocation1], 176
    %v719 = vld.sshfl [vmem:[%s718] sm:$0xff pattern:$0x90188888]
    %vm720 = vcmask 1047556
    %v721 = vsel %vm720, %v719, %v717
    %722 = vrot.lane.b32.xlu0 %v721, 120
    %v723 = vpop.permute.xlu0 %722
    %vm724 = vcmask 15360
    %s725 = scalar_lea.vmem [#allocation0], 2368
    %726 = vst.msk [vmem:[%s725] ss:$-56 sm:$0x7] %vm724, %v723
    %s727 = scalar_lea.vmem [#allocation0], 1920
    %728 = vst.msk [vmem:[%s727] ss:$168 sm:$0x18] %vm724, %v723
    %s729 = scalar_lea.vmem [#allocation0], 2816
    %730 = vst.msk [vmem:[%s729] ss:$-56 sm:$0x60] %vm724, %v723
    %s731 = scalar_lea.vmem [#allocation0], 2641
    %732 = vst.msk [vmem:[%s731] sm:$0x80] %vm724, %v723
    %s733 = scalar_lea.vmem [#allocation1], 192
    %v734 = vld.sshfl [vmem:[%s733] sm:$0xff pattern:$0x99999018]
    %s735 = scalar_lea.vmem [#allocation1], 208
    %v736 = vld.sshfl [vmem:[%s735] sm:$0xff pattern:$0x90188888]
    %vm737 = vcmask 1047556
    %v738 = vsel %vm737, %v736, %v734
    %739 = vrot.lane.b32.xlu0 %v738, 120
    %v740 = vpop.permute.xlu0 %739
    %vm741 = vcmask 15360
    %s742 = scalar_lea.vmem [#allocation0], 2816
    %743 = vst.msk [vmem:[%s742] ss:$-56 sm:$0x7] %vm741, %v740
    %s744 = scalar_lea.vmem [#allocation0], 2368
    %745 = vst.msk [vmem:[%s744] ss:$168 sm:$0x18] %vm741, %v740
    %s746 = scalar_lea.vmem [#allocation0], 3264
    %747 = vst.msk [vmem:[%s746] ss:$-56 sm:$0x60] %vm741, %v740
    %s748 = scalar_lea.vmem [#allocation0], 3089
    %749 = vst.msk [vmem:[%s748] sm:$0x80] %vm741, %v740
    %v750 = vld.sshfl [vmem:[#allocation1] sm:$0xff pattern:$0x99999018]
    %s751 = scalar_lea.vmem [#allocation1], 16
    %v752 = vld.sshfl [vmem:[%s751] sm:$0xff pattern:$0x90188888]
    %vm753 = vcmask 1047556
    %v754 = vsel %vm753, %v752, %v750
    %755 = vrot.lane.b32.xlu0 %v754, 118
    %v756 = vpop.permute.xlu0 %755
    %vm757 = vcmask 15360
    %s758 = scalar_lea.vmem [#allocation0], 129
    %759 = vst.msk [vmem:[%s758] ss:$-56 sm:$0x7] %vm757, %v756
    %s760 = scalar_lea.vmem [#allocation0], 4294966977
    %761 = vst.msk [vmem:[%s760] ss:$168 sm:$0x18] %vm757, %v756
    %s762 = scalar_lea.vmem [#allocation0], 577
    %763 = vst.msk [vmem:[%s762] ss:$-56 sm:$0x60] %vm757, %v756
    %s764 = scalar_lea.vmem [#allocation0], 402
    %765 = vst.msk [vmem:[%s764] sm:$0x80] %vm757, %v756
    %s766 = scalar_lea.vmem [#allocation1], 32
    %v767 = vld.sshfl [vmem:[%s766] sm:$0xff pattern:$0x99999018]
    %s768 = scalar_lea.vmem [#allocation1], 48
    %v769 = vld.sshfl [vmem:[%s768] sm:$0xff pattern:$0x90188888]
    %vm770 = vcmask 1047556
    %v771 = vsel %vm770, %v769, %v767
    %772 = vrot.lane.b32.xlu0 %v771, 118
    %v773 = vpop.permute.xlu0 %772
    %vm774 = vcmask 15360
    %s775 = scalar_lea.vmem [#allocation0], 577
    %776 = vst.msk [vmem:[%s775] ss:$-56 sm:$0x7] %vm774, %v773
    %s777 = scalar_lea.vmem [#allocation0], 129
    %778 = vst.msk [vmem:[%s777] ss:$168 sm:$0x18] %vm774, %v773
    %s779 = scalar_lea.vmem [#allocation0], 1025
    %780 = vst.msk [vmem:[%s779] ss:$-56 sm:$0x60] %vm774, %v773
    %s781 = scalar_lea.vmem [#allocation0], 850
    %782 = vst.msk [vmem:[%s781] sm:$0x80] %vm774, %v773
    %s783 = scalar_lea.vmem [#allocation1], 64
    %v784 = vld.sshfl [vmem:[%s783] sm:$0xff pattern:$0x99999018]
    %s785 = scalar_lea.vmem [#allocation1], 80
    %v786 = vld.sshfl [vmem:[%s785] sm:$0xff pattern:$0x90188888]
    %vm787 = vcmask 1047556
    %v788 = vsel %vm787, %v786, %v784
    %789 = vrot.lane.b32.xlu0 %v788, 118
    %v790 = vpop.permute.xlu0 %789
    %vm791 = vcmask 15360
    %s792 = scalar_lea.vmem [#allocation0], 1025
    %793 = vst.msk [vmem:[%s792] ss:$-56 sm:$0x7] %vm791, %v790
    %s794 = scalar_lea.vmem [#allocation0], 577
    %795 = vst.msk [vmem:[%s794] ss:$168 sm:$0x18] %vm791, %v790
    %s796 = scalar_lea.vmem [#allocation0], 1473
    %797 = vst.msk [vmem:[%s796] ss:$-56 sm:$0x60] %vm791, %v790
    %s798 = scalar_lea.vmem [#allocation0], 1298
    %799 = vst.msk [vmem:[%s798] sm:$0x80] %vm791, %v790
    %s800 = scalar_lea.vmem [#allocation1], 96
    %v801 = vld.sshfl [vmem:[%s800] sm:$0xff pattern:$0x99999018]
    %s802 = scalar_lea.vmem [#allocation1], 112
    %v803 = vld.sshfl [vmem:[%s802] sm:$0xff pattern:$0x90188888]
    %vm804 = vcmask 1047556
    %v805 = vsel %vm804, %v803, %v801
    %806 = vrot.lane.b32.xlu0 %v805, 118
    %v807 = vpop.permute.xlu0 %806
    %vm808 = vcmask 15360
    %s809 = scalar_lea.vmem [#allocation0], 1473
    %810 = vst.msk [vmem:[%s809] ss:$-56 sm:$0x7] %vm808, %v807
    %s811 = scalar_lea.vmem [#allocation0], 1025
    %812 = vst.msk [vmem:[%s811] ss:$168 sm:$0x18] %vm808, %v807
    %s813 = scalar_lea.vmem [#allocation0], 1921
    %814 = vst.msk [vmem:[%s813] ss:$-56 sm:$0x60] %vm808, %v807
    %s815 = scalar_lea.vmem [#allocation0], 1746
    %816 = vst.msk [vmem:[%s815] sm:$0x80] %vm808, %v807
    %s817 = scalar_lea.vmem [#allocation1], 128
    %v818 = vld.sshfl [vmem:[%s817] sm:$0xff pattern:$0x99999018]
    %s819 = scalar_lea.vmem [#allocation1], 144
    %v820 = vld.sshfl [vmem:[%s819] sm:$0xff pattern:$0x90188888]
    %vm821 = vcmask 1047556
    %v822 = vsel %vm821, %v820, %v818
    %823 = vrot.lane.b32.xlu0 %v822, 118
    %v824 = vpop.permute.xlu0 %823
    %vm825 = vcmask 15360
    %s826 = scalar_lea.vmem [#allocation0], 1921
    %827 = vst.msk [vmem:[%s826] ss:$-56 sm:$0x7] %vm825, %v824
    %s828 = scalar_lea.vmem [#allocation0], 1473
    %829 = vst.msk [vmem:[%s828] ss:$168 sm:$0x18] %vm825, %v824
    %s830 = scalar_lea.vmem [#allocation0], 2369
    %831 = vst.msk [vmem:[%s830] ss:$-56 sm:$0x60] %vm825, %v824
    %s832 = scalar_lea.vmem [#allocation0], 2194
    %833 = vst.msk [vmem:[%s832] sm:$0x80] %vm825, %v824
    %s834 = scalar_lea.vmem [#allocation1], 160
    %v835 = vld.sshfl [vmem:[%s834] sm:$0xff pattern:$0x99999018]
    %s836 = scalar_lea.vmem [#allocation1], 176
    %v837 = vld.sshfl [vmem:[%s836] sm:$0xff pattern:$0x90188888]
    %vm838 = vcmask 1047556
    %v839 = vsel %vm838, %v837, %v835
    %840 = vrot.lane.b32.xlu0 %v839, 118
    %v841 = vpop.permute.xlu0 %840
    %vm842 = vcmask 15360
    %s843 = scalar_lea.vmem [#allocation0], 2369
    %844 = vst.msk [vmem:[%s843] ss:$-56 sm:$0x7] %vm842, %v841
    %s845 = scalar_lea.vmem [#allocation0], 1921
    %846 = vst.msk [vmem:[%s845] ss:$168 sm:$0x18] %vm842, %v841
    %s847 = scalar_lea.vmem [#allocation0], 2817
    %848 = vst.msk [vmem:[%s847] ss:$-56 sm:$0x60] %vm842, %v841
    %s849 = scalar_lea.vmem [#allocation0], 2642
    %850 = vst.msk [vmem:[%s849] sm:$0x80] %vm842, %v841
    %s851 = scalar_lea.vmem [#allocation1], 192
    %v852 = vld.sshfl [vmem:[%s851] sm:$0xff pattern:$0x99999018]
    %s853 = scalar_lea.vmem [#allocation1], 208
    %v854 = vld.sshfl [vmem:[%s853] sm:$0xff pattern:$0x90188888]
    %vm855 = vcmask 1047556
    %v856 = vsel %vm855, %v854, %v852
    %857 = vrot.lane.b32.xlu0 %v856, 118
    %v858 = vpop.permute.xlu0 %857
    %vm859 = vcmask 15360
    %s860 = scalar_lea.vmem [#allocation0], 2817
    %861 = vst.msk [vmem:[%s860] ss:$-56 sm:$0x7] %vm859, %v858
    %s862 = scalar_lea.vmem [#allocation0], 2369
    %863 = vst.msk [vmem:[%s862] ss:$168 sm:$0x18] %vm859, %v858
    %s864 = scalar_lea.vmem [#allocation0], 3265
    %865 = vst.msk [vmem:[%s864] ss:$-56 sm:$0x60] %vm859, %v858
    %s866 = scalar_lea.vmem [#allocation0], 3090
    %867 = vst.msk [vmem:[%s866] sm:$0x80] %vm859, %v858
    %v868 = vld.sshfl [vmem:[#allocation1] sm:$0xff pattern:$0x189]
    %s869 = scalar_lea.vmem [#allocation1], 16
    %v870 = vld.sshfl [vmem:[%s869] sm:$0xff pattern:$0x1899999]
    %vm871 = vcmask 1047556
    %v872 = vsel %vm871, %v870, %v868
    %873 = vrot.lane.b32.xlu0 %v872, 116
    %v874 = vpop.permute.xlu0 %873
    %vm875 = vcmask 15360
    %s876 = scalar_lea.vmem [#allocation0], 192
    %877 = vst.msk [vmem:[%s876] ss:$-56 sm:$0xf] %vm875, %v874
    %s878 = scalar_lea.vmem [#allocation0], 640
    %879 = vst.msk [vmem:[%s878] ss:$-56 sm:$0xf0] %vm875, %v874
    %s880 = scalar_lea.vmem [#allocation1], 32
    %v881 = vld.sshfl [vmem:[%s880] sm:$0xff pattern:$0x189]
    %s882 = scalar_lea.vmem [#allocation1], 48
    %v883 = vld.sshfl [vmem:[%s882] sm:$0xff pattern:$0x1899999]
    %vm884 = vcmask 1047556
    %v885 = vsel %vm884, %v883, %v881
    %886 = vrot.lane.b32.xlu0 %v885, 116
    %v887 = vpop.permute.xlu0 %886
    %vm888 = vcmask 15360
    %s889 = scalar_lea.vmem [#allocation0], 640
    %890 = vst.msk [vmem:[%s889] ss:$-56 sm:$0xf] %vm888, %v887
    %s891 = scalar_lea.vmem [#allocation0], 1088
    %892 = vst.msk [vmem:[%s891] ss:$-56 sm:$0xf0] %vm888, %v887
    %s893 = scalar_lea.vmem [#allocation1], 64
    %v894 = vld.sshfl [vmem:[%s893] sm:$0xff pattern:$0x189]
    %s895 = scalar_lea.vmem [#allocation1], 80
    %v896 = vld.sshfl [vmem:[%s895] sm:$0xff pattern:$0x1899999]
    %vm897 = vcmask 1047556
    %v898 = vsel %vm897, %v896, %v894
    %899 = vrot.lane.b32.xlu0 %v898, 116
    %v900 = vpop.permute.xlu0 %899
    %vm901 = vcmask 15360
    %s902 = scalar_lea.vmem [#allocation0], 1088
    %903 = vst.msk [vmem:[%s902] ss:$-56 sm:$0xf] %vm901, %v900
    %s904 = scalar_lea.vmem [#allocation0], 1536
    %905 = vst.msk [vmem:[%s904] ss:$-56 sm:$0xf0] %vm901, %v900
    %s906 = scalar_lea.vmem [#allocation1], 96
    %v907 = vld.sshfl [vmem:[%s906] sm:$0xff pattern:$0x189]
    %s908 = scalar_lea.vmem [#allocation1], 112
    %v909 = vld.sshfl [vmem:[%s908] sm:$0xff pattern:$0x1899999]
    %vm910 = vcmask 1047556
    %v911 = vsel %vm910, %v909, %v907
    %912 = vrot.lane.b32.xlu0 %v911, 116
    %v913 = vpop.permute.xlu0 %912
    %vm914 = vcmask 15360
    %s915 = scalar_lea.vmem [#allocation0], 1536
    %916 = vst.msk [vmem:[%s915] ss:$-56 sm:$0xf] %vm914, %v913
    %s917 = scalar_lea.vmem [#allocation0], 1984
    %918 = vst.msk [vmem:[%s917] ss:$-56 sm:$0xf0] %vm914, %v913
    %s919 = scalar_lea.vmem [#allocation1], 128
    %v920 = vld.sshfl [vmem:[%s919] sm:$0xff pattern:$0x189]
    %s921 = scalar_lea.vmem [#allocation1], 144
    %v922 = vld.sshfl [vmem:[%s921] sm:$0xff pattern:$0x1899999]
    %vm923 = vcmask 1047556
    %v924 = vsel %vm923, %v922, %v920
    %925 = vrot.lane.b32.xlu0 %v924, 116
    %v926 = vpop.permute.xlu0 %925
    %vm927 = vcmask 15360
    %s928 = scalar_lea.vmem [#allocation0], 1984
    %929 = vst.msk [vmem:[%s928] ss:$-56 sm:$0xf] %vm927, %v926
    %s930 = scalar_lea.vmem [#allocation0], 2432
    %931 = vst.msk [vmem:[%s930] ss:$-56 sm:$0xf0] %vm927, %v926
    %s932 = scalar_lea.vmem [#allocation1], 160
    %v933 = vld.sshfl [vmem:[%s932] sm:$0xff pattern:$0x189]
    %s934 = scalar_lea.vmem [#allocation1], 176
    %v935 = vld.sshfl [vmem:[%s934] sm:$0xff pattern:$0x1899999]
    %vm936 = vcmask 1047556
    %v937 = vsel %vm936, %v935, %v933
    %938 = vrot.lane.b32.xlu0 %v937, 116
    %v939 = vpop.permute.xlu0 %938
    %vm940 = vcmask 15360
    %s941 = scalar_lea.vmem [#allocation0], 2432
    %942 = vst.msk [vmem:[%s941] ss:$-56 sm:$0xf] %vm940, %v939
    %s943 = scalar_lea.vmem [#allocation0], 2880
    %944 = vst.msk [vmem:[%s943] ss:$-56 sm:$0xf0] %vm940, %v939
    %s945 = scalar_lea.vmem [#allocation1], 192
    %v946 = vld.sshfl [vmem:[%s945] sm:$0xff pattern:$0x189]
    %s947 = scalar_lea.vmem [#allocation1], 208
    %v948 = vld.sshfl [vmem:[%s947] sm:$0xff pattern:$0x1899999]
    %vm949 = vcmask 1047556
    %v950 = vsel %vm949, %v948, %v946
    %951 = vrot.lane.b32.xlu0 %v950, 116
    %v952 = vpop.permute.xlu0 %951
    %vm953 = vcmask 15360
    %s954 = scalar_lea.vmem [#allocation0], 2880
    %955 = vst.msk [vmem:[%s954] ss:$-56 sm:$0xf] %vm953, %v952
    %s956 = scalar_lea.vmem [#allocation0], 3328
    %957 = vst.msk [vmem:[%s956] ss:$-56 sm:$0xf0] %vm953, %v952
    %v958 = vld.sshfl [vmem:[#allocation1] sm:$0xff pattern:$0x189]
    %s959 = scalar_lea.vmem [#allocation1], 16
    %v960 = vld.sshfl [vmem:[%s959] sm:$0xff pattern:$0x1899999]
    %vm961 = vcmask 1047556
    %v962 = vsel %vm961, %v960, %v958
    %963 = vrot.lane.b32.xlu0 %v962, 114
    %v964 = vpop.permute.xlu0 %963
    %vm965 = vcmask 15360
    %s966 = scalar_lea.vmem [#allocation0], 193
    %967 = vst.msk [vmem:[%s966] ss:$-56 sm:$0xf] %vm965, %v964
    %s968 = scalar_lea.vmem [#allocation0], 641
    %969 = vst.msk [vmem:[%s968] ss:$-56 sm:$0xf0] %vm965, %v964
    %s970 = scalar_lea.vmem [#allocation1], 32
    %v971 = vld.sshfl [vmem:[%s970] sm:$0xff pattern:$0x189]
    %s972 = scalar_lea.vmem [#allocation1], 48
    %v973 = vld.sshfl [vmem:[%s972] sm:$0xff pattern:$0x1899999]
    %vm974 = vcmask 1047556
    %v975 = vsel %vm974, %v973, %v971
    %976 = vrot.lane.b32.xlu0 %v975, 114
    %v977 = vpop.permute.xlu0 %976
    %vm978 = vcmask 15360
    %s979 = scalar_lea.vmem [#allocation0], 641
    %980 = vst.msk [vmem:[%s979] ss:$-56 sm:$0xf] %vm978, %v977
    %s981 = scalar_lea.vmem [#allocation0], 1089
    %982 = vst.msk [vmem:[%s981] ss:$-56 sm:$0xf0] %vm978, %v977
    %s983 = scalar_lea.vmem [#allocation1], 64
    %v984 = vld.sshfl [vmem:[%s983] sm:$0xff pattern:$0x189]
    %s985 = scalar_lea.vmem [#allocation1], 80
    %v986 = vld.sshfl [vmem:[%s985] sm:$0xff pattern:$0x1899999]
    %vm987 = vcmask 1047556
    %v988 = vsel %vm987, %v986, %v984
    %989 = vrot.lane.b32.xlu0 %v988, 114
    %v990 = vpop.permute.xlu0 %989
    %vm991 = vcmask 15360
    %s992 = scalar_lea.vmem [#allocation0], 1089
    %993 = vst.msk [vmem:[%s992] ss:$-56 sm:$0xf] %vm991, %v990
    %s994 = scalar_lea.vmem [#allocation0], 1537
    %995 = vst.msk [vmem:[%s994] ss:$-56 sm:$0xf0] %vm991, %v990
    %s996 = scalar_lea.vmem [#allocation1], 96
    %v997 = vld.sshfl [vmem:[%s996] sm:$0xff pattern:$0x189]
    %s998 = scalar_lea.vmem [#allocation1], 112
    %v999 = vld.sshfl [vmem:[%s998] sm:$0xff pattern:$0x1899999]
    %vm1000 = vcmask 1047556
    %v1001 = vsel %vm1000, %v999, %v997
    %1002 = vrot.lane.b32.xlu0 %v1001, 114
    %v1003 = vpop.permute.xlu0 %1002
    %vm1004 = vcmask 15360
    %s1005 = scalar_lea.vmem [#allocation0], 1537
    %1006 = vst.msk [vmem:[%s1005] ss:$-56 sm:$0xf] %vm1004, %v1003
    %s1007 = scalar_lea.vmem [#allocation0], 1985
    %1008 = vst.msk [vmem:[%s1007] ss:$-56 sm:$0xf0] %vm1004, %v1003
    %s1009 = scalar_lea.vmem [#allocation1], 128
    %v1010 = vld.sshfl [vmem:[%s1009] sm:$0xff pattern:$0x189]
    %s1011 = scalar_lea.vmem [#allocation1], 144
    %v1012 = vld.sshfl [vmem:[%s1011] sm:$0xff pattern:$0x1899999]
    %vm1013 = vcmask 1047556
    %v1014 = vsel %vm1013, %v1012, %v1010
    %1015 = vrot.lane.b32.xlu0 %v1014, 114
    %v1016 = vpop.permute.xlu0 %1015
    %vm1017 = vcmask 15360
    %s1018 = scalar_lea.vmem [#allocation0], 1985
    %1019 = vst.msk [vmem:[%s1018] ss:$-56 sm:$0xf] %vm1017, %v1016
    %s1020 = scalar_lea.vmem [#allocation0], 2433
    %1021 = vst.msk [vmem:[%s1020] ss:$-56 sm:$0xf0] %vm1017, %v1016
    %s1022 = scalar_lea.vmem [#allocation1], 160
    %v1023 = vld.sshfl [vmem:[%s1022] sm:$0xff pattern:$0x189]
    %s1024 = scalar_lea.vmem [#allocation1], 176
    %v1025 = vld.sshfl [vmem:[%s1024] sm:$0xff pattern:$0x1899999]
    %vm1026 = vcmask 1047556
    %v1027 = vsel %vm1026, %v1025, %v1023
    %1028 = vrot.lane.b32.xlu0 %v1027, 114
    %v1029 = vpop.permute.xlu0 %1028
    %vm1030 = vcmask 15360
    %s1031 = scalar_lea.vmem [#allocation0], 2433
    %1032 = vst.msk [vmem:[%s1031] ss:$-56 sm:$0xf] %vm1030, %v1029
    %s1033 = scalar_lea.vmem [#allocation0], 2881
    %1034 = vst.msk [vmem:[%s1033] ss:$-56 sm:$0xf0] %vm1030, %v1029
    %s1035 = scalar_lea.vmem [#allocation1], 192
    %v1036 = vld.sshfl [vmem:[%s1035] sm:$0xff pattern:$0x189]
    %s1037 = scalar_lea.vmem [#allocation1], 208
    %v1038 = vld.sshfl [vmem:[%s1037] sm:$0xff pattern:$0x1899999]
    %vm1039 = vcmask 1047556
    %v1040 = vsel %vm1039, %v1038, %v1036
    %1041 = vrot.lane.b32.xlu0 %v1040, 114
    %v1042 = vpop.permute.xlu0 %1041
    %vm1043 = vcmask 15360
    %s1044 = scalar_lea.vmem [#allocation0], 2881
    %1045 = vst.msk [vmem:[%s1044] ss:$-56 sm:$0xf] %vm1043, %v1042
    %s1046 = scalar_lea.vmem [#allocation0], 3329
    %1047 = vst.msk [vmem:[%s1046] ss:$-56 sm:$0xf0] %vm1043, %v1042
    %v1048 = vld.sshfl [vmem:[#allocation1] sm:$0xff pattern:$0x11111890]
    %s1049 = scalar_lea.vmem [#allocation1], 16
    %v1050 = vld.sshfl [vmem:[%s1049] sm:$0xff pattern:$0x18900000]
    %vm1051 = vcmask 1047556
    %v1052 = vsel %vm1051, %v1050, %v1048
    %1053 = vrot.lane.b32.xlu0 %v1052, 112
    %v1054 = vpop.permute.xlu0 %1053
    %vm1055 = vcmask 15360
    %s1056 = scalar_lea.vmem [#allocation0], 32
    %1057 = vst.msk [vmem:[%s1056] ss:$168 sm:$0x3] %vm1055, %v1054
    %s1058 = scalar_lea.vmem [#allocation0], 256
    %1059 = vst.msk [vmem:[%s1058] ss:$-56 sm:$0xc] %vm1055, %v1054
    %s1060 = scalar_lea.vmem [#allocation0], 4294966880
    %1061 = vst.msk [vmem:[%s1060] ss:$168 sm:$0x30] %vm1055, %v1054
    %s1062 = scalar_lea.vmem [#allocation0], 704
    %1063 = vst.msk [vmem:[%s1062] ss:$-56 sm:$0xc0] %vm1055, %v1054
    %s1064 = scalar_lea.vmem [#allocation1], 32
    %v1065 = vld.sshfl [vmem:[%s1064] sm:$0xff pattern:$0x11111890]
    %s1066 = scalar_lea.vmem [#allocation1], 48
    %v1067 = vld.sshfl [vmem:[%s1066] sm:$0xff pattern:$0x18900000]
    %vm1068 = vcmask 1047556
    %v1069 = vsel %vm1068, %v1067, %v1065
    %1070 = vrot.lane.b32.xlu0 %v1069, 112
    %v1071 = vpop.permute.xlu0 %1070
    %vm1072 = vcmask 15360
    %s1073 = scalar_lea.vmem [#allocation0], 480
    %1074 = vst.msk [vmem:[%s1073] ss:$168 sm:$0x3] %vm1072, %v1071
    %s1075 = scalar_lea.vmem [#allocation0], 704
    %1076 = vst.msk [vmem:[%s1075] ss:$-56 sm:$0xc] %vm1072, %v1071
    %s1077 = scalar_lea.vmem [#allocation0], 32
    %1078 = vst.msk [vmem:[%s1077] ss:$168 sm:$0x30] %vm1072, %v1071
    %s1079 = scalar_lea.vmem [#allocation0], 1152
    %1080 = vst.msk [vmem:[%s1079] ss:$-56 sm:$0xc0] %vm1072, %v1071
    %s1081 = scalar_lea.vmem [#allocation1], 64
    %v1082 = vld.sshfl [vmem:[%s1081] sm:$0xff pattern:$0x11111890]
    %s1083 = scalar_lea.vmem [#allocation1], 80
    %v1084 = vld.sshfl [vmem:[%s1083] sm:$0xff pattern:$0x18900000]
    %vm1085 = vcmask 1047556
    %v1086 = vsel %vm1085, %v1084, %v1082
    %1087 = vrot.lane.b32.xlu0 %v1086, 112
    %v1088 = vpop.permute.xlu0 %1087
    %vm1089 = vcmask 15360
    %s1090 = scalar_lea.vmem [#allocation0], 928
    %1091 = vst.msk [vmem:[%s1090] ss:$168 sm:$0x3] %vm1089, %v1088
    %s1092 = scalar_lea.vmem [#allocation0], 1152
    %1093 = vst.msk [vmem:[%s1092] ss:$-56 sm:$0xc] %vm1089, %v1088
    %s1094 = scalar_lea.vmem [#allocation0], 480
    %1095 = vst.msk [vmem:[%s1094] ss:$168 sm:$0x30] %vm1089, %v1088
    %s1096 = scalar_lea.vmem [#allocation0], 1600
    %1097 = vst.msk [vmem:[%s1096] ss:$-56 sm:$0xc0] %vm1089, %v1088
    %s1098 = scalar_lea.vmem [#allocation1], 96
    %v1099 = vld.sshfl [vmem:[%s1098] sm:$0xff pattern:$0x11111890]
    %s1100 = scalar_lea.vmem [#allocation1], 112
    %v1101 = vld.sshfl [vmem:[%s1100] sm:$0xff pattern:$0x18900000]
    %vm1102 = vcmask 1047556
    %v1103 = vsel %vm1102, %v1101, %v1099
    %1104 = vrot.lane.b32.xlu0 %v1103, 112
    %v1105 = vpop.permute.xlu0 %1104
    %vm1106 = vcmask 15360
    %s1107 = scalar_lea.vmem [#allocation0], 1376
    %1108 = vst.msk [vmem:[%s1107] ss:$168 sm:$0x3] %vm1106, %v1105
    %s1109 = scalar_lea.vmem [#allocation0], 1600
    %1110 = vst.msk [vmem:[%s1109] ss:$-56 sm:$0xc] %vm1106, %v1105
    %s1111 = scalar_lea.vmem [#allocation0], 928
    %1112 = vst.msk [vmem:[%s1111] ss:$168 sm:$0x30] %vm1106, %v1105
    %s1113 = scalar_lea.vmem [#allocation0], 2048
    %1114 = vst.msk [vmem:[%s1113] ss:$-56 sm:$0xc0] %vm1106, %v1105
    %s1115 = scalar_lea.vmem [#allocation1], 128
    %v1116 = vld.sshfl [vmem:[%s1115] sm:$0xff pattern:$0x11111890]
    %s1117 = scalar_lea.vmem [#allocation1], 144
    %v1118 = vld.sshfl [vmem:[%s1117] sm:$0xff pattern:$0x18900000]
    %vm1119 = vcmask 1047556
    %v1120 = vsel %vm1119, %v1118, %v1116
    %1121 = vrot.lane.b32.xlu0 %v1120, 112
    %v1122 = vpop.permute.xlu0 %1121
    %vm1123 = vcmask 15360
    %s1124 = scalar_lea.vmem [#allocation0], 1824
    %1125 = vst.msk [vmem:[%s1124] ss:$168 sm:$0x3] %vm1123, %v1122
    %s1126 = scalar_lea.vmem [#allocation0], 2048
    %1127 = vst.msk [vmem:[%s1126] ss:$-56 sm:$0xc] %vm1123, %v1122
    %s1128 = scalar_lea.vmem [#allocation0], 1376
    %1129 = vst.msk [vmem:[%s1128] ss:$168 sm:$0x30] %vm1123, %v1122
    %s1130 = scalar_lea.vmem [#allocation0], 2496
    %1131 = vst.msk [vmem:[%s1130] ss:$-56 sm:$0xc0] %vm1123, %v1122
    %s1132 = scalar_lea.vmem [#allocation1], 160
    %v1133 = vld.sshfl [vmem:[%s1132] sm:$0xff pattern:$0x11111890]
    %s1134 = scalar_lea.vmem [#allocation1], 176
    %v1135 = vld.sshfl [vmem:[%s1134] sm:$0xff pattern:$0x18900000]
    %vm1136 = vcmask 1047556
    %v1137 = vsel %vm1136, %v1135, %v1133
    %1138 = vrot.lane.b32.xlu0 %v1137, 112
    %v1139 = vpop.permute.xlu0 %1138
    %vm1140 = vcmask 15360
    %s1141 = scalar_lea.vmem [#allocation0], 2272
    %1142 = vst.msk [vmem:[%s1141] ss:$168 sm:$0x3] %vm1140, %v1139
    %s1143 = scalar_lea.vmem [#allocation0], 2496
    %1144 = vst.msk [vmem:[%s1143] ss:$-56 sm:$0xc] %vm1140, %v1139
    %s1145 = scalar_lea.vmem [#allocation0], 1824
    %1146 = vst.msk [vmem:[%s1145] ss:$168 sm:$0x30] %vm1140, %v1139
    %s1147 = scalar_lea.vmem [#allocation0], 2944
    %1148 = vst.msk [vmem:[%s1147] ss:$-56 sm:$0xc0] %vm1140, %v1139
    %s1149 = scalar_lea.vmem [#allocation1], 192
    %v1150 = vld.sshfl [vmem:[%s1149] sm:$0xff pattern:$0x11111890]
    %s1151 = scalar_lea.vmem [#allocation1], 208
    %v1152 = vld.sshfl [vmem:[%s1151] sm:$0xff pattern:$0x18900000]
    %vm1153 = vcmask 1047556
    %v1154 = vsel %vm1153, %v1152, %v1150
    %1155 = vrot.lane.b32.xlu0 %v1154, 112
    %v1156 = vpop.permute.xlu0 %1155
    %vm1157 = vcmask 15360
    %s1158 = scalar_lea.vmem [#allocation0], 2720
    %1159 = vst.msk [vmem:[%s1158] ss:$168 sm:$0x3] %vm1157, %v1156
    %s1160 = scalar_lea.vmem [#allocation0], 2944
    %1161 = vst.msk [vmem:[%s1160] ss:$-56 sm:$0xc] %vm1157, %v1156
    %s1162 = scalar_lea.vmem [#allocation0], 2272
    %1163 = vst.msk [vmem:[%s1162] ss:$168 sm:$0x30] %vm1157, %v1156
    %s1164 = scalar_lea.vmem [#allocation0], 3392
    %1165 = vst.msk [vmem:[%s1164] ss:$-56 sm:$0xc0] %vm1157, %v1156
    %v1166 = vld.sshfl [vmem:[#allocation1] sm:$0xff pattern:$0x11111890]
    %s1167 = scalar_lea.vmem [#allocation1], 16
    %v1168 = vld.sshfl [vmem:[%s1167] sm:$0xff pattern:$0x18900000]
    %vm1169 = vcmask 1047556
    %v1170 = vsel %vm1169, %v1168, %v1166
    %1171 = vrot.lane.b32.xlu0 %v1170, 110
    %v1172 = vpop.permute.xlu0 %1171
    %vm1173 = vcmask 15360
    %s1174 = scalar_lea.vmem [#allocation0], 33
    %1175 = vst.msk [vmem:[%s1174] ss:$168 sm:$0x3] %vm1173, %v1172
    %s1176 = scalar_lea.vmem [#allocation0], 257
    %1177 = vst.msk [vmem:[%s1176] ss:$-56 sm:$0xc] %vm1173, %v1172
    %s1178 = scalar_lea.vmem [#allocation0], 4294966881
    %1179 = vst.msk [vmem:[%s1178] ss:$168 sm:$0x30] %vm1173, %v1172
    %s1180 = scalar_lea.vmem [#allocation0], 705
    %1181 = vst.msk [vmem:[%s1180] ss:$-56 sm:$0xc0] %vm1173, %v1172
    %s1182 = scalar_lea.vmem [#allocation1], 32
    %v1183 = vld.sshfl [vmem:[%s1182] sm:$0xff pattern:$0x11111890]
    %s1184 = scalar_lea.vmem [#allocation1], 48
    %v1185 = vld.sshfl [vmem:[%s1184] sm:$0xff pattern:$0x18900000]
    %vm1186 = vcmask 1047556
    %v1187 = vsel %vm1186, %v1185, %v1183
    %1188 = vrot.lane.b32.xlu0 %v1187, 110
    %v1189 = vpop.permute.xlu0 %1188
    %vm1190 = vcmask 15360
    %s1191 = scalar_lea.vmem [#allocation0], 481
    %1192 = vst.msk [vmem:[%s1191] ss:$168 sm:$0x3] %vm1190, %v1189
    %s1193 = scalar_lea.vmem [#allocation0], 705
    %1194 = vst.msk [vmem:[%s1193] ss:$-56 sm:$0xc] %vm1190, %v1189
    %s1195 = scalar_lea.vmem [#allocation0], 33
    %1196 = vst.msk [vmem:[%s1195] ss:$168 sm:$0x30] %vm1190, %v1189
    %s1197 = scalar_lea.vmem [#allocation0], 1153
    %1198 = vst.msk [vmem:[%s1197] ss:$-56 sm:$0xc0] %vm1190, %v1189
    %s1199 = scalar_lea.vmem [#allocation1], 64
    %v1200 = vld.sshfl [vmem:[%s1199] sm:$0xff pattern:$0x11111890]
    %s1201 = scalar_lea.vmem [#allocation1], 80
    %v1202 = vld.sshfl [vmem:[%s1201] sm:$0xff pattern:$0x18900000]
    %vm1203 = vcmask 1047556
    %v1204 = vsel %vm1203, %v1202, %v1200
    %1205 = vrot.lane.b32.xlu0 %v1204, 110
    %v1206 = vpop.permute.xlu0 %1205
    %vm1207 = vcmask 15360
    %s1208 = scalar_lea.vmem [#allocation0], 929
    %1209 = vst.msk [vmem:[%s1208] ss:$168 sm:$0x3] %vm1207, %v1206
    %s1210 = scalar_lea.vmem [#allocation0], 1153
    %1211 = vst.msk [vmem:[%s1210] ss:$-56 sm:$0xc] %vm1207, %v1206
    %s1212 = scalar_lea.vmem [#allocation0], 481
    %1213 = vst.msk [vmem:[%s1212] ss:$168 sm:$0x30] %vm1207, %v1206
    %s1214 = scalar_lea.vmem [#allocation0], 1601
    %1215 = vst.msk [vmem:[%s1214] ss:$-56 sm:$0xc0] %vm1207, %v1206
    %s1216 = scalar_lea.vmem [#allocation1], 96
    %v1217 = vld.sshfl [vmem:[%s1216] sm:$0xff pattern:$0x11111890]
    %s1218 = scalar_lea.vmem [#allocation1], 112
    %v1219 = vld.sshfl [vmem:[%s1218] sm:$0xff pattern:$0x18900000]
    %vm1220 = vcmask 1047556
    %v1221 = vsel %vm1220, %v1219, %v1217
    %1222 = vrot.lane.b32.xlu0 %v1221, 110
    %v1223 = vpop.permute.xlu0 %1222
    %vm1224 = vcmask 15360
    %s1225 = scalar_lea.vmem [#allocation0], 1377
    %1226 = vst.msk [vmem:[%s1225] ss:$168 sm:$0x3] %vm1224, %v1223
    %s1227 = scalar_lea.vmem [#allocation0], 1601
    %1228 = vst.msk [vmem:[%s1227] ss:$-56 sm:$0xc] %vm1224, %v1223
    %s1229 = scalar_lea.vmem [#allocation0], 929
    %1230 = vst.msk [vmem:[%s1229] ss:$168 sm:$0x30] %vm1224, %v1223
    %s1231 = scalar_lea.vmem [#allocation0], 2049
    %1232 = vst.msk [vmem:[%s1231] ss:$-56 sm:$0xc0] %vm1224, %v1223
    %s1233 = scalar_lea.vmem [#allocation1], 128
    %v1234 = vld.sshfl [vmem:[%s1233] sm:$0xff pattern:$0x11111890]
    %s1235 = scalar_lea.vmem [#allocation1], 144
    %v1236 = vld.sshfl [vmem:[%s1235] sm:$0xff pattern:$0x18900000]
    %vm1237 = vcmask 1047556
    %v1238 = vsel %vm1237, %v1236, %v1234
    %1239 = vrot.lane.b32.xlu0 %v1238, 110
    %v1240 = vpop.permute.xlu0 %1239
    %vm1241 = vcmask 15360
    %s1242 = scalar_lea.vmem [#allocation0], 1825
    %1243 = vst.msk [vmem:[%s1242] ss:$168 sm:$0x3] %vm1241, %v1240
    %s1244 = scalar_lea.vmem [#allocation0], 2049
    %1245 = vst.msk [vmem:[%s1244] ss:$-56 sm:$0xc] %vm1241, %v1240
    %s1246 = scalar_lea.vmem [#allocation0], 1377
    %1247 = vst.msk [vmem:[%s1246] ss:$168 sm:$0x30] %vm1241, %v1240
    %s1248 = scalar_lea.vmem [#allocation0], 2497
    %1249 = vst.msk [vmem:[%s1248] ss:$-56 sm:$0xc0] %vm1241, %v1240
    %s1250 = scalar_lea.vmem [#allocation1], 160
    %v1251 = vld.sshfl [vmem:[%s1250] sm:$0xff pattern:$0x11111890]
    %s1252 = scalar_lea.vmem [#allocation1], 176
    %v1253 = vld.sshfl [vmem:[%s1252] sm:$0xff pattern:$0x18900000]
    %vm1254 = vcmask 1047556
    %v1255 = vsel %vm1254, %v1253, %v1251
    %1256 = vrot.lane.b32.xlu0 %v1255, 110
    %v1257 = vpop.permute.xlu0 %1256
    %vm1258 = vcmask 15360
    %s1259 = scalar_lea.vmem [#allocation0], 2273
    %1260 = vst.msk [vmem:[%s1259] ss:$168 sm:$0x3] %vm1258, %v1257
    %s1261 = scalar_lea.vmem [#allocation0], 2497
    %1262 = vst.msk [vmem:[%s1261] ss:$-56 sm:$0xc] %vm1258, %v1257
    %s1263 = scalar_lea.vmem [#allocation0], 1825
    %1264 = vst.msk [vmem:[%s1263] ss:$168 sm:$0x30] %vm1258, %v1257
    %s1265 = scalar_lea.vmem [#allocation0], 2945
    %1266 = vst.msk [vmem:[%s1265] ss:$-56 sm:$0xc0] %vm1258, %v1257
    %s1267 = scalar_lea.vmem [#allocation1], 192
    %v1268 = vld.sshfl [vmem:[%s1267] sm:$0xff pattern:$0x11111890]
    %s1269 = scalar_lea.vmem [#allocation1], 208
    %v1270 = vld.sshfl [vmem:[%s1269] sm:$0xff pattern:$0x18900000]
    %vm1271 = vcmask 1047556
    %v1272 = vsel %vm1271, %v1270, %v1268
    %1273 = vrot.lane.b32.xlu0 %v1272, 110
    %v1274 = vpop.permute.xlu0 %1273
    %vm1275 = vcmask 15360
    %s1276 = scalar_lea.vmem [#allocation0], 2721
    %1277 = vst.msk [vmem:[%s1276] ss:$168 sm:$0x3] %vm1275, %v1274
    %s1278 = scalar_lea.vmem [#allocation0], 2945
    %1279 = vst.msk [vmem:[%s1278] ss:$-56 sm:$0xc] %vm1275, %v1274
    %s1280 = scalar_lea.vmem [#allocation0], 2273
    %1281 = vst.msk [vmem:[%s1280] ss:$168 sm:$0x30] %vm1275, %v1274
    %s1282 = scalar_lea.vmem [#allocation0], 3393
    %1283 = vst.msk [vmem:[%s1282] ss:$-56 sm:$0xc0] %vm1275, %v1274
    %v1284 = vld.sshfl [vmem:[#allocation1] sm:$0xff pattern:$0x88888901]
    %s1285 = scalar_lea.vmem [#allocation1], 16
    %v1286 = vld.sshfl [vmem:[%s1285] sm:$0xff pattern:$0x89011111]
    %vm1287 = vcmask 1047556
    %v1288 = vsel %vm1287, %v1286, %v1284
    %1289 = vrot.lane.b32.xlu0 %v1288, 108
    %v1290 = vpop.permute.xlu0 %1289
    %vm1291 = vcmask 15360
    %s1292 = scalar_lea.vmem [#allocation0], 96
    %1293 = vst.msk [vmem:[%s1292] ss:$-56 sm:$0x3] %vm1291, %v1290
    %s1294 = scalar_lea.vmem [#allocation0], 320
    %1295 = vst.msk [vmem:[%s1294] ss:$-56 sm:$0xc] %vm1291, %v1290
    %s1296 = scalar_lea.vmem [#allocation0], 544
    %1297 = vst.msk [vmem:[%s1296] ss:$-56 sm:$0x30] %vm1291, %v1290
    %s1298 = scalar_lea.vmem [#allocation0], 768
    %1299 = vst.msk [vmem:[%s1298] ss:$-56 sm:$0xc0] %vm1291, %v1290
    %s1300 = scalar_lea.vmem [#allocation1], 32
    %v1301 = vld.sshfl [vmem:[%s1300] sm:$0xff pattern:$0x88888901]
    %s1302 = scalar_lea.vmem [#allocation1], 48
    %v1303 = vld.sshfl [vmem:[%s1302] sm:$0xff pattern:$0x89011111]
    %vm1304 = vcmask 1047556
    %v1305 = vsel %vm1304, %v1303, %v1301
    %1306 = vrot.lane.b32.xlu0 %v1305, 108
    %v1307 = vpop.permute.xlu0 %1306
    %vm1308 = vcmask 15360
    %s1309 = scalar_lea.vmem [#allocation0], 544
    %1310 = vst.msk [vmem:[%s1309] ss:$-56 sm:$0x3] %vm1308, %v1307
    %s1311 = scalar_lea.vmem [#allocation0], 768
    %1312 = vst.msk [vmem:[%s1311] ss:$-56 sm:$0xc] %vm1308, %v1307
    %s1313 = scalar_lea.vmem [#allocation0], 992
    %1314 = vst.msk [vmem:[%s1313] ss:$-56 sm:$0x30] %vm1308, %v1307
    %s1315 = scalar_lea.vmem [#allocation0], 1216
    %1316 = vst.msk [vmem:[%s1315] ss:$-56 sm:$0xc0] %vm1308, %v1307
    %s1317 = scalar_lea.vmem [#allocation1], 64
    %v1318 = vld.sshfl [vmem:[%s1317] sm:$0xff pattern:$0x88888901]
    %s1319 = scalar_lea.vmem [#allocation1], 80
    %v1320 = vld.sshfl [vmem:[%s1319] sm:$0xff pattern:$0x89011111]
    %vm1321 = vcmask 1047556
    %v1322 = vsel %vm1321, %v1320, %v1318
    %1323 = vrot.lane.b32.xlu0 %v1322, 108
    %v1324 = vpop.permute.xlu0 %1323
    %vm1325 = vcmask 15360
    %s1326 = scalar_lea.vmem [#allocation0], 992
    %1327 = vst.msk [vmem:[%s1326] ss:$-56 sm:$0x3] %vm1325, %v1324
    %s1328 = scalar_lea.vmem [#allocation0], 1216
    %1329 = vst.msk [vmem:[%s1328] ss:$-56 sm:$0xc] %vm1325, %v1324
    %s1330 = scalar_lea.vmem [#allocation0], 1440
    %1331 = vst.msk [vmem:[%s1330] ss:$-56 sm:$0x30] %vm1325, %v1324
    %s1332 = scalar_lea.vmem [#allocation0], 1664
    %1333 = vst.msk [vmem:[%s1332] ss:$-56 sm:$0xc0] %vm1325, %v1324
    %s1334 = scalar_lea.vmem [#allocation1], 96
    %v1335 = vld.sshfl [vmem:[%s1334] sm:$0xff pattern:$0x88888901]
    %s1336 = scalar_lea.vmem [#allocation1], 112
    %v1337 = vld.sshfl [vmem:[%s1336] sm:$0xff pattern:$0x89011111]
    %vm1338 = vcmask 1047556
    %v1339 = vsel %vm1338, %v1337, %v1335
    %1340 = vrot.lane.b32.xlu0 %v1339, 108
    %v1341 = vpop.permute.xlu0 %1340
    %vm1342 = vcmask 15360
    %s1343 = scalar_lea.vmem [#allocation0], 1440
    %1344 = vst.msk [vmem:[%s1343] ss:$-56 sm:$0x3] %vm1342, %v1341
    %s1345 = scalar_lea.vmem [#allocation0], 1664
    %1346 = vst.msk [vmem:[%s1345] ss:$-56 sm:$0xc] %vm1342, %v1341
    %s1347 = scalar_lea.vmem [#allocation0], 1888
    %1348 = vst.msk [vmem:[%s1347] ss:$-56 sm:$0x30] %vm1342, %v1341
    %s1349 = scalar_lea.vmem [#allocation0], 2112
    %1350 = vst.msk [vmem:[%s1349] ss:$-56 sm:$0xc0] %vm1342, %v1341
    %s1351 = scalar_lea.vmem [#allocation1], 128
    %v1352 = vld.sshfl [vmem:[%s1351] sm:$0xff pattern:$0x88888901]
    %s1353 = scalar_lea.vmem [#allocation1], 144
    %v1354 = vld.sshfl [vmem:[%s1353] sm:$0xff pattern:$0x89011111]
    %vm1355 = vcmask 1047556
    %v1356 = vsel %vm1355, %v1354, %v1352
    %1357 = vrot.lane.b32.xlu0 %v1356, 108
    %v1358 = vpop.permute.xlu0 %1357
    %vm1359 = vcmask 15360
    %s1360 = scalar_lea.vmem [#allocation0], 1888
    %1361 = vst.msk [vmem:[%s1360] ss:$-56 sm:$0x3] %vm1359, %v1358
    %s1362 = scalar_lea.vmem [#allocation0], 2112
    %1363 = vst.msk [vmem:[%s1362] ss:$-56 sm:$0xc] %vm1359, %v1358
    %s1364 = scalar_lea.vmem [#allocation0], 2336
    %1365 = vst.msk [vmem:[%s1364] ss:$-56 sm:$0x30] %vm1359, %v1358
    %s1366 = scalar_lea.vmem [#allocation0], 2560
    %1367 = vst.msk [vmem:[%s1366] ss:$-56 sm:$0xc0] %vm1359, %v1358
    %s1368 = scalar_lea.vmem [#allocation1], 160
    %v1369 = vld.sshfl [vmem:[%s1368] sm:$0xff pattern:$0x88888901]
    %s1370 = scalar_lea.vmem [#allocation1], 176
    %v1371 = vld.sshfl [vmem:[%s1370] sm:$0xff pattern:$0x89011111]
    %vm1372 = vcmask 1047556
    %v1373 = vsel %vm1372, %v1371, %v1369
    %1374 = vrot.lane.b32.xlu0 %v1373, 108
    %v1375 = vpop.permute.xlu0 %1374
    %vm1376 = vcmask 15360
    %s1377 = scalar_lea.vmem [#allocation0], 2336
    %1378 = vst.msk [vmem:[%s1377] ss:$-56 sm:$0x3] %vm1376, %v1375
    %s1379 = scalar_lea.vmem [#allocation0], 2560
    %1380 = vst.msk [vmem:[%s1379] ss:$-56 sm:$0xc] %vm1376, %v1375
    %s1381 = scalar_lea.vmem [#allocation0], 2784
    %1382 = vst.msk [vmem:[%s1381] ss:$-56 sm:$0x30] %vm1376, %v1375
    %s1383 = scalar_lea.vmem [#allocation0], 3008
    %1384 = vst.msk [vmem:[%s1383] ss:$-56 sm:$0xc0] %vm1376, %v1375
    %s1385 = scalar_lea.vmem [#allocation1], 192
    %v1386 = vld.sshfl [vmem:[%s1385] sm:$0xff pattern:$0x88888901]
    %s1387 = scalar_lea.vmem [#allocation1], 208
    %v1388 = vld.sshfl [vmem:[%s1387] sm:$0xff pattern:$0x89011111]
    %vm1389 = vcmask 1047556
    %v1390 = vsel %vm1389, %v1388, %v1386
    %1391 = vrot.lane.b32.xlu0 %v1390, 108
    %v1392 = vpop.permute.xlu0 %1391
    %vm1393 = vcmask 15360
    %s1394 = scalar_lea.vmem [#allocation0], 2784
    %1395 = vst.msk [vmem:[%s1394] ss:$-56 sm:$0x3] %vm1393, %v1392
    %s1396 = scalar_lea.vmem [#allocation0], 3008
    %1397 = vst.msk [vmem:[%s1396] ss:$-56 sm:$0xc] %vm1393, %v1392
    %s1398 = scalar_lea.vmem [#allocation0], 3232
    %1399 = vst.msk [vmem:[%s1398] ss:$-56 sm:$0x30] %vm1393, %v1392
    %s1400 = scalar_lea.vmem [#allocation0], 3456
    %1401 = vst.msk [vmem:[%s1400] ss:$-56 sm:$0xc0] %vm1393, %v1392
    %v1402 = vld.sshfl [vmem:[#allocation1] sm:$0xff pattern:$0x88888901]
    %s1403 = scalar_lea.vmem [#allocation1], 16
    %v1404 = vld.sshfl [vmem:[%s1403] sm:$0xff pattern:$0x89011111]
    %vm1405 = vcmask 1047556
    %v1406 = vsel %vm1405, %v1404, %v1402
    %1407 = vrot.lane.b32.xlu0 %v1406, 106
    %v1408 = vpop.permute.xlu0 %1407
    %vm1409 = vcmask 15360
    %s1410 = scalar_lea.vmem [#allocation0], 97
    %1411 = vst.msk [vmem:[%s1410] ss:$-56 sm:$0x3] %vm1409, %v1408
    %s1412 = scalar_lea.vmem [#allocation0], 321
    %1413 = vst.msk [vmem:[%s1412] ss:$-56 sm:$0xc] %vm1409, %v1408
    %s1414 = scalar_lea.vmem [#allocation0], 545
    %1415 = vst.msk [vmem:[%s1414] ss:$-56 sm:$0x30] %vm1409, %v1408
    %s1416 = scalar_lea.vmem [#allocation0], 769
    %1417 = vst.msk [vmem:[%s1416] ss:$-56 sm:$0xc0] %vm1409, %v1408
    %s1418 = scalar_lea.vmem [#allocation1], 32
    %v1419 = vld.sshfl [vmem:[%s1418] sm:$0xff pattern:$0x88888901]
    %s1420 = scalar_lea.vmem [#allocation1], 48
    %v1421 = vld.sshfl [vmem:[%s1420] sm:$0xff pattern:$0x89011111]
    %vm1422 = vcmask 1047556
    %v1423 = vsel %vm1422, %v1421, %v1419
    %1424 = vrot.lane.b32.xlu0 %v1423, 106
    %v1425 = vpop.permute.xlu0 %1424
    %vm1426 = vcmask 15360
    %s1427 = scalar_lea.vmem [#allocation0], 545
    %1428 = vst.msk [vmem:[%s1427] ss:$-56 sm:$0x3] %vm1426, %v1425
    %s1429 = scalar_lea.vmem [#allocation0], 769
    %1430 = vst.msk [vmem:[%s1429] ss:$-56 sm:$0xc] %vm1426, %v1425
    %s1431 = scalar_lea.vmem [#allocation0], 993
    %1432 = vst.msk [vmem:[%s1431] ss:$-56 sm:$0x30] %vm1426, %v1425
    %s1433 = scalar_lea.vmem [#allocation0], 1217
    %1434 = vst.msk [vmem:[%s1433] ss:$-56 sm:$0xc0] %vm1426, %v1425
    %s1435 = scalar_lea.vmem [#allocation1], 64
    %v1436 = vld.sshfl [vmem:[%s1435] sm:$0xff pattern:$0x88888901]
    %s1437 = scalar_lea.vmem [#allocation1], 80
    %v1438 = vld.sshfl [vmem:[%s1437] sm:$0xff pattern:$0x89011111]
    %vm1439 = vcmask 1047556
    %v1440 = vsel %vm1439, %v1438, %v1436
    %1441 = vrot.lane.b32.xlu0 %v1440, 106
    %v1442 = vpop.permute.xlu0 %1441
    %vm1443 = vcmask 15360
    %s1444 = scalar_lea.vmem [#allocation0], 993
    %1445 = vst.msk [vmem:[%s1444] ss:$-56 sm:$0x3] %vm1443, %v1442
    %s1446 = scalar_lea.vmem [#allocation0], 1217
    %1447 = vst.msk [vmem:[%s1446] ss:$-56 sm:$0xc] %vm1443, %v1442
    %s1448 = scalar_lea.vmem [#allocation0], 1441
    %1449 = vst.msk [vmem:[%s1448] ss:$-56 sm:$0x30] %vm1443, %v1442
    %s1450 = scalar_lea.vmem [#allocation0], 1665
    %1451 = vst.msk [vmem:[%s1450] ss:$-56 sm:$0xc0] %vm1443, %v1442
    %s1452 = scalar_lea.vmem [#allocation1], 96
    %v1453 = vld.sshfl [vmem:[%s1452] sm:$0xff pattern:$0x88888901]
    %s1454 = scalar_lea.vmem [#allocation1], 112
    %v1455 = vld.sshfl [vmem:[%s1454] sm:$0xff pattern:$0x89011111]
    %vm1456 = vcmask 1047556
    %v1457 = vsel %vm1456, %v1455, %v1453
    %1458 = vrot.lane.b32.xlu0 %v1457, 106
    %v1459 = vpop.permute.xlu0 %1458
    %vm1460 = vcmask 15360
    %s1461 = scalar_lea.vmem [#allocation0], 1441
    %1462 = vst.msk [vmem:[%s1461] ss:$-56 sm:$0x3] %vm1460, %v1459
    %s1463 = scalar_lea.vmem [#allocation0], 1665
    %1464 = vst.msk [vmem:[%s1463] ss:$-56 sm:$0xc] %vm1460, %v1459
    %s1465 = scalar_lea.vmem [#allocation0], 1889
    %1466 = vst.msk [vmem:[%s1465] ss:$-56 sm:$0x30] %vm1460, %v1459
    %s1467 = scalar_lea.vmem [#allocation0], 2113
    %1468 = vst.msk [vmem:[%s1467] ss:$-56 sm:$0xc0] %vm1460, %v1459
    %s1469 = scalar_lea.vmem [#allocation1], 128
    %v1470 = vld.sshfl [vmem:[%s1469] sm:$0xff pattern:$0x88888901]
    %s1471 = scalar_lea.vmem [#allocation1], 144
    %v1472 = vld.sshfl [vmem:[%s1471] sm:$0xff pattern:$0x89011111]
    %vm1473 = vcmask 1047556
    %v1474 = vsel %vm1473, %v1472, %v1470
    %1475 = vrot.lane.b32.xlu0 %v1474, 106
    %v1476 = vpop.permute.xlu0 %1475
    %vm1477 = vcmask 15360
    %s1478 = scalar_lea.vmem [#allocation0], 1889
    %1479 = vst.msk [vmem:[%s1478] ss:$-56 sm:$0x3] %vm1477, %v1476
    %s1480 = scalar_lea.vmem [#allocation0], 2113
    %1481 = vst.msk [vmem:[%s1480] ss:$-56 sm:$0xc] %vm1477, %v1476
    %s1482 = scalar_lea.vmem [#allocation0], 2337
    %1483 = vst.msk [vmem:[%s1482] ss:$-56 sm:$0x30] %vm1477, %v1476
    %s1484 = scalar_lea.vmem [#allocation0], 2561
    %1485 = vst.msk [vmem:[%s1484] ss:$-56 sm:$0xc0] %vm1477, %v1476
    %s1486 = scalar_lea.vmem [#allocation1], 160
    %v1487 = vld.sshfl [vmem:[%s1486] sm:$0xff pattern:$0x88888901]
    %s1488 = scalar_lea.vmem [#allocation1], 176
    %v1489 = vld.sshfl [vmem:[%s1488] sm:$0xff pattern:$0x89011111]
    %vm1490 = vcmask 1047556
    %v1491 = vsel %vm1490, %v1489, %v1487
    %1492 = vrot.lane.b32.xlu0 %v1491, 106
    %v1493 = vpop.permute.xlu0 %1492
    %vm1494 = vcmask 15360
    %s1495 = scalar_lea.vmem [#allocation0], 2337
    %1496 = vst.msk [vmem:[%s1495] ss:$-56 sm:$0x3] %vm1494, %v1493
    %s1497 = scalar_lea.vmem [#allocation0], 2561
    %1498 = vst.msk [vmem:[%s1497] ss:$-56 sm:$0xc] %vm1494, %v1493
    %s1499 = scalar_lea.vmem [#allocation0], 2785
    %1500 = vst.msk [vmem:[%s1499] ss:$-56 sm:$0x30] %vm1494, %v1493
    %s1501 = scalar_lea.vmem [#allocation0], 3009
    %1502 = vst.msk [vmem:[%s1501] ss:$-56 sm:$0xc0] %vm1494, %v1493
    %s1503 = scalar_lea.vmem [#allocation1], 192
    %v1504 = vld.sshfl [vmem:[%s1503] sm:$0xff pattern:$0x88888901]
    %s1505 = scalar_lea.vmem [#allocation1], 208
    %v1506 = vld.sshfl [vmem:[%s1505] sm:$0xff pattern:$0x89011111]
    %vm1507 = vcmask 1047556
    %v1508 = vsel %vm1507, %v1506, %v1504
    %1509 = vrot.lane.b32.xlu0 %v1508, 106
    %v1510 = vpop.permute.xlu0 %1509
    %vm1511 = vcmask 15360
    %s1512 = scalar_lea.vmem [#allocation0], 2785
    %1513 = vst.msk [vmem:[%s1512] ss:$-56 sm:$0x3] %vm1511, %v1510
    %s1514 = scalar_lea.vmem [#allocation0], 3009
    %1515 = vst.msk [vmem:[%s1514] ss:$-56 sm:$0xc] %vm1511, %v1510
    %s1516 = scalar_lea.vmem [#allocation0], 3233
    %1517 = vst.msk [vmem:[%s1516] ss:$-56 sm:$0x30] %vm1511, %v1510
    %s1518 = scalar_lea.vmem [#allocation0], 3457
    %1519 = vst.msk [vmem:[%s1518] ss:$-56 sm:$0xc0] %vm1511, %v1510
    %v1520 = vld.sshfl [vmem:[#allocation1] sm:$0xff pattern:$0x99999018]
    %s1521 = scalar_lea.vmem [#allocation1], 16
    %v1522 = vld.sshfl [vmem:[%s1521] sm:$0xff pattern:$0x90188888]
    %vm1523 = vcmask 1047556
    %v1524 = vsel %vm1523, %v1522, %v1520
    %1525 = vrot.lane.b32.xlu0 %v1524, 104
    %v1526 = vpop.permute.xlu0 %1525
    %vm1527 = vcmask 15360
    %s1528 = scalar_lea.vmem [#allocation0], 160
    %1529 = vst.msk [vmem:[%s1528] ss:$-56 sm:$0x7] %vm1527, %v1526
    %s1530 = scalar_lea.vmem [#allocation0], 4294967008
    %1531 = vst.msk [vmem:[%s1530] ss:$168 sm:$0x18] %vm1527, %v1526
    %s1532 = scalar_lea.vmem [#allocation0], 608
    %1533 = vst.msk [vmem:[%s1532] ss:$-56 sm:$0x60] %vm1527, %v1526
    %s1534 = scalar_lea.vmem [#allocation0], 433
    %1535 = vst.msk [vmem:[%s1534] sm:$0x80] %vm1527, %v1526
    %s1536 = scalar_lea.vmem [#allocation1], 32
    %v1537 = vld.sshfl [vmem:[%s1536] sm:$0xff pattern:$0x99999018]
    %s1538 = scalar_lea.vmem [#allocation1], 48
    %v1539 = vld.sshfl [vmem:[%s1538] sm:$0xff pattern:$0x90188888]
    %vm1540 = vcmask 1047556
    %v1541 = vsel %vm1540, %v1539, %v1537
    %1542 = vrot.lane.b32.xlu0 %v1541, 104
    %v1543 = vpop.permute.xlu0 %1542
    %vm1544 = vcmask 15360
    %s1545 = scalar_lea.vmem [#allocation0], 608
    %1546 = vst.msk [vmem:[%s1545] ss:$-56 sm:$0x7] %vm1544, %v1543
    %s1547 = scalar_lea.vmem [#allocation0], 160
    %1548 = vst.msk [vmem:[%s1547] ss:$168 sm:$0x18] %vm1544, %v1543
    %s1549 = scalar_lea.vmem [#allocation0], 1056
    %1550 = vst.msk [vmem:[%s1549] ss:$-56 sm:$0x60] %vm1544, %v1543
    %s1551 = scalar_lea.vmem [#allocation0], 881
    %1552 = vst.msk [vmem:[%s1551] sm:$0x80] %vm1544, %v1543
    %s1553 = scalar_lea.vmem [#allocation1], 64
    %v1554 = vld.sshfl [vmem:[%s1553] sm:$0xff pattern:$0x99999018]
    %s1555 = scalar_lea.vmem [#allocation1], 80
    %v1556 = vld.sshfl [vmem:[%s1555] sm:$0xff pattern:$0x90188888]
    %vm1557 = vcmask 1047556
    %v1558 = vsel %vm1557, %v1556, %v1554
    %1559 = vrot.lane.b32.xlu0 %v1558, 104
    %v1560 = vpop.permute.xlu0 %1559
    %vm1561 = vcmask 15360
    %s1562 = scalar_lea.vmem [#allocation0], 1056
    %1563 = vst.msk [vmem:[%s1562] ss:$-56 sm:$0x7] %vm1561, %v1560
    %s1564 = scalar_lea.vmem [#allocation0], 608
    %1565 = vst.msk [vmem:[%s1564] ss:$168 sm:$0x18] %vm1561, %v1560
    %s1566 = scalar_lea.vmem [#allocation0], 1504
    %1567 = vst.msk [vmem:[%s1566] ss:$-56 sm:$0x60] %vm1561, %v1560
    %s1568 = scalar_lea.vmem [#allocation0], 1329
    %1569 = vst.msk [vmem:[%s1568] sm:$0x80] %vm1561, %v1560
    %s1570 = scalar_lea.vmem [#allocation1], 96
    %v1571 = vld.sshfl [vmem:[%s1570] sm:$0xff pattern:$0x99999018]
    %s1572 = scalar_lea.vmem [#allocation1], 112
    %v1573 = vld.sshfl [vmem:[%s1572] sm:$0xff pattern:$0x90188888]
    %vm1574 = vcmask 1047556
    %v1575 = vsel %vm1574, %v1573, %v1571
    %1576 = vrot.lane.b32.xlu0 %v1575, 104
    %v1577 = vpop.permute.xlu0 %1576
    %vm1578 = vcmask 15360
    %s1579 = scalar_lea.vmem [#allocation0], 1504
    %1580 = vst.msk [vmem:[%s1579] ss:$-56 sm:$0x7] %vm1578, %v1577
    %s1581 = scalar_lea.vmem [#allocation0], 1056
    %1582 = vst.msk [vmem:[%s1581] ss:$168 sm:$0x18] %vm1578, %v1577
    %s1583 = scalar_lea.vmem [#allocation0], 1952
    %1584 = vst.msk [vmem:[%s1583] ss:$-56 sm:$0x60] %vm1578, %v1577
    %s1585 = scalar_lea.vmem [#allocation0], 1777
    %1586 = vst.msk [vmem:[%s1585] sm:$0x80] %vm1578, %v1577
    %s1587 = scalar_lea.vmem [#allocation1], 128
    %v1588 = vld.sshfl [vmem:[%s1587] sm:$0xff pattern:$0x99999018]
    %s1589 = scalar_lea.vmem [#allocation1], 144
    %v1590 = vld.sshfl [vmem:[%s1589] sm:$0xff pattern:$0x90188888]
    %vm1591 = vcmask 1047556
    %v1592 = vsel %vm1591, %v1590, %v1588
    %1593 = vrot.lane.b32.xlu0 %v1592, 104
    %v1594 = vpop.permute.xlu0 %1593
    %vm1595 = vcmask 15360
    %s1596 = scalar_lea.vmem [#allocation0], 1952
    %1597 = vst.msk [vmem:[%s1596] ss:$-56 sm:$0x7] %vm1595, %v1594
    %s1598 = scalar_lea.vmem [#allocation0], 1504
    %1599 = vst.msk [vmem:[%s1598] ss:$168 sm:$0x18] %vm1595, %v1594
    %s1600 = scalar_lea.vmem [#allocation0], 2400
    %1601 = vst.msk [vmem:[%s1600] ss:$-56 sm:$0x60] %vm1595, %v1594
    %s1602 = scalar_lea.vmem [#allocation0], 2225
    %1603 = vst.msk [vmem:[%s1602] sm:$0x80] %vm1595, %v1594
    %s1604 = scalar_lea.vmem [#allocation1], 160
    %v1605 = vld.sshfl [vmem:[%s1604] sm:$0xff pattern:$0x99999018]
    %s1606 = scalar_lea.vmem [#allocation1], 176
    %v1607 = vld.sshfl [vmem:[%s1606] sm:$0xff pattern:$0x90188888]
    %vm1608 = vcmask 1047556
    %v1609 = vsel %vm1608, %v1607, %v1605
    %1610 = vrot.lane.b32.xlu0 %v1609, 104
    %v1611 = vpop.permute.xlu0 %1610
    %vm1612 = vcmask 15360
    %s1613 = scalar_lea.vmem [#allocation0], 2400
    %1614 = vst.msk [vmem:[%s1613] ss:$-56 sm:$0x7] %vm1612, %v1611
    %s1615 = scalar_lea.vmem [#allocation0], 1952
    %1616 = vst.msk [vmem:[%s1615] ss:$168 sm:$0x18] %vm1612, %v1611
    %s1617 = scalar_lea.vmem [#allocation0], 2848
    %1618 = vst.msk [vmem:[%s1617] ss:$-56 sm:$0x60] %vm1612, %v1611
    %s1619 = scalar_lea.vmem [#allocation0], 2673
    %1620 = vst.msk [vmem:[%s1619] sm:$0x80] %vm1612, %v1611
    %s1621 = scalar_lea.vmem [#allocation1], 192
    %v1622 = vld.sshfl [vmem:[%s1621] sm:$0xff pattern:$0x99999018]
    %s1623 = scalar_lea.vmem [#allocation1], 208
    %v1624 = vld.sshfl [vmem:[%s1623] sm:$0xff pattern:$0x90188888]
    %vm1625 = vcmask 1047556
    %v1626 = vsel %vm1625, %v1624, %v1622
    %1627 = vrot.lane.b32.xlu0 %v1626, 104
    %v1628 = vpop.permute.xlu0 %1627
    %vm1629 = vcmask 15360
    %s1630 = scalar_lea.vmem [#allocation0], 2848
    %1631 = vst.msk [vmem:[%s1630] ss:$-56 sm:$0x7] %vm1629, %v1628
    %s1632 = scalar_lea.vmem [#allocation0], 2400
    %1633 = vst.msk [vmem:[%s1632] ss:$168 sm:$0x18] %vm1629, %v1628
    %s1634 = scalar_lea.vmem [#allocation0], 3296
    %1635 = vst.msk [vmem:[%s1634] ss:$-56 sm:$0x60] %vm1629, %v1628
    %s1636 = scalar_lea.vmem [#allocation0], 3121
    %1637 = vst.msk [vmem:[%s1636] sm:$0x80] %vm1629, %v1628
    %v1638 = vld.sshfl [vmem:[#allocation1] sm:$0xff pattern:$0x99999018]
    %s1639 = scalar_lea.vmem [#allocation1], 16
    %v1640 = vld.sshfl [vmem:[%s1639] sm:$0xff pattern:$0x90188888]
    %vm1641 = vcmask 1047556
    %v1642 = vsel %vm1641, %v1640, %v1638
    %1643 = vrot.lane.b32.xlu0 %v1642, 102
    %v1644 = vpop.permute.xlu0 %1643
    %vm1645 = vcmask 15360
    %s1646 = scalar_lea.vmem [#allocation0], 161
    %1647 = vst.msk [vmem:[%s1646] ss:$-56 sm:$0x7] %vm1645, %v1644
    %s1648 = scalar_lea.vmem [#allocation0], 4294967009
    %1649 = vst.msk [vmem:[%s1648] ss:$168 sm:$0x18] %vm1645, %v1644
    %s1650 = scalar_lea.vmem [#allocation0], 609
    %1651 = vst.msk [vmem:[%s1650] ss:$-56 sm:$0x60] %vm1645, %v1644
    %s1652 = scalar_lea.vmem [#allocation0], 434
    %1653 = vst.msk [vmem:[%s1652] sm:$0x80] %vm1645, %v1644
    %s1654 = scalar_lea.vmem [#allocation1], 32
    %v1655 = vld.sshfl [vmem:[%s1654] sm:$0xff pattern:$0x99999018]
    %s1656 = scalar_lea.vmem [#allocation1], 48
    %v1657 = vld.sshfl [vmem:[%s1656] sm:$0xff pattern:$0x90188888]
    %vm1658 = vcmask 1047556
    %v1659 = vsel %vm1658, %v1657, %v1655
    %1660 = vrot.lane.b32.xlu0 %v1659, 102
    %v1661 = vpop.permute.xlu0 %1660
    %vm1662 = vcmask 15360
    %s1663 = scalar_lea.vmem [#allocation0], 609
    %1664 = vst.msk [vmem:[%s1663] ss:$-56 sm:$0x7] %vm1662, %v1661
    %s1665 = scalar_lea.vmem [#allocation0], 161
    %1666 = vst.msk [vmem:[%s1665] ss:$168 sm:$0x18] %vm1662, %v1661
    %s1667 = scalar_lea.vmem [#allocation0], 1057
    %1668 = vst.msk [vmem:[%s1667] ss:$-56 sm:$0x60] %vm1662, %v1661
    %s1669 = scalar_lea.vmem [#allocation0], 882
    %1670 = vst.msk [vmem:[%s1669] sm:$0x80] %vm1662, %v1661
    %s1671 = scalar_lea.vmem [#allocation1], 64
    %v1672 = vld.sshfl [vmem:[%s1671] sm:$0xff pattern:$0x99999018]
    %s1673 = scalar_lea.vmem [#allocation1], 80
    %v1674 = vld.sshfl [vmem:[%s1673] sm:$0xff pattern:$0x90188888]
    %vm1675 = vcmask 1047556
    %v1676 = vsel %vm1675, %v1674, %v1672
    %1677 = vrot.lane.b32.xlu0 %v1676, 102
    %v1678 = vpop.permute.xlu0 %1677
    %vm1679 = vcmask 15360
    %s1680 = scalar_lea.vmem [#allocation0], 1057
    %1681 = vst.msk [vmem:[%s1680] ss:$-56 sm:$0x7] %vm1679, %v1678
    %s1682 = scalar_lea.vmem [#allocation0], 609
    %1683 = vst.msk [vmem:[%s1682] ss:$168 sm:$0x18] %vm1679, %v1678
    %s1684 = scalar_lea.vmem [#allocation0], 1505
    %1685 = vst.msk [vmem:[%s1684] ss:$-56 sm:$0x60] %vm1679, %v1678
    %s1686 = scalar_lea.vmem [#allocation0], 1330
    %1687 = vst.msk [vmem:[%s1686] sm:$0x80] %vm1679, %v1678
    %s1688 = scalar_lea.vmem [#allocation1], 96
    %v1689 = vld.sshfl [vmem:[%s1688] sm:$0xff pattern:$0x99999018]
    %s1690 = scalar_lea.vmem [#allocation1], 112
    %v1691 = vld.sshfl [vmem:[%s1690] sm:$0xff pattern:$0x90188888]
    %vm1692 = vcmask 1047556
    %v1693 = vsel %vm1692, %v1691, %v1689
    %1694 = vrot.lane.b32.xlu0 %v1693, 102
    %v1695 = vpop.permute.xlu0 %1694
    %vm1696 = vcmask 15360
    %s1697 = scalar_lea.vmem [#allocation0], 1505
    %1698 = vst.msk [vmem:[%s1697] ss:$-56 sm:$0x7] %vm1696, %v1695
    %s1699 = scalar_lea.vmem [#allocation0], 1057
    %1700 = vst.msk [vmem:[%s1699] ss:$168 sm:$0x18] %vm1696, %v1695
    %s1701 = scalar_lea.vmem [#allocation0], 1953
    %1702 = vst.msk [vmem:[%s1701] ss:$-56 sm:$0x60] %vm1696, %v1695
    %s1703 = scalar_lea.vmem [#allocation0], 1778
    %1704 = vst.msk [vmem:[%s1703] sm:$0x80] %vm1696, %v1695
    %s1705 = scalar_lea.vmem [#allocation1], 128
    %v1706 = vld.sshfl [vmem:[%s1705] sm:$0xff pattern:$0x99999018]
    %s1707 = scalar_lea.vmem [#allocation1], 144
    %v1708 = vld.sshfl [vmem:[%s1707] sm:$0xff pattern:$0x90188888]
    %vm1709 = vcmask 1047556
    %v1710 = vsel %vm1709, %v1708, %v1706
    %1711 = vrot.lane.b32.xlu0 %v1710, 102
    %v1712 = vpop.permute.xlu0 %1711
    %vm1713 = vcmask 15360
    %s1714 = scalar_lea.vmem [#allocation0], 1953
    %1715 = vst.msk [vmem:[%s1714] ss:$-56 sm:$0x7] %vm1713, %v1712
    %s1716 = scalar_lea.vmem [#allocation0], 1505
    %1717 = vst.msk [vmem:[%s1716] ss:$168 sm:$0x18] %vm1713, %v1712
    %s1718 = scalar_lea.vmem [#allocation0], 2401
    %1719 = vst.msk [vmem:[%s1718] ss:$-56 sm:$0x60] %vm1713, %v1712
    %s1720 = scalar_lea.vmem [#allocation0], 2226
    %1721 = vst.msk [vmem:[%s1720] sm:$0x80] %vm1713, %v1712
    %s1722 = scalar_lea.vmem [#allocation1], 160
    %v1723 = vld.sshfl [vmem:[%s1722] sm:$0xff pattern:$0x99999018]
    %s1724 = scalar_lea.vmem [#allocation1], 176
    %v1725 = vld.sshfl [vmem:[%s1724] sm:$0xff pattern:$0x90188888]
    %vm1726 = vcmask 1047556
    %v1727 = vsel %vm1726, %v1725, %v1723
    %1728 = vrot.lane.b32.xlu0 %v1727, 102
    %v1729 = vpop.permute.xlu0 %1728
    %vm1730 = vcmask 15360
    %s1731 = scalar_lea.vmem [#allocation0], 2401
    %1732 = vst.msk [vmem:[%s1731] ss:$-56 sm:$0x7] %vm1730, %v1729
    %s1733 = scalar_lea.vmem [#allocation0], 1953
    %1734 = vst.msk [vmem:[%s1733] ss:$168 sm:$0x18] %vm1730, %v1729
    %s1735 = scalar_lea.vmem [#allocation0], 2849
    %1736 = vst.msk [vmem:[%s1735] ss:$-56 sm:$0x60] %vm1730, %v1729
    %s1737 = scalar_lea.vmem [#allocation0], 2674
    %1738 = vst.msk [vmem:[%s1737] sm:$0x80] %vm1730, %v1729
    %s1739 = scalar_lea.vmem [#allocation1], 192
    %v1740 = vld.sshfl [vmem:[%s1739] sm:$0xff pattern:$0x99999018]
    %s1741 = scalar_lea.vmem [#allocation1], 208
    %v1742 = vld.sshfl [vmem:[%s1741] sm:$0xff pattern:$0x90188888]
    %vm1743 = vcmask 1047556
    %v1744 = vsel %vm1743, %v1742, %v1740
    %1745 = vrot.lane.b32.xlu0 %v1744, 102
    %v1746 = vpop.permute.xlu0 %1745
    %vm1747 = vcmask 15360
    %s1748 = scalar_lea.vmem [#allocation0], 2849
    %1749 = vst.msk [vmem:[%s1748] ss:$-56 sm:$0x7] %vm1747, %v1746
    %s1750 = scalar_lea.vmem [#allocation0], 2401
    %1751 = vst.msk [vmem:[%s1750] ss:$168 sm:$0x18] %vm1747, %v1746
    %s1752 = scalar_lea.vmem [#allocation0], 3297
    %1753 = vst.msk [vmem:[%s1752] ss:$-56 sm:$0x60] %vm1747, %v1746
    %s1754 = scalar_lea.vmem [#allocation0], 3122
    %1755 = vst.msk [vmem:[%s1754] sm:$0x80] %vm1747, %v1746
    %s1757 = sshllo.u32 0, 2
    %v1759 = vld [vmem:[#allocation0] sm:%s1757]
    %s1760 = sshllo.u32 0, 2
    %1761 = vst [vmem:[%s1] sm:%s1760] %v1759
    %s1762 = scalar_lea.vmem [#allocation0], 8
    %v1763 = vld [vmem:[%s1762] sm:%s1757]
    %s1764 = sshllo.u32 0, 2
    %s1765 = scalar_lea.vmem %s1, 2
    %1766 = vst [vmem:[%s1765] sm:%s1764] %v1763
    %s1767 = scalar_lea.vmem [#allocation0], 16
    %v1768 = vld [vmem:[%s1767] sm:%s1757]
    %s1769 = sshllo.u32 0, 2
    %s1770 = smul.addr 2, 2
    %s1771 = scalar_lea.vmem %s1, %s1770
    %1772 = vst [vmem:[%s1771] sm:%s1769] %v1768
    %s1773 = scalar_lea.vmem [#allocation0], 24
    %v1774 = vld [vmem:[%s1773] sm:%s1757]
    %s1775 = sshllo.u32 0, 2
    %s1776 = smul.addr 2, 3
    %s1777 = scalar_lea.vmem %s1, %s1776
    %1778 = vst [vmem:[%s1777] sm:%s1775] %v1774
    %s1779 = scalar_lea.vmem [#allocation0], 32
    %v1780 = vld [vmem:[%s1779] sm:%s1757]
    %s1781 = sshllo.u32 0, 2
    %s1782 = smul.addr 2, 4
    %s1783 = scalar_lea.vmem %s1, %s1782
    %1784 = vst [vmem:[%s1783] sm:%s1781] %v1780
    %s1785 = scalar_lea.vmem [#allocation0], 40
    %v1786 = vld [vmem:[%s1785] sm:%s1757]
    %s1787 = sshllo.u32 0, 2
    %s1788 = smul.addr 2, 5
    %s1789 = scalar_lea.vmem %s1, %s1788
    %1790 = vst [vmem:[%s1789] sm:%s1787] %v1786
    %s1791 = scalar_lea.vmem [#allocation0], 48
    %v1792 = vld [vmem:[%s1791] sm:%s1757]
    %s1793 = sshllo.u32 0, 2
    %s1794 = smul.addr 2, 6
    %s1795 = scalar_lea.vmem %s1, %s1794
    %1796 = vst [vmem:[%s1795] sm:%s1793] %v1792
    %s1797 = scalar_lea.vmem [#allocation0], 56
    %v1798 = vld [vmem:[%s1797] sm:%s1757]
    %s1799 = sshllo.u32 0, 2
    %s1800 = smul.addr 2, 7
    %s1801 = scalar_lea.vmem %s1, %s1800
    %1802 = vst [vmem:[%s1801] sm:%s1799] %v1798
    %s1803 = scalar_lea.vmem [#allocation0], 64
    %v1804 = vld [vmem:[%s1803] sm:%s1757]
    %s1805 = sshllo.u32 0, 2
    %s1806 = smul.addr 2, 8
    %s1807 = scalar_lea.vmem %s1, %s1806
    %1808 = vst [vmem:[%s1807] sm:%s1805] %v1804
    %s1809 = scalar_lea.vmem [#allocation0], 72
    %v1810 = vld [vmem:[%s1809] sm:%s1757]
    %s1811 = sshllo.u32 0, 2
    %s1812 = smul.addr 2, 9
    %s1813 = scalar_lea.vmem %s1, %s1812
    %1814 = vst [vmem:[%s1813] sm:%s1811] %v1810
    %s1815 = scalar_lea.vmem [#allocation0], 80
    %v1816 = vld [vmem:[%s1815] sm:%s1757]
    %s1817 = sshllo.u32 0, 2
    %s1818 = smul.addr 2, 10
    %s1819 = scalar_lea.vmem %s1, %s1818
    %1820 = vst [vmem:[%s1819] sm:%s1817] %v1816
    %s1821 = scalar_lea.vmem [#allocation0], 88
    %v1822 = vld [vmem:[%s1821] sm:%s1757]
    %s1823 = sshllo.u32 0, 2
    %s1824 = smul.addr 2, 11
    %s1825 = scalar_lea.vmem %s1, %s1824
    %1826 = vst [vmem:[%s1825] sm:%s1823] %v1822
    %s1827 = scalar_lea.vmem [#allocation0], 96
    %v1828 = vld [vmem:[%s1827] sm:%s1757]
    %s1829 = sshllo.u32 0, 2
    %s1830 = smul.addr 2, 12
    %s1831 = scalar_lea.vmem %s1, %s1830
    %1832 = vst [vmem:[%s1831] sm:%s1829] %v1828
    %s1833 = scalar_lea.vmem [#allocation0], 104
    %v1834 = vld [vmem:[%s1833] sm:%s1757]
    %s1835 = sshllo.u32 0, 2
    %s1836 = smul.addr 2, 13
    %s1837 = scalar_lea.vmem %s1, %s1836
    %1838 = vst [vmem:[%s1837] sm:%s1835] %v1834
    %s1839 = scalar_lea.vmem [#allocation0], 112
    %v1840 = vld [vmem:[%s1839] sm:%s1757]
    %s1841 = sshllo.u32 0, 2
    %s1842 = smul.addr 2, 14
    %s1843 = scalar_lea.vmem %s1, %s1842
    %1844 = vst [vmem:[%s1843] sm:%s1841] %v1840
    %s1845 = scalar_lea.vmem [#allocation0], 120
    %v1846 = vld [vmem:[%s1845] sm:%s1757]
    %s1847 = sshllo.u32 0, 2
    %s1848 = smul.addr 2, 15
    %s1849 = scalar_lea.vmem %s1, %s1848
    %1850 = vst [vmem:[%s1849] sm:%s1847] %v1846
    %s1851 = scalar_lea.vmem [#allocation0], 128
    %v1852 = vld [vmem:[%s1851] sm:%s1757]
    %s1853 = sshllo.u32 0, 2
    %s1854 = smul.addr 2, 16
    %s1855 = scalar_lea.vmem %s1, %s1854
    %1856 = vst [vmem:[%s1855] sm:%s1853] %v1852
    %s1857 = scalar_lea.vmem [#allocation0], 136
    %v1858 = vld [vmem:[%s1857] sm:%s1757]
    %s1859 = sshllo.u32 0, 2
    %s1860 = smul.addr 2, 17
    %s1861 = scalar_lea.vmem %s1, %s1860
    %1862 = vst [vmem:[%s1861] sm:%s1859] %v1858
    %s1863 = scalar_lea.vmem [#allocation0], 144
    %v1864 = vld [vmem:[%s1863] sm:%s1757]
    %s1865 = sshllo.u32 0, 2
    %s1866 = smul.addr 2, 18
    %s1867 = scalar_lea.vmem %s1, %s1866
    %1868 = vst [vmem:[%s1867] sm:%s1865] %v1864
    %s1869 = scalar_lea.vmem [#allocation0], 152
    %v1870 = vld [vmem:[%s1869] sm:%s1757]
    %s1871 = sshllo.u32 0, 2
    %s1872 = smul.addr 2, 19
    %s1873 = scalar_lea.vmem %s1, %s1872
    %1874 = vst [vmem:[%s1873] sm:%s1871] %v1870
    %s1875 = scalar_lea.vmem [#allocation0], 160
    %v1876 = vld [vmem:[%s1875] sm:%s1757]
    %s1877 = sshllo.u32 0, 2
    %s1878 = smul.addr 2, 20
    %s1879 = scalar_lea.vmem %s1, %s1878
    %1880 = vst [vmem:[%s1879] sm:%s1877] %v1876
    %s1881 = scalar_lea.vmem [#allocation0], 168
    %v1882 = vld [vmem:[%s1881] sm:%s1757]
    %s1883 = sshllo.u32 0, 2
    %s1884 = smul.addr 2, 21
    %s1885 = scalar_lea.vmem %s1, %s1884
    %1886 = vst [vmem:[%s1885] sm:%s1883] %v1882
    %s1887 = scalar_lea.vmem [#allocation0], 176
    %v1888 = vld [vmem:[%s1887] sm:%s1757]
    %s1889 = sshllo.u32 0, 2
    %s1890 = smul.addr 2, 22
    %s1891 = scalar_lea.vmem %s1, %s1890
    %1892 = vst [vmem:[%s1891] sm:%s1889] %v1888
    %s1893 = scalar_lea.vmem [#allocation0], 184
    %v1894 = vld [vmem:[%s1893] sm:%s1757]
    %s1895 = sshllo.u32 0, 2
    %s1896 = smul.addr 2, 23
    %s1897 = scalar_lea.vmem %s1, %s1896
    %1898 = vst [vmem:[%s1897] sm:%s1895] %v1894
    %s1899 = scalar_lea.vmem [#allocation0], 192
    %v1900 = vld [vmem:[%s1899] sm:%s1757]
    %s1901 = sshllo.u32 0, 2
    %s1902 = smul.addr 2, 24
    %s1903 = scalar_lea.vmem %s1, %s1902
    %1904 = vst [vmem:[%s1903] sm:%s1901] %v1900
    %s1905 = scalar_lea.vmem [#allocation0], 200
    %v1906 = vld [vmem:[%s1905] sm:%s1757]
    %s1907 = sshllo.u32 0, 2
    %s1908 = smul.addr 2, 25
    %s1909 = scalar_lea.vmem %s1, %s1908
    %1910 = vst [vmem:[%s1909] sm:%s1907] %v1906
    %s1911 = scalar_lea.vmem [#allocation0], 208
    %v1912 = vld [vmem:[%s1911] sm:%s1757]
    %s1913 = sshllo.u32 0, 2
    %s1914 = smul.addr 2, 26
    %s1915 = scalar_lea.vmem %s1, %s1914
    %1916 = vst [vmem:[%s1915] sm:%s1913] %v1912
    %s1917 = scalar_lea.vmem [#allocation0], 216
    %v1918 = vld [vmem:[%s1917] sm:%s1757]
    %s1919 = sshllo.u32 0, 2
    %s1920 = smul.addr 2, 27
    %s1921 = scalar_lea.vmem %s1, %s1920
    %1922 = vst [vmem:[%s1921] sm:%s1919] %v1918
    %s1923 = scalar_lea.vmem [#allocation0], 224
    %v1924 = vld [vmem:[%s1923] sm:%s1757]
    %s1925 = sshllo.u32 0, 2
    %s1926 = smul.addr 2, 28
    %s1927 = scalar_lea.vmem %s1, %s1926
    %1928 = vst [vmem:[%s1927] sm:%s1925] %v1924
    %s1929 = scalar_lea.vmem [#allocation0], 232
    %v1930 = vld [vmem:[%s1929] sm:%s1757]
    %s1931 = sshllo.u32 0, 2
    %s1932 = smul.addr 2, 29
    %s1933 = scalar_lea.vmem %s1, %s1932
    %1934 = vst [vmem:[%s1933] sm:%s1931] %v1930
    %s1935 = scalar_lea.vmem [#allocation0], 240
    %v1936 = vld [vmem:[%s1935] sm:%s1757]
    %s1937 = sshllo.u32 0, 2
    %s1938 = smul.addr 2, 30
    %s1939 = scalar_lea.vmem %s1, %s1938
    %1940 = vst [vmem:[%s1939] sm:%s1937] %v1936
    %s1941 = scalar_lea.vmem [#allocation0], 248
    %v1942 = vld [vmem:[%s1941] sm:%s1757]
    %s1943 = sshllo.u32 0, 2
    %s1944 = smul.addr 2, 31
    %s1945 = scalar_lea.vmem %s1, %s1944
    %1946 = vst [vmem:[%s1945] sm:%s1943] %v1942
    %s1947 = scalar_lea.vmem [#allocation0], 256
    %v1948 = vld [vmem:[%s1947] sm:%s1757]
    %s1949 = sshllo.u32 0, 2
    %s1950 = smul.addr 2, 32
    %s1951 = scalar_lea.vmem %s1, %s1950
    %1952 = vst [vmem:[%s1951] sm:%s1949] %v1948
    %s1953 = scalar_lea.vmem [#allocation0], 264
    %v1954 = vld [vmem:[%s1953] sm:%s1757]
    %s1955 = sshllo.u32 0, 2
    %s1956 = smul.addr 2, 33
    %s1957 = scalar_lea.vmem %s1, %s1956
    %1958 = vst [vmem:[%s1957] sm:%s1955] %v1954
    %s1959 = scalar_lea.vmem [#allocation0], 272
    %v1960 = vld [vmem:[%s1959] sm:%s1757]
    %s1961 = sshllo.u32 0, 2
    %s1962 = smul.addr 2, 34
    %s1963 = scalar_lea.vmem %s1, %s1962
    %1964 = vst [vmem:[%s1963] sm:%s1961] %v1960
    %s1965 = scalar_lea.vmem [#allocation0], 280
    %v1966 = vld [vmem:[%s1965] sm:%s1757]
    %s1967 = sshllo.u32 0, 2
    %s1968 = smul.addr 2, 35
    %s1969 = scalar_lea.vmem %s1, %s1968
    %1970 = vst [vmem:[%s1969] sm:%s1967] %v1966
    %s1971 = scalar_lea.vmem [#allocation0], 288
    %v1972 = vld [vmem:[%s1971] sm:%s1757]
    %s1973 = sshllo.u32 0, 2
    %s1974 = smul.addr 2, 36
    %s1975 = scalar_lea.vmem %s1, %s1974
    %1976 = vst [vmem:[%s1975] sm:%s1973] %v1972
    %s1977 = scalar_lea.vmem [#allocation0], 296
    %v1978 = vld [vmem:[%s1977] sm:%s1757]
    %s1979 = sshllo.u32 0, 2
    %s1980 = smul.addr 2, 37
    %s1981 = scalar_lea.vmem %s1, %s1980
    %1982 = vst [vmem:[%s1981] sm:%s1979] %v1978
    %s1983 = scalar_lea.vmem [#allocation0], 304
    %v1984 = vld [vmem:[%s1983] sm:%s1757]
    %s1985 = sshllo.u32 0, 2
    %s1986 = smul.addr 2, 38
    %s1987 = scalar_lea.vmem %s1, %s1986
    %1988 = vst [vmem:[%s1987] sm:%s1985] %v1984
    %s1989 = scalar_lea.vmem [#allocation0], 312
    %v1990 = vld [vmem:[%s1989] sm:%s1757]
    %s1991 = sshllo.u32 0, 2
    %s1992 = smul.addr 2, 39
    %s1993 = scalar_lea.vmem %s1, %s1992
    %1994 = vst [vmem:[%s1993] sm:%s1991] %v1990
    %s1995 = scalar_lea.vmem [#allocation0], 320
    %v1996 = vld [vmem:[%s1995] sm:%s1757]
    %s1997 = sshllo.u32 0, 2
    %s1998 = smul.addr 2, 40
    %s1999 = scalar_lea.vmem %s1, %s1998
    %2000 = vst [vmem:[%s1999] sm:%s1997] %v1996
    %s2001 = scalar_lea.vmem [#allocation0], 328
    %v2002 = vld [vmem:[%s2001] sm:%s1757]
    %s2003 = sshllo.u32 0, 2
    %s2004 = smul.addr 2, 41
    %s2005 = scalar_lea.vmem %s1, %s2004
    %2006 = vst [vmem:[%s2005] sm:%s2003] %v2002
    %s2007 = scalar_lea.vmem [#allocation0], 336
    %v2008 = vld [vmem:[%s2007] sm:%s1757]
    %s2009 = sshllo.u32 0, 2
    %s2010 = smul.addr 2, 42
    %s2011 = scalar_lea.vmem %s1, %s2010
    %2012 = vst [vmem:[%s2011] sm:%s2009] %v2008
    %s2013 = scalar_lea.vmem [#allocation0], 344
    %v2014 = vld [vmem:[%s2013] sm:%s1757]
    %s2015 = sshllo.u32 0, 2
    %s2016 = smul.addr 2, 43
    %s2017 = scalar_lea.vmem %s1, %s2016
    %2018 = vst [vmem:[%s2017] sm:%s2015] %v2014
    %s2019 = scalar_lea.vmem [#allocation0], 352
    %v2020 = vld [vmem:[%s2019] sm:%s1757]
    %s2021 = sshllo.u32 0, 2
    %s2022 = smul.addr 2, 44
    %s2023 = scalar_lea.vmem %s1, %s2022
    %2024 = vst [vmem:[%s2023] sm:%s2021] %v2020
    %s2025 = scalar_lea.vmem [#allocation0], 360
    %v2026 = vld [vmem:[%s2025] sm:%s1757]
    %s2027 = sshllo.u32 0, 2
    %s2028 = smul.addr 2, 45
    %s2029 = scalar_lea.vmem %s1, %s2028
    %2030 = vst [vmem:[%s2029] sm:%s2027] %v2026
    %s2031 = scalar_lea.vmem [#allocation0], 368
    %v2032 = vld [vmem:[%s2031] sm:%s1757]
    %s2033 = sshllo.u32 0, 2
    %s2034 = smul.addr 2, 46
    %s2035 = scalar_lea.vmem %s1, %s2034
    %2036 = vst [vmem:[%s2035] sm:%s2033] %v2032
    %s2037 = scalar_lea.vmem [#allocation0], 376
    %v2038 = vld [vmem:[%s2037] sm:%s1757]
    %s2039 = sshllo.u32 0, 2
    %s2040 = smul.addr 2, 47
    %s2041 = scalar_lea.vmem %s1, %s2040
    %2042 = vst [vmem:[%s2041] sm:%s2039] %v2038
    %s2043 = scalar_lea.vmem [#allocation0], 384
    %v2044 = vld [vmem:[%s2043] sm:%s1757]
    %s2045 = sshllo.u32 0, 2
    %s2046 = smul.addr 2, 48
    %s2047 = scalar_lea.vmem %s1, %s2046
    %2048 = vst [vmem:[%s2047] sm:%s2045] %v2044
    %s2049 = scalar_lea.vmem [#allocation0], 392
    %v2050 = vld [vmem:[%s2049] sm:%s1757]
    %s2051 = sshllo.u32 0, 2
    %s2052 = smul.addr 2, 49
    %s2053 = scalar_lea.vmem %s1, %s2052
    %2054 = vst [vmem:[%s2053] sm:%s2051] %v2050
    %s2055 = scalar_lea.vmem [#allocation0], 400
    %v2056 = vld [vmem:[%s2055] sm:%s1757]
    %s2057 = sshllo.u32 0, 2
    %s2058 = smul.addr 2, 50
    %s2059 = scalar_lea.vmem %s1, %s2058
    %2060 = vst [vmem:[%s2059] sm:%s2057] %v2056
    %s2061 = scalar_lea.vmem [#allocation0], 408
    %v2062 = vld [vmem:[%s2061] sm:%s1757]
    %s2063 = sshllo.u32 0, 2
    %s2064 = smul.addr 2, 51
    %s2065 = scalar_lea.vmem %s1, %s2064
    %2066 = vst [vmem:[%s2065] sm:%s2063] %v2062
    %s2067 = scalar_lea.vmem [#allocation0], 416
    %v2068 = vld [vmem:[%s2067] sm:%s1757]
    %s2069 = sshllo.u32 0, 2
    %s2070 = smul.addr 2, 52
    %s2071 = scalar_lea.vmem %s1, %s2070
    %2072 = vst [vmem:[%s2071] sm:%s2069] %v2068
    %s2073 = scalar_lea.vmem [#allocation0], 424
    %v2074 = vld [vmem:[%s2073] sm:%s1757]
    %s2075 = sshllo.u32 0, 2
    %s2076 = smul.addr 2, 53
    %s2077 = scalar_lea.vmem %s1, %s2076
    %2078 = vst [vmem:[%s2077] sm:%s2075] %v2074
    %s2079 = scalar_lea.vmem [#allocation0], 432
    %v2080 = vld [vmem:[%s2079] sm:%s1757]
    %s2081 = sshllo.u32 0, 2
    %s2082 = smul.addr 2, 54
    %s2083 = scalar_lea.vmem %s1, %s2082
    %2084 = vst [vmem:[%s2083] sm:%s2081] %v2080
    %s2085 = scalar_lea.vmem [#allocation0], 440
    %v2086 = vld [vmem:[%s2085] sm:%s1757]
    %s2087 = sshllo.u32 0, 2
    %s2088 = smul.addr 2, 55
    %s2089 = scalar_lea.vmem %s1, %s2088
    %2090 = vst [vmem:[%s2089] sm:%s2087] %v2086
    %s2091 = scalar_lea.vmem [#allocation0], 448
    %v2092 = vld [vmem:[%s2091] sm:%s1757]
    %s2093 = sshllo.u32 0, 2
    %s2094 = smul.addr 2, 56
    %s2095 = scalar_lea.vmem %s1, %s2094
    %2096 = vst [vmem:[%s2095] sm:%s2093] %v2092
    %s2097 = scalar_lea.vmem [#allocation0], 456
    %v2098 = vld [vmem:[%s2097] sm:%s1757]
    %s2099 = sshllo.u32 0, 2
    %s2100 = smul.addr 2, 57
    %s2101 = scalar_lea.vmem %s1, %s2100
    %2102 = vst [vmem:[%s2101] sm:%s2099] %v2098
    %s2103 = scalar_lea.vmem [#allocation0], 464
    %v2104 = vld [vmem:[%s2103] sm:%s1757]
    %s2105 = sshllo.u32 0, 2
    %s2106 = smul.addr 2, 58
    %s2107 = scalar_lea.vmem %s1, %s2106
    %2108 = vst [vmem:[%s2107] sm:%s2105] %v2104
    %s2109 = scalar_lea.vmem [#allocation0], 472
    %v2110 = vld [vmem:[%s2109] sm:%s1757]
    %s2111 = sshllo.u32 0, 2
    %s2112 = smul.addr 2, 59
    %s2113 = scalar_lea.vmem %s1, %s2112
    %2114 = vst [vmem:[%s2113] sm:%s2111] %v2110
    %s2115 = scalar_lea.vmem [#allocation0], 480
    %v2116 = vld [vmem:[%s2115] sm:%s1757]
    %s2117 = sshllo.u32 0, 2
    %s2118 = smul.addr 2, 60
    %s2119 = scalar_lea.vmem %s1, %s2118
    %2120 = vst [vmem:[%s2119] sm:%s2117] %v2116
    %s2121 = scalar_lea.vmem [#allocation0], 488
    %v2122 = vld [vmem:[%s2121] sm:%s1757]
    %s2123 = sshllo.u32 0, 2
    %s2124 = smul.addr 2, 61
    %s2125 = scalar_lea.vmem %s1, %s2124
    %2126 = vst [vmem:[%s2125] sm:%s2123] %v2122
    %s2127 = scalar_lea.vmem [#allocation0], 496
    %v2128 = vld [vmem:[%s2127] sm:%s1757]
    %s2129 = sshllo.u32 0, 2
    %s2130 = smul.addr 2, 62
    %s2131 = scalar_lea.vmem %s1, %s2130
    %2132 = vst [vmem:[%s2131] sm:%s2129] %v2128
    %s2133 = scalar_lea.vmem [#allocation0], 504
    %v2134 = vld [vmem:[%s2133] sm:%s1757]
    %s2135 = sshllo.u32 0, 2
    %s2136 = smul.addr 2, 63
    %s2137 = scalar_lea.vmem %s1, %s2136
    %2138 = vst [vmem:[%s2137] sm:%s2135] %v2134
    %s2139 = scalar_lea.vmem [#allocation0], 512
    %v2140 = vld [vmem:[%s2139] sm:%s1757]
    %s2141 = sshllo.u32 0, 2
    %s2142 = smul.addr 2, 64
    %s2143 = scalar_lea.vmem %s1, %s2142
    %2144 = vst [vmem:[%s2143] sm:%s2141] %v2140
    %s2145 = scalar_lea.vmem [#allocation0], 520
    %v2146 = vld [vmem:[%s2145] sm:%s1757]
    %s2147 = sshllo.u32 0, 2
    %s2148 = smul.addr 2, 65
    %s2149 = scalar_lea.vmem %s1, %s2148
    %2150 = vst [vmem:[%s2149] sm:%s2147] %v2146
    %s2151 = scalar_lea.vmem [#allocation0], 528
    %v2152 = vld [vmem:[%s2151] sm:%s1757]
    %s2153 = sshllo.u32 0, 2
    %s2154 = smul.addr 2, 66
    %s2155 = scalar_lea.vmem %s1, %s2154
    %2156 = vst [vmem:[%s2155] sm:%s2153] %v2152
    %s2157 = scalar_lea.vmem [#allocation0], 536
    %v2158 = vld [vmem:[%s2157] sm:%s1757]
    %s2159 = sshllo.u32 0, 2
    %s2160 = smul.addr 2, 67
    %s2161 = scalar_lea.vmem %s1, %s2160
    %2162 = vst [vmem:[%s2161] sm:%s2159] %v2158
    %s2163 = scalar_lea.vmem [#allocation0], 544
    %v2164 = vld [vmem:[%s2163] sm:%s1757]
    %s2165 = sshllo.u32 0, 2
    %s2166 = smul.addr 2, 68
    %s2167 = scalar_lea.vmem %s1, %s2166
    %2168 = vst [vmem:[%s2167] sm:%s2165] %v2164
    %s2169 = scalar_lea.vmem [#allocation0], 552
    %v2170 = vld [vmem:[%s2169] sm:%s1757]
    %s2171 = sshllo.u32 0, 2
    %s2172 = smul.addr 2, 69
    %s2173 = scalar_lea.vmem %s1, %s2172
    %2174 = vst [vmem:[%s2173] sm:%s2171] %v2170
    %s2175 = scalar_lea.vmem [#allocation0], 560
    %v2176 = vld [vmem:[%s2175] sm:%s1757]
    %s2177 = sshllo.u32 0, 2
    %s2178 = smul.addr 2, 70
    %s2179 = scalar_lea.vmem %s1, %s2178
    %2180 = vst [vmem:[%s2179] sm:%s2177] %v2176
    %s2181 = scalar_lea.vmem [#allocation0], 568
    %v2182 = vld [vmem:[%s2181] sm:%s1757]
    %s2183 = sshllo.u32 0, 2
    %s2184 = smul.addr 2, 71
    %s2185 = scalar_lea.vmem %s1, %s2184
    %2186 = vst [vmem:[%s2185] sm:%s2183] %v2182
    %s2187 = scalar_lea.vmem [#allocation0], 576
    %v2188 = vld [vmem:[%s2187] sm:%s1757]
    %s2189 = sshllo.u32 0, 2
    %s2190 = smul.addr 2, 72
    %s2191 = scalar_lea.vmem %s1, %s2190
    %2192 = vst [vmem:[%s2191] sm:%s2189] %v2188
    %s2193 = scalar_lea.vmem [#allocation0], 584
    %v2194 = vld [vmem:[%s2193] sm:%s1757]
    %s2195 = sshllo.u32 0, 2
    %s2196 = smul.addr 2, 73
    %s2197 = scalar_lea.vmem %s1, %s2196
    %2198 = vst [vmem:[%s2197] sm:%s2195] %v2194
    %s2199 = scalar_lea.vmem [#allocation0], 592
    %v2200 = vld [vmem:[%s2199] sm:%s1757]
    %s2201 = sshllo.u32 0, 2
    %s2202 = smul.addr 2, 74
    %s2203 = scalar_lea.vmem %s1, %s2202
    %2204 = vst [vmem:[%s2203] sm:%s2201] %v2200
    %s2205 = scalar_lea.vmem [#allocation0], 600
    %v2206 = vld [vmem:[%s2205] sm:%s1757]
    %s2207 = sshllo.u32 0, 2
    %s2208 = smul.addr 2, 75
    %s2209 = scalar_lea.vmem %s1, %s2208
    %2210 = vst [vmem:[%s2209] sm:%s2207] %v2206
    %s2211 = scalar_lea.vmem [#allocation0], 608
    %v2212 = vld [vmem:[%s2211] sm:%s1757]
    %s2213 = sshllo.u32 0, 2
    %s2214 = smul.addr 2, 76
    %s2215 = scalar_lea.vmem %s1, %s2214
    %2216 = vst [vmem:[%s2215] sm:%s2213] %v2212
    %s2217 = scalar_lea.vmem [#allocation0], 616
    %v2218 = vld [vmem:[%s2217] sm:%s1757]
    %s2219 = sshllo.u32 0, 2
    %s2220 = smul.addr 2, 77
    %s2221 = scalar_lea.vmem %s1, %s2220
    %2222 = vst [vmem:[%s2221] sm:%s2219] %v2218
    %s2223 = scalar_lea.vmem [#allocation0], 624
    %v2224 = vld [vmem:[%s2223] sm:%s1757]
    %s2225 = sshllo.u32 0, 2
    %s2226 = smul.addr 2, 78
    %s2227 = scalar_lea.vmem %s1, %s2226
    %2228 = vst [vmem:[%s2227] sm:%s2225] %v2224
    %s2229 = scalar_lea.vmem [#allocation0], 632
    %v2230 = vld [vmem:[%s2229] sm:%s1757]
    %s2231 = sshllo.u32 0, 2
    %s2232 = smul.addr 2, 79
    %s2233 = scalar_lea.vmem %s1, %s2232
    %2234 = vst [vmem:[%s2233] sm:%s2231] %v2230
    %s2235 = scalar_lea.vmem [#allocation0], 640
    %v2236 = vld [vmem:[%s2235] sm:%s1757]
    %s2237 = sshllo.u32 0, 2
    %s2238 = smul.addr 2, 80
    %s2239 = scalar_lea.vmem %s1, %s2238
    %2240 = vst [vmem:[%s2239] sm:%s2237] %v2236
    %s2241 = scalar_lea.vmem [#allocation0], 648
    %v2242 = vld [vmem:[%s2241] sm:%s1757]
    %s2243 = sshllo.u32 0, 2
    %s2244 = smul.addr 2, 81
    %s2245 = scalar_lea.vmem %s1, %s2244
    %2246 = vst [vmem:[%s2245] sm:%s2243] %v2242
    %s2247 = scalar_lea.vmem [#allocation0], 656
    %v2248 = vld [vmem:[%s2247] sm:%s1757]
    %s2249 = sshllo.u32 0, 2
    %s2250 = smul.addr 2, 82
    %s2251 = scalar_lea.vmem %s1, %s2250
    %2252 = vst [vmem:[%s2251] sm:%s2249] %v2248
    %s2253 = scalar_lea.vmem [#allocation0], 664
    %v2254 = vld [vmem:[%s2253] sm:%s1757]
    %s2255 = sshllo.u32 0, 2
    %s2256 = smul.addr 2, 83
    %s2257 = scalar_lea.vmem %s1, %s2256
    %2258 = vst [vmem:[%s2257] sm:%s2255] %v2254
    %s2259 = scalar_lea.vmem [#allocation0], 672
    %v2260 = vld [vmem:[%s2259] sm:%s1757]
    %s2261 = sshllo.u32 0, 2
    %s2262 = smul.addr 2, 84
    %s2263 = scalar_lea.vmem %s1, %s2262
    %2264 = vst [vmem:[%s2263] sm:%s2261] %v2260
    %s2265 = scalar_lea.vmem [#allocation0], 680
    %v2266 = vld [vmem:[%s2265] sm:%s1757]
    %s2267 = sshllo.u32 0, 2
    %s2268 = smul.addr 2, 85
    %s2269 = scalar_lea.vmem %s1, %s2268
    %2270 = vst [vmem:[%s2269] sm:%s2267] %v2266
    %s2271 = scalar_lea.vmem [#allocation0], 688
    %v2272 = vld [vmem:[%s2271] sm:%s1757]
    %s2273 = sshllo.u32 0, 2
    %s2274 = smul.addr 2, 86
    %s2275 = scalar_lea.vmem %s1, %s2274
    %2276 = vst [vmem:[%s2275] sm:%s2273] %v2272
    %s2277 = scalar_lea.vmem [#allocation0], 696
    %v2278 = vld [vmem:[%s2277] sm:%s1757]
    %s2279 = sshllo.u32 0, 2
    %s2280 = smul.addr 2, 87
    %s2281 = scalar_lea.vmem %s1, %s2280
    %2282 = vst [vmem:[%s2281] sm:%s2279] %v2278
    %s2283 = scalar_lea.vmem [#allocation0], 704
    %v2284 = vld [vmem:[%s2283] sm:%s1757]
    %s2285 = sshllo.u32 0, 2
    %s2286 = smul.addr 2, 88
    %s2287 = scalar_lea.vmem %s1, %s2286
    %2288 = vst [vmem:[%s2287] sm:%s2285] %v2284
    %s2289 = scalar_lea.vmem [#allocation0], 712
    %v2290 = vld [vmem:[%s2289] sm:%s1757]
    %s2291 = sshllo.u32 0, 2
    %s2292 = smul.addr 2, 89
    %s2293 = scalar_lea.vmem %s1, %s2292
    %2294 = vst [vmem:[%s2293] sm:%s2291] %v2290
    %s2295 = scalar_lea.vmem [#allocation0], 720
    %v2296 = vld [vmem:[%s2295] sm:%s1757]
    %s2297 = sshllo.u32 0, 2
    %s2298 = smul.addr 2, 90
    %s2299 = scalar_lea.vmem %s1, %s2298
    %2300 = vst [vmem:[%s2299] sm:%s2297] %v2296
    %s2301 = scalar_lea.vmem [#allocation0], 728
    %v2302 = vld [vmem:[%s2301] sm:%s1757]
    %s2303 = sshllo.u32 0, 2
    %s2304 = smul.addr 2, 91
    %s2305 = scalar_lea.vmem %s1, %s2304
    %2306 = vst [vmem:[%s2305] sm:%s2303] %v2302
    %s2307 = scalar_lea.vmem [#allocation0], 736
    %v2308 = vld [vmem:[%s2307] sm:%s1757]
    %s2309 = sshllo.u32 0, 2
    %s2310 = smul.addr 2, 92
    %s2311 = scalar_lea.vmem %s1, %s2310
    %2312 = vst [vmem:[%s2311] sm:%s2309] %v2308
    %s2313 = scalar_lea.vmem [#allocation0], 744
    %v2314 = vld [vmem:[%s2313] sm:%s1757]
    %s2315 = sshllo.u32 0, 2
    %s2316 = smul.addr 2, 93
    %s2317 = scalar_lea.vmem %s1, %s2316
    %2318 = vst [vmem:[%s2317] sm:%s2315] %v2314
    %s2319 = scalar_lea.vmem [#allocation0], 752
    %v2320 = vld [vmem:[%s2319] sm:%s1757]
    %s2321 = sshllo.u32 0, 2
    %s2322 = smul.addr 2, 94
    %s2323 = scalar_lea.vmem %s1, %s2322
    %2324 = vst [vmem:[%s2323] sm:%s2321] %v2320
    %s2325 = scalar_lea.vmem [#allocation0], 760
    %v2326 = vld [vmem:[%s2325] sm:%s1757]
    %s2327 = sshllo.u32 0, 2
    %s2328 = smul.addr 2, 95
    %s2329 = scalar_lea.vmem %s1, %s2328
    %2330 = vst [vmem:[%s2329] sm:%s2327] %v2326
    %s2331 = scalar_lea.vmem [#allocation0], 768
    %v2332 = vld [vmem:[%s2331] sm:%s1757]
    %s2333 = sshllo.u32 0, 2
    %s2334 = smul.addr 2, 96
    %s2335 = scalar_lea.vmem %s1, %s2334
    %2336 = vst [vmem:[%s2335] sm:%s2333] %v2332
    %s2337 = scalar_lea.vmem [#allocation0], 776
    %v2338 = vld [vmem:[%s2337] sm:%s1757]
    %s2339 = sshllo.u32 0, 2
    %s2340 = smul.addr 2, 97
    %s2341 = scalar_lea.vmem %s1, %s2340
    %2342 = vst [vmem:[%s2341] sm:%s2339] %v2338
    %s2343 = scalar_lea.vmem [#allocation0], 784
    %v2344 = vld [vmem:[%s2343] sm:%s1757]
    %s2345 = sshllo.u32 0, 2
    %s2346 = smul.addr 2, 98
    %s2347 = scalar_lea.vmem %s1, %s2346
    %2348 = vst [vmem:[%s2347] sm:%s2345] %v2344
    %s2349 = scalar_lea.vmem [#allocation0], 792
    %v2350 = vld [vmem:[%s2349] sm:%s1757]
    %s2351 = sshllo.u32 0, 2
    %s2352 = smul.addr 2, 99
    %s2353 = scalar_lea.vmem %s1, %s2352
    %2354 = vst [vmem:[%s2353] sm:%s2351] %v2350
    %s2355 = scalar_lea.vmem [#allocation0], 800
    %v2356 = vld [vmem:[%s2355] sm:%s1757]
    %s2357 = sshllo.u32 0, 2
    %s2358 = smul.addr 2, 100
    %s2359 = scalar_lea.vmem %s1, %s2358
    %2360 = vst [vmem:[%s2359] sm:%s2357] %v2356
    %s2361 = scalar_lea.vmem [#allocation0], 808
    %v2362 = vld [vmem:[%s2361] sm:%s1757]
    %s2363 = sshllo.u32 0, 2
    %s2364 = smul.addr 2, 101
    %s2365 = scalar_lea.vmem %s1, %s2364
    %2366 = vst [vmem:[%s2365] sm:%s2363] %v2362
    %s2367 = scalar_lea.vmem [#allocation0], 816
    %v2368 = vld [vmem:[%s2367] sm:%s1757]
    %s2369 = sshllo.u32 0, 2
    %s2370 = smul.addr 2, 102
    %s2371 = scalar_lea.vmem %s1, %s2370
    %2372 = vst [vmem:[%s2371] sm:%s2369] %v2368
    %s2373 = scalar_lea.vmem [#allocation0], 824
    %v2374 = vld [vmem:[%s2373] sm:%s1757]
    %s2375 = sshllo.u32 0, 2
    %s2376 = smul.addr 2, 103
    %s2377 = scalar_lea.vmem %s1, %s2376
    %2378 = vst [vmem:[%s2377] sm:%s2375] %v2374
    %s2379 = scalar_lea.vmem [#allocation0], 832
    %v2380 = vld [vmem:[%s2379] sm:%s1757]
    %s2381 = sshllo.u32 0, 2
    %s2382 = smul.addr 2, 104
    %s2383 = scalar_lea.vmem %s1, %s2382
    %2384 = vst [vmem:[%s2383] sm:%s2381] %v2380
    %s2385 = scalar_lea.vmem [#allocation0], 840
    %v2386 = vld [vmem:[%s2385] sm:%s1757]
    %s2387 = sshllo.u32 0, 2
    %s2388 = smul.addr 2, 105
    %s2389 = scalar_lea.vmem %s1, %s2388
    %2390 = vst [vmem:[%s2389] sm:%s2387] %v2386
    %s2391 = scalar_lea.vmem [#allocation0], 848
    %v2392 = vld [vmem:[%s2391] sm:%s1757]
    %s2393 = sshllo.u32 0, 2
    %s2394 = smul.addr 2, 106
    %s2395 = scalar_lea.vmem %s1, %s2394
    %2396 = vst [vmem:[%s2395] sm:%s2393] %v2392
    %s2397 = scalar_lea.vmem [#allocation0], 856
    %v2398 = vld [vmem:[%s2397] sm:%s1757]
    %s2399 = sshllo.u32 0, 2
    %s2400 = smul.addr 2, 107
    %s2401 = scalar_lea.vmem %s1, %s2400
    %2402 = vst [vmem:[%s2401] sm:%s2399] %v2398
    %s2403 = scalar_lea.vmem [#allocation0], 864
    %v2404 = vld [vmem:[%s2403] sm:%s1757]
    %s2405 = sshllo.u32 0, 2
    %s2406 = smul.addr 2, 108
    %s2407 = scalar_lea.vmem %s1, %s2406
    %2408 = vst [vmem:[%s2407] sm:%s2405] %v2404
    %s2409 = scalar_lea.vmem [#allocation0], 872
    %v2410 = vld [vmem:[%s2409] sm:%s1757]
    %s2411 = sshllo.u32 0, 2
    %s2412 = smul.addr 2, 109
    %s2413 = scalar_lea.vmem %s1, %s2412
    %2414 = vst [vmem:[%s2413] sm:%s2411] %v2410
    %s2415 = scalar_lea.vmem [#allocation0], 880
    %v2416 = vld [vmem:[%s2415] sm:%s1757]
    %s2417 = sshllo.u32 0, 2
    %s2418 = smul.addr 2, 110
    %s2419 = scalar_lea.vmem %s1, %s2418
    %2420 = vst [vmem:[%s2419] sm:%s2417] %v2416
    %s2421 = scalar_lea.vmem [#allocation0], 888
    %v2422 = vld [vmem:[%s2421] sm:%s1757]
    %s2423 = sshllo.u32 0, 2
    %s2424 = smul.addr 2, 111
    %s2425 = scalar_lea.vmem %s1, %s2424
    %2426 = vst [vmem:[%s2425] sm:%s2423] %v2422
    %s2427 = scalar_lea.vmem [#allocation0], 896
    %v2428 = vld [vmem:[%s2427] sm:%s1757]
    %s2429 = sshllo.u32 0, 2
    %s2430 = smul.addr 2, 112
    %s2431 = scalar_lea.vmem %s1, %s2430
    %2432 = vst [vmem:[%s2431] sm:%s2429] %v2428
    %s2433 = scalar_lea.vmem [#allocation0], 904
    %v2434 = vld [vmem:[%s2433] sm:%s1757]
    %s2435 = sshllo.u32 0, 2
    %s2436 = smul.addr 2, 113
    %s2437 = scalar_lea.vmem %s1, %s2436
    %2438 = vst [vmem:[%s2437] sm:%s2435] %v2434
    %s2439 = scalar_lea.vmem [#allocation0], 912
    %v2440 = vld [vmem:[%s2439] sm:%s1757]
    %s2441 = sshllo.u32 0, 2
    %s2442 = smul.addr 2, 114
    %s2443 = scalar_lea.vmem %s1, %s2442
    %2444 = vst [vmem:[%s2443] sm:%s2441] %v2440
    %s2445 = scalar_lea.vmem [#allocation0], 920
    %v2446 = vld [vmem:[%s2445] sm:%s1757]
    %s2447 = sshllo.u32 0, 2
    %s2448 = smul.addr 2, 115
    %s2449 = scalar_lea.vmem %s1, %s2448
    %2450 = vst [vmem:[%s2449] sm:%s2447] %v2446
    %s2451 = scalar_lea.vmem [#allocation0], 928
    %v2452 = vld [vmem:[%s2451] sm:%s1757]
    %s2453 = sshllo.u32 0, 2
    %s2454 = smul.addr 2, 116
    %s2455 = scalar_lea.vmem %s1, %s2454
    %2456 = vst [vmem:[%s2455] sm:%s2453] %v2452
    %s2457 = scalar_lea.vmem [#allocation0], 936
    %v2458 = vld [vmem:[%s2457] sm:%s1757]
    %s2459 = sshllo.u32 0, 2
    %s2460 = smul.addr 2, 117
    %s2461 = scalar_lea.vmem %s1, %s2460
    %2462 = vst [vmem:[%s2461] sm:%s2459] %v2458
    %s2463 = scalar_lea.vmem [#allocation0], 944
    %v2464 = vld [vmem:[%s2463] sm:%s1757]
    %s2465 = sshllo.u32 0, 2
    %s2466 = smul.addr 2, 118
    %s2467 = scalar_lea.vmem %s1, %s2466
    %2468 = vst [vmem:[%s2467] sm:%s2465] %v2464
    %s2469 = scalar_lea.vmem [#allocation0], 952
    %v2470 = vld [vmem:[%s2469] sm:%s1757]
    %s2471 = sshllo.u32 0, 2
    %s2472 = smul.addr 2, 119
    %s2473 = scalar_lea.vmem %s1, %s2472
    %2474 = vst [vmem:[%s2473] sm:%s2471] %v2470
    %s2475 = scalar_lea.vmem [#allocation0], 960
    %v2476 = vld [vmem:[%s2475] sm:%s1757]
    %s2477 = sshllo.u32 0, 2
    %s2478 = smul.addr 2, 120
    %s2479 = scalar_lea.vmem %s1, %s2478
    %2480 = vst [vmem:[%s2479] sm:%s2477] %v2476
    %s2481 = scalar_lea.vmem [#allocation0], 968
    %v2482 = vld [vmem:[%s2481] sm:%s1757]
    %s2483 = sshllo.u32 0, 2
    %s2484 = smul.addr 2, 121
    %s2485 = scalar_lea.vmem %s1, %s2484
    %2486 = vst [vmem:[%s2485] sm:%s2483] %v2482
    %s2487 = scalar_lea.vmem [#allocation0], 976
    %v2488 = vld [vmem:[%s2487] sm:%s1757]
    %s2489 = sshllo.u32 0, 2
    %s2490 = smul.addr 2, 122
    %s2491 = scalar_lea.vmem %s1, %s2490
    %2492 = vst [vmem:[%s2491] sm:%s2489] %v2488
    %s2493 = scalar_lea.vmem [#allocation0], 984
    %v2494 = vld [vmem:[%s2493] sm:%s1757]
    %s2495 = sshllo.u32 0, 2
    %s2496 = smul.addr 2, 123
    %s2497 = scalar_lea.vmem %s1, %s2496
    %2498 = vst [vmem:[%s2497] sm:%s2495] %v2494
    %s2499 = scalar_lea.vmem [#allocation0], 992
    %v2500 = vld [vmem:[%s2499] sm:%s1757]
    %s2501 = sshllo.u32 0, 2
    %s2502 = smul.addr 2, 124
    %s2503 = scalar_lea.vmem %s1, %s2502
    %2504 = vst [vmem:[%s2503] sm:%s2501] %v2500
    %s2505 = scalar_lea.vmem [#allocation0], 1000
    %v2506 = vld [vmem:[%s2505] sm:%s1757]
    %s2507 = sshllo.u32 0, 2
    %s2508 = smul.addr 2, 125
    %s2509 = scalar_lea.vmem %s1, %s2508
    %2510 = vst [vmem:[%s2509] sm:%s2507] %v2506
    %s2511 = scalar_lea.vmem [#allocation0], 1008
    %v2512 = vld [vmem:[%s2511] sm:%s1757]
    %s2513 = sshllo.u32 0, 2
    %s2514 = smul.addr 2, 126
    %s2515 = scalar_lea.vmem %s1, %s2514
    %2516 = vst [vmem:[%s2515] sm:%s2513] %v2512
    %s2517 = scalar_lea.vmem [#allocation0], 1016
    %v2518 = vld [vmem:[%s2517] sm:%s1757]
    %s2519 = sshllo.u32 0, 2
    %s2520 = smul.addr 2, 127
    %s2521 = scalar_lea.vmem %s1, %s2520
    %2522 = vst [vmem:[%s2521] sm:%s2519] %v2518
    %s2523 = scalar_lea.vmem [#allocation0], 1024
    %v2524 = vld [vmem:[%s2523] sm:%s1757]
    %s2525 = sshllo.u32 0, 2
    %s2526 = smul.addr 2, 128
    %s2527 = scalar_lea.vmem %s1, %s2526
    %2528 = vst [vmem:[%s2527] sm:%s2525] %v2524
    %s2529 = scalar_lea.vmem [#allocation0], 1032
    %v2530 = vld [vmem:[%s2529] sm:%s1757]
    %s2531 = sshllo.u32 0, 2
    %s2532 = smul.addr 2, 129
    %s2533 = scalar_lea.vmem %s1, %s2532
    %2534 = vst [vmem:[%s2533] sm:%s2531] %v2530
    %s2535 = scalar_lea.vmem [#allocation0], 1040
    %v2536 = vld [vmem:[%s2535] sm:%s1757]
    %s2537 = sshllo.u32 0, 2
    %s2538 = smul.addr 2, 130
    %s2539 = scalar_lea.vmem %s1, %s2538
    %2540 = vst [vmem:[%s2539] sm:%s2537] %v2536
    %s2541 = scalar_lea.vmem [#allocation0], 1048
    %v2542 = vld [vmem:[%s2541] sm:%s1757]
    %s2543 = sshllo.u32 0, 2
    %s2544 = smul.addr 2, 131
    %s2545 = scalar_lea.vmem %s1, %s2544
    %2546 = vst [vmem:[%s2545] sm:%s2543] %v2542
    %s2547 = scalar_lea.vmem [#allocation0], 1056
    %v2548 = vld [vmem:[%s2547] sm:%s1757]
    %s2549 = sshllo.u32 0, 2
    %s2550 = smul.addr 2, 132
    %s2551 = scalar_lea.vmem %s1, %s2550
    %2552 = vst [vmem:[%s2551] sm:%s2549] %v2548
    %s2553 = scalar_lea.vmem [#allocation0], 1064
    %v2554 = vld [vmem:[%s2553] sm:%s1757]
    %s2555 = sshllo.u32 0, 2
    %s2556 = smul.addr 2, 133
    %s2557 = scalar_lea.vmem %s1, %s2556
    %2558 = vst [vmem:[%s2557] sm:%s2555] %v2554
    %s2559 = scalar_lea.vmem [#allocation0], 1072
    %v2560 = vld [vmem:[%s2559] sm:%s1757]
    %s2561 = sshllo.u32 0, 2
    %s2562 = smul.addr 2, 134
    %s2563 = scalar_lea.vmem %s1, %s2562
    %2564 = vst [vmem:[%s2563] sm:%s2561] %v2560
    %s2565 = scalar_lea.vmem [#allocation0], 1080
    %v2566 = vld [vmem:[%s2565] sm:%s1757]
    %s2567 = sshllo.u32 0, 2
    %s2568 = smul.addr 2, 135
    %s2569 = scalar_lea.vmem %s1, %s2568
    %2570 = vst [vmem:[%s2569] sm:%s2567] %v2566
    %s2571 = scalar_lea.vmem [#allocation0], 1088
    %v2572 = vld [vmem:[%s2571] sm:%s1757]
    %s2573 = sshllo.u32 0, 2
    %s2574 = smul.addr 2, 136
    %s2575 = scalar_lea.vmem %s1, %s2574
    %2576 = vst [vmem:[%s2575] sm:%s2573] %v2572
    %s2577 = scalar_lea.vmem [#allocation0], 1096
    %v2578 = vld [vmem:[%s2577] sm:%s1757]
    %s2579 = sshllo.u32 0, 2
    %s2580 = smul.addr 2, 137
    %s2581 = scalar_lea.vmem %s1, %s2580
    %2582 = vst [vmem:[%s2581] sm:%s2579] %v2578
    %s2583 = scalar_lea.vmem [#allocation0], 1104
    %v2584 = vld [vmem:[%s2583] sm:%s1757]
    %s2585 = sshllo.u32 0, 2
    %s2586 = smul.addr 2, 138
    %s2587 = scalar_lea.vmem %s1, %s2586
    %2588 = vst [vmem:[%s2587] sm:%s2585] %v2584
    %s2589 = scalar_lea.vmem [#allocation0], 1112
    %v2590 = vld [vmem:[%s2589] sm:%s1757]
    %s2591 = sshllo.u32 0, 2
    %s2592 = smul.addr 2, 139
    %s2593 = scalar_lea.vmem %s1, %s2592
    %2594 = vst [vmem:[%s2593] sm:%s2591] %v2590
    %s2595 = scalar_lea.vmem [#allocation0], 1120
    %v2596 = vld [vmem:[%s2595] sm:%s1757]
    %s2597 = sshllo.u32 0, 2
    %s2598 = smul.addr 2, 140
    %s2599 = scalar_lea.vmem %s1, %s2598
    %2600 = vst [vmem:[%s2599] sm:%s2597] %v2596
    %s2601 = scalar_lea.vmem [#allocation0], 1128
    %v2602 = vld [vmem:[%s2601] sm:%s1757]
    %s2603 = sshllo.u32 0, 2
    %s2604 = smul.addr 2, 141
    %s2605 = scalar_lea.vmem %s1, %s2604
    %2606 = vst [vmem:[%s2605] sm:%s2603] %v2602
    %s2607 = scalar_lea.vmem [#allocation0], 1136
    %v2608 = vld [vmem:[%s2607] sm:%s1757]
    %s2609 = sshllo.u32 0, 2
    %s2610 = smul.addr 2, 142
    %s2611 = scalar_lea.vmem %s1, %s2610
    %2612 = vst [vmem:[%s2611] sm:%s2609] %v2608
    %s2613 = scalar_lea.vmem [#allocation0], 1144
    %v2614 = vld [vmem:[%s2613] sm:%s1757]
    %s2615 = sshllo.u32 0, 2
    %s2616 = smul.addr 2, 143
    %s2617 = scalar_lea.vmem %s1, %s2616
    %2618 = vst [vmem:[%s2617] sm:%s2615] %v2614
    %s2619 = scalar_lea.vmem [#allocation0], 1152
    %v2620 = vld [vmem:[%s2619] sm:%s1757]
    %s2621 = sshllo.u32 0, 2
    %s2622 = smul.addr 2, 144
    %s2623 = scalar_lea.vmem %s1, %s2622
    %2624 = vst [vmem:[%s2623] sm:%s2621] %v2620
    %s2625 = scalar_lea.vmem [#allocation0], 1160
    %v2626 = vld [vmem:[%s2625] sm:%s1757]
    %s2627 = sshllo.u32 0, 2
    %s2628 = smul.addr 2, 145
    %s2629 = scalar_lea.vmem %s1, %s2628
    %2630 = vst [vmem:[%s2629] sm:%s2627] %v2626
    %s2631 = scalar_lea.vmem [#allocation0], 1168
    %v2632 = vld [vmem:[%s2631] sm:%s1757]
    %s2633 = sshllo.u32 0, 2
    %s2634 = smul.addr 2, 146
    %s2635 = scalar_lea.vmem %s1, %s2634
    %2636 = vst [vmem:[%s2635] sm:%s2633] %v2632
    %s2637 = scalar_lea.vmem [#allocation0], 1176
    %v2638 = vld [vmem:[%s2637] sm:%s1757]
    %s2639 = sshllo.u32 0, 2
    %s2640 = smul.addr 2, 147
    %s2641 = scalar_lea.vmem %s1, %s2640
    %2642 = vst [vmem:[%s2641] sm:%s2639] %v2638
    %s2643 = scalar_lea.vmem [#allocation0], 1184
    %v2644 = vld [vmem:[%s2643] sm:%s1757]
    %s2645 = sshllo.u32 0, 2
    %s2646 = smul.addr 2, 148
    %s2647 = scalar_lea.vmem %s1, %s2646
    %2648 = vst [vmem:[%s2647] sm:%s2645] %v2644
    %s2649 = scalar_lea.vmem [#allocation0], 1192
    %v2650 = vld [vmem:[%s2649] sm:%s1757]
    %s2651 = sshllo.u32 0, 2
    %s2652 = smul.addr 2, 149
    %s2653 = scalar_lea.vmem %s1, %s2652
    %2654 = vst [vmem:[%s2653] sm:%s2651] %v2650
    %s2655 = scalar_lea.vmem [#allocation0], 1200
    %v2656 = vld [vmem:[%s2655] sm:%s1757]
    %s2657 = sshllo.u32 0, 2
    %s2658 = smul.addr 2, 150
    %s2659 = scalar_lea.vmem %s1, %s2658
    %2660 = vst [vmem:[%s2659] sm:%s2657] %v2656
    %s2661 = scalar_lea.vmem [#allocation0], 1208
    %v2662 = vld [vmem:[%s2661] sm:%s1757]
    %s2663 = sshllo.u32 0, 2
    %s2664 = smul.addr 2, 151
    %s2665 = scalar_lea.vmem %s1, %s2664
    %2666 = vst [vmem:[%s2665] sm:%s2663] %v2662
    %s2667 = scalar_lea.vmem [#allocation0], 1216
    %v2668 = vld [vmem:[%s2667] sm:%s1757]
    %s2669 = sshllo.u32 0, 2
    %s2670 = smul.addr 2, 152
    %s2671 = scalar_lea.vmem %s1, %s2670
    %2672 = vst [vmem:[%s2671] sm:%s2669] %v2668
    %s2673 = scalar_lea.vmem [#allocation0], 1224
    %v2674 = vld [vmem:[%s2673] sm:%s1757]
    %s2675 = sshllo.u32 0, 2
    %s2676 = smul.addr 2, 153
    %s2677 = scalar_lea.vmem %s1, %s2676
    %2678 = vst [vmem:[%s2677] sm:%s2675] %v2674
    %s2679 = scalar_lea.vmem [#allocation0], 1232
    %v2680 = vld [vmem:[%s2679] sm:%s1757]
    %s2681 = sshllo.u32 0, 2
    %s2682 = smul.addr 2, 154
    %s2683 = scalar_lea.vmem %s1, %s2682
    %2684 = vst [vmem:[%s2683] sm:%s2681] %v2680
    %s2685 = scalar_lea.vmem [#allocation0], 1240
    %v2686 = vld [vmem:[%s2685] sm:%s1757]
    %s2687 = sshllo.u32 0, 2
    %s2688 = smul.addr 2, 155
    %s2689 = scalar_lea.vmem %s1, %s2688
    %2690 = vst [vmem:[%s2689] sm:%s2687] %v2686
    %s2691 = scalar_lea.vmem [#allocation0], 1248
    %v2692 = vld [vmem:[%s2691] sm:%s1757]
    %s2693 = sshllo.u32 0, 2
    %s2694 = smul.addr 2, 156
    %s2695 = scalar_lea.vmem %s1, %s2694
    %2696 = vst [vmem:[%s2695] sm:%s2693] %v2692
    %s2697 = scalar_lea.vmem [#allocation0], 1256
    %v2698 = vld [vmem:[%s2697] sm:%s1757]
    %s2699 = sshllo.u32 0, 2
    %s2700 = smul.addr 2, 157
    %s2701 = scalar_lea.vmem %s1, %s2700
    %2702 = vst [vmem:[%s2701] sm:%s2699] %v2698
    %s2703 = scalar_lea.vmem [#allocation0], 1264
    %v2704 = vld [vmem:[%s2703] sm:%s1757]
    %s2705 = sshllo.u32 0, 2
    %s2706 = smul.addr 2, 158
    %s2707 = scalar_lea.vmem %s1, %s2706
    %2708 = vst [vmem:[%s2707] sm:%s2705] %v2704
    %s2709 = scalar_lea.vmem [#allocation0], 1272
    %v2710 = vld [vmem:[%s2709] sm:%s1757]
    %s2711 = sshllo.u32 0, 2
    %s2712 = smul.addr 2, 159
    %s2713 = scalar_lea.vmem %s1, %s2712
    %2714 = vst [vmem:[%s2713] sm:%s2711] %v2710
    %s2715 = scalar_lea.vmem [#allocation0], 1280
    %v2716 = vld [vmem:[%s2715] sm:%s1757]
    %s2717 = sshllo.u32 0, 2
    %s2718 = smul.addr 2, 160
    %s2719 = scalar_lea.vmem %s1, %s2718
    %2720 = vst [vmem:[%s2719] sm:%s2717] %v2716
    %s2721 = scalar_lea.vmem [#allocation0], 1288
    %v2722 = vld [vmem:[%s2721] sm:%s1757]
    %s2723 = sshllo.u32 0, 2
    %s2724 = smul.addr 2, 161
    %s2725 = scalar_lea.vmem %s1, %s2724
    %2726 = vst [vmem:[%s2725] sm:%s2723] %v2722
    %s2727 = scalar_lea.vmem [#allocation0], 1296
    %v2728 = vld [vmem:[%s2727] sm:%s1757]
    %s2729 = sshllo.u32 0, 2
    %s2730 = smul.addr 2, 162
    %s2731 = scalar_lea.vmem %s1, %s2730
    %2732 = vst [vmem:[%s2731] sm:%s2729] %v2728
    %s2733 = scalar_lea.vmem [#allocation0], 1304
    %v2734 = vld [vmem:[%s2733] sm:%s1757]
    %s2735 = sshllo.u32 0, 2
    %s2736 = smul.addr 2, 163
    %s2737 = scalar_lea.vmem %s1, %s2736
    %2738 = vst [vmem:[%s2737] sm:%s2735] %v2734
    %s2739 = scalar_lea.vmem [#allocation0], 1312
    %v2740 = vld [vmem:[%s2739] sm:%s1757]
    %s2741 = sshllo.u32 0, 2
    %s2742 = smul.addr 2, 164
    %s2743 = scalar_lea.vmem %s1, %s2742
    %2744 = vst [vmem:[%s2743] sm:%s2741] %v2740
    %s2745 = scalar_lea.vmem [#allocation0], 1320
    %v2746 = vld [vmem:[%s2745] sm:%s1757]
    %s2747 = sshllo.u32 0, 2
    %s2748 = smul.addr 2, 165
    %s2749 = scalar_lea.vmem %s1, %s2748
    %2750 = vst [vmem:[%s2749] sm:%s2747] %v2746
    %s2751 = scalar_lea.vmem [#allocation0], 1328
    %v2752 = vld [vmem:[%s2751] sm:%s1757]
    %s2753 = sshllo.u32 0, 2
    %s2754 = smul.addr 2, 166
    %s2755 = scalar_lea.vmem %s1, %s2754
    %2756 = vst [vmem:[%s2755] sm:%s2753] %v2752
    %s2757 = scalar_lea.vmem [#allocation0], 1336
    %v2758 = vld [vmem:[%s2757] sm:%s1757]
    %s2759 = sshllo.u32 0, 2
    %s2760 = smul.addr 2, 167
    %s2761 = scalar_lea.vmem %s1, %s2760
    %2762 = vst [vmem:[%s2761] sm:%s2759] %v2758
    %s2763 = scalar_lea.vmem [#allocation0], 1344
    %v2764 = vld [vmem:[%s2763] sm:%s1757]
    %s2765 = sshllo.u32 0, 2
    %s2766 = smul.addr 2, 168
    %s2767 = scalar_lea.vmem %s1, %s2766
    %2768 = vst [vmem:[%s2767] sm:%s2765] %v2764
    %s2769 = scalar_lea.vmem [#allocation0], 1352
    %v2770 = vld [vmem:[%s2769] sm:%s1757]
    %s2771 = sshllo.u32 0, 2
    %s2772 = smul.addr 2, 169
    %s2773 = scalar_lea.vmem %s1, %s2772
    %2774 = vst [vmem:[%s2773] sm:%s2771] %v2770
    %s2775 = scalar_lea.vmem [#allocation0], 1360
    %v2776 = vld [vmem:[%s2775] sm:%s1757]
    %s2777 = sshllo.u32 0, 2
    %s2778 = smul.addr 2, 170
    %s2779 = scalar_lea.vmem %s1, %s2778
    %2780 = vst [vmem:[%s2779] sm:%s2777] %v2776
    %s2781 = scalar_lea.vmem [#allocation0], 1368
    %v2782 = vld [vmem:[%s2781] sm:%s1757]
    %s2783 = sshllo.u32 0, 2
    %s2784 = smul.addr 2, 171
    %s2785 = scalar_lea.vmem %s1, %s2784
    %2786 = vst [vmem:[%s2785] sm:%s2783] %v2782
    %s2787 = scalar_lea.vmem [#allocation0], 1376
    %v2788 = vld [vmem:[%s2787] sm:%s1757]
    %s2789 = sshllo.u32 0, 2
    %s2790 = smul.addr 2, 172
    %s2791 = scalar_lea.vmem %s1, %s2790
    %2792 = vst [vmem:[%s2791] sm:%s2789] %v2788
    %s2793 = scalar_lea.vmem [#allocation0], 1384
    %v2794 = vld [vmem:[%s2793] sm:%s1757]
    %s2795 = sshllo.u32 0, 2
    %s2796 = smul.addr 2, 173
    %s2797 = scalar_lea.vmem %s1, %s2796
    %2798 = vst [vmem:[%s2797] sm:%s2795] %v2794
    %s2799 = scalar_lea.vmem [#allocation0], 1392
    %v2800 = vld [vmem:[%s2799] sm:%s1757]
    %s2801 = sshllo.u32 0, 2
    %s2802 = smul.addr 2, 174
    %s2803 = scalar_lea.vmem %s1, %s2802
    %2804 = vst [vmem:[%s2803] sm:%s2801] %v2800
    %s2805 = scalar_lea.vmem [#allocation0], 1400
    %v2806 = vld [vmem:[%s2805] sm:%s1757]
    %s2807 = sshllo.u32 0, 2
    %s2808 = smul.addr 2, 175
    %s2809 = scalar_lea.vmem %s1, %s2808
    %2810 = vst [vmem:[%s2809] sm:%s2807] %v2806
    %s2811 = scalar_lea.vmem [#allocation0], 1408
    %v2812 = vld [vmem:[%s2811] sm:%s1757]
    %s2813 = sshllo.u32 0, 2
    %s2814 = smul.addr 2, 176
    %s2815 = scalar_lea.vmem %s1, %s2814
    %2816 = vst [vmem:[%s2815] sm:%s2813] %v2812
    %s2817 = scalar_lea.vmem [#allocation0], 1416
    %v2818 = vld [vmem:[%s2817] sm:%s1757]
    %s2819 = sshllo.u32 0, 2
    %s2820 = smul.addr 2, 177
    %s2821 = scalar_lea.vmem %s1, %s2820
    %2822 = vst [vmem:[%s2821] sm:%s2819] %v2818
    %s2823 = scalar_lea.vmem [#allocation0], 1424
    %v2824 = vld [vmem:[%s2823] sm:%s1757]
    %s2825 = sshllo.u32 0, 2
    %s2826 = smul.addr 2, 178
    %s2827 = scalar_lea.vmem %s1, %s2826
    %2828 = vst [vmem:[%s2827] sm:%s2825] %v2824
    %s2829 = scalar_lea.vmem [#allocation0], 1432
    %v2830 = vld [vmem:[%s2829] sm:%s1757]
    %s2831 = sshllo.u32 0, 2
    %s2832 = smul.addr 2, 179
    %s2833 = scalar_lea.vmem %s1, %s2832
    %2834 = vst [vmem:[%s2833] sm:%s2831] %v2830
    %s2835 = scalar_lea.vmem [#allocation0], 1440
    %v2836 = vld [vmem:[%s2835] sm:%s1757]
    %s2837 = sshllo.u32 0, 2
    %s2838 = smul.addr 2, 180
    %s2839 = scalar_lea.vmem %s1, %s2838
    %2840 = vst [vmem:[%s2839] sm:%s2837] %v2836
    %s2841 = scalar_lea.vmem [#allocation0], 1448
    %v2842 = vld [vmem:[%s2841] sm:%s1757]
    %s2843 = sshllo.u32 0, 2
    %s2844 = smul.addr 2, 181
    %s2845 = scalar_lea.vmem %s1, %s2844
    %2846 = vst [vmem:[%s2845] sm:%s2843] %v2842
    %s2847 = scalar_lea.vmem [#allocation0], 1456
    %v2848 = vld [vmem:[%s2847] sm:%s1757]
    %s2849 = sshllo.u32 0, 2
    %s2850 = smul.addr 2, 182
    %s2851 = scalar_lea.vmem %s1, %s2850
    %2852 = vst [vmem:[%s2851] sm:%s2849] %v2848
    %s2853 = scalar_lea.vmem [#allocation0], 1464
    %v2854 = vld [vmem:[%s2853] sm:%s1757]
    %s2855 = sshllo.u32 0, 2
    %s2856 = smul.addr 2, 183
    %s2857 = scalar_lea.vmem %s1, %s2856
    %2858 = vst [vmem:[%s2857] sm:%s2855] %v2854
    %s2859 = scalar_lea.vmem [#allocation0], 1472
    %v2860 = vld [vmem:[%s2859] sm:%s1757]
    %s2861 = sshllo.u32 0, 2
    %s2862 = smul.addr 2, 184
    %s2863 = scalar_lea.vmem %s1, %s2862
    %2864 = vst [vmem:[%s2863] sm:%s2861] %v2860
    %s2865 = scalar_lea.vmem [#allocation0], 1480
    %v2866 = vld [vmem:[%s2865] sm:%s1757]
    %s2867 = sshllo.u32 0, 2
    %s2868 = smul.addr 2, 185
    %s2869 = scalar_lea.vmem %s1, %s2868
    %2870 = vst [vmem:[%s2869] sm:%s2867] %v2866
    %s2871 = scalar_lea.vmem [#allocation0], 1488
    %v2872 = vld [vmem:[%s2871] sm:%s1757]
    %s2873 = sshllo.u32 0, 2
    %s2874 = smul.addr 2, 186
    %s2875 = scalar_lea.vmem %s1, %s2874
    %2876 = vst [vmem:[%s2875] sm:%s2873] %v2872
    %s2877 = scalar_lea.vmem [#allocation0], 1496
    %v2878 = vld [vmem:[%s2877] sm:%s1757]
    %s2879 = sshllo.u32 0, 2
    %s2880 = smul.addr 2, 187
    %s2881 = scalar_lea.vmem %s1, %s2880
    %2882 = vst [vmem:[%s2881] sm:%s2879] %v2878
    %s2883 = scalar_lea.vmem [#allocation0], 1504
    %v2884 = vld [vmem:[%s2883] sm:%s1757]
    %s2885 = sshllo.u32 0, 2
    %s2886 = smul.addr 2, 188
    %s2887 = scalar_lea.vmem %s1, %s2886
    %2888 = vst [vmem:[%s2887] sm:%s2885] %v2884
    %s2889 = scalar_lea.vmem [#allocation0], 1512
    %v2890 = vld [vmem:[%s2889] sm:%s1757]
    %s2891 = sshllo.u32 0, 2
    %s2892 = smul.addr 2, 189
    %s2893 = scalar_lea.vmem %s1, %s2892
    %2894 = vst [vmem:[%s2893] sm:%s2891] %v2890
    %s2895 = scalar_lea.vmem [#allocation0], 1520
    %v2896 = vld [vmem:[%s2895] sm:%s1757]
    %s2897 = sshllo.u32 0, 2
    %s2898 = smul.addr 2, 190
    %s2899 = scalar_lea.vmem %s1, %s2898
    %2900 = vst [vmem:[%s2899] sm:%s2897] %v2896
    %s2901 = scalar_lea.vmem [#allocation0], 1528
    %v2902 = vld [vmem:[%s2901] sm:%s1757]
    %s2903 = sshllo.u32 0, 2
    %s2904 = smul.addr 2, 191
    %s2905 = scalar_lea.vmem %s1, %s2904
    %2906 = vst [vmem:[%s2905] sm:%s2903] %v2902
    %s2907 = scalar_lea.vmem [#allocation0], 1536
    %v2908 = vld [vmem:[%s2907] sm:%s1757]
    %s2909 = sshllo.u32 0, 2
    %s2910 = smul.addr 2, 192
    %s2911 = scalar_lea.vmem %s1, %s2910
    %2912 = vst [vmem:[%s2911] sm:%s2909] %v2908
    %s2913 = scalar_lea.vmem [#allocation0], 1544
    %v2914 = vld [vmem:[%s2913] sm:%s1757]
    %s2915 = sshllo.u32 0, 2
    %s2916 = smul.addr 2, 193
    %s2917 = scalar_lea.vmem %s1, %s2916
    %2918 = vst [vmem:[%s2917] sm:%s2915] %v2914
    %s2919 = scalar_lea.vmem [#allocation0], 1552
    %v2920 = vld [vmem:[%s2919] sm:%s1757]
    %s2921 = sshllo.u32 0, 2
    %s2922 = smul.addr 2, 194
    %s2923 = scalar_lea.vmem %s1, %s2922
    %2924 = vst [vmem:[%s2923] sm:%s2921] %v2920
    %s2925 = scalar_lea.vmem [#allocation0], 1560
    %v2926 = vld [vmem:[%s2925] sm:%s1757]
    %s2927 = sshllo.u32 0, 2
    %s2928 = smul.addr 2, 195
    %s2929 = scalar_lea.vmem %s1, %s2928
    %2930 = vst [vmem:[%s2929] sm:%s2927] %v2926
    %s2931 = scalar_lea.vmem [#allocation0], 1568
    %v2932 = vld [vmem:[%s2931] sm:%s1757]
    %s2933 = sshllo.u32 0, 2
    %s2934 = smul.addr 2, 196
    %s2935 = scalar_lea.vmem %s1, %s2934
    %2936 = vst [vmem:[%s2935] sm:%s2933] %v2932
    %s2937 = scalar_lea.vmem [#allocation0], 1576
    %v2938 = vld [vmem:[%s2937] sm:%s1757]
    %s2939 = sshllo.u32 0, 2
    %s2940 = smul.addr 2, 197
    %s2941 = scalar_lea.vmem %s1, %s2940
    %2942 = vst [vmem:[%s2941] sm:%s2939] %v2938
    %s2943 = scalar_lea.vmem [#allocation0], 1584
    %v2944 = vld [vmem:[%s2943] sm:%s1757]
    %s2945 = sshllo.u32 0, 2
    %s2946 = smul.addr 2, 198
    %s2947 = scalar_lea.vmem %s1, %s2946
    %2948 = vst [vmem:[%s2947] sm:%s2945] %v2944
    %s2949 = scalar_lea.vmem [#allocation0], 1592
    %v2950 = vld [vmem:[%s2949] sm:%s1757]
    %s2951 = sshllo.u32 0, 2
    %s2952 = smul.addr 2, 199
    %s2953 = scalar_lea.vmem %s1, %s2952
    %2954 = vst [vmem:[%s2953] sm:%s2951] %v2950
    %s2955 = scalar_lea.vmem [#allocation0], 1600
    %v2956 = vld [vmem:[%s2955] sm:%s1757]
    %s2957 = sshllo.u32 0, 2
    %s2958 = smul.addr 2, 200
    %s2959 = scalar_lea.vmem %s1, %s2958
    %2960 = vst [vmem:[%s2959] sm:%s2957] %v2956
    %s2961 = scalar_lea.vmem [#allocation0], 1608
    %v2962 = vld [vmem:[%s2961] sm:%s1757]
    %s2963 = sshllo.u32 0, 2
    %s2964 = smul.addr 2, 201
    %s2965 = scalar_lea.vmem %s1, %s2964
    %2966 = vst [vmem:[%s2965] sm:%s2963] %v2962
    %s2967 = scalar_lea.vmem [#allocation0], 1616
    %v2968 = vld [vmem:[%s2967] sm:%s1757]
    %s2969 = sshllo.u32 0, 2
    %s2970 = smul.addr 2, 202
    %s2971 = scalar_lea.vmem %s1, %s2970
    %2972 = vst [vmem:[%s2971] sm:%s2969] %v2968
    %s2973 = scalar_lea.vmem [#allocation0], 1624
    %v2974 = vld [vmem:[%s2973] sm:%s1757]
    %s2975 = sshllo.u32 0, 2
    %s2976 = smul.addr 2, 203
    %s2977 = scalar_lea.vmem %s1, %s2976
    %2978 = vst [vmem:[%s2977] sm:%s2975] %v2974
    %s2979 = scalar_lea.vmem [#allocation0], 1632
    %v2980 = vld [vmem:[%s2979] sm:%s1757]
    %s2981 = sshllo.u32 0, 2
    %s2982 = smul.addr 2, 204
    %s2983 = scalar_lea.vmem %s1, %s2982
    %2984 = vst [vmem:[%s2983] sm:%s2981] %v2980
    %s2985 = scalar_lea.vmem [#allocation0], 1640
    %v2986 = vld [vmem:[%s2985] sm:%s1757]
    %s2987 = sshllo.u32 0, 2
    %s2988 = smul.addr 2, 205
    %s2989 = scalar_lea.vmem %s1, %s2988
    %2990 = vst [vmem:[%s2989] sm:%s2987] %v2986
    %s2991 = scalar_lea.vmem [#allocation0], 1648
    %v2992 = vld [vmem:[%s2991] sm:%s1757]
    %s2993 = sshllo.u32 0, 2
    %s2994 = smul.addr 2, 206
    %s2995 = scalar_lea.vmem %s1, %s2994
    %2996 = vst [vmem:[%s2995] sm:%s2993] %v2992
    %s2997 = scalar_lea.vmem [#allocation0], 1656
    %v2998 = vld [vmem:[%s2997] sm:%s1757]
    %s2999 = sshllo.u32 0, 2
    %s3000 = smul.addr 2, 207
    %s3001 = scalar_lea.vmem %s1, %s3000
    %3002 = vst [vmem:[%s3001] sm:%s2999] %v2998
    %s3003 = scalar_lea.vmem [#allocation0], 1664
    %v3004 = vld [vmem:[%s3003] sm:%s1757]
    %s3005 = sshllo.u32 0, 2
    %s3006 = smul.addr 2, 208
    %s3007 = scalar_lea.vmem %s1, %s3006
    %3008 = vst [vmem:[%s3007] sm:%s3005] %v3004
    %s3009 = scalar_lea.vmem [#allocation0], 1672
    %v3010 = vld [vmem:[%s3009] sm:%s1757]
    %s3011 = sshllo.u32 0, 2
    %s3012 = smul.addr 2, 209
    %s3013 = scalar_lea.vmem %s1, %s3012
    %3014 = vst [vmem:[%s3013] sm:%s3011] %v3010
    %s3015 = scalar_lea.vmem [#allocation0], 1680
    %v3016 = vld [vmem:[%s3015] sm:%s1757]
    %s3017 = sshllo.u32 0, 2
    %s3018 = smul.addr 2, 210
    %s3019 = scalar_lea.vmem %s1, %s3018
    %3020 = vst [vmem:[%s3019] sm:%s3017] %v3016
    %s3021 = scalar_lea.vmem [#allocation0], 1688
    %v3022 = vld [vmem:[%s3021] sm:%s1757]
    %s3023 = sshllo.u32 0, 2
    %s3024 = smul.addr 2, 211
    %s3025 = scalar_lea.vmem %s1, %s3024
    %3026 = vst [vmem:[%s3025] sm:%s3023] %v3022
    %s3027 = scalar_lea.vmem [#allocation0], 1696
    %v3028 = vld [vmem:[%s3027] sm:%s1757]
    %s3029 = sshllo.u32 0, 2
    %s3030 = smul.addr 2, 212
    %s3031 = scalar_lea.vmem %s1, %s3030
    %3032 = vst [vmem:[%s3031] sm:%s3029] %v3028
    %s3033 = scalar_lea.vmem [#allocation0], 1704
    %v3034 = vld [vmem:[%s3033] sm:%s1757]
    %s3035 = sshllo.u32 0, 2
    %s3036 = smul.addr 2, 213
    %s3037 = scalar_lea.vmem %s1, %s3036
    %3038 = vst [vmem:[%s3037] sm:%s3035] %v3034
    %s3039 = scalar_lea.vmem [#allocation0], 1712
    %v3040 = vld [vmem:[%s3039] sm:%s1757]
    %s3041 = sshllo.u32 0, 2
    %s3042 = smul.addr 2, 214
    %s3043 = scalar_lea.vmem %s1, %s3042
    %3044 = vst [vmem:[%s3043] sm:%s3041] %v3040
    %s3045 = scalar_lea.vmem [#allocation0], 1720
    %v3046 = vld [vmem:[%s3045] sm:%s1757]
    %s3047 = sshllo.u32 0, 2
    %s3048 = smul.addr 2, 215
    %s3049 = scalar_lea.vmem %s1, %s3048
    %3050 = vst [vmem:[%s3049] sm:%s3047] %v3046
    %s3051 = scalar_lea.vmem [#allocation0], 1728
    %v3052 = vld [vmem:[%s3051] sm:%s1757]
    %s3053 = sshllo.u32 0, 2
    %s3054 = smul.addr 2, 216
    %s3055 = scalar_lea.vmem %s1, %s3054
    %3056 = vst [vmem:[%s3055] sm:%s3053] %v3052
    %s3057 = scalar_lea.vmem [#allocation0], 1736
    %v3058 = vld [vmem:[%s3057] sm:%s1757]
    %s3059 = sshllo.u32 0, 2
    %s3060 = smul.addr 2, 217
    %s3061 = scalar_lea.vmem %s1, %s3060
    %3062 = vst [vmem:[%s3061] sm:%s3059] %v3058
    %s3063 = scalar_lea.vmem [#allocation0], 1744
    %v3064 = vld [vmem:[%s3063] sm:%s1757]
    %s3065 = sshllo.u32 0, 2
    %s3066 = smul.addr 2, 218
    %s3067 = scalar_lea.vmem %s1, %s3066
    %3068 = vst [vmem:[%s3067] sm:%s3065] %v3064
    %s3069 = scalar_lea.vmem [#allocation0], 1752
    %v3070 = vld [vmem:[%s3069] sm:%s1757]
    %s3071 = sshllo.u32 0, 2
    %s3072 = smul.addr 2, 219
    %s3073 = scalar_lea.vmem %s1, %s3072
    %3074 = vst [vmem:[%s3073] sm:%s3071] %v3070
    %s3075 = scalar_lea.vmem [#allocation0], 1760
    %v3076 = vld [vmem:[%s3075] sm:%s1757]
    %s3077 = sshllo.u32 0, 2
    %s3078 = smul.addr 2, 220
    %s3079 = scalar_lea.vmem %s1, %s3078
    %3080 = vst [vmem:[%s3079] sm:%s3077] %v3076
    %s3081 = scalar_lea.vmem [#allocation0], 1768
    %v3082 = vld [vmem:[%s3081] sm:%s1757]
    %s3083 = sshllo.u32 0, 2
    %s3084 = smul.addr 2, 221
    %s3085 = scalar_lea.vmem %s1, %s3084
    %3086 = vst [vmem:[%s3085] sm:%s3083] %v3082
    %s3087 = scalar_lea.vmem [#allocation0], 1776
    %v3088 = vld [vmem:[%s3087] sm:%s1757]
    %s3089 = sshllo.u32 0, 2
    %s3090 = smul.addr 2, 222
    %s3091 = scalar_lea.vmem %s1, %s3090
    %3092 = vst [vmem:[%s3091] sm:%s3089] %v3088
    %s3093 = scalar_lea.vmem [#allocation0], 1784
    %v3094 = vld [vmem:[%s3093] sm:%s1757]
    %s3095 = sshllo.u32 0, 2
    %s3096 = smul.addr 2, 223
    %s3097 = scalar_lea.vmem %s1, %s3096
    %3098 = vst [vmem:[%s3097] sm:%s3095] %v3094
    %s3099 = scalar_lea.vmem [#allocation0], 1792
    %v3100 = vld [vmem:[%s3099] sm:%s1757]
    %s3101 = sshllo.u32 0, 2
    %s3102 = smul.addr 2, 224
    %s3103 = scalar_lea.vmem %s1, %s3102
    %3104 = vst [vmem:[%s3103] sm:%s3101] %v3100
    %s3105 = scalar_lea.vmem [#allocation0], 1800
    %v3106 = vld [vmem:[%s3105] sm:%s1757]
    %s3107 = sshllo.u32 0, 2
    %s3108 = smul.addr 2, 225
    %s3109 = scalar_lea.vmem %s1, %s3108
    %3110 = vst [vmem:[%s3109] sm:%s3107] %v3106
    %s3111 = scalar_lea.vmem [#allocation0], 1808
    %v3112 = vld [vmem:[%s3111] sm:%s1757]
    %s3113 = sshllo.u32 0, 2
    %s3114 = smul.addr 2, 226
    %s3115 = scalar_lea.vmem %s1, %s3114
    %3116 = vst [vmem:[%s3115] sm:%s3113] %v3112
    %s3117 = scalar_lea.vmem [#allocation0], 1816
    %v3118 = vld [vmem:[%s3117] sm:%s1757]
    %s3119 = sshllo.u32 0, 2
    %s3120 = smul.addr 2, 227
    %s3121 = scalar_lea.vmem %s1, %s3120
    %3122 = vst [vmem:[%s3121] sm:%s3119] %v3118
    %s3123 = scalar_lea.vmem [#allocation0], 1824
    %v3124 = vld [vmem:[%s3123] sm:%s1757]
    %s3125 = sshllo.u32 0, 2
    %s3126 = smul.addr 2, 228
    %s3127 = scalar_lea.vmem %s1, %s3126
    %3128 = vst [vmem:[%s3127] sm:%s3125] %v3124
    %s3129 = scalar_lea.vmem [#allocation0], 1832
    %v3130 = vld [vmem:[%s3129] sm:%s1757]
    %s3131 = sshllo.u32 0, 2
    %s3132 = smul.addr 2, 229
    %s3133 = scalar_lea.vmem %s1, %s3132
    %3134 = vst [vmem:[%s3133] sm:%s3131] %v3130
    %s3135 = scalar_lea.vmem [#allocation0], 1840
    %v3136 = vld [vmem:[%s3135] sm:%s1757]
    %s3137 = sshllo.u32 0, 2
    %s3138 = smul.addr 2, 230
    %s3139 = scalar_lea.vmem %s1, %s3138
    %3140 = vst [vmem:[%s3139] sm:%s3137] %v3136
    %s3141 = scalar_lea.vmem [#allocation0], 1848
    %v3142 = vld [vmem:[%s3141] sm:%s1757]
    %s3143 = sshllo.u32 0, 2
    %s3144 = smul.addr 2, 231
    %s3145 = scalar_lea.vmem %s1, %s3144
    %3146 = vst [vmem:[%s3145] sm:%s3143] %v3142
    %s3147 = scalar_lea.vmem [#allocation0], 1856
    %v3148 = vld [vmem:[%s3147] sm:%s1757]
    %s3149 = sshllo.u32 0, 2
    %s3150 = smul.addr 2, 232
    %s3151 = scalar_lea.vmem %s1, %s3150
    %3152 = vst [vmem:[%s3151] sm:%s3149] %v3148
    %s3153 = scalar_lea.vmem [#allocation0], 1864
    %v3154 = vld [vmem:[%s3153] sm:%s1757]
    %s3155 = sshllo.u32 0, 2
    %s3156 = smul.addr 2, 233
    %s3157 = scalar_lea.vmem %s1, %s3156
    %3158 = vst [vmem:[%s3157] sm:%s3155] %v3154
    %s3159 = scalar_lea.vmem [#allocation0], 1872
    %v3160 = vld [vmem:[%s3159] sm:%s1757]
    %s3161 = sshllo.u32 0, 2
    %s3162 = smul.addr 2, 234
    %s3163 = scalar_lea.vmem %s1, %s3162
    %3164 = vst [vmem:[%s3163] sm:%s3161] %v3160
    %s3165 = scalar_lea.vmem [#allocation0], 1880
    %v3166 = vld [vmem:[%s3165] sm:%s1757]
    %s3167 = sshllo.u32 0, 2
    %s3168 = smul.addr 2, 235
    %s3169 = scalar_lea.vmem %s1, %s3168
    %3170 = vst [vmem:[%s3169] sm:%s3167] %v3166
    %s3171 = scalar_lea.vmem [#allocation0], 1888
    %v3172 = vld [vmem:[%s3171] sm:%s1757]
    %s3173 = sshllo.u32 0, 2
    %s3174 = smul.addr 2, 236
    %s3175 = scalar_lea.vmem %s1, %s3174
    %3176 = vst [vmem:[%s3175] sm:%s3173] %v3172
    %s3177 = scalar_lea.vmem [#allocation0], 1896
    %v3178 = vld [vmem:[%s3177] sm:%s1757]
    %s3179 = sshllo.u32 0, 2
    %s3180 = smul.addr 2, 237
    %s3181 = scalar_lea.vmem %s1, %s3180
    %3182 = vst [vmem:[%s3181] sm:%s3179] %v3178
    %s3183 = scalar_lea.vmem [#allocation0], 1904
    %v3184 = vld [vmem:[%s3183] sm:%s1757]
    %s3185 = sshllo.u32 0, 2
    %s3186 = smul.addr 2, 238
    %s3187 = scalar_lea.vmem %s1, %s3186
    %3188 = vst [vmem:[%s3187] sm:%s3185] %v3184
    %s3189 = scalar_lea.vmem [#allocation0], 1912
    %v3190 = vld [vmem:[%s3189] sm:%s1757]
    %s3191 = sshllo.u32 0, 2
    %s3192 = smul.addr 2, 239
    %s3193 = scalar_lea.vmem %s1, %s3192
    %3194 = vst [vmem:[%s3193] sm:%s3191] %v3190
    %s3195 = scalar_lea.vmem [#allocation0], 1920
    %v3196 = vld [vmem:[%s3195] sm:%s1757]
    %s3197 = sshllo.u32 0, 2
    %s3198 = smul.addr 2, 240
    %s3199 = scalar_lea.vmem %s1, %s3198
    %3200 = vst [vmem:[%s3199] sm:%s3197] %v3196
    %s3201 = scalar_lea.vmem [#allocation0], 1928
    %v3202 = vld [vmem:[%s3201] sm:%s1757]
    %s3203 = sshllo.u32 0, 2
    %s3204 = smul.addr 2, 241
    %s3205 = scalar_lea.vmem %s1, %s3204
    %3206 = vst [vmem:[%s3205] sm:%s3203] %v3202
    %s3207 = scalar_lea.vmem [#allocation0], 1936
    %v3208 = vld [vmem:[%s3207] sm:%s1757]
    %s3209 = sshllo.u32 0, 2
    %s3210 = smul.addr 2, 242
    %s3211 = scalar_lea.vmem %s1, %s3210
    %3212 = vst [vmem:[%s3211] sm:%s3209] %v3208
    %s3213 = scalar_lea.vmem [#allocation0], 1944
    %v3214 = vld [vmem:[%s3213] sm:%s1757]
    %s3215 = sshllo.u32 0, 2
    %s3216 = smul.addr 2, 243
    %s3217 = scalar_lea.vmem %s1, %s3216
    %3218 = vst [vmem:[%s3217] sm:%s3215] %v3214
    %s3219 = scalar_lea.vmem [#allocation0], 1952
    %v3220 = vld [vmem:[%s3219] sm:%s1757]
    %s3221 = sshllo.u32 0, 2
    %s3222 = smul.addr 2, 244
    %s3223 = scalar_lea.vmem %s1, %s3222
    %3224 = vst [vmem:[%s3223] sm:%s3221] %v3220
    %s3225 = scalar_lea.vmem [#allocation0], 1960
    %v3226 = vld [vmem:[%s3225] sm:%s1757]
    %s3227 = sshllo.u32 0, 2
    %s3228 = smul.addr 2, 245
    %s3229 = scalar_lea.vmem %s1, %s3228
    %3230 = vst [vmem:[%s3229] sm:%s3227] %v3226
    %s3231 = scalar_lea.vmem [#allocation0], 1968
    %v3232 = vld [vmem:[%s3231] sm:%s1757]
    %s3233 = sshllo.u32 0, 2
    %s3234 = smul.addr 2, 246
    %s3235 = scalar_lea.vmem %s1, %s3234
    %3236 = vst [vmem:[%s3235] sm:%s3233] %v3232
    %s3237 = scalar_lea.vmem [#allocation0], 1976
    %v3238 = vld [vmem:[%s3237] sm:%s1757]
    %s3239 = sshllo.u32 0, 2
    %s3240 = smul.addr 2, 247
    %s3241 = scalar_lea.vmem %s1, %s3240
    %3242 = vst [vmem:[%s3241] sm:%s3239] %v3238
    %s3243 = scalar_lea.vmem [#allocation0], 1984
    %v3244 = vld [vmem:[%s3243] sm:%s1757]
    %s3245 = sshllo.u32 0, 2
    %s3246 = smul.addr 2, 248
    %s3247 = scalar_lea.vmem %s1, %s3246
    %3248 = vst [vmem:[%s3247] sm:%s3245] %v3244
    %s3249 = scalar_lea.vmem [#allocation0], 1992
    %v3250 = vld [vmem:[%s3249] sm:%s1757]
    %s3251 = sshllo.u32 0, 2
    %s3252 = smul.addr 2, 249
    %s3253 = scalar_lea.vmem %s1, %s3252
    %3254 = vst [vmem:[%s3253] sm:%s3251] %v3250
    %s3255 = scalar_lea.vmem [#allocation0], 2000
    %v3256 = vld [vmem:[%s3255] sm:%s1757]
    %s3257 = sshllo.u32 0, 2
    %s3258 = smul.addr 2, 250
    %s3259 = scalar_lea.vmem %s1, %s3258
    %3260 = vst [vmem:[%s3259] sm:%s3257] %v3256
    %s3261 = scalar_lea.vmem [#allocation0], 2008
    %v3262 = vld [vmem:[%s3261] sm:%s1757]
    %s3263 = sshllo.u32 0, 2
    %s3264 = smul.addr 2, 251
    %s3265 = scalar_lea.vmem %s1, %s3264
    %3266 = vst [vmem:[%s3265] sm:%s3263] %v3262
    %s3267 = scalar_lea.vmem [#allocation0], 2016
    %v3268 = vld [vmem:[%s3267] sm:%s1757]
    %s3269 = sshllo.u32 0, 2
    %s3270 = smul.addr 2, 252
    %s3271 = scalar_lea.vmem %s1, %s3270
    %3272 = vst [vmem:[%s3271] sm:%s3269] %v3268
    %s3273 = scalar_lea.vmem [#allocation0], 2024
    %v3274 = vld [vmem:[%s3273] sm:%s1757]
    %s3275 = sshllo.u32 0, 2
    %s3276 = smul.addr 2, 253
    %s3277 = scalar_lea.vmem %s1, %s3276
    %3278 = vst [vmem:[%s3277] sm:%s3275] %v3274
    %s3279 = scalar_lea.vmem [#allocation0], 2032
    %v3280 = vld [vmem:[%s3279] sm:%s1757]
    %s3281 = sshllo.u32 0, 2
    %s3282 = smul.addr 2, 254
    %s3283 = scalar_lea.vmem %s1, %s3282
    %3284 = vst [vmem:[%s3283] sm:%s3281] %v3280
    %s3285 = scalar_lea.vmem [#allocation0], 2040
    %v3286 = vld [vmem:[%s3285] sm:%s1757]
    %s3287 = sshllo.u32 0, 2
    %s3288 = smul.addr 2, 255
    %s3289 = scalar_lea.vmem %s1, %s3288
    %3290 = vst [vmem:[%s3289] sm:%s3287] %v3286
    %s3291 = scalar_lea.vmem [#allocation0], 2048
    %v3292 = vld [vmem:[%s3291] sm:%s1757]
    %s3293 = sshllo.u32 0, 2
    %s3294 = smul.addr 2, 256
    %s3295 = scalar_lea.vmem %s1, %s3294
    %3296 = vst [vmem:[%s3295] sm:%s3293] %v3292
    %s3297 = scalar_lea.vmem [#allocation0], 2056
    %v3298 = vld [vmem:[%s3297] sm:%s1757]
    %s3299 = sshllo.u32 0, 2
    %s3300 = smul.addr 2, 257
    %s3301 = scalar_lea.vmem %s1, %s3300
    %3302 = vst [vmem:[%s3301] sm:%s3299] %v3298
    %s3303 = scalar_lea.vmem [#allocation0], 2064
    %v3304 = vld [vmem:[%s3303] sm:%s1757]
    %s3305 = sshllo.u32 0, 2
    %s3306 = smul.addr 2, 258
    %s3307 = scalar_lea.vmem %s1, %s3306
    %3308 = vst [vmem:[%s3307] sm:%s3305] %v3304
    %s3309 = scalar_lea.vmem [#allocation0], 2072
    %v3310 = vld [vmem:[%s3309] sm:%s1757]
    %s3311 = sshllo.u32 0, 2
    %s3312 = smul.addr 2, 259
    %s3313 = scalar_lea.vmem %s1, %s3312
    %3314 = vst [vmem:[%s3313] sm:%s3311] %v3310
    %s3315 = scalar_lea.vmem [#allocation0], 2080
    %v3316 = vld [vmem:[%s3315] sm:%s1757]
    %s3317 = sshllo.u32 0, 2
    %s3318 = smul.addr 2, 260
    %s3319 = scalar_lea.vmem %s1, %s3318
    %3320 = vst [vmem:[%s3319] sm:%s3317] %v3316
    %s3321 = scalar_lea.vmem [#allocation0], 2088
    %v3322 = vld [vmem:[%s3321] sm:%s1757]
    %s3323 = sshllo.u32 0, 2
    %s3324 = smul.addr 2, 261
    %s3325 = scalar_lea.vmem %s1, %s3324
    %3326 = vst [vmem:[%s3325] sm:%s3323] %v3322
    %s3327 = scalar_lea.vmem [#allocation0], 2096
    %v3328 = vld [vmem:[%s3327] sm:%s1757]
    %s3329 = sshllo.u32 0, 2
    %s3330 = smul.addr 2, 262
    %s3331 = scalar_lea.vmem %s1, %s3330
    %3332 = vst [vmem:[%s3331] sm:%s3329] %v3328
    %s3333 = scalar_lea.vmem [#allocation0], 2104
    %v3334 = vld [vmem:[%s3333] sm:%s1757]
    %s3335 = sshllo.u32 0, 2
    %s3336 = smul.addr 2, 263
    %s3337 = scalar_lea.vmem %s1, %s3336
    %3338 = vst [vmem:[%s3337] sm:%s3335] %v3334
    %s3339 = scalar_lea.vmem [#allocation0], 2112
    %v3340 = vld [vmem:[%s3339] sm:%s1757]
    %s3341 = sshllo.u32 0, 2
    %s3342 = smul.addr 2, 264
    %s3343 = scalar_lea.vmem %s1, %s3342
    %3344 = vst [vmem:[%s3343] sm:%s3341] %v3340
    %s3345 = scalar_lea.vmem [#allocation0], 2120
    %v3346 = vld [vmem:[%s3345] sm:%s1757]
    %s3347 = sshllo.u32 0, 2
    %s3348 = smul.addr 2, 265
    %s3349 = scalar_lea.vmem %s1, %s3348
    %3350 = vst [vmem:[%s3349] sm:%s3347] %v3346
    %s3351 = scalar_lea.vmem [#allocation0], 2128
    %v3352 = vld [vmem:[%s3351] sm:%s1757]
    %s3353 = sshllo.u32 0, 2
    %s3354 = smul.addr 2, 266
    %s3355 = scalar_lea.vmem %s1, %s3354
    %3356 = vst [vmem:[%s3355] sm:%s3353] %v3352
    %s3357 = scalar_lea.vmem [#allocation0], 2136
    %v3358 = vld [vmem:[%s3357] sm:%s1757]
    %s3359 = sshllo.u32 0, 2
    %s3360 = smul.addr 2, 267
    %s3361 = scalar_lea.vmem %s1, %s3360
    %3362 = vst [vmem:[%s3361] sm:%s3359] %v3358
    %s3363 = scalar_lea.vmem [#allocation0], 2144
    %v3364 = vld [vmem:[%s3363] sm:%s1757]
    %s3365 = sshllo.u32 0, 2
    %s3366 = smul.addr 2, 268
    %s3367 = scalar_lea.vmem %s1, %s3366
    %3368 = vst [vmem:[%s3367] sm:%s3365] %v3364
    %s3369 = scalar_lea.vmem [#allocation0], 2152
    %v3370 = vld [vmem:[%s3369] sm:%s1757]
    %s3371 = sshllo.u32 0, 2
    %s3372 = smul.addr 2, 269
    %s3373 = scalar_lea.vmem %s1, %s3372
    %3374 = vst [vmem:[%s3373] sm:%s3371] %v3370
    %s3375 = scalar_lea.vmem [#allocation0], 2160
    %v3376 = vld [vmem:[%s3375] sm:%s1757]
    %s3377 = sshllo.u32 0, 2
    %s3378 = smul.addr 2, 270
    %s3379 = scalar_lea.vmem %s1, %s3378
    %3380 = vst [vmem:[%s3379] sm:%s3377] %v3376
    %s3381 = scalar_lea.vmem [#allocation0], 2168
    %v3382 = vld [vmem:[%s3381] sm:%s1757]
    %s3383 = sshllo.u32 0, 2
    %s3384 = smul.addr 2, 271
    %s3385 = scalar_lea.vmem %s1, %s3384
    %3386 = vst [vmem:[%s3385] sm:%s3383] %v3382
    %s3387 = scalar_lea.vmem [#allocation0], 2176
    %v3388 = vld [vmem:[%s3387] sm:%s1757]
    %s3389 = sshllo.u32 0, 2
    %s3390 = smul.addr 2, 272
    %s3391 = scalar_lea.vmem %s1, %s3390
    %3392 = vst [vmem:[%s3391] sm:%s3389] %v3388
    %s3393 = scalar_lea.vmem [#allocation0], 2184
    %v3394 = vld [vmem:[%s3393] sm:%s1757]
    %s3395 = sshllo.u32 0, 2
    %s3396 = smul.addr 2, 273
    %s3397 = scalar_lea.vmem %s1, %s3396
    %3398 = vst [vmem:[%s3397] sm:%s3395] %v3394
    %s3399 = scalar_lea.vmem [#allocation0], 2192
    %v3400 = vld [vmem:[%s3399] sm:%s1757]
    %s3401 = sshllo.u32 0, 2
    %s3402 = smul.addr 2, 274
    %s3403 = scalar_lea.vmem %s1, %s3402
    %3404 = vst [vmem:[%s3403] sm:%s3401] %v3400
    %s3405 = scalar_lea.vmem [#allocation0], 2200
    %v3406 = vld [vmem:[%s3405] sm:%s1757]
    %s3407 = sshllo.u32 0, 2
    %s3408 = smul.addr 2, 275
    %s3409 = scalar_lea.vmem %s1, %s3408
    %3410 = vst [vmem:[%s3409] sm:%s3407] %v3406
    %s3411 = scalar_lea.vmem [#allocation0], 2208
    %v3412 = vld [vmem:[%s3411] sm:%s1757]
    %s3413 = sshllo.u32 0, 2
    %s3414 = smul.addr 2, 276
    %s3415 = scalar_lea.vmem %s1, %s3414
    %3416 = vst [vmem:[%s3415] sm:%s3413] %v3412
    %s3417 = scalar_lea.vmem [#allocation0], 2216
    %v3418 = vld [vmem:[%s3417] sm:%s1757]
    %s3419 = sshllo.u32 0, 2
    %s3420 = smul.addr 2, 277
    %s3421 = scalar_lea.vmem %s1, %s3420
    %3422 = vst [vmem:[%s3421] sm:%s3419] %v3418
    %s3423 = scalar_lea.vmem [#allocation0], 2224
    %v3424 = vld [vmem:[%s3423] sm:%s1757]
    %s3425 = sshllo.u32 0, 2
    %s3426 = smul.addr 2, 278
    %s3427 = scalar_lea.vmem %s1, %s3426
    %3428 = vst [vmem:[%s3427] sm:%s3425] %v3424
    %s3429 = scalar_lea.vmem [#allocation0], 2232
    %v3430 = vld [vmem:[%s3429] sm:%s1757]
    %s3431 = sshllo.u32 0, 2
    %s3432 = smul.addr 2, 279
    %s3433 = scalar_lea.vmem %s1, %s3432
    %3434 = vst [vmem:[%s3433] sm:%s3431] %v3430
    %s3435 = scalar_lea.vmem [#allocation0], 2240
    %v3436 = vld [vmem:[%s3435] sm:%s1757]
    %s3437 = sshllo.u32 0, 2
    %s3438 = smul.addr 2, 280
    %s3439 = scalar_lea.vmem %s1, %s3438
    %3440 = vst [vmem:[%s3439] sm:%s3437] %v3436
    %s3441 = scalar_lea.vmem [#allocation0], 2248
    %v3442 = vld [vmem:[%s3441] sm:%s1757]
    %s3443 = sshllo.u32 0, 2
    %s3444 = smul.addr 2, 281
    %s3445 = scalar_lea.vmem %s1, %s3444
    %3446 = vst [vmem:[%s3445] sm:%s3443] %v3442
    %s3447 = scalar_lea.vmem [#allocation0], 2256
    %v3448 = vld [vmem:[%s3447] sm:%s1757]
    %s3449 = sshllo.u32 0, 2
    %s3450 = smul.addr 2, 282
    %s3451 = scalar_lea.vmem %s1, %s3450
    %3452 = vst [vmem:[%s3451] sm:%s3449] %v3448
    %s3453 = scalar_lea.vmem [#allocation0], 2264
    %v3454 = vld [vmem:[%s3453] sm:%s1757]
    %s3455 = sshllo.u32 0, 2
    %s3456 = smul.addr 2, 283
    %s3457 = scalar_lea.vmem %s1, %s3456
    %3458 = vst [vmem:[%s3457] sm:%s3455] %v3454
    %s3459 = scalar_lea.vmem [#allocation0], 2272
    %v3460 = vld [vmem:[%s3459] sm:%s1757]
    %s3461 = sshllo.u32 0, 2
    %s3462 = smul.addr 2, 284
    %s3463 = scalar_lea.vmem %s1, %s3462
    %3464 = vst [vmem:[%s3463] sm:%s3461] %v3460
    %s3465 = scalar_lea.vmem [#allocation0], 2280
    %v3466 = vld [vmem:[%s3465] sm:%s1757]
    %s3467 = sshllo.u32 0, 2
    %s3468 = smul.addr 2, 285
    %s3469 = scalar_lea.vmem %s1, %s3468
    %3470 = vst [vmem:[%s3469] sm:%s3467] %v3466
    %s3471 = scalar_lea.vmem [#allocation0], 2288
    %v3472 = vld [vmem:[%s3471] sm:%s1757]
    %s3473 = sshllo.u32 0, 2
    %s3474 = smul.addr 2, 286
    %s3475 = scalar_lea.vmem %s1, %s3474
    %3476 = vst [vmem:[%s3475] sm:%s3473] %v3472
    %s3477 = scalar_lea.vmem [#allocation0], 2296
    %v3478 = vld [vmem:[%s3477] sm:%s1757]
    %s3479 = sshllo.u32 0, 2
    %s3480 = smul.addr 2, 287
    %s3481 = scalar_lea.vmem %s1, %s3480
    %3482 = vst [vmem:[%s3481] sm:%s3479] %v3478
    %s3483 = scalar_lea.vmem [#allocation0], 2304
    %v3484 = vld [vmem:[%s3483] sm:%s1757]
    %s3485 = sshllo.u32 0, 2
    %s3486 = smul.addr 2, 288
    %s3487 = scalar_lea.vmem %s1, %s3486
    %3488 = vst [vmem:[%s3487] sm:%s3485] %v3484
    %s3489 = scalar_lea.vmem [#allocation0], 2312
    %v3490 = vld [vmem:[%s3489] sm:%s1757]
    %s3491 = sshllo.u32 0, 2
    %s3492 = smul.addr 2, 289
    %s3493 = scalar_lea.vmem %s1, %s3492
    %3494 = vst [vmem:[%s3493] sm:%s3491] %v3490
    %s3495 = scalar_lea.vmem [#allocation0], 2320
    %v3496 = vld [vmem:[%s3495] sm:%s1757]
    %s3497 = sshllo.u32 0, 2
    %s3498 = smul.addr 2, 290
    %s3499 = scalar_lea.vmem %s1, %s3498
    %3500 = vst [vmem:[%s3499] sm:%s3497] %v3496
    %s3501 = scalar_lea.vmem [#allocation0], 2328
    %v3502 = vld [vmem:[%s3501] sm:%s1757]
    %s3503 = sshllo.u32 0, 2
    %s3504 = smul.addr 2, 291
    %s3505 = scalar_lea.vmem %s1, %s3504
    %3506 = vst [vmem:[%s3505] sm:%s3503] %v3502
    %s3507 = scalar_lea.vmem [#allocation0], 2336
    %v3508 = vld [vmem:[%s3507] sm:%s1757]
    %s3509 = sshllo.u32 0, 2
    %s3510 = smul.addr 2, 292
    %s3511 = scalar_lea.vmem %s1, %s3510
    %3512 = vst [vmem:[%s3511] sm:%s3509] %v3508
    %s3513 = scalar_lea.vmem [#allocation0], 2344
    %v3514 = vld [vmem:[%s3513] sm:%s1757]
    %s3515 = sshllo.u32 0, 2
    %s3516 = smul.addr 2, 293
    %s3517 = scalar_lea.vmem %s1, %s3516
    %3518 = vst [vmem:[%s3517] sm:%s3515] %v3514
    %s3519 = scalar_lea.vmem [#allocation0], 2352
    %v3520 = vld [vmem:[%s3519] sm:%s1757]
    %s3521 = sshllo.u32 0, 2
    %s3522 = smul.addr 2, 294
    %s3523 = scalar_lea.vmem %s1, %s3522
    %3524 = vst [vmem:[%s3523] sm:%s3521] %v3520
    %s3525 = scalar_lea.vmem [#allocation0], 2360
    %v3526 = vld [vmem:[%s3525] sm:%s1757]
    %s3527 = sshllo.u32 0, 2
    %s3528 = smul.addr 2, 295
    %s3529 = scalar_lea.vmem %s1, %s3528
    %3530 = vst [vmem:[%s3529] sm:%s3527] %v3526
    %s3531 = scalar_lea.vmem [#allocation0], 2368
    %v3532 = vld [vmem:[%s3531] sm:%s1757]
    %s3533 = sshllo.u32 0, 2
    %s3534 = smul.addr 2, 296
    %s3535 = scalar_lea.vmem %s1, %s3534
    %3536 = vst [vmem:[%s3535] sm:%s3533] %v3532
    %s3537 = scalar_lea.vmem [#allocation0], 2376
    %v3538 = vld [vmem:[%s3537] sm:%s1757]
    %s3539 = sshllo.u32 0, 2
    %s3540 = smul.addr 2, 297
    %s3541 = scalar_lea.vmem %s1, %s3540
    %3542 = vst [vmem:[%s3541] sm:%s3539] %v3538
    %s3543 = scalar_lea.vmem [#allocation0], 2384
    %v3544 = vld [vmem:[%s3543] sm:%s1757]
    %s3545 = sshllo.u32 0, 2
    %s3546 = smul.addr 2, 298
    %s3547 = scalar_lea.vmem %s1, %s3546
    %3548 = vst [vmem:[%s3547] sm:%s3545] %v3544
    %s3549 = scalar_lea.vmem [#allocation0], 2392
    %v3550 = vld [vmem:[%s3549] sm:%s1757]
    %s3551 = sshllo.u32 0, 2
    %s3552 = smul.addr 2, 299
    %s3553 = scalar_lea.vmem %s1, %s3552
    %3554 = vst [vmem:[%s3553] sm:%s3551] %v3550
    %s3555 = scalar_lea.vmem [#allocation0], 2400
    %v3556 = vld [vmem:[%s3555] sm:%s1757]
    %s3557 = sshllo.u32 0, 2
    %s3558 = smul.addr 2, 300
    %s3559 = scalar_lea.vmem %s1, %s3558
    %3560 = vst [vmem:[%s3559] sm:%s3557] %v3556
    %s3561 = scalar_lea.vmem [#allocation0], 2408
    %v3562 = vld [vmem:[%s3561] sm:%s1757]
    %s3563 = sshllo.u32 0, 2
    %s3564 = smul.addr 2, 301
    %s3565 = scalar_lea.vmem %s1, %s3564
    %3566 = vst [vmem:[%s3565] sm:%s3563] %v3562
    %s3567 = scalar_lea.vmem [#allocation0], 2416
    %v3568 = vld [vmem:[%s3567] sm:%s1757]
    %s3569 = sshllo.u32 0, 2
    %s3570 = smul.addr 2, 302
    %s3571 = scalar_lea.vmem %s1, %s3570
    %3572 = vst [vmem:[%s3571] sm:%s3569] %v3568
    %s3573 = scalar_lea.vmem [#allocation0], 2424
    %v3574 = vld [vmem:[%s3573] sm:%s1757]
    %s3575 = sshllo.u32 0, 2
    %s3576 = smul.addr 2, 303
    %s3577 = scalar_lea.vmem %s1, %s3576
    %3578 = vst [vmem:[%s3577] sm:%s3575] %v3574
    %s3579 = scalar_lea.vmem [#allocation0], 2432
    %v3580 = vld [vmem:[%s3579] sm:%s1757]
    %s3581 = sshllo.u32 0, 2
    %s3582 = smul.addr 2, 304
    %s3583 = scalar_lea.vmem %s1, %s3582
    %3584 = vst [vmem:[%s3583] sm:%s3581] %v3580
    %s3585 = scalar_lea.vmem [#allocation0], 2440
    %v3586 = vld [vmem:[%s3585] sm:%s1757]
    %s3587 = sshllo.u32 0, 2
    %s3588 = smul.addr 2, 305
    %s3589 = scalar_lea.vmem %s1, %s3588
    %3590 = vst [vmem:[%s3589] sm:%s3587] %v3586
    %s3591 = scalar_lea.vmem [#allocation0], 2448
    %v3592 = vld [vmem:[%s3591] sm:%s1757]
    %s3593 = sshllo.u32 0, 2
    %s3594 = smul.addr 2, 306
    %s3595 = scalar_lea.vmem %s1, %s3594
    %3596 = vst [vmem:[%s3595] sm:%s3593] %v3592
    %s3597 = scalar_lea.vmem [#allocation0], 2456
    %v3598 = vld [vmem:[%s3597] sm:%s1757]
    %s3599 = sshllo.u32 0, 2
    %s3600 = smul.addr 2, 307
    %s3601 = scalar_lea.vmem %s1, %s3600
    %3602 = vst [vmem:[%s3601] sm:%s3599] %v3598
    %s3603 = scalar_lea.vmem [#allocation0], 2464
    %v3604 = vld [vmem:[%s3603] sm:%s1757]
    %s3605 = sshllo.u32 0, 2
    %s3606 = smul.addr 2, 308
    %s3607 = scalar_lea.vmem %s1, %s3606
    %3608 = vst [vmem:[%s3607] sm:%s3605] %v3604
    %s3609 = scalar_lea.vmem [#allocation0], 2472
    %v3610 = vld [vmem:[%s3609] sm:%s1757]
    %s3611 = sshllo.u32 0, 2
    %s3612 = smul.addr 2, 309
    %s3613 = scalar_lea.vmem %s1, %s3612
    %3614 = vst [vmem:[%s3613] sm:%s3611] %v3610
    %s3615 = scalar_lea.vmem [#allocation0], 2480
    %v3616 = vld [vmem:[%s3615] sm:%s1757]
    %s3617 = sshllo.u32 0, 2
    %s3618 = smul.addr 2, 310
    %s3619 = scalar_lea.vmem %s1, %s3618
    %3620 = vst [vmem:[%s3619] sm:%s3617] %v3616
    %s3621 = scalar_lea.vmem [#allocation0], 2488
    %v3622 = vld [vmem:[%s3621] sm:%s1757]
    %s3623 = sshllo.u32 0, 2
    %s3624 = smul.addr 2, 311
    %s3625 = scalar_lea.vmem %s1, %s3624
    %3626 = vst [vmem:[%s3625] sm:%s3623] %v3622
    %s3627 = scalar_lea.vmem [#allocation0], 2496
    %v3628 = vld [vmem:[%s3627] sm:%s1757]
    %s3629 = sshllo.u32 0, 2
    %s3630 = smul.addr 2, 312
    %s3631 = scalar_lea.vmem %s1, %s3630
    %3632 = vst [vmem:[%s3631] sm:%s3629] %v3628
    %s3633 = scalar_lea.vmem [#allocation0], 2504
    %v3634 = vld [vmem:[%s3633] sm:%s1757]
    %s3635 = sshllo.u32 0, 2
    %s3636 = smul.addr 2, 313
    %s3637 = scalar_lea.vmem %s1, %s3636
    %3638 = vst [vmem:[%s3637] sm:%s3635] %v3634
    %s3639 = scalar_lea.vmem [#allocation0], 2512
    %v3640 = vld [vmem:[%s3639] sm:%s1757]
    %s3641 = sshllo.u32 0, 2
    %s3642 = smul.addr 2, 314
    %s3643 = scalar_lea.vmem %s1, %s3642
    %3644 = vst [vmem:[%s3643] sm:%s3641] %v3640
    %s3645 = scalar_lea.vmem [#allocation0], 2520
    %v3646 = vld [vmem:[%s3645] sm:%s1757]
    %s3647 = sshllo.u32 0, 2
    %s3648 = smul.addr 2, 315
    %s3649 = scalar_lea.vmem %s1, %s3648
    %3650 = vst [vmem:[%s3649] sm:%s3647] %v3646
    %s3651 = scalar_lea.vmem [#allocation0], 2528
    %v3652 = vld [vmem:[%s3651] sm:%s1757]
    %s3653 = sshllo.u32 0, 2
    %s3654 = smul.addr 2, 316
    %s3655 = scalar_lea.vmem %s1, %s3654
    %3656 = vst [vmem:[%s3655] sm:%s3653] %v3652
    %s3657 = scalar_lea.vmem [#allocation0], 2536
    %v3658 = vld [vmem:[%s3657] sm:%s1757]
    %s3659 = sshllo.u32 0, 2
    %s3660 = smul.addr 2, 317
    %s3661 = scalar_lea.vmem %s1, %s3660
    %3662 = vst [vmem:[%s3661] sm:%s3659] %v3658
    %s3663 = scalar_lea.vmem [#allocation0], 2544
    %v3664 = vld [vmem:[%s3663] sm:%s1757]
    %s3665 = sshllo.u32 0, 2
    %s3666 = smul.addr 2, 318
    %s3667 = scalar_lea.vmem %s1, %s3666
    %3668 = vst [vmem:[%s3667] sm:%s3665] %v3664
    %s3669 = scalar_lea.vmem [#allocation0], 2552
    %v3670 = vld [vmem:[%s3669] sm:%s1757]
    %s3671 = sshllo.u32 0, 2
    %s3672 = smul.addr 2, 319
    %s3673 = scalar_lea.vmem %s1, %s3672
    %3674 = vst [vmem:[%s3673] sm:%s3671] %v3670
    %s3675 = scalar_lea.vmem [#allocation0], 2560
    %v3676 = vld [vmem:[%s3675] sm:%s1757]
    %s3677 = sshllo.u32 0, 2
    %s3678 = smul.addr 2, 320
    %s3679 = scalar_lea.vmem %s1, %s3678
    %3680 = vst [vmem:[%s3679] sm:%s3677] %v3676
    %s3681 = scalar_lea.vmem [#allocation0], 2568
    %v3682 = vld [vmem:[%s3681] sm:%s1757]
    %s3683 = sshllo.u32 0, 2
    %s3684 = smul.addr 2, 321
    %s3685 = scalar_lea.vmem %s1, %s3684
    %3686 = vst [vmem:[%s3685] sm:%s3683] %v3682
    %s3687 = scalar_lea.vmem [#allocation0], 2576
    %v3688 = vld [vmem:[%s3687] sm:%s1757]
    %s3689 = sshllo.u32 0, 2
    %s3690 = smul.addr 2, 322
    %s3691 = scalar_lea.vmem %s1, %s3690
    %3692 = vst [vmem:[%s3691] sm:%s3689] %v3688
    %s3693 = scalar_lea.vmem [#allocation0], 2584
    %v3694 = vld [vmem:[%s3693] sm:%s1757]
    %s3695 = sshllo.u32 0, 2
    %s3696 = smul.addr 2, 323
    %s3697 = scalar_lea.vmem %s1, %s3696
    %3698 = vst [vmem:[%s3697] sm:%s3695] %v3694
    %s3699 = scalar_lea.vmem [#allocation0], 2592
    %v3700 = vld [vmem:[%s3699] sm:%s1757]
    %s3701 = sshllo.u32 0, 2
    %s3702 = smul.addr 2, 324
    %s3703 = scalar_lea.vmem %s1, %s3702
    %3704 = vst [vmem:[%s3703] sm:%s3701] %v3700
    %s3705 = scalar_lea.vmem [#allocation0], 2600
    %v3706 = vld [vmem:[%s3705] sm:%s1757]
    %s3707 = sshllo.u32 0, 2
    %s3708 = smul.addr 2, 325
    %s3709 = scalar_lea.vmem %s1, %s3708
    %3710 = vst [vmem:[%s3709] sm:%s3707] %v3706
    %s3711 = scalar_lea.vmem [#allocation0], 2608
    %v3712 = vld [vmem:[%s3711] sm:%s1757]
    %s3713 = sshllo.u32 0, 2
    %s3714 = smul.addr 2, 326
    %s3715 = scalar_lea.vmem %s1, %s3714
    %3716 = vst [vmem:[%s3715] sm:%s3713] %v3712
    %s3717 = scalar_lea.vmem [#allocation0], 2616
    %v3718 = vld [vmem:[%s3717] sm:%s1757]
    %s3719 = sshllo.u32 0, 2
    %s3720 = smul.addr 2, 327
    %s3721 = scalar_lea.vmem %s1, %s3720
    %3722 = vst [vmem:[%s3721] sm:%s3719] %v3718
    %s3723 = scalar_lea.vmem [#allocation0], 2624
    %v3724 = vld [vmem:[%s3723] sm:%s1757]
    %s3725 = sshllo.u32 0, 2
    %s3726 = smul.addr 2, 328
    %s3727 = scalar_lea.vmem %s1, %s3726
    %3728 = vst [vmem:[%s3727] sm:%s3725] %v3724
    %s3729 = scalar_lea.vmem [#allocation0], 2632
    %v3730 = vld [vmem:[%s3729] sm:%s1757]
    %s3731 = sshllo.u32 0, 2
    %s3732 = smul.addr 2, 329
    %s3733 = scalar_lea.vmem %s1, %s3732
    %3734 = vst [vmem:[%s3733] sm:%s3731] %v3730
    %s3735 = scalar_lea.vmem [#allocation0], 2640
    %v3736 = vld [vmem:[%s3735] sm:%s1757]
    %s3737 = sshllo.u32 0, 2
    %s3738 = smul.addr 2, 330
    %s3739 = scalar_lea.vmem %s1, %s3738
    %3740 = vst [vmem:[%s3739] sm:%s3737] %v3736
    %s3741 = scalar_lea.vmem [#allocation0], 2648
    %v3742 = vld [vmem:[%s3741] sm:%s1757]
    %s3743 = sshllo.u32 0, 2
    %s3744 = smul.addr 2, 331
    %s3745 = scalar_lea.vmem %s1, %s3744
    %3746 = vst [vmem:[%s3745] sm:%s3743] %v3742
    %s3747 = scalar_lea.vmem [#allocation0], 2656
    %v3748 = vld [vmem:[%s3747] sm:%s1757]
    %s3749 = sshllo.u32 0, 2
    %s3750 = smul.addr 2, 332
    %s3751 = scalar_lea.vmem %s1, %s3750
    %3752 = vst [vmem:[%s3751] sm:%s3749] %v3748
    %s3753 = scalar_lea.vmem [#allocation0], 2664
    %v3754 = vld [vmem:[%s3753] sm:%s1757]
    %s3755 = sshllo.u32 0, 2
    %s3756 = smul.addr 2, 333
    %s3757 = scalar_lea.vmem %s1, %s3756
    %3758 = vst [vmem:[%s3757] sm:%s3755] %v3754
    %s3759 = scalar_lea.vmem [#allocation0], 2672
    %v3760 = vld [vmem:[%s3759] sm:%s1757]
    %s3761 = sshllo.u32 0, 2
    %s3762 = smul.addr 2, 334
    %s3763 = scalar_lea.vmem %s1, %s3762
    %3764 = vst [vmem:[%s3763] sm:%s3761] %v3760
    %s3765 = scalar_lea.vmem [#allocation0], 2680
    %v3766 = vld [vmem:[%s3765] sm:%s1757]
    %s3767 = sshllo.u32 0, 2
    %s3768 = smul.addr 2, 335
    %s3769 = scalar_lea.vmem %s1, %s3768
    %3770 = vst [vmem:[%s3769] sm:%s3767] %v3766
    %s3771 = scalar_lea.vmem [#allocation0], 2688
    %v3772 = vld [vmem:[%s3771] sm:%s1757]
    %s3773 = sshllo.u32 0, 2
    %s3774 = smul.addr 2, 336
    %s3775 = scalar_lea.vmem %s1, %s3774
    %3776 = vst [vmem:[%s3775] sm:%s3773] %v3772
    %s3777 = scalar_lea.vmem [#allocation0], 2696
    %v3778 = vld [vmem:[%s3777] sm:%s1757]
    %s3779 = sshllo.u32 0, 2
    %s3780 = smul.addr 2, 337
    %s3781 = scalar_lea.vmem %s1, %s3780
    %3782 = vst [vmem:[%s3781] sm:%s3779] %v3778
    %s3783 = scalar_lea.vmem [#allocation0], 2704
    %v3784 = vld [vmem:[%s3783] sm:%s1757]
    %s3785 = sshllo.u32 0, 2
    %s3786 = smul.addr 2, 338
    %s3787 = scalar_lea.vmem %s1, %s3786
    %3788 = vst [vmem:[%s3787] sm:%s3785] %v3784
    %s3789 = scalar_lea.vmem [#allocation0], 2712
    %v3790 = vld [vmem:[%s3789] sm:%s1757]
    %s3791 = sshllo.u32 0, 2
    %s3792 = smul.addr 2, 339
    %s3793 = scalar_lea.vmem %s1, %s3792
    %3794 = vst [vmem:[%s3793] sm:%s3791] %v3790
    %s3795 = scalar_lea.vmem [#allocation0], 2720
    %v3796 = vld [vmem:[%s3795] sm:%s1757]
    %s3797 = sshllo.u32 0, 2
    %s3798 = smul.addr 2, 340
    %s3799 = scalar_lea.vmem %s1, %s3798
    %3800 = vst [vmem:[%s3799] sm:%s3797] %v3796
    %s3801 = scalar_lea.vmem [#allocation0], 2728
    %v3802 = vld [vmem:[%s3801] sm:%s1757]
    %s3803 = sshllo.u32 0, 2
    %s3804 = smul.addr 2, 341
    %s3805 = scalar_lea.vmem %s1, %s3804
    %3806 = vst [vmem:[%s3805] sm:%s3803] %v3802
    %s3807 = scalar_lea.vmem [#allocation0], 2736
    %v3808 = vld [vmem:[%s3807] sm:%s1757]
    %s3809 = sshllo.u32 0, 2
    %s3810 = smul.addr 2, 342
    %s3811 = scalar_lea.vmem %s1, %s3810
    %3812 = vst [vmem:[%s3811] sm:%s3809] %v3808
    %s3813 = scalar_lea.vmem [#allocation0], 2744
    %v3814 = vld [vmem:[%s3813] sm:%s1757]
    %s3815 = sshllo.u32 0, 2
    %s3816 = smul.addr 2, 343
    %s3817 = scalar_lea.vmem %s1, %s3816
    %3818 = vst [vmem:[%s3817] sm:%s3815] %v3814
    %s3819 = scalar_lea.vmem [#allocation0], 2752
    %v3820 = vld [vmem:[%s3819] sm:%s1757]
    %s3821 = sshllo.u32 0, 2
    %s3822 = smul.addr 2, 344
    %s3823 = scalar_lea.vmem %s1, %s3822
    %3824 = vst [vmem:[%s3823] sm:%s3821] %v3820
    %s3825 = scalar_lea.vmem [#allocation0], 2760
    %v3826 = vld [vmem:[%s3825] sm:%s1757]
    %s3827 = sshllo.u32 0, 2
    %s3828 = smul.addr 2, 345
    %s3829 = scalar_lea.vmem %s1, %s3828
    %3830 = vst [vmem:[%s3829] sm:%s3827] %v3826
    %s3831 = scalar_lea.vmem [#allocation0], 2768
    %v3832 = vld [vmem:[%s3831] sm:%s1757]
    %s3833 = sshllo.u32 0, 2
    %s3834 = smul.addr 2, 346
    %s3835 = scalar_lea.vmem %s1, %s3834
    %3836 = vst [vmem:[%s3835] sm:%s3833] %v3832
    %s3837 = scalar_lea.vmem [#allocation0], 2776
    %v3838 = vld [vmem:[%s3837] sm:%s1757]
    %s3839 = sshllo.u32 0, 2
    %s3840 = smul.addr 2, 347
    %s3841 = scalar_lea.vmem %s1, %s3840
    %3842 = vst [vmem:[%s3841] sm:%s3839] %v3838
    %s3843 = scalar_lea.vmem [#allocation0], 2784
    %v3844 = vld [vmem:[%s3843] sm:%s1757]
    %s3845 = sshllo.u32 0, 2
    %s3846 = smul.addr 2, 348
    %s3847 = scalar_lea.vmem %s1, %s3846
    %3848 = vst [vmem:[%s3847] sm:%s3845] %v3844
    %s3849 = scalar_lea.vmem [#allocation0], 2792
    %v3850 = vld [vmem:[%s3849] sm:%s1757]
    %s3851 = sshllo.u32 0, 2
    %s3852 = smul.addr 2, 349
    %s3853 = scalar_lea.vmem %s1, %s3852
    %3854 = vst [vmem:[%s3853] sm:%s3851] %v3850
    %s3855 = scalar_lea.vmem [#allocation0], 2800
    %v3856 = vld [vmem:[%s3855] sm:%s1757]
    %s3857 = sshllo.u32 0, 2
    %s3858 = smul.addr 2, 350
    %s3859 = scalar_lea.vmem %s1, %s3858
    %3860 = vst [vmem:[%s3859] sm:%s3857] %v3856
    %s3861 = scalar_lea.vmem [#allocation0], 2808
    %v3862 = vld [vmem:[%s3861] sm:%s1757]
    %s3863 = sshllo.u32 0, 2
    %s3864 = smul.addr 2, 351
    %s3865 = scalar_lea.vmem %s1, %s3864
    %3866 = vst [vmem:[%s3865] sm:%s3863] %v3862
    %s3867 = scalar_lea.vmem [#allocation0], 2816
    %v3868 = vld [vmem:[%s3867] sm:%s1757]
    %s3869 = sshllo.u32 0, 2
    %s3870 = smul.addr 2, 352
    %s3871 = scalar_lea.vmem %s1, %s3870
    %3872 = vst [vmem:[%s3871] sm:%s3869] %v3868
    %s3873 = scalar_lea.vmem [#allocation0], 2824
    %v3874 = vld [vmem:[%s3873] sm:%s1757]
    %s3875 = sshllo.u32 0, 2
    %s3876 = smul.addr 2, 353
    %s3877 = scalar_lea.vmem %s1, %s3876
    %3878 = vst [vmem:[%s3877] sm:%s3875] %v3874
    %s3879 = scalar_lea.vmem [#allocation0], 2832
    %v3880 = vld [vmem:[%s3879] sm:%s1757]
    %s3881 = sshllo.u32 0, 2
    %s3882 = smul.addr 2, 354
    %s3883 = scalar_lea.vmem %s1, %s3882
    %3884 = vst [vmem:[%s3883] sm:%s3881] %v3880
    %s3885 = scalar_lea.vmem [#allocation0], 2840
    %v3886 = vld [vmem:[%s3885] sm:%s1757]
    %s3887 = sshllo.u32 0, 2
    %s3888 = smul.addr 2, 355
    %s3889 = scalar_lea.vmem %s1, %s3888
    %3890 = vst [vmem:[%s3889] sm:%s3887] %v3886
    %s3891 = scalar_lea.vmem [#allocation0], 2848
    %v3892 = vld [vmem:[%s3891] sm:%s1757]
    %s3893 = sshllo.u32 0, 2
    %s3894 = smul.addr 2, 356
    %s3895 = scalar_lea.vmem %s1, %s3894
    %3896 = vst [vmem:[%s3895] sm:%s3893] %v3892
    %s3897 = scalar_lea.vmem [#allocation0], 2856
    %v3898 = vld [vmem:[%s3897] sm:%s1757]
    %s3899 = sshllo.u32 0, 2
    %s3900 = smul.addr 2, 357
    %s3901 = scalar_lea.vmem %s1, %s3900
    %3902 = vst [vmem:[%s3901] sm:%s3899] %v3898
    %s3903 = scalar_lea.vmem [#allocation0], 2864
    %v3904 = vld [vmem:[%s3903] sm:%s1757]
    %s3905 = sshllo.u32 0, 2
    %s3906 = smul.addr 2, 358
    %s3907 = scalar_lea.vmem %s1, %s3906
    %3908 = vst [vmem:[%s3907] sm:%s3905] %v3904
    %s3909 = scalar_lea.vmem [#allocation0], 2872
    %v3910 = vld [vmem:[%s3909] sm:%s1757]
    %s3911 = sshllo.u32 0, 2
    %s3912 = smul.addr 2, 359
    %s3913 = scalar_lea.vmem %s1, %s3912
    %3914 = vst [vmem:[%s3913] sm:%s3911] %v3910
    %s3915 = scalar_lea.vmem [#allocation0], 2880
    %v3916 = vld [vmem:[%s3915] sm:%s1757]
    %s3917 = sshllo.u32 0, 2
    %s3918 = smul.addr 2, 360
    %s3919 = scalar_lea.vmem %s1, %s3918
    %3920 = vst [vmem:[%s3919] sm:%s3917] %v3916
    %s3921 = scalar_lea.vmem [#allocation0], 2888
    %v3922 = vld [vmem:[%s3921] sm:%s1757]
    %s3923 = sshllo.u32 0, 2
    %s3924 = smul.addr 2, 361
    %s3925 = scalar_lea.vmem %s1, %s3924
    %3926 = vst [vmem:[%s3925] sm:%s3923] %v3922
    %s3927 = scalar_lea.vmem [#allocation0], 2896
    %v3928 = vld [vmem:[%s3927] sm:%s1757]
    %s3929 = sshllo.u32 0, 2
    %s3930 = smul.addr 2, 362
    %s3931 = scalar_lea.vmem %s1, %s3930
    %3932 = vst [vmem:[%s3931] sm:%s3929] %v3928
    %s3933 = scalar_lea.vmem [#allocation0], 2904
    %v3934 = vld [vmem:[%s3933] sm:%s1757]
    %s3935 = sshllo.u32 0, 2
    %s3936 = smul.addr 2, 363
    %s3937 = scalar_lea.vmem %s1, %s3936
    %3938 = vst [vmem:[%s3937] sm:%s3935] %v3934
    %s3939 = scalar_lea.vmem [#allocation0], 2912
    %v3940 = vld [vmem:[%s3939] sm:%s1757]
    %s3941 = sshllo.u32 0, 2
    %s3942 = smul.addr 2, 364
    %s3943 = scalar_lea.vmem %s1, %s3942
    %3944 = vst [vmem:[%s3943] sm:%s3941] %v3940
    %s3945 = scalar_lea.vmem [#allocation0], 2920
    %v3946 = vld [vmem:[%s3945] sm:%s1757]
    %s3947 = sshllo.u32 0, 2
    %s3948 = smul.addr 2, 365
    %s3949 = scalar_lea.vmem %s1, %s3948
    %3950 = vst [vmem:[%s3949] sm:%s3947] %v3946
    %s3951 = scalar_lea.vmem [#allocation0], 2928
    %v3952 = vld [vmem:[%s3951] sm:%s1757]
    %s3953 = sshllo.u32 0, 2
    %s3954 = smul.addr 2, 366
    %s3955 = scalar_lea.vmem %s1, %s3954
    %3956 = vst [vmem:[%s3955] sm:%s3953] %v3952
    %s3957 = scalar_lea.vmem [#allocation0], 2936
    %v3958 = vld [vmem:[%s3957] sm:%s1757]
    %s3959 = sshllo.u32 0, 2
    %s3960 = smul.addr 2, 367
    %s3961 = scalar_lea.vmem %s1, %s3960
    %3962 = vst [vmem:[%s3961] sm:%s3959] %v3958
    %s3963 = scalar_lea.vmem [#allocation0], 2944
    %v3964 = vld [vmem:[%s3963] sm:%s1757]
    %s3965 = sshllo.u32 0, 2
    %s3966 = smul.addr 2, 368
    %s3967 = scalar_lea.vmem %s1, %s3966
    %3968 = vst [vmem:[%s3967] sm:%s3965] %v3964
    %s3969 = scalar_lea.vmem [#allocation0], 2952
    %v3970 = vld [vmem:[%s3969] sm:%s1757]
    %s3971 = sshllo.u32 0, 2
    %s3972 = smul.addr 2, 369
    %s3973 = scalar_lea.vmem %s1, %s3972
    %3974 = vst [vmem:[%s3973] sm:%s3971] %v3970
    %s3975 = scalar_lea.vmem [#allocation0], 2960
    %v3976 = vld [vmem:[%s3975] sm:%s1757]
    %s3977 = sshllo.u32 0, 2
    %s3978 = smul.addr 2, 370
    %s3979 = scalar_lea.vmem %s1, %s3978
    %3980 = vst [vmem:[%s3979] sm:%s3977] %v3976
    %s3981 = scalar_lea.vmem [#allocation0], 2968
    %v3982 = vld [vmem:[%s3981] sm:%s1757]
    %s3983 = sshllo.u32 0, 2
    %s3984 = smul.addr 2, 371
    %s3985 = scalar_lea.vmem %s1, %s3984
    %3986 = vst [vmem:[%s3985] sm:%s3983] %v3982
    %s3987 = scalar_lea.vmem [#allocation0], 2976
    %v3988 = vld [vmem:[%s3987] sm:%s1757]
    %s3989 = sshllo.u32 0, 2
    %s3990 = smul.addr 2, 372
    %s3991 = scalar_lea.vmem %s1, %s3990
    %3992 = vst [vmem:[%s3991] sm:%s3989] %v3988
    %s3993 = scalar_lea.vmem [#allocation0], 2984
    %v3994 = vld [vmem:[%s3993] sm:%s1757]
    %s3995 = sshllo.u32 0, 2
    %s3996 = smul.addr 2, 373
    %s3997 = scalar_lea.vmem %s1, %s3996
    %3998 = vst [vmem:[%s3997] sm:%s3995] %v3994
    %s3999 = scalar_lea.vmem [#allocation0], 2992
    %v4000 = vld [vmem:[%s3999] sm:%s1757]
    %s4001 = sshllo.u32 0, 2
    %s4002 = smul.addr 2, 374
    %s4003 = scalar_lea.vmem %s1, %s4002
    %4004 = vst [vmem:[%s4003] sm:%s4001] %v4000
    %s4005 = scalar_lea.vmem [#allocation0], 3000
    %v4006 = vld [vmem:[%s4005] sm:%s1757]
    %s4007 = sshllo.u32 0, 2
    %s4008 = smul.addr 2, 375
    %s4009 = scalar_lea.vmem %s1, %s4008
    %4010 = vst [vmem:[%s4009] sm:%s4007] %v4006
    %s4011 = scalar_lea.vmem [#allocation0], 3008
    %v4012 = vld [vmem:[%s4011] sm:%s1757]
    %s4013 = sshllo.u32 0, 2
    %s4014 = smul.addr 2, 376
    %s4015 = scalar_lea.vmem %s1, %s4014
    %4016 = vst [vmem:[%s4015] sm:%s4013] %v4012
    %s4017 = scalar_lea.vmem [#allocation0], 3016
    %v4018 = vld [vmem:[%s4017] sm:%s1757]
    %s4019 = sshllo.u32 0, 2
    %s4020 = smul.addr 2, 377
    %s4021 = scalar_lea.vmem %s1, %s4020
    %4022 = vst [vmem:[%s4021] sm:%s4019] %v4018
    %s4023 = scalar_lea.vmem [#allocation0], 3024
    %v4024 = vld [vmem:[%s4023] sm:%s1757]
    %s4025 = sshllo.u32 0, 2
    %s4026 = smul.addr 2, 378
    %s4027 = scalar_lea.vmem %s1, %s4026
    %4028 = vst [vmem:[%s4027] sm:%s4025] %v4024
    %s4029 = scalar_lea.vmem [#allocation0], 3032
    %v4030 = vld [vmem:[%s4029] sm:%s1757]
    %s4031 = sshllo.u32 0, 2
    %s4032 = smul.addr 2, 379
    %s4033 = scalar_lea.vmem %s1, %s4032
    %4034 = vst [vmem:[%s4033] sm:%s4031] %v4030
    %s4035 = scalar_lea.vmem [#allocation0], 3040
    %v4036 = vld [vmem:[%s4035] sm:%s1757]
    %s4037 = sshllo.u32 0, 2
    %s4038 = smul.addr 2, 380
    %s4039 = scalar_lea.vmem %s1, %s4038
    %4040 = vst [vmem:[%s4039] sm:%s4037] %v4036
    %s4041 = scalar_lea.vmem [#allocation0], 3048
    %v4042 = vld [vmem:[%s4041] sm:%s1757]
    %s4043 = sshllo.u32 0, 2
    %s4044 = smul.addr 2, 381
    %s4045 = scalar_lea.vmem %s1, %s4044
    %4046 = vst [vmem:[%s4045] sm:%s4043] %v4042
    %s4047 = scalar_lea.vmem [#allocation0], 3056
    %v4048 = vld [vmem:[%s4047] sm:%s1757]
    %s4049 = sshllo.u32 0, 2
    %s4050 = smul.addr 2, 382
    %s4051 = scalar_lea.vmem %s1, %s4050
    %4052 = vst [vmem:[%s4051] sm:%s4049] %v4048
    %s4053 = scalar_lea.vmem [#allocation0], 3064
    %v4054 = vld [vmem:[%s4053] sm:%s1757]
    %s4055 = sshllo.u32 0, 2
    %s4056 = smul.addr 2, 383
    %s4057 = scalar_lea.vmem %s1, %s4056
    %4058 = vst [vmem:[%s4057] sm:%s4055] %v4054
    %s4059 = scalar_lea.vmem [#allocation0], 3072
    %v4060 = vld [vmem:[%s4059] sm:%s1757]
    %s4061 = sshllo.u32 0, 2
    %s4062 = smul.addr 2, 384
    %s4063 = scalar_lea.vmem %s1, %s4062
    %4064 = vst [vmem:[%s4063] sm:%s4061] %v4060
    %s4065 = scalar_lea.vmem [#allocation0], 3080
    %v4066 = vld [vmem:[%s4065] sm:%s1757]
    %s4067 = sshllo.u32 0, 2
    %s4068 = smul.addr 2, 385
    %s4069 = scalar_lea.vmem %s1, %s4068
    %4070 = vst [vmem:[%s4069] sm:%s4067] %v4066
    %s4071 = scalar_lea.vmem [#allocation0], 3088
    %v4072 = vld [vmem:[%s4071] sm:%s1757]
    %s4073 = sshllo.u32 0, 2
    %s4074 = smul.addr 2, 386
    %s4075 = scalar_lea.vmem %s1, %s4074
    %4076 = vst [vmem:[%s4075] sm:%s4073] %v4072
    %s4077 = scalar_lea.vmem [#allocation0], 3096
    %v4078 = vld [vmem:[%s4077] sm:%s1757]
    %s4079 = sshllo.u32 0, 2
    %s4080 = smul.addr 2, 387
    %s4081 = scalar_lea.vmem %s1, %s4080
    %4082 = vst [vmem:[%s4081] sm:%s4079] %v4078
    %s4083 = scalar_lea.vmem [#allocation0], 3104
    %v4084 = vld [vmem:[%s4083] sm:%s1757]
    %s4085 = sshllo.u32 0, 2
    %s4086 = smul.addr 2, 388
    %s4087 = scalar_lea.vmem %s1, %s4086
    %4088 = vst [vmem:[%s4087] sm:%s4085] %v4084
    %s4089 = scalar_lea.vmem [#allocation0], 3112
    %v4090 = vld [vmem:[%s4089] sm:%s1757]
    %s4091 = sshllo.u32 0, 2
    %s4092 = smul.addr 2, 389
    %s4093 = scalar_lea.vmem %s1, %s4092
    %4094 = vst [vmem:[%s4093] sm:%s4091] %v4090
    %s4095 = scalar_lea.vmem [#allocation0], 3120
    %v4096 = vld [vmem:[%s4095] sm:%s1757]
    %s4097 = sshllo.u32 0, 2
    %s4098 = smul.addr 2, 390
    %s4099 = scalar_lea.vmem %s1, %s4098
    %4100 = vst [vmem:[%s4099] sm:%s4097] %v4096
    %s4101 = scalar_lea.vmem [#allocation0], 3128
    %v4102 = vld [vmem:[%s4101] sm:%s1757]
    %s4103 = sshllo.u32 0, 2
    %s4104 = smul.addr 2, 391
    %s4105 = scalar_lea.vmem %s1, %s4104
    %4106 = vst [vmem:[%s4105] sm:%s4103] %v4102

// kernel: discriminator_forward.1
$region0: #{discriminator_forward.1}
  #allocation0 [shape = 'u32[]', space=smem, size = 0x4, offset = 0x4, fixed_abs, tag = 'smem constant byte address 0x4 - core index']
  #allocation1 [shape = 'u32[144,128]{1,0:T(1,128)}', space=vmem, size = 0x12000, scoped, tag = 'internal scratch']
  #allocation2 [shape = 'f32[98,128]{1,0:T(8,128)}', space=vmem, size = 0xd000, scoped, tag = 'scratch operand']
  #allocation3 [shape = 'f32[98,64]{1,0:T(8,128)}', space=vmem, size = 0xd000, scoped, tag = 'scratch operand']
  #allocation4 [shape = 'f32[18,576]{1,0:T(8,128)}', space=vmem, size = 0xf000, scoped, tag = 'scratch operand']
  #allocation5 [shape = 'f32[18,128]{1,0:T(8,128)}', space=vmem, size = 0x3000, scoped, tag = 'scratch operand']
  #allocation6 [shape = 'f32[2,1152]{1,0:T(2,128)}', space=vmem, size = 0x2400, scoped, tag = 'scratch operand']
  %s0 = inlined_call_operand.vmem [shape: f32[2,256], index: 0, kind: input, shape index: {}]
  %s1 = inlined_call_operand.vmem [shape: f32[98,16], index: 1, kind: input, shape index: {}]
  %s2 = inlined_call_operand.vmem [shape: bf16[256,256], index: 2, kind: input, shape index: {}]
  %s3 = inlined_call_operand.vmem [shape: f32[1,256], index: 3, kind: input, shape index: {}]
  %s4 = inlined_call_operand.vmem [shape: bf16[256,320], index: 4, kind: input, shape index: {}]
  %s5 = inlined_call_operand.vmem [shape: f32[1,320], index: 5, kind: input, shape index: {}]
  %s6 = inlined_call_operand.vmem [shape: bf16[16,128], index: 6, kind: input, shape index: {}]
  %s7 = inlined_call_operand.vmem [shape: f32[1,128], index: 7, kind: input, shape index: {}]
  %s8 = inlined_call_operand.vmem [shape: bf16[128,64], index: 8, kind: input, shape index: {}]
  %s9 = inlined_call_operand.vmem [shape: f32[1,64], index: 9, kind: input, shape index: {}]
  %s10 = inlined_call_operand.vmem [shape: f32[1,64], index: 10, kind: input, shape index: {}]
  %s11 = inlined_call_operand.vmem [shape: bf16[576,128], index: 11, kind: input, shape index: {}]
  %s12 = inlined_call_operand.vmem [shape: f32[1,128], index: 12, kind: input, shape index: {}]
  %s13 = inlined_call_operand.vmem [shape: f32[1,128], index: 13, kind: input, shape index: {}]
  %s14 = inlined_call_operand.vmem [shape: bf16[1152,256], index: 14, kind: input, shape index: {}]
  %s15 = inlined_call_operand.vmem [shape: f32[1,256], index: 15, kind: input, shape index: {}]
  %s16 = inlined_call_operand.vmem [shape: bf16[256,256], index: 16, kind: input, shape index: {}]
  %s17 = inlined_call_operand.vmem [shape: bf16[256,256], index: 17, kind: input, shape index: {}]
  %s18 = inlined_call_operand.vmem [shape: f32[1,256], index: 18, kind: input, shape index: {}]
  %s19 = inlined_call_operand.vmem [shape: bf16[256,10], index: 19, kind: input, shape index: {}]
  %s20 = inlined_call_operand.vmem [shape: f32[1,10], index: 20, kind: input, shape index: {}]
  %s21 = inlined_call_operand.hbm [shape: f32[2,10], index: 21, kind: output, shape index: {}]
  %s22 = sld [smem:[#allocation0]]
  $region94: #{discriminator_forward.1} parent=0
    _
  %s24 = ssub.s32 1, %s22
  %s25 = scalar_select 0, %s24, %s22
  $region1: #{discriminator_forward.1} parent=0
    #allocation7 [shape = 'u8[1024]{0}', space=vmem, size = 0x400, scoped, tag = 'output window, operand 0, single buffered']
    #allocation8 [shape = 's32[1]{0}', space=sflag, size = 0x4, scoped, tag = 'scoped memory for discriminator_forward.1']
    %26 = vsyncpa [#allocation8], 0
    // Predicated region
    $region2: #{discriminator_forward.1} parent=1 // pred_check
      _
    $region3: #{discriminator_forward.1} parent=1 // pred_check_branch
      %28 = sbr.rel (0) target = $region5
    $region4: #{discriminator_forward.1} parent=1 // pred_region
      _
    $region5: #{discriminator_forward.1} parent=1 // pred_fallthru
      _
    // Predicated region
    $region6: #{discriminator_forward.1} parent=1 // pred_check
      _
    $region7: #{discriminator_forward.1} parent=1 // pred_check_branch
      %30 = sbr.rel (0) target = $region9
    $region8: #{discriminator_forward.1} parent=1 // pred_region
      _
    $region9: #{discriminator_forward.1} parent=1 // pred_fallthru
      _
    // Predicated region
    $region10: #{discriminator_forward.1} parent=1 // pred_check
      _
    $region11: #{discriminator_forward.1} parent=1 // pred_check_branch
      %32 = sbr.rel (0) target = $region13
    $region12: #{discriminator_forward.1} parent=1 // pred_region
      _
    $region13: #{discriminator_forward.1} parent=1 // pred_fallthru
      _
    // Predicated region
    $region14: #{discriminator_forward.1} parent=1 // pred_check
      _
    $region15: #{discriminator_forward.1} parent=1 // pred_check_branch
      %34 = sbr.rel (0) target = $region17
    $region16: #{discriminator_forward.1} parent=1 // pred_region
      _
    $region17: #{discriminator_forward.1} parent=1 // pred_fallthru
      _
    // Predicated region
    $region18: #{discriminator_forward.1} parent=1 // pred_check
      _
    $region19: #{discriminator_forward.1} parent=1 // pred_check_branch
      %36 = sbr.rel (0) target = $region21
    $region20: #{discriminator_forward.1} parent=1 // pred_region
      _
    $region21: #{discriminator_forward.1} parent=1 // pred_fallthru
      _
    // Predicated region
    $region22: #{discriminator_forward.1} parent=1 // pred_check
      _
    $region23: #{discriminator_forward.1} parent=1 // pred_check_branch
      %38 = sbr.rel (0) target = $region25
    $region24: #{discriminator_forward.1} parent=1 // pred_region
      _
    $region25: #{discriminator_forward.1} parent=1 // pred_fallthru
      _
    // Predicated region
    $region26: #{discriminator_forward.1} parent=1 // pred_check
      _
    $region27: #{discriminator_forward.1} parent=1 // pred_check_branch
      %40 = sbr.rel (0) target = $region29
    $region28: #{discriminator_forward.1} parent=1 // pred_region
      _
    $region29: #{discriminator_forward.1} parent=1 // pred_fallthru
      _
    // Predicated region
    $region30: #{discriminator_forward.1} parent=1 // pred_check
      _
    $region31: #{discriminator_forward.1} parent=1 // pred_check_branch
      %42 = sbr.rel (0) target = $region33
    $region32: #{discriminator_forward.1} parent=1 // pred_region
      _
    $region33: #{discriminator_forward.1} parent=1 // pred_fallthru
      _
    // Predicated region
    $region34: #{discriminator_forward.1} parent=1 // pred_check
      _
    $region35: #{discriminator_forward.1} parent=1 // pred_check_branch
      %44 = sbr.rel (0) target = $region37
    $region36: #{discriminator_forward.1} parent=1 // pred_region
      _
    $region37: #{discriminator_forward.1} parent=1 // pred_fallthru
      _
    // Predicated region
    $region38: #{discriminator_forward.1} parent=1 // pred_check
      _
    $region39: #{discriminator_forward.1} parent=1 // pred_check_branch
      %46 = sbr.rel (0) target = $region41
    $region40: #{discriminator_forward.1} parent=1 // pred_region
      _
    $region41: #{discriminator_forward.1} parent=1 // pred_fallthru
      _
    // Predicated region
    $region42: #{discriminator_forward.1} parent=1 // pred_check
      _
    $region43: #{discriminator_forward.1} parent=1 // pred_check_branch
      %48 = sbr.rel (0) target = $region45
    $region44: #{discriminator_forward.1} parent=1 // pred_region
      _
    $region45: #{discriminator_forward.1} parent=1 // pred_fallthru
      _
    // Predicated region
    $region46: #{discriminator_forward.1} parent=1 // pred_check
      _
    $region47: #{discriminator_forward.1} parent=1 // pred_check_branch
      %50 = sbr.rel (0) target = $region49
    $region48: #{discriminator_forward.1} parent=1 // pred_region
      _
    $region49: #{discriminator_forward.1} parent=1 // pred_fallthru
      _
    // Predicated region
    $region50: #{discriminator_forward.1} parent=1 // pred_check
      _
    $region51: #{discriminator_forward.1} parent=1 // pred_check_branch
      %52 = sbr.rel (0) target = $region53
    $region52: #{discriminator_forward.1} parent=1 // pred_region
      _
    $region53: #{discriminator_forward.1} parent=1 // pred_fallthru
      _
    // Predicated region
    $region54: #{discriminator_forward.1} parent=1 // pred_check
      _
    $region55: #{discriminator_forward.1} parent=1 // pred_check_branch
      %54 = sbr.rel (0) target = $region57
    $region56: #{discriminator_forward.1} parent=1 // pred_region
      _
    $region57: #{discriminator_forward.1} parent=1 // pred_fallthru
      _
    // Predicated region
    $region58: #{discriminator_forward.1} parent=1 // pred_check
      _
    $region59: #{discriminator_forward.1} parent=1 // pred_check_branch
      %56 = sbr.rel (0) target = $region61
    $region60: #{discriminator_forward.1} parent=1 // pred_region
      _
    $region61: #{discriminator_forward.1} parent=1 // pred_fallthru
      _
    // Predicated region
    $region62: #{discriminator_forward.1} parent=1 // pred_check
      _
    $region63: #{discriminator_forward.1} parent=1 // pred_check_branch
      %58 = sbr.rel (0) target = $region65
    $region64: #{discriminator_forward.1} parent=1 // pred_region
      _
    $region65: #{discriminator_forward.1} parent=1 // pred_fallthru
      _
    // Predicated region
    $region66: #{discriminator_forward.1} parent=1 // pred_check
      _
    $region67: #{discriminator_forward.1} parent=1 // pred_check_branch
      %60 = sbr.rel (0) target = $region69
    $region68: #{discriminator_forward.1} parent=1 // pred_region
      _
    $region69: #{discriminator_forward.1} parent=1 // pred_fallthru
      _
    // Predicated region
    $region70: #{discriminator_forward.1} parent=1 // pred_check
      _
    $region71: #{discriminator_forward.1} parent=1 // pred_check_branch
      %62 = sbr.rel (0) target = $region73
    $region72: #{discriminator_forward.1} parent=1 // pred_region
      _
    $region73: #{discriminator_forward.1} parent=1 // pred_fallthru
      _
    // Predicated region
    $region74: #{discriminator_forward.1} parent=1 // pred_check
      _
    $region75: #{discriminator_forward.1} parent=1 // pred_check_branch
      %64 = sbr.rel (0) target = $region77
    $region76: #{discriminator_forward.1} parent=1 // pred_region
      _
    $region77: #{discriminator_forward.1} parent=1 // pred_fallthru
      _
    // Predicated region
    $region78: #{discriminator_forward.1} parent=1 // pred_check
      _
    $region79: #{discriminator_forward.1} parent=1 // pred_check_branch
      %66 = sbr.rel (0) target = $region81
    $region80: #{discriminator_forward.1} parent=1 // pred_region
      _
    $region81: #{discriminator_forward.1} parent=1 // pred_fallthru
      _
    // Predicated region
    $region82: #{discriminator_forward.1} parent=1 // pred_check
      _
    $region83: #{discriminator_forward.1} parent=1 // pred_check_branch
      %68 = sbr.rel (0) target = $region85
    $region84: #{discriminator_forward.1} parent=1 // pred_region
      _
    $region85: #{discriminator_forward.1} parent=1 // pred_fallthru
      _
    %v70 = vld [vmem:[%s0] sm:$0xf]
    %v73 = vunpack.c.l.s4 1983009808
    %v74 = vunpack.c.0.s8 %v73
    %v75 = vlaneseq
    %v76 = vshrl.u32 %v75, 7
    %v77 = vsub.s32 %v74, %v76
    %v78 = vrot.slane %v70, %v77
    %v79 = vcombine.high %v78, %v78
    %v82 = vpack.c.bf16 %v78, %v78
    %v83 = vpack.c.bf16 %v79, %v79
    %v84 = vld [vmem:[%s2] sm:$0xff]
    %v85 = vld [vmem:[%s2 + $0x8] sm:$0xff]
    %v86 = vld [vmem:[%s2 + $0x10] sm:$0xff]
    %v87 = vld [vmem:[%s2 + $0x18] sm:$0xff]
    %v88 = vld [vmem:[%s2 + $0x20] sm:$0xff]
    %v89 = vld [vmem:[%s2 + $0x28] sm:$0xff]
    %v90 = vld [vmem:[%s2 + $0x30] sm:$0xff]
    %v91 = vld [vmem:[%s2 + $0x38] sm:$0xff]
    %v92 = vld [vmem:[%s2 + $0x40] sm:$0xff]
    %v93 = vld [vmem:[%s2 + $0x48] sm:$0xff]
    %v94 = vld [vmem:[%s2 + $0x50] sm:$0xff]
    %v95 = vld [vmem:[%s2 + $0x58] sm:$0xff]
    %v96 = vld [vmem:[%s2 + $0x60] sm:$0xff]
    %v97 = vld [vmem:[%s2 + $0x68] sm:$0xff]
    %v98 = vld [vmem:[%s2 + $0x70] sm:$0xff]
    %v99 = vld [vmem:[%s2 + $0x78] sm:$0xff]
    %v100 = vld [vmem:[%s2 + $0x80] sm:$0xff]
    %v101 = vld [vmem:[%s2 + $0x88] sm:$0xff]
    %v102 = vld [vmem:[%s2 + $0x90] sm:$0xff]
    %v103 = vld [vmem:[%s2 + $0x98] sm:$0xff]
    %v104 = vld [vmem:[%s2 + $0xa0] sm:$0xff]
    %v105 = vld [vmem:[%s2 + $0xa8] sm:$0xff]
    %v106 = vld [vmem:[%s2 + $0xb0] sm:$0xff]
    %v107 = vld [vmem:[%s2 + $0xb8] sm:$0xff]
    %v108 = vld [vmem:[%s2 + $0xc0] sm:$0xff]
    %v109 = vld [vmem:[%s2 + $0xc8] sm:$0xff]
    %v110 = vld [vmem:[%s2 + $0xd0] sm:$0xff]
    %v111 = vld [vmem:[%s2 + $0xd8] sm:$0xff]
    %v112 = vld [vmem:[%s2 + $0xe0] sm:$0xff]
    %v113 = vld [vmem:[%s2 + $0xe8] sm:$0xff]
    %v114 = vld [vmem:[%s2 + $0xf0] sm:$0xff]
    %v115 = vld [vmem:[%s2 + $0xf8] sm:$0xff]
    %v116 = vld [vmem:[%s3] sm:$0x3]
    %v118 = vlaneseq
    %v119 = vshrl.u32 %v118, 7
    %v120 = vsub.s32 0, %v119
    %v121 = vrot.slane %v116, %v120
    %v122 = vlaneseq
    %v123 = vshrl.u32 %v122, 7
    %v124 = vsub.s32 1, %v123
    %v125 = vrot.slane %v116, %v124
    %v160 = vunpack.c.l.b16 %v84
    %v161 = vunpack.c.h.b16 %v84
    %v162 = vunpack.c.l.b16 %v85
    %v163 = vunpack.c.h.b16 %v85
    %v164 = vunpack.c.l.b16 %v86
    %v165 = vunpack.c.h.b16 %v86
    %v166 = vunpack.c.l.b16 %v87
    %v167 = vunpack.c.h.b16 %v87
    %v168 = vunpack.c.l.b16 %v88
    %v169 = vunpack.c.h.b16 %v88
    %v170 = vunpack.c.l.b16 %v89
    %v171 = vunpack.c.h.b16 %v89
    %v172 = vunpack.c.l.b16 %v90
    %v173 = vunpack.c.h.b16 %v90
    %v174 = vunpack.c.l.b16 %v91
    %v175 = vunpack.c.h.b16 %v91
    %v176 = vunpack.c.l.b16 %v92
    %v177 = vunpack.c.h.b16 %v92
    %v178 = vunpack.c.l.b16 %v93
    %v179 = vunpack.c.h.b16 %v93
    %v180 = vunpack.c.l.b16 %v94
    %v181 = vunpack.c.h.b16 %v94
    %v182 = vunpack.c.l.b16 %v95
    %v183 = vunpack.c.h.b16 %v95
    %v184 = vunpack.c.l.b16 %v96
    %v185 = vunpack.c.h.b16 %v96
    %v186 = vunpack.c.l.b16 %v97
    %v187 = vunpack.c.h.b16 %v97
    %v188 = vunpack.c.l.b16 %v98
    %v189 = vunpack.c.h.b16 %v98
    %v190 = vunpack.c.l.b16 %v99
    %v191 = vunpack.c.h.b16 %v99
    %v192 = vunpack.c.l.b16 %v100
    %v193 = vunpack.c.h.b16 %v100
    %v194 = vunpack.c.l.b16 %v101
    %v195 = vunpack.c.h.b16 %v101
    %v196 = vunpack.c.l.b16 %v102
    %v197 = vunpack.c.h.b16 %v102
    %v198 = vunpack.c.l.b16 %v103
    %v199 = vunpack.c.h.b16 %v103
    %v200 = vunpack.c.l.b16 %v104
    %v201 = vunpack.c.h.b16 %v104
    %v202 = vunpack.c.l.b16 %v105
    %v203 = vunpack.c.h.b16 %v105
    %v204 = vunpack.c.l.b16 %v106
    %v205 = vunpack.c.h.b16 %v106
    %v206 = vunpack.c.l.b16 %v107
    %v207 = vunpack.c.h.b16 %v107
    %v208 = vunpack.c.l.b16 %v108
    %v209 = vunpack.c.h.b16 %v108
    %v210 = vunpack.c.l.b16 %v109
    %v211 = vunpack.c.h.b16 %v109
    %v212 = vunpack.c.l.b16 %v110
    %v213 = vunpack.c.h.b16 %v110
    %v214 = vunpack.c.l.b16 %v111
    %v215 = vunpack.c.h.b16 %v111
    %v216 = vunpack.c.l.b16 %v112
    %v217 = vunpack.c.h.b16 %v112
    %v218 = vunpack.c.l.b16 %v113
    %v219 = vunpack.c.h.b16 %v113
    %v220 = vunpack.c.l.b16 %v114
    %v221 = vunpack.c.h.b16 %v114
    %v222 = vunpack.c.l.b16 %v115
    %v223 = vunpack.c.h.b16 %v115
    %v224 = vpack.c.b16 %v162, %v160
    %v225 = vpack.c.b16 %v163, %v161
    %v226 = vpack.c.b16 %v166, %v164
    %v227 = vpack.c.b16 %v167, %v165
    %v228 = vpack.c.b16 %v170, %v168
    %v229 = vpack.c.b16 %v171, %v169
    %v230 = vpack.c.b16 %v174, %v172
    %v231 = vpack.c.b16 %v175, %v173
    %v232 = vpack.c.b16 %v178, %v176
    %v233 = vpack.c.b16 %v179, %v177
    %v234 = vpack.c.b16 %v182, %v180
    %v235 = vpack.c.b16 %v183, %v181
    %v236 = vpack.c.b16 %v186, %v184
    %v237 = vpack.c.b16 %v187, %v185
    %v238 = vpack.c.b16 %v190, %v188
    %v239 = vpack.c.b16 %v191, %v189
    %v240 = vpack.c.b16 %v194, %v192
    %v241 = vpack.c.b16 %v195, %v193
    %v242 = vpack.c.b16 %v198, %v196
    %v243 = vpack.c.b16 %v199, %v197
    %v244 = vpack.c.b16 %v202, %v200
    %v245 = vpack.c.b16 %v203, %v201
    %v246 = vpack.c.b16 %v206, %v204
    %v247 = vpack.c.b16 %v207, %v205
    %v248 = vpack.c.b16 %v210, %v208
    %v249 = vpack.c.b16 %v211, %v209
    %v250 = vpack.c.b16 %v214, %v212
    %v251 = vpack.c.b16 %v215, %v213
    %v252 = vpack.c.b16 %v218, %v216
    %v253 = vpack.c.b16 %v219, %v217
    %v254 = vpack.c.b16 %v222, %v220
    %v255 = vpack.c.b16 %v223, %v221
    %288 = vmatprep.subr.bf16.mxu0 %v225
    %289 = vmatpush1.bf16.msra.mxu0 %v224
    %290 = vmatprep.subr.bf16.mxu0 %v227
    %291 = vmatpush1.bf16.msra.mxu0 %v226
    %292 = vmatprep.subr.bf16.mxu0 %v229
    %293 = vmatpush1.bf16.msra.mxu0 %v228
    %294 = vmatprep.subr.bf16.mxu0 %v231
    %295 = vmatpush1.bf16.msra.mxu0 %v230
    %296 = vmatprep.subr.bf16.mxu0 %v233
    %297 = vmatpush1.bf16.msra.mxu0 %v232
    %298 = vmatprep.subr.bf16.mxu0 %v235
    %299 = vmatpush1.bf16.msra.mxu0 %v234
    %300 = vmatprep.subr.bf16.mxu0 %v237
    %301 = vmatpush1.bf16.msra.mxu0 %v236
    %302 = vmatprep.subr.bf16.mxu0 %v239
    %303 = vmatpush1.bf16.msra.mxu0 %v238
    %304 = vmatprep.subr.bf16.mxu0 %v241
    %305 = vmatpush1.bf16.msra.mxu0 %v240
    %306 = vmatprep.subr.bf16.mxu0 %v243
    %307 = vmatpush1.bf16.msra.mxu0 %v242
    %308 = vmatprep.subr.bf16.mxu0 %v245
    %309 = vmatpush1.bf16.msra.mxu0 %v244
    %310 = vmatprep.subr.bf16.mxu0 %v247
    %311 = vmatpush1.bf16.msra.mxu0 %v246
    %312 = vmatprep.subr.bf16.mxu0 %v249
    %313 = vmatpush1.bf16.msra.mxu0 %v248
    %314 = vmatprep.subr.bf16.mxu0 %v251
    %315 = vmatpush1.bf16.msra.mxu0 %v250
    %316 = vmatprep.subr.bf16.mxu0 %v253
    %317 = vmatpush1.bf16.msra.mxu0 %v252
    %318 = vmatprep.subr.bf16.mxu0 %v255
    %319 = vmatpush1.bf16.msra.mxu0 %v254
    %320 = vmatprep.mubr.bf16.mxu0 %v83
    %321 = vmatmul.mubr.bf16.gmra.mrb[0].mxu0 %v82
    %v322 = vpop.f32.mrb[0].mxu0
    %v323 = vadd.f32 %v121, %v322
    %v324 = vpop.f32.mrb[0].mxu0
    %v325 = vadd.f32 %v125, %v324
    %v326 = vpop.f32.mrb[0].mxu0
    %v327 = vpop.f32.mrb[0].mxu0
    %328 = vdwg.mxu0
    %v329 = vmax.f32 %v323, 0.0
    %v330 = vmax.f32 %v325, 0.0
    %v331 = vpack.c.bf16 %v329, %v329
    %v332 = vpack.c.bf16 %v330, %v330
    %v333 = vld [vmem:[%s4] sm:$0xff]
    %v334 = vld [vmem:[%s4 + $0x8] sm:$0xf]
    %v335 = vld [vmem:[%s4 + $0xc] sm:$0xff]
    %v336 = vld [vmem:[%s4 + $0x14] sm:$0xf]
    %v337 = vld [vmem:[%s4 + $0x18] sm:$0xff]
    %v338 = vld [vmem:[%s4 + $0x20] sm:$0xf]
    %v339 = vld [vmem:[%s4 + $0x24] sm:$0xff]
    %v340 = vld [vmem:[%s4 + $0x2c] sm:$0xf]
    %v341 = vld [vmem:[%s4 + $0x30] sm:$0xff]
    %v342 = vld [vmem:[%s4 + $0x38] sm:$0xf]
    %v343 = vld [vmem:[%s4 + $0x3c] sm:$0xff]
    %v344 = vld [vmem:[%s4 + $0x44] sm:$0xf]
    %v345 = vld [vmem:[%s4 + $0x48] sm:$0xff]
    %v346 = vld [vmem:[%s4 + $0x50] sm:$0xf]
    %v347 = vld [vmem:[%s4 + $0x54] sm:$0xff]
    %v348 = vld [vmem:[%s4 + $0x5c] sm:$0xf]
    %v349 = vld [vmem:[%s4 + $0x60] sm:$0xff]
    %v350 = vld [vmem:[%s4 + $0x68] sm:$0xf]
    %v351 = vld [vmem:[%s4 + $0x6c] sm:$0xff]
    %v352 = vld [vmem:[%s4 + $0x74] sm:$0xf]
    %v353 = vld [vmem:[%s4 + $0x78] sm:$0xff]
    %v354 = vld [vmem:[%s4 + $0x80] sm:$0xf]
    %v355 = vld [vmem:[%s4 + $0x84] sm:$0xff]
    %v356 = vld [vmem:[%s4 + $0x8c] sm:$0xf]
    %v357 = vld [vmem:[%s4 + $0x90] sm:$0xff]
    %v358 = vld [vmem:[%s4 + $0x98] sm:$0xf]
    %v359 = vld [vmem:[%s4 + $0x9c] sm:$0xff]
    %v360 = vld [vmem:[%s4 + $0xa4] sm:$0xf]
    %v361 = vld [vmem:[%s4 + $0xa8] sm:$0xff]
    %v362 = vld [vmem:[%s4 + $0xb0] sm:$0xf]
    %v363 = vld [vmem:[%s4 + $0xb4] sm:$0xff]
    %v364 = vld [vmem:[%s4 + $0xbc] sm:$0xf]
    %v365 = vld [vmem:[%s4 + $0xc0] sm:$0xff]
    %v366 = vld [vmem:[%s4 + $0xc8] sm:$0xf]
    %v367 = vld [vmem:[%s4 + $0xcc] sm:$0xff]
    %v368 = vld [vmem:[%s4 + $0xd4] sm:$0xf]
    %v369 = vld [vmem:[%s4 + $0xd8] sm:$0xff]
    %v370 = vld [vmem:[%s4 + $0xe0] sm:$0xf]
    %v371 = vld [vmem:[%s4 + $0xe4] sm:$0xff]
    %v372 = vld [vmem:[%s4 + $0xec] sm:$0xf]
    %v373 = vld [vmem:[%s4 + $0xf0] sm:$0xff]
    %v374 = vld [vmem:[%s4 + $0xf8] sm:$0xf]
    %v375 = vld [vmem:[%s4 + $0xfc] sm:$0xff]
    %v376 = vld [vmem:[%s4 + $0x104] sm:$0xf]
    %v377 = vld [vmem:[%s4 + $0x108] sm:$0xff]
    %v378 = vld [vmem:[%s4 + $0x110] sm:$0xf]
    %v379 = vld [vmem:[%s4 + $0x114] sm:$0xff]
    %v380 = vld [vmem:[%s4 + $0x11c] sm:$0xf]
    %v381 = vld [vmem:[%s4 + $0x120] sm:$0xff]
    %v382 = vld [vmem:[%s4 + $0x128] sm:$0xf]
    %v383 = vld [vmem:[%s4 + $0x12c] sm:$0xff]
    %v384 = vld [vmem:[%s4 + $0x134] sm:$0xf]
    %v385 = vld [vmem:[%s4 + $0x138] sm:$0xff]
    %v386 = vld [vmem:[%s4 + $0x140] sm:$0xf]
    %v387 = vld [vmem:[%s4 + $0x144] sm:$0xff]
    %v388 = vld [vmem:[%s4 + $0x14c] sm:$0xf]
    %v389 = vld [vmem:[%s4 + $0x150] sm:$0xff]
    %v390 = vld [vmem:[%s4 + $0x158] sm:$0xf]
    %v391 = vld [vmem:[%s4 + $0x15c] sm:$0xff]
    %v392 = vld [vmem:[%s4 + $0x164] sm:$0xf]
    %v393 = vld [vmem:[%s4 + $0x168] sm:$0xff]
    %v394 = vld [vmem:[%s4 + $0x170] sm:$0xf]
    %v395 = vld [vmem:[%s4 + $0x174] sm:$0xff]
    %v396 = vld [vmem:[%s4 + $0x17c] sm:$0xf]
    %v397 = vld [vmem:[%s5] sm:$0x7]
    %v399 = vlaneseq
    %v400 = vshrl.u32 %v399, 7
    %v401 = vsub.s32 0, %v400
    %v402 = vrot.slane %v397, %v401
    %v403 = vlaneseq
    %v404 = vshrl.u32 %v403, 7
    %v405 = vsub.s32 1, %v404
    %v406 = vrot.slane %v397, %v405
    %v407 = vlaneseq
    %v408 = vshrl.u32 %v407, 7
    %v409 = vsub.s32 2, %v408
    %v410 = vrot.slane %v397, %v409
    %v478 = vunpack.c.l.b16 %v333
    %v479 = vunpack.c.h.b16 %v333
    %v480 = vunpack.c.l.b16 %v334
    %v481 = vunpack.c.l.b16 %v335
    %v482 = vunpack.c.h.b16 %v335
    %v483 = vunpack.c.l.b16 %v336
    %v484 = vunpack.c.l.b16 %v337
    %v485 = vunpack.c.h.b16 %v337
    %v486 = vunpack.c.l.b16 %v338
    %v487 = vunpack.c.l.b16 %v339
    %v488 = vunpack.c.h.b16 %v339
    %v489 = vunpack.c.l.b16 %v340
    %v490 = vunpack.c.l.b16 %v341
    %v491 = vunpack.c.h.b16 %v341
    %v492 = vunpack.c.l.b16 %v342
    %v493 = vunpack.c.l.b16 %v343
    %v494 = vunpack.c.h.b16 %v343
    %v495 = vunpack.c.l.b16 %v344
    %v496 = vunpack.c.l.b16 %v345
    %v497 = vunpack.c.h.b16 %v345
    %v498 = vunpack.c.l.b16 %v346
    %v499 = vunpack.c.l.b16 %v347
    %v500 = vunpack.c.h.b16 %v347
    %v501 = vunpack.c.l.b16 %v348
    %v502 = vunpack.c.l.b16 %v349
    %v503 = vunpack.c.h.b16 %v349
    %v504 = vunpack.c.l.b16 %v350
    %v505 = vunpack.c.l.b16 %v351
    %v506 = vunpack.c.h.b16 %v351
    %v507 = vunpack.c.l.b16 %v352
    %v508 = vunpack.c.l.b16 %v353
    %v509 = vunpack.c.h.b16 %v353
    %v510 = vunpack.c.l.b16 %v354
    %v511 = vunpack.c.l.b16 %v355
    %v512 = vunpack.c.h.b16 %v355
    %v513 = vunpack.c.l.b16 %v356
    %v514 = vunpack.c.l.b16 %v357
    %v515 = vunpack.c.h.b16 %v357
    %v516 = vunpack.c.l.b16 %v358
    %v517 = vunpack.c.l.b16 %v359
    %v518 = vunpack.c.h.b16 %v359
    %v519 = vunpack.c.l.b16 %v360
    %v520 = vunpack.c.l.b16 %v361
    %v521 = vunpack.c.h.b16 %v361
    %v522 = vunpack.c.l.b16 %v362
    %v523 = vunpack.c.l.b16 %v363
    %v524 = vunpack.c.h.b16 %v363
    %v525 = vunpack.c.l.b16 %v364
    %v526 = vunpack.c.l.b16 %v365
    %v527 = vunpack.c.h.b16 %v365
    %v528 = vunpack.c.l.b16 %v366
    %v529 = vunpack.c.l.b16 %v367
    %v530 = vunpack.c.h.b16 %v367
    %v531 = vunpack.c.l.b16 %v368
    %v532 = vunpack.c.l.b16 %v369
    %v533 = vunpack.c.h.b16 %v369
    %v534 = vunpack.c.l.b16 %v370
    %v535 = vunpack.c.l.b16 %v371
    %v536 = vunpack.c.h.b16 %v371
    %v537 = vunpack.c.l.b16 %v372
    %v538 = vunpack.c.l.b16 %v373
    %v539 = vunpack.c.h.b16 %v373
    %v540 = vunpack.c.l.b16 %v374
    %v541 = vunpack.c.l.b16 %v375
    %v542 = vunpack.c.h.b16 %v375
    %v543 = vunpack.c.l.b16 %v376
    %v544 = vunpack.c.l.b16 %v377
    %v545 = vunpack.c.h.b16 %v377
    %v546 = vunpack.c.l.b16 %v378
    %v547 = vunpack.c.l.b16 %v379
    %v548 = vunpack.c.h.b16 %v379
    %v549 = vunpack.c.l.b16 %v380
    %v550 = vunpack.c.l.b16 %v381
    %v551 = vunpack.c.h.b16 %v381
    %v552 = vunpack.c.l.b16 %v382
    %v553 = vunpack.c.l.b16 %v383
    %v554 = vunpack.c.h.b16 %v383
    %v555 = vunpack.c.l.b16 %v384
    %v556 = vunpack.c.l.b16 %v385
    %v557 = vunpack.c.h.b16 %v385
    %v558 = vunpack.c.l.b16 %v386
    %v559 = vunpack.c.l.b16 %v387
    %v560 = vunpack.c.h.b16 %v387
    %v561 = vunpack.c.l.b16 %v388
    %v562 = vunpack.c.l.b16 %v389
    %v563 = vunpack.c.h.b16 %v389
    %v564 = vunpack.c.l.b16 %v390
    %v565 = vunpack.c.l.b16 %v391
    %v566 = vunpack.c.h.b16 %v391
    %v567 = vunpack.c.l.b16 %v392
    %v568 = vunpack.c.l.b16 %v393
    %v569 = vunpack.c.h.b16 %v393
    %v570 = vunpack.c.l.b16 %v394
    %v571 = vunpack.c.l.b16 %v395
    %v572 = vunpack.c.h.b16 %v395
    %v573 = vunpack.c.l.b16 %v396
    %v574 = vpack.c.b16 %v481, %v478
    %v575 = vpack.c.b16 %v482, %v479
    %v576 = vpack.c.b16 %v483, %v480
    %v577 = vpack.c.b16 %v487, %v484
    %v578 = vpack.c.b16 %v488, %v485
    %v579 = vpack.c.b16 %v489, %v486
    %v580 = vpack.c.b16 %v493, %v490
    %v581 = vpack.c.b16 %v494, %v491
    %v582 = vpack.c.b16 %v495, %v492
    %v583 = vpack.c.b16 %v499, %v496
    %v584 = vpack.c.b16 %v500, %v497
    %v585 = vpack.c.b16 %v501, %v498
    %v586 = vpack.c.b16 %v505, %v502
    %v587 = vpack.c.b16 %v506, %v503
    %v588 = vpack.c.b16 %v507, %v504
    %v589 = vpack.c.b16 %v511, %v508
    %v590 = vpack.c.b16 %v512, %v509
    %v591 = vpack.c.b16 %v513, %v510
    %v592 = vpack.c.b16 %v517, %v514
    %v593 = vpack.c.b16 %v518, %v515
    %v594 = vpack.c.b16 %v519, %v516
    %v595 = vpack.c.b16 %v523, %v520
    %v596 = vpack.c.b16 %v524, %v521
    %v597 = vpack.c.b16 %v525, %v522
    %v598 = vpack.c.b16 %v529, %v526
    %v599 = vpack.c.b16 %v530, %v527
    %v600 = vpack.c.b16 %v531, %v528
    %v601 = vpack.c.b16 %v535, %v532
    %v602 = vpack.c.b16 %v536, %v533
    %v603 = vpack.c.b16 %v537, %v534
    %v604 = vpack.c.b16 %v541, %v538
    %v605 = vpack.c.b16 %v542, %v539
    %v606 = vpack.c.b16 %v543, %v540
    %v607 = vpack.c.b16 %v547, %v544
    %v608 = vpack.c.b16 %v548, %v545
    %v609 = vpack.c.b16 %v549, %v546
    %v610 = vpack.c.b16 %v553, %v550
    %v611 = vpack.c.b16 %v554, %v551
    %v612 = vpack.c.b16 %v555, %v552
    %v613 = vpack.c.b16 %v559, %v556
    %v614 = vpack.c.b16 %v560, %v557
    %v615 = vpack.c.b16 %v561, %v558
    %v616 = vpack.c.b16 %v565, %v562
    %v617 = vpack.c.b16 %v566, %v563
    %v618 = vpack.c.b16 %v567, %v564
    %v619 = vpack.c.b16 %v571, %v568
    %v620 = vpack.c.b16 %v572, %v569
    %v621 = vpack.c.b16 %v573, %v570
    %670 = vmatprep.subr.bf16.mxu0 %v575
    %671 = vmatpush1.bf16.msra.mxu0 %v574
    %672 = vmatprep.subr.bf16.mxu0 %v578
    %673 = vmatpush1.bf16.msra.mxu0 %v577
    %674 = vmatprep.subr.bf16.mxu0 %v581
    %675 = vmatpush1.bf16.msra.mxu0 %v580
    %676 = vmatprep.subr.bf16.mxu0 %v584
    %677 = vmatpush1.bf16.msra.mxu0 %v583
    %678 = vmatprep.subr.bf16.mxu0 %v587
    %679 = vmatpush1.bf16.msra.mxu0 %v586
    %680 = vmatprep.subr.bf16.mxu0 %v590
    %681 = vmatpush1.bf16.msra.mxu0 %v589
    %682 = vmatprep.subr.bf16.mxu0 %v593
    %683 = vmatpush1.bf16.msra.mxu0 %v592
    %684 = vmatprep.subr.bf16.mxu0 %v596
    %685 = vmatpush1.bf16.msra.mxu0 %v595
    %686 = vmatprep.subr.bf16.mxu0 %v599
    %687 = vmatpush1.bf16.msra.mxu0 %v598
    %688 = vmatprep.subr.bf16.mxu0 %v602
    %689 = vmatpush1.bf16.msra.mxu0 %v601
    %690 = vmatprep.subr.bf16.mxu0 %v605
    %691 = vmatpush1.bf16.msra.mxu0 %v604
    %692 = vmatprep.subr.bf16.mxu0 %v608
    %693 = vmatpush1.bf16.msra.mxu0 %v607
    %694 = vmatprep.subr.bf16.mxu0 %v611
    %695 = vmatpush1.bf16.msra.mxu0 %v610
    %696 = vmatprep.subr.bf16.mxu0 %v614
    %697 = vmatpush1.bf16.msra.mxu0 %v613
    %698 = vmatprep.subr.bf16.mxu0 %v617
    %699 = vmatpush1.bf16.msra.mxu0 %v616
    %700 = vmatprep.subr.bf16.mxu0 %v620
    %701 = vmatpush1.bf16.msra.mxu0 %v619
    %702 = vmatprep.mubr.bf16.mxu0 %v332
    %703 = vmatmul.mubr.bf16.gmra.mrb[0].mxu0 %v331
    %v704 = vpop.f32.mrb[0].mxu0
    %v705 = vadd.f32 %v402, %v704
    %v706 = vpop.f32.mrb[0].mxu0
    %v707 = vadd.f32 %v406, %v706
    %v708 = vpop.f32.mrb[0].mxu0
    %v709 = vpop.f32.mrb[0].mxu0
    %710 = vdwg.mxu0
    %711 = vmatprep.subr.bf16.mxu0 0
    %712 = vmatpush1.bf16.msra.mxu0 %v576
    %713 = vmatprep.subr.bf16.mxu0 0
    %714 = vmatpush1.bf16.msra.mxu0 %v579
    %715 = vmatprep.subr.bf16.mxu0 0
    %716 = vmatpush1.bf16.msra.mxu0 %v582
    %717 = vmatprep.subr.bf16.mxu0 0
    %718 = vmatpush1.bf16.msra.mxu0 %v585
    %719 = vmatprep.subr.bf16.mxu0 0
    %720 = vmatpush1.bf16.msra.mxu0 %v588
    %721 = vmatprep.subr.bf16.mxu0 0
    %722 = vmatpush1.bf16.msra.mxu0 %v591
    %723 = vmatprep.subr.bf16.mxu0 0
    %724 = vmatpush1.bf16.msra.mxu0 %v594
    %725 = vmatprep.subr.bf16.mxu0 0
    %726 = vmatpush1.bf16.msra.mxu0 %v597
    %727 = vmatprep.subr.bf16.mxu0 0
    %728 = vmatpush1.bf16.msra.mxu0 %v600
    %729 = vmatprep.subr.bf16.mxu0 0
    %730 = vmatpush1.bf16.msra.mxu0 %v603
    %731 = vmatprep.subr.bf16.mxu0 0
    %732 = vmatpush1.bf16.msra.mxu0 %v606
    %733 = vmatprep.subr.bf16.mxu0 0
    %734 = vmatpush1.bf16.msra.mxu0 %v609
    %735 = vmatprep.subr.bf16.mxu0 0
    %736 = vmatpush1.bf16.msra.mxu0 %v612
    %737 = vmatprep.subr.bf16.mxu0 0
    %738 = vmatpush1.bf16.msra.mxu0 %v615
    %739 = vmatprep.subr.bf16.mxu0 0
    %740 = vmatpush1.bf16.msra.mxu0 %v618
    %741 = vmatprep.subr.bf16.mxu0 0
    %742 = vmatpush1.bf16.msra.mxu0 %v621
    %743 = vmatprep.mubr.bf16.mxu0 %v332
    %744 = vmatmul.mubr.bf16.gmra.mrb[0].mxu0 %v331
    %v745 = vpop.f32.mrb[0].mxu0
    %v746 = vadd.f32 %v410, %v745
    %v747 = vpop.f32.mrb[0].mxu0
    %v748 = vpop.f32.mrb[0].mxu0
    %v749 = vpop.f32.mrb[0].mxu0
    %750 = vdwg.mxu0
    %v751 = vld [vmem:[%s1] sm:$0xff]
    %v752 = vld [vmem:[%s1 + $0x8] sm:$0xff]
    %v753 = vld [vmem:[%s1 + $0x10] sm:$0xff]
    %v754 = vld [vmem:[%s1 + $0x18] sm:$0xff]
    %v755 = vld [vmem:[%s1 + $0x20] sm:$0xff]
    %v756 = vld [vmem:[%s1 + $0x28] sm:$0xff]
    %v757 = vld [vmem:[%s1 + $0x30] sm:$0xff]
    %v758 = vld [vmem:[%s1 + $0x38] sm:$0xff]
    %v759 = vld [vmem:[%s1 + $0x40] sm:$0xff]
    %v760 = vld [vmem:[%s1 + $0x48] sm:$0xff]
    %v761 = vld [vmem:[%s1 + $0x50] sm:$0xff]
    %v762 = vld [vmem:[%s1 + $0x58] sm:$0xff]
    %v763 = vld [vmem:[%s1 + $0x60] sm:$0x3]
    %v764 = vpack.c.bf16 %v752, %v751
    %v765 = vpack.c.bf16 %v754, %v753
    %v766 = vpack.c.bf16 %v756, %v755
    %v767 = vpack.c.bf16 %v758, %v757
    %v768 = vpack.c.bf16 %v760, %v759
    %v769 = vpack.c.bf16 %v762, %v761
    %v770 = vpack.c.bf16 %v763, %v763
    %v771 = vld [vmem:[%s6] sm:$0xf]
    %v772 = vld [vmem:[%s6 + $0x4] sm:$0xf]
    %v773 = vld [vmem:[%s7] sm:$0x1]
    %v775 = vlaneseq
    %v776 = vshrl.u32 %v775, 7
    %v777 = vsub.s32 0, %v776
    %v778 = vrot.slane %v773, %v777
    %v782 = vunpack.c.l.b16 %v771
    %v783 = vunpack.c.l.b16 %v772
    %v784 = vpack.c.b16 %v783, %v782
    %vm786 = vcmask 130048
    %v788 = vsel %vm786, %v764, 0
    %v791 = vsel %vm786, %v765, 0
    %v794 = vsel %vm786, %v766, 0
    %v797 = vsel %vm786, %v767, 0
    %v800 = vsel %vm786, %v768, 0
    %v803 = vsel %vm786, %v769, 0
    %v806 = vsel %vm786, %v770, 0
    %808 = vmatprep.subr.bf16.mxu0 0
    %809 = vmatpush1.bf16.msra.mxu0 %v784
    %810 = vmatprep.subr.bf16.mxu0 0
    %811 = vmatpush1.bf16.msra.mxu0 0
    %812 = vmatprep.subr.bf16.mxu0 0
    %813 = vmatpush1.bf16.msra.mxu0 0
    %814 = vmatprep.subr.bf16.mxu0 0
    %815 = vmatpush1.bf16.msra.mxu0 0
    %816 = vmatprep.subr.bf16.mxu0 0
    %817 = vmatpush1.bf16.msra.mxu0 0
    %818 = vmatprep.subr.bf16.mxu0 0
    %819 = vmatpush1.bf16.msra.mxu0 0
    %820 = vmatprep.subr.bf16.mxu0 0
    %821 = vmatpush1.bf16.msra.mxu0 0
    %822 = vmatprep.subr.bf16.mxu0 0
    %823 = vmatpush1.bf16.msra.mxu0 0
    %824 = vmatprep.subr.bf16.mxu0 0
    %825 = vmatpush1.bf16.msra.mxu0 0
    %826 = vmatprep.subr.bf16.mxu0 0
    %827 = vmatpush1.bf16.msra.mxu0 0
    %828 = vmatprep.subr.bf16.mxu0 0
    %829 = vmatpush1.bf16.msra.mxu0 0
    %830 = vmatprep.subr.bf16.mxu0 0
    %831 = vmatpush1.bf16.msra.mxu0 0
    %832 = vmatprep.subr.bf16.mxu0 0
    %833 = vmatpush1.bf16.msra.mxu0 0
    %834 = vmatprep.subr.bf16.mxu0 0
    %835 = vmatpush1.bf16.msra.mxu0 0
    %836 = vmatprep.subr.bf16.mxu0 0
    %837 = vmatpush1.bf16.msra.mxu0 0
    %838 = vmatprep.subr.bf16.mxu0 0
    %839 = vmatpush1.bf16.msra.mxu0 0
    %840 = vmatprep.mubr.bf16.mxu0 0
    %841 = vmatmul.mubr.bf16.gmra.mrb[0].mxu0 %v788
    %v842 = vpop.f32.mrb[0].mxu0
    %v843 = vadd.f32 %v778, %v842
    %v844 = vpop.f32.mrb[0].mxu0
    %v845 = vpop.f32.mrb[0].mxu0
    %v846 = vadd.f32 %v778, %v845
    %v847 = vpop.f32.mrb[0].mxu0
    %848 = vmatprep.mubr.bf16.mxu0 0
    %849 = vmatmul.mubr.bf16.gmra.mrb[0].mxu0 %v791
    %v850 = vpop.f32.mrb[0].mxu0
    %v851 = vadd.f32 %v778, %v850
    %v852 = vpop.f32.mrb[0].mxu0
    %v853 = vpop.f32.mrb[0].mxu0
    %v854 = vadd.f32 %v778, %v853
    %v855 = vpop.f32.mrb[0].mxu0
    %856 = vmatprep.mubr.bf16.mxu0 0
    %857 = vmatmul.mubr.bf16.gmra.mrb[0].mxu0 %v794
    %v858 = vpop.f32.mrb[0].mxu0
    %v859 = vadd.f32 %v778, %v858
    %v860 = vpop.f32.mrb[0].mxu0
    %v861 = vpop.f32.mrb[0].mxu0
    %v862 = vadd.f32 %v778, %v861
    %v863 = vpop.f32.mrb[0].mxu0
    %864 = vmatprep.mubr.bf16.mxu0 0
    %865 = vmatmul.mubr.bf16.gmra.mrb[0].mxu0 %v797
    %v866 = vpop.f32.mrb[0].mxu0
    %v867 = vadd.f32 %v778, %v866
    %v868 = vpop.f32.mrb[0].mxu0
    %v869 = vpop.f32.mrb[0].mxu0
    %v870 = vadd.f32 %v778, %v869
    %v871 = vpop.f32.mrb[0].mxu0
    %872 = vmatprep.mubr.bf16.mxu0 0
    %873 = vmatmul.mubr.bf16.gmra.mrb[0].mxu0 %v800
    %v874 = vpop.f32.mrb[0].mxu0
    %v875 = vadd.f32 %v778, %v874
    %v876 = vpop.f32.mrb[0].mxu0
    %v877 = vpop.f32.mrb[0].mxu0
    %v878 = vadd.f32 %v778, %v877
    %v879 = vpop.f32.mrb[0].mxu0
    %880 = vmatprep.mubr.bf16.mxu0 0
    %881 = vmatmul.mubr.bf16.gmra.mrb[0].mxu0 %v803
    %v882 = vpop.f32.mrb[0].mxu0
    %v883 = vadd.f32 %v778, %v882
    %v884 = vpop.f32.mrb[0].mxu0
    %v885 = vpop.f32.mrb[0].mxu0
    %v886 = vadd.f32 %v778, %v885
    %v887 = vpop.f32.mrb[0].mxu0
    %888 = vmatprep.mubr.bf16.mxu0 0
    %889 = vmatmul.mubr.bf16.gmra.mrb[0].mxu0 %v806
    %v890 = vpop.f32.mrb[0].mxu0
    %v891 = vadd.f32 %v778, %v890
    %v892 = vpop.f32.mrb[0].mxu0
    %v893 = vpop.f32.mrb[0].mxu0
    %v894 = vpop.f32.mrb[0].mxu0
    %895 = vdwg.mxu0
    %v896 = vmul.f32 %v843, 0.01
    %v897 = vmul.f32 %v846, 0.01
    %v898 = vmul.f32 %v851, 0.01
    %v899 = vmul.f32 %v854, 0.01
    %v900 = vmul.f32 %v859, 0.01
    %v901 = vmul.f32 %v862, 0.01
    %v902 = vmul.f32 %v867, 0.01
    %v903 = vmul.f32 %v870, 0.01
    %v904 = vmul.f32 %v875, 0.01
    %v905 = vmul.f32 %v878, 0.01
    %v906 = vmul.f32 %v883, 0.01
    %v907 = vmul.f32 %v886, 0.01
    %v908 = vmul.f32 %v891, 0.01
    %v909 = vmax.f32 %v843, %v896
    %v910 = vmax.f32 %v846, %v897
    %v911 = vmax.f32 %v851, %v898
    %v912 = vmax.f32 %v854, %v899
    %v913 = vmax.f32 %v859, %v900
    %v914 = vmax.f32 %v862, %v901
    %v915 = vmax.f32 %v867, %v902
    %v916 = vmax.f32 %v870, %v903
    %v917 = vmax.f32 %v875, %v904
    %v918 = vmax.f32 %v878, %v905
    %v919 = vmax.f32 %v883, %v906
    %v920 = vmax.f32 %v886, %v907
    %v921 = vmax.f32 %v891, %v908
    %922 = vst [vmem:[#allocation2] sm:$0xff] %v909
    %923 = vst [vmem:[#allocation2 + $0x8] sm:$0xff] %v910
    %924 = vst [vmem:[#allocation2 + $0x10] sm:$0xff] %v911
    %925 = vst [vmem:[#allocation2 + $0x18] sm:$0xff] %v912
    %926 = vst [vmem:[#allocation2 + $0x20] sm:$0xff] %v913
    %927 = vst [vmem:[#allocation2 + $0x28] sm:$0xff] %v914
    %928 = vst [vmem:[#allocation2 + $0x30] sm:$0xff] %v915
    %929 = vst [vmem:[#allocation2 + $0x38] sm:$0xff] %v916
    %930 = vst [vmem:[#allocation2 + $0x40] sm:$0xff] %v917
    %931 = vst [vmem:[#allocation2 + $0x48] sm:$0xff] %v918
    %932 = vst [vmem:[#allocation2 + $0x50] sm:$0xff] %v919
    %933 = vst [vmem:[#allocation2 + $0x58] sm:$0xff] %v920
    %934 = vst [vmem:[#allocation2 + $0x60] sm:$0x3] %v921
    %v935 = vld [vmem:[#allocation2] sm:$0xff]
    %v936 = vld [vmem:[#allocation2 + $0x8] sm:$0xff]
    %v937 = vld [vmem:[#allocation2 + $0x10] sm:$0xff]
    %v938 = vld [vmem:[#allocation2 + $0x18] sm:$0xff]
    %v939 = vld [vmem:[#allocation2 + $0x20] sm:$0xff]
    %v940 = vld [vmem:[#allocation2 + $0x28] sm:$0xff]
    %v941 = vld [vmem:[#allocation2 + $0x30] sm:$0x1]
    %v942 = vlaneseq
    %v943 = vshrl.u32 %v942, 7
    %v944 = vsub.s32 0, %v943
    %v945 = vrot.slane %v705, %v944
    %v946 = vadd.f32 %v935, %v945
    %v947 = vadd.f32 %v936, %v945
    %v948 = vadd.f32 %v937, %v945
    %v949 = vadd.f32 %v938, %v945
    %v950 = vadd.f32 %v939, %v945
    %v951 = vadd.f32 %v940, %v945
    %v952 = vadd.f32 %v941, %v945
    %953 = vst [vmem:[#allocation2] sm:$0xff] %v946
    %954 = vst [vmem:[#allocation2 + $0x8] sm:$0xff] %v947
    %955 = vst [vmem:[#allocation2 + $0x10] sm:$0xff] %v948
    %956 = vst [vmem:[#allocation2 + $0x18] sm:$0xff] %v949
    %957 = vst [vmem:[#allocation2 + $0x20] sm:$0xff] %v950
    %958 = vst [vmem:[#allocation2 + $0x28] sm:$0xff] %v951
    %959 = vst [vmem:[#allocation2 + $0x30] sm:$0x1] %v952
    %v960 = vld [vmem:[#allocation2 + $0x31] sm:$0xff]
    %v961 = vld [vmem:[#allocation2 + $0x39] sm:$0xff]
    %v962 = vld [vmem:[#allocation2 + $0x41] sm:$0xff]
    %v963 = vld [vmem:[#allocation2 + $0x49] sm:$0xff]
    %v964 = vld [vmem:[#allocation2 + $0x51] sm:$0xff]
    %v965 = vld [vmem:[#allocation2 + $0x59] sm:$0xff]
    %v966 = vld [vmem:[#allocation2 + $0x61] sm:$0x1]
    %v967 = vlaneseq
    %v968 = vshrl.u32 %v967, 7
    %v969 = vsub.s32 1, %v968
    %v970 = vrot.slane %v705, %v969
    %v971 = vadd.f32 %v960, %v970
    %v972 = vadd.f32 %v961, %v970
    %v973 = vadd.f32 %v962, %v970
    %v974 = vadd.f32 %v963, %v970
    %v975 = vadd.f32 %v964, %v970
    %v976 = vadd.f32 %v965, %v970
    %v977 = vadd.f32 %v966, %v970
    %978 = vst [vmem:[#allocation2 + $0x31] sm:$0xff] %v971
    %979 = vst [vmem:[#allocation2 + $0x39] sm:$0xff] %v972
    %980 = vst [vmem:[#allocation2 + $0x41] sm:$0xff] %v973
    %981 = vst [vmem:[#allocation2 + $0x49] sm:$0xff] %v974
    %982 = vst [vmem:[#allocation2 + $0x51] sm:$0xff] %v975
    %983 = vst [vmem:[#allocation2 + $0x59] sm:$0xff] %v976
    %984 = vst [vmem:[#allocation2 + $0x61] sm:$0x1] %v977
    %v985 = vld [vmem:[#allocation2] sm:$0xff]
    %v986 = vld [vmem:[#allocation2 + $0x8] sm:$0xff]
    %v987 = vld [vmem:[#allocation2 + $0x10] sm:$0xff]
    %v988 = vld [vmem:[#allocation2 + $0x18] sm:$0xff]
    %v989 = vld [vmem:[#allocation2 + $0x20] sm:$0xff]
    %v990 = vld [vmem:[#allocation2 + $0x28] sm:$0xff]
    %v991 = vld [vmem:[#allocation2 + $0x30] sm:$0xff]
    %v992 = vld [vmem:[#allocation2 + $0x38] sm:$0xff]
    %v993 = vld [vmem:[#allocation2 + $0x40] sm:$0xff]
    %v994 = vld [vmem:[#allocation2 + $0x48] sm:$0xff]
    %v995 = vld [vmem:[#allocation2 + $0x50] sm:$0xff]
    %v996 = vld [vmem:[#allocation2 + $0x58] sm:$0xff]
    %v997 = vld [vmem:[#allocation2 + $0x60] sm:$0x3]
    %v998 = vpack.c.bf16 %v986, %v985
    %v999 = vpack.c.bf16 %v988, %v987
    %v1000 = vpack.c.bf16 %v990, %v989
    %v1001 = vpack.c.bf16 %v992, %v991
    %v1002 = vpack.c.bf16 %v994, %v993
    %v1003 = vpack.c.bf16 %v996, %v995
    %v1004 = vpack.c.bf16 %v997, %v997
    %v1005 = vld [vmem:[%s8] sm:$0xf]
    %v1006 = vld [vmem:[%s8 + $0x4] sm:$0xf]
    %v1007 = vld [vmem:[%s8 + $0x8] sm:$0xf]
    %v1008 = vld [vmem:[%s8 + $0xc] sm:$0xf]
    %v1009 = vld [vmem:[%s8 + $0x10] sm:$0xf]
    %v1010 = vld [vmem:[%s8 + $0x14] sm:$0xf]
    %v1011 = vld [vmem:[%s8 + $0x18] sm:$0xf]
    %v1012 = vld [vmem:[%s8 + $0x1c] sm:$0xf]
    %v1013 = vld [vmem:[%s8 + $0x20] sm:$0xf]
    %v1014 = vld [vmem:[%s8 + $0x24] sm:$0xf]
    %v1015 = vld [vmem:[%s8 + $0x28] sm:$0xf]
    %v1016 = vld [vmem:[%s8 + $0x2c] sm:$0xf]
    %v1017 = vld [vmem:[%s8 + $0x30] sm:$0xf]
    %v1018 = vld [vmem:[%s8 + $0x34] sm:$0xf]
    %v1019 = vld [vmem:[%s8 + $0x38] sm:$0xf]
    %v1020 = vld [vmem:[%s8 + $0x3c] sm:$0xf]
    %v1037 = vunpack.c.l.b16 %v1005
    %v1038 = vunpack.c.l.b16 %v1006
    %v1039 = vunpack.c.l.b16 %v1007
    %v1040 = vunpack.c.l.b16 %v1008
    %v1041 = vunpack.c.l.b16 %v1009
    %v1042 = vunpack.c.l.b16 %v1010
    %v1043 = vunpack.c.l.b16 %v1011
    %v1044 = vunpack.c.l.b16 %v1012
    %v1045 = vunpack.c.l.b16 %v1013
    %v1046 = vunpack.c.l.b16 %v1014
    %v1047 = vunpack.c.l.b16 %v1015
    %v1048 = vunpack.c.l.b16 %v1016
    %v1049 = vunpack.c.l.b16 %v1017
    %v1050 = vunpack.c.l.b16 %v1018
    %v1051 = vunpack.c.l.b16 %v1019
    %v1052 = vunpack.c.l.b16 %v1020
    %v1053 = vpack.c.b16 %v1038, %v1037
    %v1054 = vpack.c.b16 %v1040, %v1039
    %v1055 = vpack.c.b16 %v1042, %v1041
    %v1056 = vpack.c.b16 %v1044, %v1043
    %v1057 = vpack.c.b16 %v1046, %v1045
    %v1058 = vpack.c.b16 %v1048, %v1047
    %v1059 = vpack.c.b16 %v1050, %v1049
    %v1060 = vpack.c.b16 %v1052, %v1051
    %1069 = vmatprep.subr.bf16.mxu0 0
    %1070 = vmatpush1.bf16.msra.mxu0 %v1053
    %1071 = vmatprep.subr.bf16.mxu0 0
    %1072 = vmatpush1.bf16.msra.mxu0 %v1054
    %1073 = vmatprep.subr.bf16.mxu0 0
    %1074 = vmatpush1.bf16.msra.mxu0 %v1055
    %1075 = vmatprep.subr.bf16.mxu0 0
    %1076 = vmatpush1.bf16.msra.mxu0 %v1056
    %1077 = vmatprep.subr.bf16.mxu0 0
    %1078 = vmatpush1.bf16.msra.mxu0 %v1057
    %1079 = vmatprep.subr.bf16.mxu0 0
    %1080 = vmatpush1.bf16.msra.mxu0 %v1058
    %1081 = vmatprep.subr.bf16.mxu0 0
    %1082 = vmatpush1.bf16.msra.mxu0 %v1059
    %1083 = vmatprep.subr.bf16.mxu0 0
    %1084 = vmatpush1.bf16.msra.mxu0 %v1060
    %1085 = vmatprep.subr.bf16.mxu0 0
    %1086 = vmatpush1.bf16.msra.mxu0 0
    %1087 = vmatprep.subr.bf16.mxu0 0
    %1088 = vmatpush1.bf16.msra.mxu0 0
    %1089 = vmatprep.subr.bf16.mxu0 0
    %1090 = vmatpush1.bf16.msra.mxu0 0
    %1091 = vmatprep.subr.bf16.mxu0 0
    %1092 = vmatpush1.bf16.msra.mxu0 0
    %1093 = vmatprep.subr.bf16.mxu0 0
    %1094 = vmatpush1.bf16.msra.mxu0 0
    %1095 = vmatprep.subr.bf16.mxu0 0
    %1096 = vmatpush1.bf16.msra.mxu0 0
    %1097 = vmatprep.subr.bf16.mxu0 0
    %1098 = vmatpush1.bf16.msra.mxu0 0
    %1099 = vmatprep.subr.bf16.mxu0 0
    %1100 = vmatpush1.bf16.msra.mxu0 0
    %1101 = vmatprep.mubr.bf16.mxu0 0
    %1102 = vmatmul.mubr.bf16.gmra.mrb[0].mxu0 %v998
    %v1103 = vpop.f32.mrb[0].mxu0
    %v1104 = vadd.f32 0.0, %v1103
    %v1105 = vpop.f32.mrb[0].mxu0
    %v1106 = vpop.f32.mrb[0].mxu0
    %v1107 = vadd.f32 0.0, %v1106
    %v1108 = vpop.f32.mrb[0].mxu0
    %1109 = vmatprep.mubr.bf16.mxu0 0
    %1110 = vmatmul.mubr.bf16.gmra.mrb[0].mxu0 %v999
    %v1111 = vpop.f32.mrb[0].mxu0
    %v1112 = vadd.f32 0.0, %v1111
    %v1113 = vpop.f32.mrb[0].mxu0
    %v1114 = vpop.f32.mrb[0].mxu0
    %v1115 = vadd.f32 0.0, %v1114
    %v1116 = vpop.f32.mrb[0].mxu0
    %1117 = vmatprep.mubr.bf16.mxu0 0
    %1118 = vmatmul.mubr.bf16.gmra.mrb[0].mxu0 %v1000
    %v1119 = vpop.f32.mrb[0].mxu0
    %v1120 = vadd.f32 0.0, %v1119
    %v1121 = vpop.f32.mrb[0].mxu0
    %v1122 = vpop.f32.mrb[0].mxu0
    %v1123 = vadd.f32 0.0, %v1122
    %v1124 = vpop.f32.mrb[0].mxu0
    %1125 = vmatprep.mubr.bf16.mxu0 0
    %1126 = vmatmul.mubr.bf16.gmra.mrb[0].mxu0 %v1001
    %v1127 = vpop.f32.mrb[0].mxu0
    %v1128 = vadd.f32 0.0, %v1127
    %v1129 = vpop.f32.mrb[0].mxu0
    %v1130 = vpop.f32.mrb[0].mxu0
    %v1131 = vadd.f32 0.0, %v1130
    %v1132 = vpop.f32.mrb[0].mxu0
    %1133 = vmatprep.mubr.bf16.mxu0 0
    %1134 = vmatmul.mubr.bf16.gmra.mrb[0].mxu0 %v1002
    %v1135 = vpop.f32.mrb[0].mxu0
    %v1136 = vadd.f32 0.0, %v1135
    %v1137 = vpop.f32.mrb[0].mxu0
    %v1138 = vpop.f32.mrb[0].mxu0
    %v1139 = vadd.f32 0.0, %v1138
    %v1140 = vpop.f32.mrb[0].mxu0
    %1141 = vmatprep.mubr.bf16.mxu0 0
    %1142 = vmatmul.mubr.bf16.gmra.mrb[0].mxu0 %v1003
    %v1143 = vpop.f32.mrb[0].mxu0
    %v1144 = vadd.f32 0.0, %v1143
    %v1145 = vpop.f32.mrb[0].mxu0
    %v1146 = vpop.f32.mrb[0].mxu0
    %v1147 = vadd.f32 0.0, %v1146
    %v1148 = vpop.f32.mrb[0].mxu0
    %1149 = vmatprep.mubr.bf16.mxu0 0
    %1150 = vmatmul.mubr.bf16.gmra.mrb[0].mxu0 %v1004
    %v1151 = vpop.f32.mrb[0].mxu0
    %v1152 = vadd.f32 0.0, %v1151
    %v1153 = vpop.f32.mrb[0].mxu0
    %v1154 = vpop.f32.mrb[0].mxu0
    %v1155 = vpop.f32.mrb[0].mxu0
    %1156 = vdwg.mxu0
    %v1157 = vld [vmem:[%s9] sm:$0x1]
    %v1158 = vld [vmem:[%s10] sm:$0x1]
    %vm1159 = vcmask 523264
    %v1160 = vsel %vm1159, %v1104, 0.0
    %v1161 = vsel %vm1159, %v1107, 0.0
    %v1162 = vadd.f32 %v1160, %v1161
    %v1163 = vsel %vm1159, %v1112, 0.0
    %v1164 = vadd.f32 %v1162, %v1163
    %v1165 = vsel %vm1159, %v1115, 0.0
    %v1166 = vadd.f32 %v1164, %v1165
    %v1167 = vsel %vm1159, %v1120, 0.0
    %v1168 = vadd.f32 %v1166, %v1167
    %v1169 = vsel %vm1159, %v1123, 0.0
    %v1170 = vadd.f32 %v1168, %v1169
    %v1171 = vsel %vm1159, %v1128, 0.0
    %v1172 = vadd.f32 %v1170, %v1171
    %v1173 = vsel %vm1159, %v1131, 0.0
    %v1174 = vadd.f32 %v1172, %v1173
    %v1175 = vsel %vm1159, %v1136, 0.0
    %v1176 = vadd.f32 %v1174, %v1175
    %v1177 = vsel %vm1159, %v1139, 0.0
    %v1178 = vadd.f32 %v1176, %v1177
    %v1179 = vsel %vm1159, %v1144, 0.0
    %v1180 = vadd.f32 %v1178, %v1179
    %v1181 = vsel %vm1159, %v1147, 0.0
    %v1182 = vadd.f32 %v1180, %v1181
    %vm1183 = vcmask 517120
    %v1184 = vsel %vm1183, %v1152, 0.0
    %v1185 = vadd.f32 %v1182, %v1184
    %v1186 = vrot.slane %v1185, 4
    %v1187 = vadd.f32 %v1185, %v1186
    %v1188 = vrot.slane %v1187, 2
    %v1189 = vadd.f32 %v1187, %v1188
    %v1190 = vrot.slane %v1189, 1
    %v1191 = vadd.f32 %v1189, %v1190
    %v1192 = vrcp.pop 98.0
    %v1193 = vmul.f32 %v1191, %v1192
    %v1194 = vmul.f32 %v1104, %v1104
    %v1195 = vmul.f32 %v1107, %v1107
    %v1196 = vmul.f32 %v1112, %v1112
    %v1197 = vmul.f32 %v1115, %v1115
    %v1198 = vmul.f32 %v1120, %v1120
    %v1199 = vmul.f32 %v1123, %v1123
    %v1200 = vmul.f32 %v1128, %v1128
    %v1201 = vmul.f32 %v1131, %v1131
    %v1202 = vmul.f32 %v1136, %v1136
    %v1203 = vmul.f32 %v1139, %v1139
    %v1204 = vmul.f32 %v1144, %v1144
    %v1205 = vmul.f32 %v1147, %v1147
    %v1206 = vmul.f32 %v1152, %v1152
    %v1207 = vsel %vm1159, %v1194, 0.0
    %v1208 = vsel %vm1159, %v1195, 0.0
    %v1209 = vadd.f32 %v1207, %v1208
    %v1210 = vsel %vm1159, %v1196, 0.0
    %v1211 = vadd.f32 %v1209, %v1210
    %v1212 = vsel %vm1159, %v1197, 0.0
    %v1213 = vadd.f32 %v1211, %v1212
    %v1214 = vsel %vm1159, %v1198, 0.0
    %v1215 = vadd.f32 %v1213, %v1214
    %v1216 = vsel %vm1159, %v1199, 0.0
    %v1217 = vadd.f32 %v1215, %v1216
    %v1218 = vsel %vm1159, %v1200, 0.0
    %v1219 = vadd.f32 %v1217, %v1218
    %v1220 = vsel %vm1159, %v1201, 0.0
    %v1221 = vadd.f32 %v1219, %v1220
    %v1222 = vsel %vm1159, %v1202, 0.0
    %v1223 = vadd.f32 %v1221, %v1222
    %v1224 = vsel %vm1159, %v1203, 0.0
    %v1225 = vadd.f32 %v1223, %v1224
    %v1226 = vsel %vm1159, %v1204, 0.0
    %v1227 = vadd.f32 %v1225, %v1226
    %v1228 = vsel %vm1159, %v1205, 0.0
    %v1229 = vadd.f32 %v1227, %v1228
    %v1230 = vsel %vm1183, %v1206, 0.0
    %v1231 = vadd.f32 %v1229, %v1230
    %v1232 = vrot.slane %v1231, 4
    %v1233 = vadd.f32 %v1231, %v1232
    %v1234 = vrot.slane %v1233, 2
    %v1235 = vadd.f32 %v1233, %v1234
    %v1236 = vrot.slane %v1235, 1
    %v1237 = vadd.f32 %v1235, %v1236
    %v1238 = vmul.f32 %v1237, %v1192
    %v1239 = vmul.f32 %v1193, %v1193
    %v1240 = vsub.f32 %v1238, %v1239
    %v1241 = vmax.f32 %v1240, 0.0
    %v1242 = vadd.f32 %v1241, 1e-05
    %v1243 = vrsqrt.pop %v1242
    %v1244 = vmul.f32 %v1157, %v1243
    %v1246 = vlaneseq
    %v1247 = vshrl.u32 %v1246, 7
    %v1248 = vsub.s32 0, %v1247
    %v1249 = vrot.slane %v1244, %v1248
    %v1251 = vmul.f32 %v1104, %v1249
    %v1252 = vmul.f32 %v1107, %v1249
    %v1253 = vmul.f32 %v1112, %v1249
    %v1254 = vmul.f32 %v1115, %v1249
    %v1255 = vmul.f32 %v1120, %v1249
    %v1256 = vmul.f32 %v1123, %v1249
    %v1257 = vmul.f32 %v1128, %v1249
    %v1258 = vmul.f32 %v1131, %v1249
    %v1259 = vmul.f32 %v1136, %v1249
    %v1260 = vmul.f32 %v1139, %v1249
    %v1261 = vmul.f32 %v1144, %v1249
    %v1262 = vmul.f32 %v1147, %v1249
    %v1263 = vmul.f32 %v1152, %v1249
    %v1264 = vmul.f32 %v1193, %v1244
    %v1265 = vsub.f32 %v1158, %v1264
    %v1267 = vlaneseq
    %v1268 = vshrl.u32 %v1267, 7
    %v1269 = vsub.s32 0, %v1268
    %v1270 = vrot.slane %v1265, %v1269
    %v1272 = vadd.f32 %v1251, %v1270
    %v1273 = vadd.f32 %v1252, %v1270
    %v1274 = vadd.f32 %v1253, %v1270
    %v1275 = vadd.f32 %v1254, %v1270
    %v1276 = vadd.f32 %v1255, %v1270
    %v1277 = vadd.f32 %v1256, %v1270
    %v1278 = vadd.f32 %v1257, %v1270
    %v1279 = vadd.f32 %v1258, %v1270
    %v1280 = vadd.f32 %v1259, %v1270
    %v1281 = vadd.f32 %v1260, %v1270
    %v1282 = vadd.f32 %v1261, %v1270
    %v1283 = vadd.f32 %v1262, %v1270
    %v1284 = vadd.f32 %v1263, %v1270
    %v1285 = vmul.f32 %v1272, 0.01
    %v1286 = vmul.f32 %v1273, 0.01
    %v1287 = vmul.f32 %v1274, 0.01
    %v1288 = vmul.f32 %v1275, 0.01
    %v1289 = vmul.f32 %v1276, 0.01
    %v1290 = vmul.f32 %v1277, 0.01
    %v1291 = vmul.f32 %v1278, 0.01
    %v1292 = vmul.f32 %v1279, 0.01
    %v1293 = vmul.f32 %v1280, 0.01
    %v1294 = vmul.f32 %v1281, 0.01
    %v1295 = vmul.f32 %v1282, 0.01
    %v1296 = vmul.f32 %v1283, 0.01
    %v1297 = vmul.f32 %v1284, 0.01
    %v1298 = vmax.f32 %v1272, %v1285
    %v1299 = vmax.f32 %v1273, %v1286
    %v1300 = vmax.f32 %v1274, %v1287
    %v1301 = vmax.f32 %v1275, %v1288
    %v1302 = vmax.f32 %v1276, %v1289
    %v1303 = vmax.f32 %v1277, %v1290
    %v1304 = vmax.f32 %v1278, %v1291
    %v1305 = vmax.f32 %v1279, %v1292
    %v1306 = vmax.f32 %v1280, %v1293
    %v1307 = vmax.f32 %v1281, %v1294
    %v1308 = vmax.f32 %v1282, %v1295
    %v1309 = vmax.f32 %v1283, %v1296
    %v1310 = vmax.f32 %v1284, %v1297
    %1311 = vst.msk [vmem:[#allocation3] sm:$0xff] %vm1159, %v1298
    %1312 = vst.msk [vmem:[#allocation3 + $0x8] sm:$0xff] %vm1159, %v1299
    %1313 = vst.msk [vmem:[#allocation3 + $0x10] sm:$0xff] %vm1159, %v1300
    %1314 = vst.msk [vmem:[#allocation3 + $0x18] sm:$0xff] %vm1159, %v1301
    %1315 = vst.msk [vmem:[#allocation3 + $0x20] sm:$0xff] %vm1159, %v1302
    %1316 = vst.msk [vmem:[#allocation3 + $0x28] sm:$0xff] %vm1159, %v1303
    %1317 = vst.msk [vmem:[#allocation3 + $0x30] sm:$0xff] %vm1159, %v1304
    %1318 = vst.msk [vmem:[#allocation3 + $0x38] sm:$0xff] %vm1159, %v1305
    %1319 = vst.msk [vmem:[#allocation3 + $0x40] sm:$0xff] %vm1159, %v1306
    %1320 = vst.msk [vmem:[#allocation3 + $0x48] sm:$0xff] %vm1159, %v1307
    %1321 = vst.msk [vmem:[#allocation3 + $0x50] sm:$0xff] %vm1159, %v1308
    %1322 = vst.msk [vmem:[#allocation3 + $0x58] sm:$0xff] %vm1159, %v1309
    %1323 = vst.msk [vmem:[#allocation3 + $0x60] sm:$0x3] %vm1183, %v1310
    %v1324 = vld [vmem:[#allocation3] sm:$0xff]
    %v1325 = vld [vmem:[#allocation3 + $0x8] sm:$0xff]
    %v1326 = vld [vmem:[#allocation3 + $0x10] sm:$0xff]
    %v1327 = vld [vmem:[#allocation3 + $0x18] sm:$0xff]
    %v1328 = vld [vmem:[#allocation3 + $0x20] sm:$0xff]
    %v1329 = vld [vmem:[#allocation3 + $0x28] sm:$0xff]
    %v1330 = vld [vmem:[#allocation3 + $0x30] sm:$0x1]
    %v1331 = vlaneseq
    %v1332 = vshrl.u32 %v1331, 7
    %v1333 = vsub.s32 0, %v1332
    %v1334 = vrot.slane %v746, %v1333
    %v1335 = vadd.f32 %v1324, %v1334
    %v1336 = vadd.f32 %v1325, %v1334
    %v1337 = vadd.f32 %v1326, %v1334
    %v1338 = vadd.f32 %v1327, %v1334
    %v1339 = vadd.f32 %v1328, %v1334
    %v1340 = vadd.f32 %v1329, %v1334
    %v1341 = vadd.f32 %v1330, %v1334
    %1342 = vst.msk [vmem:[#allocation3] sm:$0xff] %vm1159, %v1335
    %1343 = vst.msk [vmem:[#allocation3 + $0x8] sm:$0xff] %vm1159, %v1336
    %1344 = vst.msk [vmem:[#allocation3 + $0x10] sm:$0xff] %vm1159, %v1337
    %1345 = vst.msk [vmem:[#allocation3 + $0x18] sm:$0xff] %vm1159, %v1338
    %1346 = vst.msk [vmem:[#allocation3 + $0x20] sm:$0xff] %vm1159, %v1339
    %1347 = vst.msk [vmem:[#allocation3 + $0x28] sm:$0xff] %vm1159, %v1340
    %vm1348 = vcmask 516096
    %1349 = vst.msk [vmem:[#allocation3 + $0x30] sm:$0x1] %vm1348, %v1341
    %v1350 = vld [vmem:[#allocation3 + $0x31] sm:$0xff]
    %v1351 = vld [vmem:[#allocation3 + $0x39] sm:$0xff]
    %v1352 = vld [vmem:[#allocation3 + $0x41] sm:$0xff]
    %v1353 = vld [vmem:[#allocation3 + $0x49] sm:$0xff]
    %v1354 = vld [vmem:[#allocation3 + $0x51] sm:$0xff]
    %v1355 = vld [vmem:[#allocation3 + $0x59] sm:$0xff]
    %v1356 = vld [vmem:[#allocation3 + $0x61] sm:$0x1]
    %v1357 = vlaneseq
    %v1358 = vshrl.u32 %v1357, 7
    %v1359 = vsub.s32 1, %v1358
    %v1360 = vrot.slane %v746, %v1359
    %v1361 = vadd.f32 %v1350, %v1360
    %v1362 = vadd.f32 %v1351, %v1360
    %v1363 = vadd.f32 %v1352, %v1360
    %v1364 = vadd.f32 %v1353, %v1360
    %v1365 = vadd.f32 %v1354, %v1360
    %v1366 = vadd.f32 %v1355, %v1360
    %v1367 = vadd.f32 %v1356, %v1360
    %1368 = vst.msk [vmem:[#allocation3 + $0x31] sm:$0xff] %vm1159, %v1361
    %1369 = vst.msk [vmem:[#allocation3 + $0x39] sm:$0xff] %vm1159, %v1362
    %1370 = vst.msk [vmem:[#allocation3 + $0x41] sm:$0xff] %vm1159, %v1363
    %1371 = vst.msk [vmem:[#allocation3 + $0x49] sm:$0xff] %vm1159, %v1364
    %1372 = vst.msk [vmem:[#allocation3 + $0x51] sm:$0xff] %vm1159, %v1365
    %1373 = vst.msk [vmem:[#allocation3 + $0x59] sm:$0xff] %vm1159, %v1366
    %1374 = vst.msk [vmem:[#allocation3 + $0x61] sm:$0x1] %vm1348, %v1367
    %v1375 = vld [vmem:[#allocation3] ss:$2 sm:$0x7]
    %vm1376 = vcmask 518144
    %1377 = vst.msk [vmem:[#allocation4] sm:$0x7] %vm1376, %v1375
    %s1378 = scalar_lea.vmem [#allocation3], 1
    %v1379 = vld [vmem:[%s1378] ss:$2 sm:$0x7]
    %1381 = vrot.lane.b32.xlu0 %v1379, 64
    %v1382 = vpop.permute.xlu0 %1381
    %vm1384 = vcmask 1042944
    %1385 = vst.msk [vmem:[#allocation4] sm:$0x7] %vm1384, %v1382
    %s1386 = scalar_lea.vmem [#allocation3], 2
    %v1387 = vld [vmem:[%s1386] ss:$2 sm:$0x7]
    %1388 = vst.msk [vmem:[#allocation4 + $0x8] sm:$0x7] %vm1376, %v1387
    %s1389 = scalar_lea.vmem [#allocation3], 7
    %v1390 = vld [vmem:[%s1389] ss:$2 sm:$0x7]
    %1392 = vrot.lane.b32.xlu0 %v1390, 64
    %v1393 = vpop.permute.xlu0 %1392
    %1395 = vst.msk [vmem:[#allocation4 + $0x8] sm:$0x7] %vm1384, %v1393
    %s1396 = scalar_lea.vmem [#allocation3], 8
    %v1397 = vld [vmem:[%s1396] ss:$2 sm:$0x7]
    %1398 = vst.msk [vmem:[#allocation4 + $0x10] sm:$0x7] %vm1376, %v1397
    %s1399 = scalar_lea.vmem [#allocation3], 9
    %v1400 = vld [vmem:[%s1399] ss:$2 sm:$0x7]
    %1402 = vrot.lane.b32.xlu0 %v1400, 64
    %v1403 = vpop.permute.xlu0 %1402
    %1405 = vst.msk [vmem:[#allocation4 + $0x10] sm:$0x7] %vm1384, %v1403
    %s1406 = scalar_lea.vmem [#allocation3], 14
    %v1407 = vld [vmem:[%s1406] ss:$2 sm:$0x7]
    %1408 = vst.msk [vmem:[#allocation4 + $0x18] sm:$0x7] %vm1376, %v1407
    %s1409 = scalar_lea.vmem [#allocation3], 15
    %v1410 = vld [vmem:[%s1409] ss:$2 sm:$0x7]
    %1412 = vrot.lane.b32.xlu0 %v1410, 64
    %v1413 = vpop.permute.xlu0 %1412
    %1415 = vst.msk [vmem:[#allocation4 + $0x18] sm:$0x7] %vm1384, %v1413
    %s1416 = scalar_lea.vmem [#allocation3], 16
    %v1417 = vld [vmem:[%s1416] ss:$2 sm:$0x7]
    %1418 = vst.msk [vmem:[#allocation4 + $0x20] sm:$0x7] %vm1376, %v1417
    %v1419 = vld [vmem:[%s1406] ss:$2 sm:$0x7]
    %v1421 = vrot.slane %v1419, 5
    %vm1423 = vcmask 521219
    %1424 = vst.msk [vmem:[#allocation4] sm:$0x38] %vm1423, %v1421
    %v1425 = vld [vmem:[%s1409] ss:$2 sm:$0x7]
    %v1427 = vrot.slane %v1425, 5
    %1428 = vrot.lane.b32.xlu0 %v1427, 64
    %v1429 = vpop.permute.xlu0 %1428
    %vm1431 = vcmask 1046019
    %1432 = vst.msk [vmem:[#allocation4] sm:$0x38] %vm1431, %v1429
    %v1433 = vld [vmem:[%s1416] ss:$2 sm:$0x7]
    %v1435 = vrot.slane %v1433, 5
    %1437 = vst.msk [vmem:[#allocation4 + $0x8] sm:$0x38] %vm1423, %v1435
    %s1438 = scalar_lea.vmem [#allocation3], 21
    %v1439 = vld [vmem:[%s1438] ss:$2 sm:$0x7]
    %v1441 = vrot.slane %v1439, 5
    %1442 = vrot.lane.b32.xlu0 %v1441, 64
    %v1443 = vpop.permute.xlu0 %1442
    %1445 = vst.msk [vmem:[#allocation4 + $0x8] sm:$0x38] %vm1431, %v1443
    %s1446 = scalar_lea.vmem [#allocation3], 22
    %v1447 = vld [vmem:[%s1446] ss:$2 sm:$0x7]
    %v1449 = vrot.slane %v1447, 5
    %1451 = vst.msk [vmem:[#allocation4 + $0x10] sm:$0x38] %vm1423, %v1449
    %s1452 = scalar_lea.vmem [#allocation3], 23
    %v1453 = vld [vmem:[%s1452] ss:$2 sm:$0x7]
    %v1455 = vrot.slane %v1453, 5
    %1456 = vrot.lane.b32.xlu0 %v1455, 64
    %v1457 = vpop.permute.xlu0 %1456
    %1459 = vst.msk [vmem:[#allocation4 + $0x10] sm:$0x38] %vm1431, %v1457
    %s1460 = scalar_lea.vmem [#allocation3], 28
    %v1461 = vld [vmem:[%s1460] ss:$2 sm:$0x7]
    %v1463 = vrot.slane %v1461, 5
    %1465 = vst.msk [vmem:[#allocation4 + $0x18] sm:$0x38] %vm1423, %v1463
    %s1466 = scalar_lea.vmem [#allocation3], 29
    %v1467 = vld [vmem:[%s1466] ss:$2 sm:$0x7]
    %v1469 = vrot.slane %v1467, 5
    %1470 = vrot.lane.b32.xlu0 %v1469, 64
    %v1471 = vpop.permute.xlu0 %1470
    %1473 = vst.msk [vmem:[#allocation4 + $0x18] sm:$0x38] %vm1431, %v1471
    %s1474 = scalar_lea.vmem [#allocation3], 30
    %v1475 = vld [vmem:[%s1474] ss:$2 sm:$0x7]
    %v1477 = vrot.slane %v1475, 5
    %1479 = vst.msk [vmem:[#allocation4 + $0x20] sm:$0x38] %vm1423, %v1477
    %v1480 = vld [vmem:[%s1460] ss:$2 sm:$0x7]
    %v1482 = vrot.slane %v1480, 2
    %vm1484 = vcmask 523270
    %1485 = vst.msk [vmem:[#allocation4] sm:$0xc0] %vm1484, %v1482
    %1486 = vst.msk [vmem:[#allocation4 + $0x28] sm:$0x1] %vm1348, %v1482
    %v1487 = vld [vmem:[%s1466] ss:$2 sm:$0x7]
    %v1489 = vrot.slane %v1487, 2
    %1490 = vrot.lane.b32.xlu0 %v1489, 64
    %v1491 = vpop.permute.xlu0 %1490
    %vm1493 = vcmask 1048070
    %1494 = vst.msk [vmem:[#allocation4] sm:$0xc0] %vm1493, %v1491
    %vm1495 = vcmask 1040896
    %1496 = vst.msk [vmem:[#allocation4 + $0x28] sm:$0x1] %vm1495, %v1491
    %v1497 = vld [vmem:[%s1474] ss:$2 sm:$0x7]
    %v1499 = vrot.slane %v1497, 2
    %1501 = vst.msk [vmem:[#allocation4 + $0x8] sm:$0xc0] %vm1484, %v1499
    %1502 = vst.msk [vmem:[#allocation4 + $0x30] sm:$0x1] %vm1348, %v1499
    %s1503 = scalar_lea.vmem [#allocation3], 35
    %v1504 = vld [vmem:[%s1503] ss:$2 sm:$0x7]
    %v1506 = vrot.slane %v1504, 2
    %1507 = vrot.lane.b32.xlu0 %v1506, 64
    %v1508 = vpop.permute.xlu0 %1507
    %1510 = vst.msk [vmem:[#allocation4 + $0x8] sm:$0xc0] %vm1493, %v1508
    %1511 = vst.msk [vmem:[#allocation4 + $0x30] sm:$0x1] %vm1495, %v1508
    %s1512 = scalar_lea.vmem [#allocation3], 36
    %v1513 = vld [vmem:[%s1512] ss:$2 sm:$0x7]
    %v1515 = vrot.slane %v1513, 2
    %1517 = vst.msk [vmem:[#allocation4 + $0x10] sm:$0xc0] %vm1484, %v1515
    %1518 = vst.msk [vmem:[#allocation4 + $0x38] sm:$0x1] %vm1348, %v1515
    %s1519 = scalar_lea.vmem [#allocation3], 37
    %v1520 = vld [vmem:[%s1519] ss:$2 sm:$0x7]
    %v1522 = vrot.slane %v1520, 2
    %1523 = vrot.lane.b32.xlu0 %v1522, 64
    %v1524 = vpop.permute.xlu0 %1523
    %1526 = vst.msk [vmem:[#allocation4 + $0x10] sm:$0xc0] %vm1493, %v1524
    %1527 = vst.msk [vmem:[#allocation4 + $0x38] sm:$0x1] %vm1495, %v1524
    %s1528 = scalar_lea.vmem [#allocation3], 42
    %v1529 = vld [vmem:[%s1528] ss:$2 sm:$0x7]
    %v1531 = vrot.slane %v1529, 2
    %1533 = vst.msk [vmem:[#allocation4 + $0x18] sm:$0xc0] %vm1484, %v1531
    %1534 = vst.msk [vmem:[#allocation4 + $0x40] sm:$0x1] %vm1348, %v1531
    %s1535 = scalar_lea.vmem [#allocation3], 43
    %v1536 = vld [vmem:[%s1535] ss:$2 sm:$0x7]
    %v1538 = vrot.slane %v1536, 2
    %1539 = vrot.lane.b32.xlu0 %v1538, 64
    %v1540 = vpop.permute.xlu0 %1539
    %1542 = vst.msk [vmem:[#allocation4 + $0x18] sm:$0xc0] %vm1493, %v1540
    %1543 = vst.msk [vmem:[#allocation4 + $0x40] sm:$0x1] %vm1495, %v1540
    %s1544 = scalar_lea.vmem [#allocation3], 44
    %v1545 = vld [vmem:[%s1544] ss:$2 sm:$0x7]
    %v1547 = vrot.slane %v1545, 2
    %1549 = vst.msk [vmem:[#allocation4 + $0x20] sm:$0xc0] %vm1484, %v1547
    %1550 = vst.msk [vmem:[#allocation4 + $0x48] sm:$0x1] %vm1348, %v1547
    %s1551 = scalar_lea.vmem [#allocation3], 49
    %v1552 = vld [vmem:[%s1551] ss:$2 sm:$0x7]
    %v1554 = vrot.slane %v1552, 7
    %vm1556 = vcmask 519169
    %1557 = vst.msk [vmem:[#allocation4 + $0x28] sm:$0xe] %vm1556, %v1554
    %s1558 = scalar_lea.vmem [#allocation3], 50
    %v1559 = vld [vmem:[%s1558] ss:$2 sm:$0x7]
    %v1561 = vrot.slane %v1559, 7
    %1562 = vrot.lane.b32.xlu0 %v1561, 64
    %v1563 = vpop.permute.xlu0 %1562
    %vm1565 = vcmask 1043969
    %1566 = vst.msk [vmem:[#allocation4 + $0x28] sm:$0xe] %vm1565, %v1563
    %s1567 = scalar_lea.vmem [#allocation3], 51
    %v1568 = vld [vmem:[%s1567] ss:$2 sm:$0x7]
    %v1570 = vrot.slane %v1568, 7
    %1572 = vst.msk [vmem:[#allocation4 + $0x30] sm:$0xe] %vm1556, %v1570
    %s1573 = scalar_lea.vmem [#allocation3], 56
    %v1574 = vld [vmem:[%s1573] ss:$2 sm:$0x7]
    %v1576 = vrot.slane %v1574, 7
    %1577 = vrot.lane.b32.xlu0 %v1576, 64
    %v1578 = vpop.permute.xlu0 %1577
    %1580 = vst.msk [vmem:[#allocation4 + $0x30] sm:$0xe] %vm1565, %v1578
    %s1581 = scalar_lea.vmem [#allocation3], 57
    %v1582 = vld [vmem:[%s1581] ss:$2 sm:$0x7]
    %v1584 = vrot.slane %v1582, 7
    %1586 = vst.msk [vmem:[#allocation4 + $0x38] sm:$0xe] %vm1556, %v1584
    %s1587 = scalar_lea.vmem [#allocation3], 58
    %v1588 = vld [vmem:[%s1587] ss:$2 sm:$0x7]
    %v1590 = vrot.slane %v1588, 7
    %1591 = vrot.lane.b32.xlu0 %v1590, 64
    %v1592 = vpop.permute.xlu0 %1591
    %1594 = vst.msk [vmem:[#allocation4 + $0x38] sm:$0xe] %vm1565, %v1592
    %s1595 = scalar_lea.vmem [#allocation3], 63
    %v1596 = vld [vmem:[%s1595] ss:$2 sm:$0x7]
    %v1598 = vrot.slane %v1596, 7
    %1600 = vst.msk [vmem:[#allocation4 + $0x40] sm:$0xe] %vm1556, %v1598
    %s1601 = scalar_lea.vmem [#allocation3], 64
    %v1602 = vld [vmem:[%s1601] ss:$2 sm:$0x7]
    %v1604 = vrot.slane %v1602, 7
    %1605 = vrot.lane.b32.xlu0 %v1604, 64
    %v1606 = vpop.permute.xlu0 %1605
    %1608 = vst.msk [vmem:[#allocation4 + $0x40] sm:$0xe] %vm1565, %v1606
    %s1609 = scalar_lea.vmem [#allocation3], 65
    %v1610 = vld [vmem:[%s1609] ss:$2 sm:$0x7]
    %v1612 = vrot.slane %v1610, 7
    %1614 = vst.msk [vmem:[#allocation4 + $0x48] sm:$0xe] %vm1556, %v1612
    %v1615 = vld [vmem:[%s1595] ss:$2 sm:$0x7]
    %v1617 = vrot.slane %v1615, 4
    %vm1619 = vcmask 522244
    %1620 = vst.msk [vmem:[#allocation4 + $0x28] sm:$0x70] %vm1619, %v1617
    %v1621 = vld [vmem:[%s1601] ss:$2 sm:$0x7]
    %v1623 = vrot.slane %v1621, 4
    %1624 = vrot.lane.b32.xlu0 %v1623, 64
    %v1625 = vpop.permute.xlu0 %1624
    %vm1627 = vcmask 1047044
    %1628 = vst.msk [vmem:[#allocation4 + $0x28] sm:$0x70] %vm1627, %v1625
    %v1629 = vld [vmem:[%s1609] ss:$2 sm:$0x7]
    %v1631 = vrot.slane %v1629, 4
    %1633 = vst.msk [vmem:[#allocation4 + $0x30] sm:$0x70] %vm1619, %v1631
    %s1634 = scalar_lea.vmem [#allocation3], 70
    %v1635 = vld [vmem:[%s1634] ss:$2 sm:$0x7]
    %v1637 = vrot.slane %v1635, 4
    %1638 = vrot.lane.b32.xlu0 %v1637, 64
    %v1639 = vpop.permute.xlu0 %1638
    %1641 = vst.msk [vmem:[#allocation4 + $0x30] sm:$0x70] %vm1627, %v1639
    %s1642 = scalar_lea.vmem [#allocation3], 71
    %v1643 = vld [vmem:[%s1642] ss:$2 sm:$0x7]
    %v1645 = vrot.slane %v1643, 4
    %1647 = vst.msk [vmem:[#allocation4 + $0x38] sm:$0x70] %vm1619, %v1645
    %s1648 = scalar_lea.vmem [#allocation3], 72
    %v1649 = vld [vmem:[%s1648] ss:$2 sm:$0x7]
    %v1651 = vrot.slane %v1649, 4
    %1652 = vrot.lane.b32.xlu0 %v1651, 64
    %v1653 = vpop.permute.xlu0 %1652
    %1655 = vst.msk [vmem:[#allocation4 + $0x38] sm:$0x70] %vm1627, %v1653
    %s1656 = scalar_lea.vmem [#allocation3], 77
    %v1657 = vld [vmem:[%s1656] ss:$2 sm:$0x7]
    %v1659 = vrot.slane %v1657, 4
    %1661 = vst.msk [vmem:[#allocation4 + $0x40] sm:$0x70] %vm1619, %v1659
    %s1662 = scalar_lea.vmem [#allocation3], 78
    %v1663 = vld [vmem:[%s1662] ss:$2 sm:$0x7]
    %v1665 = vrot.slane %v1663, 4
    %1666 = vrot.lane.b32.xlu0 %v1665, 64
    %v1667 = vpop.permute.xlu0 %1666
    %1669 = vst.msk [vmem:[#allocation4 + $0x40] sm:$0x70] %vm1627, %v1667
    %s1670 = scalar_lea.vmem [#allocation3], 79
    %v1671 = vld [vmem:[%s1670] ss:$2 sm:$0x7]
    %v1673 = vrot.slane %v1671, 4
    %1675 = vst.msk [vmem:[#allocation4 + $0x48] sm:$0x70] %vm1619, %v1673
    %v1676 = vld [vmem:[%s1656] ss:$2 sm:$0x7]
    %v1678 = vrot.slane %v1676, 1
    %vm1680 = vcmask 523271
    %1681 = vst.msk [vmem:[#allocation4 + $0x28] sm:$0x80] %vm1680, %v1678
    %1682 = vst.msk [vmem:[#allocation4 + $0x50] sm:$0x3] %vm1183, %v1678
    %v1683 = vld [vmem:[%s1662] ss:$2 sm:$0x7]
    %v1685 = vrot.slane %v1683, 1
    %1686 = vrot.lane.b32.xlu0 %v1685, 64
    %v1687 = vpop.permute.xlu0 %1686
    %vm1689 = vcmask 1048071
    %1690 = vst.msk [vmem:[#allocation4 + $0x28] sm:$0x80] %vm1689, %v1687
    %vm1691 = vcmask 1041920
    %1692 = vst.msk [vmem:[#allocation4 + $0x50] sm:$0x3] %vm1691, %v1687
    %v1693 = vld [vmem:[%s1670] ss:$2 sm:$0x7]
    %v1695 = vrot.slane %v1693, 1
    %1697 = vst.msk [vmem:[#allocation4 + $0x30] sm:$0x80] %vm1680, %v1695
    %1698 = vst.msk [vmem:[#allocation4 + $0x58] sm:$0x3] %vm1183, %v1695
    %s1699 = scalar_lea.vmem [#allocation3], 84
    %v1700 = vld [vmem:[%s1699] ss:$2 sm:$0x7]
    %v1702 = vrot.slane %v1700, 1
    %1703 = vrot.lane.b32.xlu0 %v1702, 64
    %v1704 = vpop.permute.xlu0 %1703
    %1706 = vst.msk [vmem:[#allocation4 + $0x30] sm:$0x80] %vm1689, %v1704
    %1707 = vst.msk [vmem:[#allocation4 + $0x58] sm:$0x3] %vm1691, %v1704
    %s1708 = scalar_lea.vmem [#allocation3], 85
    %v1709 = vld [vmem:[%s1708] ss:$2 sm:$0x7]
    %v1711 = vrot.slane %v1709, 1
    %1713 = vst.msk [vmem:[#allocation4 + $0x38] sm:$0x80] %vm1680, %v1711
    %1714 = vst.msk [vmem:[#allocation4 + $0x60] sm:$0x3] %vm1183, %v1711
    %s1715 = scalar_lea.vmem [#allocation3], 86
    %v1716 = vld [vmem:[%s1715] ss:$2 sm:$0x7]
    %v1718 = vrot.slane %v1716, 1
    %1719 = vrot.lane.b32.xlu0 %v1718, 64
    %v1720 = vpop.permute.xlu0 %1719
    %1722 = vst.msk [vmem:[#allocation4 + $0x38] sm:$0x80] %vm1689, %v1720
    %1723 = vst.msk [vmem:[#allocation4 + $0x60] sm:$0x3] %vm1691, %v1720
    %s1724 = scalar_lea.vmem [#allocation3], 91
    %v1725 = vld [vmem:[%s1724] ss:$2 sm:$0x7]
    %v1727 = vrot.slane %v1725, 1
    %1729 = vst.msk [vmem:[#allocation4 + $0x40] sm:$0x80] %vm1680, %v1727
    %1730 = vst.msk [vmem:[#allocation4 + $0x68] sm:$0x3] %vm1183, %v1727
    %s1731 = scalar_lea.vmem [#allocation3], 92
    %v1732 = vld [vmem:[%s1731] ss:$2 sm:$0x7]
    %v1734 = vrot.slane %v1732, 1
    %1735 = vrot.lane.b32.xlu0 %v1734, 64
    %v1736 = vpop.permute.xlu0 %1735
    %1738 = vst.msk [vmem:[#allocation4 + $0x40] sm:$0x80] %vm1689, %v1736
    %1739 = vst.msk [vmem:[#allocation4 + $0x68] sm:$0x3] %vm1691, %v1736
    %s1740 = scalar_lea.vmem [#allocation3], 93
    %v1741 = vld [vmem:[%s1740] ss:$2 sm:$0x7]
    %v1743 = vrot.slane %v1741, 1
    %1745 = vst.msk [vmem:[#allocation4 + $0x48] sm:$0x80] %vm1680, %v1743
    %1746 = vst.msk [vmem:[#allocation4 + $0x70] sm:$0x3] %vm1183, %v1743
    %v1747 = vld [vmem:[#allocation4] sm:$0xff]
    %v1748 = vld [vmem:[#allocation4 + $0x8] sm:$0xff]
    %v1749 = vld [vmem:[#allocation4 + $0x10] sm:$0xff]
    %v1750 = vld [vmem:[#allocation4 + $0x18] sm:$0xff]
    %v1751 = vld [vmem:[#allocation4 + $0x20] sm:$0xff]
    %v1752 = vld [vmem:[#allocation4 + $0x28] sm:$0xff]
    %v1753 = vld [vmem:[#allocation4 + $0x30] sm:$0xff]
    %v1754 = vld [vmem:[#allocation4 + $0x38] sm:$0xff]
    %v1755 = vld [vmem:[#allocation4 + $0x40] sm:$0xff]
    %v1756 = vld [vmem:[#allocation4 + $0x48] sm:$0xff]
    %v1757 = vld [vmem:[#allocation4 + $0x50] sm:$0x3]
    %v1758 = vld [vmem:[#allocation4 + $0x58] sm:$0x3]
    %v1759 = vld [vmem:[#allocation4 + $0x60] sm:$0x3]
    %v1760 = vld [vmem:[#allocation4 + $0x68] sm:$0x3]
    %v1761 = vld [vmem:[#allocation4 + $0x70] sm:$0x3]
    %v1762 = vpack.c.bf16 %v1752, %v1747
    %v1763 = vpack.c.bf16 %v1753, %v1748
    %v1764 = vpack.c.bf16 %v1754, %v1749
    %v1765 = vpack.c.bf16 %v1755, %v1750
    %v1766 = vpack.c.bf16 %v1756, %v1751
    %v1767 = vpack.c.bf16 %v1757, %v1757
    %v1768 = vpack.c.bf16 %v1758, %v1758
    %v1769 = vpack.c.bf16 %v1759, %v1759
    %v1770 = vpack.c.bf16 %v1760, %v1760
    %v1771 = vpack.c.bf16 %v1761, %v1761
    %v1772 = vld [vmem:[%s11] sm:$0xf]
    %v1773 = vld [vmem:[%s11 + $0x4] sm:$0xf]
    %v1774 = vld [vmem:[%s11 + $0x8] sm:$0xf]
    %v1775 = vld [vmem:[%s11 + $0xc] sm:$0xf]
    %v1776 = vld [vmem:[%s11 + $0x10] sm:$0xf]
    %v1777 = vld [vmem:[%s11 + $0x14] sm:$0xf]
    %v1778 = vld [vmem:[%s11 + $0x18] sm:$0xf]
    %v1779 = vld [vmem:[%s11 + $0x1c] sm:$0xf]
    %v1780 = vld [vmem:[%s11 + $0x20] sm:$0xf]
    %v1781 = vld [vmem:[%s11 + $0x24] sm:$0xf]
    %v1782 = vld [vmem:[%s11 + $0x28] sm:$0xf]
    %v1783 = vld [vmem:[%s11 + $0x2c] sm:$0xf]
    %v1784 = vld [vmem:[%s11 + $0x30] sm:$0xf]
    %v1785 = vld [vmem:[%s11 + $0x34] sm:$0xf]
    %v1786 = vld [vmem:[%s11 + $0x38] sm:$0xf]
    %v1787 = vld [vmem:[%s11 + $0x3c] sm:$0xf]
    %v1788 = vld [vmem:[%s11 + $0x40] sm:$0xf]
    %v1789 = vld [vmem:[%s11 + $0x44] sm:$0xf]
    %v1790 = vld [vmem:[%s11 + $0x48] sm:$0xf]
    %v1791 = vld [vmem:[%s11 + $0x4c] sm:$0xf]
    %v1792 = vld [vmem:[%s11 + $0x50] sm:$0xf]
    %v1793 = vld [vmem:[%s11 + $0x54] sm:$0xf]
    %v1794 = vld [vmem:[%s11 + $0x58] sm:$0xf]
    %v1795 = vld [vmem:[%s11 + $0x5c] sm:$0xf]
    %v1796 = vld [vmem:[%s11 + $0x60] sm:$0xf]
    %v1797 = vld [vmem:[%s11 + $0x64] sm:$0xf]
    %v1798 = vld [vmem:[%s11 + $0x68] sm:$0xf]
    %v1799 = vld [vmem:[%s11 + $0x6c] sm:$0xf]
    %v1800 = vld [vmem:[%s11 + $0x70] sm:$0xf]
    %v1801 = vld [vmem:[%s11 + $0x74] sm:$0xf]
    %v1802 = vld [vmem:[%s11 + $0x78] sm:$0xf]
    %v1803 = vld [vmem:[%s11 + $0x7c] sm:$0xf]
    %v1804 = vld [vmem:[%s11 + $0x80] sm:$0xf]
    %v1805 = vld [vmem:[%s11 + $0x84] sm:$0xf]
    %v1806 = vld [vmem:[%s11 + $0x88] sm:$0xf]
    %v1807 = vld [vmem:[%s11 + $0x8c] sm:$0xf]
    %v1808 = vld [vmem:[%s11 + $0x90] sm:$0xf]
    %v1809 = vld [vmem:[%s11 + $0x94] sm:$0xf]
    %v1810 = vld [vmem:[%s11 + $0x98] sm:$0xf]
    %v1811 = vld [vmem:[%s11 + $0x9c] sm:$0xf]
    %v1812 = vld [vmem:[%s11 + $0xa0] sm:$0xf]
    %v1813 = vld [vmem:[%s11 + $0xa4] sm:$0xf]
    %v1814 = vld [vmem:[%s11 + $0xa8] sm:$0xf]
    %v1815 = vld [vmem:[%s11 + $0xac] sm:$0xf]
    %v1816 = vld [vmem:[%s11 + $0xb0] sm:$0xf]
    %v1817 = vld [vmem:[%s11 + $0xb4] sm:$0xf]
    %v1818 = vld [vmem:[%s11 + $0xb8] sm:$0xf]
    %v1819 = vld [vmem:[%s11 + $0xbc] sm:$0xf]
    %v1820 = vld [vmem:[%s11 + $0xc0] sm:$0xf]
    %v1821 = vld [vmem:[%s11 + $0xc4] sm:$0xf]
    %v1822 = vld [vmem:[%s11 + $0xc8] sm:$0xf]
    %v1823 = vld [vmem:[%s11 + $0xcc] sm:$0xf]
    %v1824 = vld [vmem:[%s11 + $0xd0] sm:$0xf]
    %v1825 = vld [vmem:[%s11 + $0xd4] sm:$0xf]
    %v1826 = vld [vmem:[%s11 + $0xd8] sm:$0xf]
    %v1827 = vld [vmem:[%s11 + $0xdc] sm:$0xf]
    %v1828 = vld [vmem:[%s11 + $0xe0] sm:$0xf]
    %v1829 = vld [vmem:[%s11 + $0xe4] sm:$0xf]
    %v1830 = vld [vmem:[%s11 + $0xe8] sm:$0xf]
    %v1831 = vld [vmem:[%s11 + $0xec] sm:$0xf]
    %v1832 = vld [vmem:[%s11 + $0xf0] sm:$0xf]
    %v1833 = vld [vmem:[%s11 + $0xf4] sm:$0xf]
    %v1834 = vld [vmem:[%s11 + $0xf8] sm:$0xf]
    %v1835 = vld [vmem:[%s11 + $0xfc] sm:$0xf]
    %v1836 = vld [vmem:[%s11 + $0x100] sm:$0xf]
    %v1837 = vld [vmem:[%s11 + $0x104] sm:$0xf]
    %v1838 = vld [vmem:[%s11 + $0x108] sm:$0xf]
    %v1839 = vld [vmem:[%s11 + $0x10c] sm:$0xf]
    %v1840 = vld [vmem:[%s11 + $0x110] sm:$0xf]
    %v1841 = vld [vmem:[%s11 + $0x114] sm:$0xf]
    %v1842 = vld [vmem:[%s11 + $0x118] sm:$0xf]
    %v1843 = vld [vmem:[%s11 + $0x11c] sm:$0xf]
    %v1916 = vunpack.c.l.b16 %v1772
    %v1917 = vunpack.c.l.b16 %v1773
    %v1918 = vunpack.c.l.b16 %v1774
    %v1919 = vunpack.c.l.b16 %v1775
    %v1920 = vunpack.c.l.b16 %v1776
    %v1921 = vunpack.c.l.b16 %v1777
    %v1922 = vunpack.c.l.b16 %v1778
    %v1923 = vunpack.c.l.b16 %v1779
    %v1924 = vunpack.c.l.b16 %v1780
    %v1925 = vunpack.c.l.b16 %v1781
    %v1926 = vunpack.c.l.b16 %v1782
    %v1927 = vunpack.c.l.b16 %v1783
    %v1928 = vunpack.c.l.b16 %v1784
    %v1929 = vunpack.c.l.b16 %v1785
    %v1930 = vunpack.c.l.b16 %v1786
    %v1931 = vunpack.c.l.b16 %v1787
    %v1932 = vunpack.c.l.b16 %v1788
    %v1933 = vunpack.c.l.b16 %v1789
    %v1934 = vunpack.c.l.b16 %v1790
    %v1935 = vunpack.c.l.b16 %v1791
    %v1936 = vunpack.c.l.b16 %v1792
    %v1937 = vunpack.c.l.b16 %v1793
    %v1938 = vunpack.c.l.b16 %v1794
    %v1939 = vunpack.c.l.b16 %v1795
    %v1940 = vunpack.c.l.b16 %v1796
    %v1941 = vunpack.c.l.b16 %v1797
    %v1942 = vunpack.c.l.b16 %v1798
    %v1943 = vunpack.c.l.b16 %v1799
    %v1944 = vunpack.c.l.b16 %v1800
    %v1945 = vunpack.c.l.b16 %v1801
    %v1946 = vunpack.c.l.b16 %v1802
    %v1947 = vunpack.c.l.b16 %v1803
    %v1948 = vunpack.c.l.b16 %v1804
    %v1949 = vunpack.c.l.b16 %v1805
    %v1950 = vunpack.c.l.b16 %v1806
    %v1951 = vunpack.c.l.b16 %v1807
    %v1952 = vunpack.c.l.b16 %v1808
    %v1953 = vunpack.c.l.b16 %v1809
    %v1954 = vunpack.c.l.b16 %v1810
    %v1955 = vunpack.c.l.b16 %v1811
    %v1956 = vunpack.c.l.b16 %v1812
    %v1957 = vunpack.c.l.b16 %v1813
    %v1958 = vunpack.c.l.b16 %v1814
    %v1959 = vunpack.c.l.b16 %v1815
    %v1960 = vunpack.c.l.b16 %v1816
    %v1961 = vunpack.c.l.b16 %v1817
    %v1962 = vunpack.c.l.b16 %v1818
    %v1963 = vunpack.c.l.b16 %v1819
    %v1964 = vunpack.c.l.b16 %v1820
    %v1965 = vunpack.c.l.b16 %v1821
    %v1966 = vunpack.c.l.b16 %v1822
    %v1967 = vunpack.c.l.b16 %v1823
    %v1968 = vunpack.c.l.b16 %v1824
    %v1969 = vunpack.c.l.b16 %v1825
    %v1970 = vunpack.c.l.b16 %v1826
    %v1971 = vunpack.c.l.b16 %v1827
    %v1972 = vunpack.c.l.b16 %v1828
    %v1973 = vunpack.c.l.b16 %v1829
    %v1974 = vunpack.c.l.b16 %v1830
    %v1975 = vunpack.c.l.b16 %v1831
    %v1976 = vunpack.c.l.b16 %v1832
    %v1977 = vunpack.c.l.b16 %v1833
    %v1978 = vunpack.c.l.b16 %v1834
    %v1979 = vunpack.c.l.b16 %v1835
    %v1980 = vunpack.c.l.b16 %v1836
    %v1981 = vunpack.c.l.b16 %v1837
    %v1982 = vunpack.c.l.b16 %v1838
    %v1983 = vunpack.c.l.b16 %v1839
    %v1984 = vunpack.c.l.b16 %v1840
    %v1985 = vunpack.c.l.b16 %v1841
    %v1986 = vunpack.c.l.b16 %v1842
    %v1987 = vunpack.c.l.b16 %v1843
    %v1988 = vpack.c.b16 %v1917, %v1916
    %v1989 = vpack.c.b16 %v1919, %v1918
    %v1990 = vpack.c.b16 %v1921, %v1920
    %v1991 = vpack.c.b16 %v1923, %v1922
    %v1992 = vpack.c.b16 %v1925, %v1924
    %v1993 = vpack.c.b16 %v1927, %v1926
    %v1994 = vpack.c.b16 %v1929, %v1928
    %v1995 = vpack.c.b16 %v1931, %v1930
    %v1996 = vpack.c.b16 %v1933, %v1932
    %v1997 = vpack.c.b16 %v1935, %v1934
    %v1998 = vpack.c.b16 %v1937, %v1936
    %v1999 = vpack.c.b16 %v1939, %v1938
    %v2000 = vpack.c.b16 %v1941, %v1940
    %v2001 = vpack.c.b16 %v1943, %v1942
    %v2002 = vpack.c.b16 %v1945, %v1944
    %v2003 = vpack.c.b16 %v1947, %v1946
    %v2004 = vpack.c.b16 %v1949, %v1948
    %v2005 = vpack.c.b16 %v1951, %v1950
    %v2006 = vpack.c.b16 %v1953, %v1952
    %v2007 = vpack.c.b16 %v1955, %v1954
    %v2008 = vpack.c.b16 %v1957, %v1956
    %v2009 = vpack.c.b16 %v1959, %v1958
    %v2010 = vpack.c.b16 %v1961, %v1960
    %v2011 = vpack.c.b16 %v1963, %v1962
    %v2012 = vpack.c.b16 %v1965, %v1964
    %v2013 = vpack.c.b16 %v1967, %v1966
    %v2014 = vpack.c.b16 %v1969, %v1968
    %v2015 = vpack.c.b16 %v1971, %v1970
    %v2016 = vpack.c.b16 %v1973, %v1972
    %v2017 = vpack.c.b16 %v1975, %v1974
    %v2018 = vpack.c.b16 %v1977, %v1976
    %v2019 = vpack.c.b16 %v1979, %v1978
    %v2020 = vpack.c.b16 %v1981, %v1980
    %v2021 = vpack.c.b16 %v1983, %v1982
    %v2022 = vpack.c.b16 %v1985, %v1984
    %v2023 = vpack.c.b16 %v1987, %v1986
    %v2061 = vsel %vm1159, %v1766, 0
    %v2064 = vsel %vm1159, %v1771, 0
    %2066 = vmatprep.subr.bf16.mxu0 0
    %2067 = vmatpush1.bf16.msra.mxu0 %v1988
    %2068 = vmatprep.subr.bf16.mxu0 0
    %2069 = vmatpush1.bf16.msra.mxu0 %v1989
    %2070 = vmatprep.subr.bf16.mxu0 0
    %2071 = vmatpush1.bf16.msra.mxu0 %v1990
    %2072 = vmatprep.subr.bf16.mxu0 0
    %2073 = vmatpush1.bf16.msra.mxu0 %v1991
    %2074 = vmatprep.subr.bf16.mxu0 0
    %2075 = vmatpush1.bf16.msra.mxu0 %v1992
    %2076 = vmatprep.subr.bf16.mxu0 0
    %2077 = vmatpush1.bf16.msra.mxu0 %v1993
    %2078 = vmatprep.subr.bf16.mxu0 0
    %2079 = vmatpush1.bf16.msra.mxu0 %v1994
    %2080 = vmatprep.subr.bf16.mxu0 0
    %2081 = vmatpush1.bf16.msra.mxu0 %v1995
    %2082 = vmatprep.subr.bf16.mxu0 0
    %2083 = vmatpush1.bf16.msra.mxu0 %v1996
    %2084 = vmatprep.subr.bf16.mxu0 0
    %2085 = vmatpush1.bf16.msra.mxu0 %v1997
    %2086 = vmatprep.subr.bf16.mxu0 0
    %2087 = vmatpush1.bf16.msra.mxu0 %v1998
    %2088 = vmatprep.subr.bf16.mxu0 0
    %2089 = vmatpush1.bf16.msra.mxu0 %v1999
    %2090 = vmatprep.subr.bf16.mxu0 0
    %2091 = vmatpush1.bf16.msra.mxu0 %v2000
    %2092 = vmatprep.subr.bf16.mxu0 0
    %2093 = vmatpush1.bf16.msra.mxu0 %v2001
    %2094 = vmatprep.subr.bf16.mxu0 0
    %2095 = vmatpush1.bf16.msra.mxu0 %v2002
    %2096 = vmatprep.subr.bf16.mxu0 0
    %2097 = vmatpush1.bf16.msra.mxu0 %v2003
    %2098 = vmatprep.mubr.bf16.mxu0 %v1763
    %2099 = vmatmul.mubr.bf16.gmra.mrb[0].mxu0 %v1762
    %v2100 = vpop.f32.mrb[0].mxu0
    %v2101 = vadd.f32 0.0, %v2100
    %v2102 = vpop.f32.mrb[0].mxu0
    %v2103 = vpop.f32.mrb[0].mxu0
    %v2104 = vadd.f32 0.0, %v2103
    %v2105 = vpop.f32.mrb[0].mxu0
    %2106 = vmatprep.mubr.bf16.mxu0 %v1768
    %2107 = vmatmul.mubr.bf16.gmra.mrb[0].mxu0 %v1767
    %v2108 = vpop.f32.mrb[0].mxu0
    %v2109 = vadd.f32 0.0, %v2108
    %v2110 = vpop.f32.mrb[0].mxu0
    %v2111 = vpop.f32.mrb[0].mxu0
    %v2112 = vpop.f32.mrb[0].mxu0
    %2113 = vdwg.mxu0
    %2114 = vmatprep.subr.bf16.mxu0 0
    %2115 = vmatpush1.bf16.msra.mxu0 %v2004
    %2116 = vmatprep.subr.bf16.mxu0 0
    %2117 = vmatpush1.bf16.msra.mxu0 %v2005
    %2118 = vmatprep.subr.bf16.mxu0 0
    %2119 = vmatpush1.bf16.msra.mxu0 %v2006
    %2120 = vmatprep.subr.bf16.mxu0 0
    %2121 = vmatpush1.bf16.msra.mxu0 %v2007
    %2122 = vmatprep.subr.bf16.mxu0 0
    %2123 = vmatpush1.bf16.msra.mxu0 %v2008
    %2124 = vmatprep.subr.bf16.mxu0 0
    %2125 = vmatpush1.bf16.msra.mxu0 %v2009
    %2126 = vmatprep.subr.bf16.mxu0 0
    %2127 = vmatpush1.bf16.msra.mxu0 %v2010
    %2128 = vmatprep.subr.bf16.mxu0 0
    %2129 = vmatpush1.bf16.msra.mxu0 %v2011
    %2130 = vmatprep.subr.bf16.mxu0 0
    %2131 = vmatpush1.bf16.msra.mxu0 %v2012
    %2132 = vmatprep.subr.bf16.mxu0 0
    %2133 = vmatpush1.bf16.msra.mxu0 %v2013
    %2134 = vmatprep.subr.bf16.mxu0 0
    %2135 = vmatpush1.bf16.msra.mxu0 %v2014
    %2136 = vmatprep.subr.bf16.mxu0 0
    %2137 = vmatpush1.bf16.msra.mxu0 %v2015
    %2138 = vmatprep.subr.bf16.mxu0 0
    %2139 = vmatpush1.bf16.msra.mxu0 %v2016
    %2140 = vmatprep.subr.bf16.mxu0 0
    %2141 = vmatpush1.bf16.msra.mxu0 %v2017
    %2142 = vmatprep.subr.bf16.mxu0 0
    %2143 = vmatpush1.bf16.msra.mxu0 %v2018
    %2144 = vmatprep.subr.bf16.mxu0 0
    %2145 = vmatpush1.bf16.msra.mxu0 %v2019
    %2146 = vmatprep.mubr.bf16.mxu0 %v1765
    %2147 = vmatmul.mubr.bf16.gmra.mrb[0].mxu0 %v1764
    %v2148 = vpop.f32.mrb[0].mxu0
    %v2149 = vadd.f32 %v2101, %v2148
    %v2150 = vpop.f32.mrb[0].mxu0
    %v2151 = vpop.f32.mrb[0].mxu0
    %v2152 = vadd.f32 %v2104, %v2151
    %v2153 = vpop.f32.mrb[0].mxu0
    %2154 = vmatprep.mubr.bf16.mxu0 %v1770
    %2155 = vmatmul.mubr.bf16.gmra.mrb[0].mxu0 %v1769
    %v2156 = vpop.f32.mrb[0].mxu0
    %v2157 = vadd.f32 %v2109, %v2156
    %v2158 = vpop.f32.mrb[0].mxu0
    %v2159 = vpop.f32.mrb[0].mxu0
    %v2160 = vpop.f32.mrb[0].mxu0
    %2161 = vdwg.mxu0
    %2162 = vmatprep.subr.bf16.mxu0 0
    %2163 = vmatpush1.bf16.msra.mxu0 %v2020
    %2164 = vmatprep.subr.bf16.mxu0 0
    %2165 = vmatpush1.bf16.msra.mxu0 %v2021
    %2166 = vmatprep.subr.bf16.mxu0 0
    %2167 = vmatpush1.bf16.msra.mxu0 %v2022
    %2168 = vmatprep.subr.bf16.mxu0 0
    %2169 = vmatpush1.bf16.msra.mxu0 %v2023
    %2170 = vmatprep.subr.bf16.mxu0 0
    %2171 = vmatpush1.bf16.msra.mxu0 0
    %2172 = vmatprep.subr.bf16.mxu0 0
    %2173 = vmatpush1.bf16.msra.mxu0 0
    %2174 = vmatprep.subr.bf16.mxu0 0
    %2175 = vmatpush1.bf16.msra.mxu0 0
    %2176 = vmatprep.subr.bf16.mxu0 0
    %2177 = vmatpush1.bf16.msra.mxu0 0
    %2178 = vmatprep.subr.bf16.mxu0 0
    %2179 = vmatpush1.bf16.msra.mxu0 0
    %2180 = vmatprep.subr.bf16.mxu0 0
    %2181 = vmatpush1.bf16.msra.mxu0 0
    %2182 = vmatprep.subr.bf16.mxu0 0
    %2183 = vmatpush1.bf16.msra.mxu0 0
    %2184 = vmatprep.subr.bf16.mxu0 0
    %2185 = vmatpush1.bf16.msra.mxu0 0
    %2186 = vmatprep.subr.bf16.mxu0 0
    %2187 = vmatpush1.bf16.msra.mxu0 0
    %2188 = vmatprep.subr.bf16.mxu0 0
    %2189 = vmatpush1.bf16.msra.mxu0 0
    %2190 = vmatprep.subr.bf16.mxu0 0
    %2191 = vmatpush1.bf16.msra.mxu0 0
    %2192 = vmatprep.subr.bf16.mxu0 0
    %2193 = vmatpush1.bf16.msra.mxu0 0
    %2194 = vmatprep.mubr.bf16.mxu0 0
    %2195 = vmatmul.mubr.bf16.gmra.mrb[0].mxu0 %v2061
    %v2196 = vpop.f32.mrb[0].mxu0
    %v2197 = vadd.f32 %v2149, %v2196
    %v2198 = vpop.f32.mrb[0].mxu0
    %v2199 = vpop.f32.mrb[0].mxu0
    %v2200 = vadd.f32 %v2152, %v2199
    %v2201 = vpop.f32.mrb[0].mxu0
    %2202 = vmatprep.mubr.bf16.mxu0 0
    %2203 = vmatmul.mubr.bf16.gmra.mrb[0].mxu0 %v2064
    %v2204 = vpop.f32.mrb[0].mxu0
    %v2205 = vadd.f32 %v2157, %v2204
    %v2206 = vpop.f32.mrb[0].mxu0
    %v2207 = vpop.f32.mrb[0].mxu0
    %v2208 = vpop.f32.mrb[0].mxu0
    %2209 = vdwg.mxu0
    %v2210 = vld [vmem:[%s12] sm:$0x1]
    %v2211 = vld [vmem:[%s13] sm:$0x1]
    %v2212 = vadd.f32 %v2197, %v2200
    %vm2213 = vcmask 1041408
    %v2214 = vsel %vm2213, %v2205, 0.0
    %v2215 = vadd.f32 %v2212, %v2214
    %v2216 = vrot.slane %v2215, 4
    %v2217 = vadd.f32 %v2215, %v2216
    %v2218 = vrot.slane %v2217, 2
    %v2219 = vadd.f32 %v2217, %v2218
    %v2220 = vrot.slane %v2219, 1
    %v2221 = vadd.f32 %v2219, %v2220
    %v2222 = vrcp.pop 18.0
    %v2223 = vmul.f32 %v2221, %v2222
    %v2224 = vmul.f32 %v2197, %v2197
    %v2225 = vmul.f32 %v2200, %v2200
    %v2226 = vmul.f32 %v2205, %v2205
    %v2227 = vadd.f32 %v2224, %v2225
    %v2228 = vsel %vm2213, %v2226, 0.0
    %v2229 = vadd.f32 %v2227, %v2228
    %v2230 = vrot.slane %v2229, 4
    %v2231 = vadd.f32 %v2229, %v2230
    %v2232 = vrot.slane %v2231, 2
    %v2233 = vadd.f32 %v2231, %v2232
    %v2234 = vrot.slane %v2233, 1
    %v2235 = vadd.f32 %v2233, %v2234
    %v2236 = vmul.f32 %v2235, %v2222
    %v2237 = vmul.f32 %v2223, %v2223
    %v2238 = vsub.f32 %v2236, %v2237
    %v2239 = vmax.f32 %v2238, 0.0
    %v2240 = vadd.f32 %v2239, 1e-05
    %v2241 = vrsqrt.pop %v2240
    %v2242 = vmul.f32 %v2210, %v2241
    %v2244 = vlaneseq
    %v2245 = vshrl.u32 %v2244, 7
    %v2246 = vsub.s32 0, %v2245
    %v2247 = vrot.slane %v2242, %v2246
    %v2249 = vmul.f32 %v2197, %v2247
    %v2250 = vmul.f32 %v2200, %v2247
    %v2251 = vmul.f32 %v2205, %v2247
    %v2252 = vmul.f32 %v2223, %v2242
    %v2253 = vsub.f32 %v2211, %v2252
    %v2255 = vlaneseq
    %v2256 = vshrl.u32 %v2255, 7
    %v2257 = vsub.s32 0, %v2256
    %v2258 = vrot.slane %v2253, %v2257
    %v2260 = vadd.f32 %v2249, %v2258
    %v2261 = vadd.f32 %v2250, %v2258
    %v2262 = vadd.f32 %v2251, %v2258
    %v2263 = vmul.f32 %v2260, 0.01
    %v2264 = vmul.f32 %v2261, 0.01
    %v2265 = vmul.f32 %v2262, 0.01
    %v2266 = vmax.f32 %v2260, %v2263
    %v2267 = vmax.f32 %v2261, %v2264
    %v2268 = vmax.f32 %v2262, %v2265
    %2269 = vst [vmem:[#allocation5] sm:$0xff] %v2266
    %2270 = vst [vmem:[#allocation5 + $0x8] sm:$0xff] %v2267
    %2271 = vst [vmem:[#allocation5 + $0x10] sm:$0x3] %v2268
    %v2272 = vld [vmem:[#allocation5] sm:$0xff]
    %v2273 = vld [vmem:[#allocation5 + $0x8] sm:$0x1]
    %v2274 = vlaneseq
    %v2275 = vshrl.u32 %v2274, 7
    %v2276 = vsub.s32 0, %v2275
    %v2277 = vrot.slane %v707, %v2276
    %v2278 = vadd.f32 %v2272, %v2277
    %v2279 = vadd.f32 %v2273, %v2277
    %2280 = vst [vmem:[#allocation5] sm:$0xff] %v2278
    %2281 = vst [vmem:[#allocation5 + $0x8] sm:$0x1] %v2279
    %v2282 = vld [vmem:[#allocation5 + $0x9] sm:$0xff]
    %v2283 = vld [vmem:[#allocation5 + $0x11] sm:$0x1]
    %v2284 = vlaneseq
    %v2285 = vshrl.u32 %v2284, 7
    %v2286 = vsub.s32 1, %v2285
    %v2287 = vrot.slane %v707, %v2286
    %v2288 = vadd.f32 %v2282, %v2287
    %v2289 = vadd.f32 %v2283, %v2287
    %2290 = vst [vmem:[#allocation5 + $0x9] sm:$0xff] %v2288
    %2291 = vst [vmem:[#allocation5 + $0x11] sm:$0x1] %v2289
    %v2292 = vld [vmem:[#allocation5] ss:$9 sm:$0x3]
    %2293 = vst [vmem:[#allocation6] sm:$0x3] %v2292
    %s2294 = scalar_lea.vmem [#allocation5], 1
    %v2295 = vld [vmem:[%s2294] ss:$9 sm:$0x3]
    %2296 = vst [vmem:[#allocation6 + $0x2] sm:$0x3] %v2295
    %s2297 = scalar_lea.vmem [#allocation5], 2
    %v2298 = vld [vmem:[%s2297] ss:$9 sm:$0x3]
    %2299 = vst [vmem:[#allocation6 + $0x4] sm:$0x3] %v2298
    %s2300 = scalar_lea.vmem [#allocation5], 3
    %v2301 = vld [vmem:[%s2300] ss:$9 sm:$0x3]
    %2302 = vst [vmem:[#allocation6 + $0x6] sm:$0x3] %v2301
    %s2303 = scalar_lea.vmem [#allocation5], 4
    %v2304 = vld [vmem:[%s2303] ss:$9 sm:$0x3]
    %2305 = vst [vmem:[#allocation6 + $0x8] sm:$0x3] %v2304
    %s2306 = scalar_lea.vmem [#allocation5], 5
    %v2307 = vld [vmem:[%s2306] ss:$9 sm:$0x3]
    %2308 = vst [vmem:[#allocation6 + $0xa] sm:$0x3] %v2307
    %s2309 = scalar_lea.vmem [#allocation5], 6
    %v2310 = vld [vmem:[%s2309] ss:$9 sm:$0x3]
    %2311 = vst [vmem:[#allocation6 + $0xc] sm:$0x3] %v2310
    %s2312 = scalar_lea.vmem [#allocation5], 7
    %v2313 = vld [vmem:[%s2312] ss:$9 sm:$0x3]
    %2314 = vst [vmem:[#allocation6 + $0xe] sm:$0x3] %v2313
    %s2315 = scalar_lea.vmem [#allocation5], 8
    %v2316 = vld [vmem:[%s2315] ss:$9 sm:$0x3]
    %2317 = vst [vmem:[#allocation6 + $0x10] sm:$0x3] %v2316
    %v2318 = vld [vmem:[#allocation6] sm:$0xff]
    %v2319 = vld [vmem:[#allocation6 + $0x8] sm:$0xff]
    %v2320 = vld [vmem:[#allocation6 + $0x10] sm:$0x3]
    %v2324 = vcombine.high %v2318, %v2318
    %v2326 = vunpack.c.l.s4 1983009808
    %v2327 = vunpack.c.0.s8 %v2326
    %v2328 = vlaneseq
    %v2329 = vshrl.u32 %v2328, 7
    %v2330 = vsub.s32 %v2327, %v2329
    %v2331 = vrot.slane %v2318, %v2330
    %v2333 = vunpack.c.l.s4 1983009808
    %v2334 = vunpack.c.0.s8 %v2333
    %v2335 = vlaneseq
    %v2336 = vshrl.u32 %v2335, 7
    %v2337 = vsub.s32 %v2334, %v2336
    %v2338 = vrot.slane %v2324, %v2337
    %v2339 = vcombine.high %v2331, %v2331
    %v2340 = vcombine.high %v2338, %v2338
    %v2341 = vcombine.high %v2319, %v2319
    %v2343 = vunpack.c.l.s4 1983009808
    %v2344 = vunpack.c.0.s8 %v2343
    %v2345 = vlaneseq
    %v2346 = vshrl.u32 %v2345, 7
    %v2347 = vsub.s32 %v2344, %v2346
    %v2348 = vrot.slane %v2319, %v2347
    %v2350 = vunpack.c.l.s4 1983009808
    %v2351 = vunpack.c.0.s8 %v2350
    %v2352 = vlaneseq
    %v2353 = vshrl.u32 %v2352, 7
    %v2354 = vsub.s32 %v2351, %v2353
    %v2355 = vrot.slane %v2341, %v2354
    %v2356 = vcombine.high %v2348, %v2348
    %v2357 = vcombine.high %v2355, %v2355
    %v2359 = vunpack.c.l.s4 1983009808
    %v2360 = vunpack.c.0.s8 %v2359
    %v2361 = vlaneseq
    %v2362 = vshrl.u32 %v2361, 7
    %v2363 = vsub.s32 %v2360, %v2362
    %v2364 = vrot.slane %v2320, %v2363
    %v2374 = vpack.c.bf16 %v2331, %v2331
    %v2375 = vpack.c.bf16 %v2339, %v2339
    %v2376 = vpack.c.bf16 %v2338, %v2338
    %v2377 = vpack.c.bf16 %v2340, %v2340
    %v2378 = vpack.c.bf16 %v2348, %v2348
    %v2379 = vpack.c.bf16 %v2356, %v2356
    %v2380 = vpack.c.bf16 %v2355, %v2355
    %v2381 = vpack.c.bf16 %v2357, %v2357
    %v2382 = vpack.c.bf16 %v2364, %v2364
    %v2383 = vld [vmem:[%s14] sm:$0xff]
    %v2384 = vld [vmem:[%s14 + $0x8] sm:$0xff]
    %v2385 = vld [vmem:[%s14 + $0x10] sm:$0xff]
    %v2386 = vld [vmem:[%s14 + $0x18] sm:$0xff]
    %v2387 = vld [vmem:[%s14 + $0x20] sm:$0xff]
    %v2388 = vld [vmem:[%s14 + $0x28] sm:$0xff]
    %v2389 = vld [vmem:[%s14 + $0x30] sm:$0xff]
    %v2390 = vld [vmem:[%s14 + $0x38] sm:$0xff]
    %v2391 = vld [vmem:[%s14 + $0x40] sm:$0xff]
    %v2392 = vld [vmem:[%s14 + $0x48] sm:$0xff]
    %v2393 = vld [vmem:[%s14 + $0x50] sm:$0xff]
    %v2394 = vld [vmem:[%s14 + $0x58] sm:$0xff]
    %v2395 = vld [vmem:[%s14 + $0x60] sm:$0xff]
    %v2396 = vld [vmem:[%s14 + $0x68] sm:$0xff]
    %v2397 = vld [vmem:[%s14 + $0x70] sm:$0xff]
    %v2398 = vld [vmem:[%s14 + $0x78] sm:$0xff]
    %v2399 = vld [vmem:[%s14 + $0x80] sm:$0xff]
    %v2400 = vld [vmem:[%s14 + $0x88] sm:$0xff]
    %v2401 = vld [vmem:[%s14 + $0x90] sm:$0xff]
    %v2402 = vld [vmem:[%s14 + $0x98] sm:$0xff]
    %v2403 = vld [vmem:[%s14 + $0xa0] sm:$0xff]
    %v2404 = vld [vmem:[%s14 + $0xa8] sm:$0xff]
    %v2405 = vld [vmem:[%s14 + $0xb0] sm:$0xff]
    %v2406 = vld [vmem:[%s14 + $0xb8] sm:$0xff]
    %v2407 = vld [vmem:[%s14 + $0xc0] sm:$0xff]
    %v2408 = vld [vmem:[%s14 + $0xc8] sm:$0xff]
    %v2409 = vld [vmem:[%s14 + $0xd0] sm:$0xff]
    %v2410 = vld [vmem:[%s14 + $0xd8] sm:$0xff]
    %v2411 = vld [vmem:[%s14 + $0xe0] sm:$0xff]
    %v2412 = vld [vmem:[%s14 + $0xe8] sm:$0xff]
    %v2413 = vld [vmem:[%s14 + $0xf0] sm:$0xff]
    %v2414 = vld [vmem:[%s14 + $0xf8] sm:$0xff]
    %v2415 = vld [vmem:[%s14 + $0x100] sm:$0xff]
    %v2416 = vld [vmem:[%s14 + $0x108] sm:$0xff]
    %v2417 = vld [vmem:[%s14 + $0x110] sm:$0xff]
    %v2418 = vld [vmem:[%s14 + $0x118] sm:$0xff]
    %v2419 = vld [vmem:[%s14 + $0x120] sm:$0xff]
    %v2420 = vld [vmem:[%s14 + $0x128] sm:$0xff]
    %v2421 = vld [vmem:[%s14 + $0x130] sm:$0xff]
    %v2422 = vld [vmem:[%s14 + $0x138] sm:$0xff]
    %v2423 = vld [vmem:[%s14 + $0x140] sm:$0xff]
    %v2424 = vld [vmem:[%s14 + $0x148] sm:$0xff]
    %v2425 = vld [vmem:[%s14 + $0x150] sm:$0xff]
    %v2426 = vld [vmem:[%s14 + $0x158] sm:$0xff]
    %v2427 = vld [vmem:[%s14 + $0x160] sm:$0xff]
    %v2428 = vld [vmem:[%s14 + $0x168] sm:$0xff]
    %v2429 = vld [vmem:[%s14 + $0x170] sm:$0xff]
    %v2430 = vld [vmem:[%s14 + $0x178] sm:$0xff]
    %v2431 = vld [vmem:[%s14 + $0x180] sm:$0xff]
    %v2432 = vld [vmem:[%s14 + $0x188] sm:$0xff]
    %v2433 = vld [vmem:[%s14 + $0x190] sm:$0xff]
    %v2434 = vld [vmem:[%s14 + $0x198] sm:$0xff]
    %v2435 = vld [vmem:[%s14 + $0x1a0] sm:$0xff]
    %v2436 = vld [vmem:[%s14 + $0x1a8] sm:$0xff]
    %v2437 = vld [vmem:[%s14 + $0x1b0] sm:$0xff]
    %v2438 = vld [vmem:[%s14 + $0x1b8] sm:$0xff]
    %v2439 = vld [vmem:[%s14 + $0x1c0] sm:$0xff]
    %v2440 = vld [vmem:[%s14 + $0x1c8] sm:$0xff]
    %v2441 = vld [vmem:[%s14 + $0x1d0] sm:$0xff]
    %v2442 = vld [vmem:[%s14 + $0x1d8] sm:$0xff]
    %v2443 = vld [vmem:[%s14 + $0x1e0] sm:$0xff]
    %v2444 = vld [vmem:[%s14 + $0x1e8] sm:$0xff]
    %v2445 = vld [vmem:[%s14 + $0x1f0] sm:$0xff]
    %v2446 = vld [vmem:[%s14 + $0x1f8] sm:$0xff]
    %v2447 = vld [vmem:[%s14 + $0x200] sm:$0xff]
    %v2448 = vld [vmem:[%s14 + $0x208] sm:$0xff]
    %v2449 = vld [vmem:[%s14 + $0x210] sm:$0xff]
    %v2450 = vld [vmem:[%s14 + $0x218] sm:$0xff]
    %v2451 = vld [vmem:[%s14 + $0x220] sm:$0xff]
    %v2452 = vld [vmem:[%s14 + $0x228] sm:$0xff]
    %v2453 = vld [vmem:[%s14 + $0x230] sm:$0xff]
    %v2454 = vld [vmem:[%s14 + $0x238] sm:$0xff]
    %v2455 = vld [vmem:[%s14 + $0x240] sm:$0xff]
    %v2456 = vld [vmem:[%s14 + $0x248] sm:$0xff]
    %v2457 = vld [vmem:[%s14 + $0x250] sm:$0xff]
    %v2458 = vld [vmem:[%s14 + $0x258] sm:$0xff]
    %v2459 = vld [vmem:[%s14 + $0x260] sm:$0xff]
    %v2460 = vld [vmem:[%s14 + $0x268] sm:$0xff]
    %v2461 = vld [vmem:[%s14 + $0x270] sm:$0xff]
    %v2462 = vld [vmem:[%s14 + $0x278] sm:$0xff]
    %v2463 = vld [vmem:[%s14 + $0x280] sm:$0xff]
    %v2464 = vld [vmem:[%s14 + $0x288] sm:$0xff]
    %v2465 = vld [vmem:[%s14 + $0x290] sm:$0xff]
    %v2466 = vld [vmem:[%s14 + $0x298] sm:$0xff]
    %v2467 = vld [vmem:[%s14 + $0x2a0] sm:$0xff]
    %v2468 = vld [vmem:[%s14 + $0x2a8] sm:$0xff]
    %v2469 = vld [vmem:[%s14 + $0x2b0] sm:$0xff]
    %v2470 = vld [vmem:[%s14 + $0x2b8] sm:$0xff]
    %v2471 = vld [vmem:[%s14 + $0x2c0] sm:$0xff]
    %v2472 = vld [vmem:[%s14 + $0x2c8] sm:$0xff]
    %v2473 = vld [vmem:[%s14 + $0x2d0] sm:$0xff]
    %v2474 = vld [vmem:[%s14 + $0x2d8] sm:$0xff]
    %v2475 = vld [vmem:[%s14 + $0x2e0] sm:$0xff]
    %v2476 = vld [vmem:[%s14 + $0x2e8] sm:$0xff]
    %v2477 = vld [vmem:[%s14 + $0x2f0] sm:$0xff]
    %v2478 = vld [vmem:[%s14 + $0x2f8] sm:$0xff]
    %v2479 = vld [vmem:[%s14 + $0x300] sm:$0xff]
    %v2480 = vld [vmem:[%s14 + $0x308] sm:$0xff]
    %v2481 = vld [vmem:[%s14 + $0x310] sm:$0xff]
    %v2482 = vld [vmem:[%s14 + $0x318] sm:$0xff]
    %v2483 = vld [vmem:[%s14 + $0x320] sm:$0xff]
    %v2484 = vld [vmem:[%s14 + $0x328] sm:$0xff]
    %v2485 = vld [vmem:[%s14 + $0x330] sm:$0xff]
    %v2486 = vld [vmem:[%s14 + $0x338] sm:$0xff]
    %v2487 = vld [vmem:[%s14 + $0x340] sm:$0xff]
    %v2488 = vld [vmem:[%s14 + $0x348] sm:$0xff]
    %v2489 = vld [vmem:[%s14 + $0x350] sm:$0xff]
    %v2490 = vld [vmem:[%s14 + $0x358] sm:$0xff]
    %v2491 = vld [vmem:[%s14 + $0x360] sm:$0xff]
    %v2492 = vld [vmem:[%s14 + $0x368] sm:$0xff]
    %v2493 = vld [vmem:[%s14 + $0x370] sm:$0xff]
    %v2494 = vld [vmem:[%s14 + $0x378] sm:$0xff]
    %v2495 = vld [vmem:[%s14 + $0x380] sm:$0xff]
    %v2496 = vld [vmem:[%s14 + $0x388] sm:$0xff]
    %v2497 = vld [vmem:[%s14 + $0x390] sm:$0xff]
    %v2498 = vld [vmem:[%s14 + $0x398] sm:$0xff]
    %v2499 = vld [vmem:[%s14 + $0x3a0] sm:$0xff]
    %v2500 = vld [vmem:[%s14 + $0x3a8] sm:$0xff]
    %v2501 = vld [vmem:[%s14 + $0x3b0] sm:$0xff]
    %v2502 = vld [vmem:[%s14 + $0x3b8] sm:$0xff]
    %v2503 = vld [vmem:[%s14 + $0x3c0] sm:$0xff]
    %v2504 = vld [vmem:[%s14 + $0x3c8] sm:$0xff]
    %v2505 = vld [vmem:[%s14 + $0x3d0] sm:$0xff]
    %v2506 = vld [vmem:[%s14 + $0x3d8] sm:$0xff]
    %v2507 = vld [vmem:[%s14 + $0x3e0] sm:$0xff]
    %v2508 = vld [vmem:[%s14 + $0x3e8] sm:$0xff]
    %v2509 = vld [vmem:[%s14 + $0x3f0] sm:$0xff]
    %v2510 = vld [vmem:[%s14 + $0x3f8] sm:$0xff]
    %v2511 = vld [vmem:[%s14 + $0x400] sm:$0xff]
    %v2512 = vld [vmem:[%s14 + $0x408] sm:$0xff]
    %v2513 = vld [vmem:[%s14 + $0x410] sm:$0xff]
    %v2514 = vld [vmem:[%s14 + $0x418] sm:$0xff]
    %v2515 = vld [vmem:[%s14 + $0x420] sm:$0xff]
    %v2516 = vld [vmem:[%s14 + $0x428] sm:$0xff]
    %v2517 = vld [vmem:[%s14 + $0x430] sm:$0xff]
    %v2518 = vld [vmem:[%s14 + $0x438] sm:$0xff]
    %v2519 = vld [vmem:[%s14 + $0x440] sm:$0xff]
    %v2520 = vld [vmem:[%s14 + $0x448] sm:$0xff]
    %v2521 = vld [vmem:[%s14 + $0x450] sm:$0xff]
    %v2522 = vld [vmem:[%s14 + $0x458] sm:$0xff]
    %v2523 = vld [vmem:[%s14 + $0x460] sm:$0xff]
    %v2524 = vld [vmem:[%s14 + $0x468] sm:$0xff]
    %v2525 = vld [vmem:[%s14 + $0x470] sm:$0xff]
    %v2526 = vld [vmem:[%s14 + $0x478] sm:$0xff]
    %v2527 = vld [vmem:[%s15] sm:$0x3]
    %v2529 = vlaneseq
    %v2530 = vshrl.u32 %v2529, 7
    %v2531 = vsub.s32 0, %v2530
    %v2532 = vrot.slane %v2527, %v2531
    %v2533 = vlaneseq
    %v2534 = vshrl.u32 %v2533, 7
    %v2535 = vsub.s32 1, %v2534
    %v2536 = vrot.slane %v2527, %v2535
    %v2683 = vunpack.c.l.b16 %v2383
    %v2684 = vunpack.c.h.b16 %v2383
    %v2685 = vunpack.c.l.b16 %v2384
    %v2686 = vunpack.c.h.b16 %v2384
    %v2687 = vunpack.c.l.b16 %v2385
    %v2688 = vunpack.c.h.b16 %v2385
    %v2689 = vunpack.c.l.b16 %v2386
    %v2690 = vunpack.c.h.b16 %v2386
    %v2691 = vunpack.c.l.b16 %v2387
    %v2692 = vunpack.c.h.b16 %v2387
    %v2693 = vunpack.c.l.b16 %v2388
    %v2694 = vunpack.c.h.b16 %v2388
    %v2695 = vunpack.c.l.b16 %v2389
    %v2696 = vunpack.c.h.b16 %v2389
    %v2697 = vunpack.c.l.b16 %v2390
    %v2698 = vunpack.c.h.b16 %v2390
    %v2699 = vunpack.c.l.b16 %v2391
    %v2700 = vunpack.c.h.b16 %v2391
    %v2701 = vunpack.c.l.b16 %v2392
    %v2702 = vunpack.c.h.b16 %v2392
    %v2703 = vunpack.c.l.b16 %v2393
    %v2704 = vunpack.c.h.b16 %v2393
    %v2705 = vunpack.c.l.b16 %v2394
    %v2706 = vunpack.c.h.b16 %v2394
    %v2707 = vunpack.c.l.b16 %v2395
    %v2708 = vunpack.c.h.b16 %v2395
    %v2709 = vunpack.c.l.b16 %v2396
    %v2710 = vunpack.c.h.b16 %v2396
    %v2711 = vunpack.c.l.b16 %v2397
    %v2712 = vunpack.c.h.b16 %v2397
    %v2713 = vunpack.c.l.b16 %v2398
    %v2714 = vunpack.c.h.b16 %v2398
    %v2715 = vunpack.c.l.b16 %v2399
    %v2716 = vunpack.c.h.b16 %v2399
    %v2717 = vunpack.c.l.b16 %v2400
    %v2718 = vunpack.c.h.b16 %v2400
    %v2719 = vunpack.c.l.b16 %v2401
    %v2720 = vunpack.c.h.b16 %v2401
    %v2721 = vunpack.c.l.b16 %v2402
    %v2722 = vunpack.c.h.b16 %v2402
    %v2723 = vunpack.c.l.b16 %v2403
    %v2724 = vunpack.c.h.b16 %v2403
    %v2725 = vunpack.c.l.b16 %v2404
    %v2726 = vunpack.c.h.b16 %v2404
    %v2727 = vunpack.c.l.b16 %v2405
    %v2728 = vunpack.c.h.b16 %v2405
    %v2729 = vunpack.c.l.b16 %v2406
    %v2730 = vunpack.c.h.b16 %v2406
    %v2731 = vunpack.c.l.b16 %v2407
    %v2732 = vunpack.c.h.b16 %v2407
    %v2733 = vunpack.c.l.b16 %v2408
    %v2734 = vunpack.c.h.b16 %v2408
    %v2735 = vunpack.c.l.b16 %v2409
    %v2736 = vunpack.c.h.b16 %v2409
    %v2737 = vunpack.c.l.b16 %v2410
    %v2738 = vunpack.c.h.b16 %v2410
    %v2739 = vunpack.c.l.b16 %v2411
    %v2740 = vunpack.c.h.b16 %v2411
    %v2741 = vunpack.c.l.b16 %v2412
    %v2742 = vunpack.c.h.b16 %v2412
    %v2743 = vunpack.c.l.b16 %v2413
    %v2744 = vunpack.c.h.b16 %v2413
    %v2745 = vunpack.c.l.b16 %v2414
    %v2746 = vunpack.c.h.b16 %v2414
    %v2747 = vunpack.c.l.b16 %v2415
    %v2748 = vunpack.c.h.b16 %v2415
    %v2749 = vunpack.c.l.b16 %v2416
    %v2750 = vunpack.c.h.b16 %v2416
    %v2751 = vunpack.c.l.b16 %v2417
    %v2752 = vunpack.c.h.b16 %v2417
    %v2753 = vunpack.c.l.b16 %v2418
    %v2754 = vunpack.c.h.b16 %v2418
    %v2755 = vunpack.c.l.b16 %v2419
    %v2756 = vunpack.c.h.b16 %v2419
    %v2757 = vunpack.c.l.b16 %v2420
    %v2758 = vunpack.c.h.b16 %v2420
    %v2759 = vunpack.c.l.b16 %v2421
    %v2760 = vunpack.c.h.b16 %v2421
    %v2761 = vunpack.c.l.b16 %v2422
    %v2762 = vunpack.c.h.b16 %v2422
    %v2763 = vunpack.c.l.b16 %v2423
    %v2764 = vunpack.c.h.b16 %v2423
    %v2765 = vunpack.c.l.b16 %v2424
    %v2766 = vunpack.c.h.b16 %v2424
    %v2767 = vunpack.c.l.b16 %v2425
    %v2768 = vunpack.c.h.b16 %v2425
    %v2769 = vunpack.c.l.b16 %v2426
    %v2770 = vunpack.c.h.b16 %v2426
    %v2771 = vunpack.c.l.b16 %v2427
    %v2772 = vunpack.c.h.b16 %v2427
    %v2773 = vunpack.c.l.b16 %v2428
    %v2774 = vunpack.c.h.b16 %v2428
    %v2775 = vunpack.c.l.b16 %v2429
    %v2776 = vunpack.c.h.b16 %v2429
    %v2777 = vunpack.c.l.b16 %v2430
    %v2778 = vunpack.c.h.b16 %v2430
    %v2779 = vunpack.c.l.b16 %v2431
    %v2780 = vunpack.c.h.b16 %v2431
    %v2781 = vunpack.c.l.b16 %v2432
    %v2782 = vunpack.c.h.b16 %v2432
    %v2783 = vunpack.c.l.b16 %v2433
    %v2784 = vunpack.c.h.b16 %v2433
    %v2785 = vunpack.c.l.b16 %v2434
    %v2786 = vunpack.c.h.b16 %v2434
    %v2787 = vunpack.c.l.b16 %v2435
    %v2788 = vunpack.c.h.b16 %v2435
    %v2789 = vunpack.c.l.b16 %v2436
    %v2790 = vunpack.c.h.b16 %v2436
    %v2791 = vunpack.c.l.b16 %v2437
    %v2792 = vunpack.c.h.b16 %v2437
    %v2793 = vunpack.c.l.b16 %v2438
    %v2794 = vunpack.c.h.b16 %v2438
    %v2795 = vunpack.c.l.b16 %v2439
    %v2796 = vunpack.c.h.b16 %v2439
    %v2797 = vunpack.c.l.b16 %v2440
    %v2798 = vunpack.c.h.b16 %v2440
    %v2799 = vunpack.c.l.b16 %v2441
    %v2800 = vunpack.c.h.b16 %v2441
    %v2801 = vunpack.c.l.b16 %v2442
    %v2802 = vunpack.c.h.b16 %v2442
    %v2803 = vunpack.c.l.b16 %v2443
    %v2804 = vunpack.c.h.b16 %v2443
    %v2805 = vunpack.c.l.b16 %v2444
    %v2806 = vunpack.c.h.b16 %v2444
    %v2807 = vunpack.c.l.b16 %v2445
    %v2808 = vunpack.c.h.b16 %v2445
    %v2809 = vunpack.c.l.b16 %v2446
    %v2810 = vunpack.c.h.b16 %v2446
    %v2811 = vunpack.c.l.b16 %v2447
    %v2812 = vunpack.c.h.b16 %v2447
    %v2813 = vunpack.c.l.b16 %v2448
    %v2814 = vunpack.c.h.b16 %v2448
    %v2815 = vunpack.c.l.b16 %v2449
    %v2816 = vunpack.c.h.b16 %v2449
    %v2817 = vunpack.c.l.b16 %v2450
    %v2818 = vunpack.c.h.b16 %v2450
    %v2819 = vunpack.c.l.b16 %v2451
    %v2820 = vunpack.c.h.b16 %v2451
    %v2821 = vunpack.c.l.b16 %v2452
    %v2822 = vunpack.c.h.b16 %v2452
    %v2823 = vunpack.c.l.b16 %v2453
    %v2824 = vunpack.c.h.b16 %v2453
    %v2825 = vunpack.c.l.b16 %v2454
    %v2826 = vunpack.c.h.b16 %v2454
    %v2827 = vunpack.c.l.b16 %v2455
    %v2828 = vunpack.c.h.b16 %v2455
    %v2829 = vunpack.c.l.b16 %v2456
    %v2830 = vunpack.c.h.b16 %v2456
    %v2831 = vunpack.c.l.b16 %v2457
    %v2832 = vunpack.c.h.b16 %v2457
    %v2833 = vunpack.c.l.b16 %v2458
    %v2834 = vunpack.c.h.b16 %v2458
    %v2835 = vunpack.c.l.b16 %v2459
    %v2836 = vunpack.c.h.b16 %v2459
    %v2837 = vunpack.c.l.b16 %v2460
    %v2838 = vunpack.c.h.b16 %v2460
    %v2839 = vunpack.c.l.b16 %v2461
    %v2840 = vunpack.c.h.b16 %v2461
    %v2841 = vunpack.c.l.b16 %v2462
    %v2842 = vunpack.c.h.b16 %v2462
    %v2843 = vunpack.c.l.b16 %v2463
    %v2844 = vunpack.c.h.b16 %v2463
    %v2845 = vunpack.c.l.b16 %v2464
    %v2846 = vunpack.c.h.b16 %v2464
    %v2847 = vunpack.c.l.b16 %v2465
    %v2848 = vunpack.c.h.b16 %v2465
    %v2849 = vunpack.c.l.b16 %v2466
    %v2850 = vunpack.c.h.b16 %v2466
    %v2851 = vunpack.c.l.b16 %v2467
    %v2852 = vunpack.c.h.b16 %v2467
    %v2853 = vunpack.c.l.b16 %v2468
    %v2854 = vunpack.c.h.b16 %v2468
    %v2855 = vunpack.c.l.b16 %v2469
    %v2856 = vunpack.c.h.b16 %v2469
    %v2857 = vunpack.c.l.b16 %v2470
    %v2858 = vunpack.c.h.b16 %v2470
    %v2859 = vunpack.c.l.b16 %v2471
    %v2860 = vunpack.c.h.b16 %v2471
    %v2861 = vunpack.c.l.b16 %v2472
    %v2862 = vunpack.c.h.b16 %v2472
    %v2863 = vunpack.c.l.b16 %v2473
    %v2864 = vunpack.c.h.b16 %v2473
    %v2865 = vunpack.c.l.b16 %v2474
    %v2866 = vunpack.c.h.b16 %v2474
    %v2867 = vunpack.c.l.b16 %v2475
    %v2868 = vunpack.c.h.b16 %v2475
    %v2869 = vunpack.c.l.b16 %v2476
    %v2870 = vunpack.c.h.b16 %v2476
    %v2871 = vunpack.c.l.b16 %v2477
    %v2872 = vunpack.c.h.b16 %v2477
    %v2873 = vunpack.c.l.b16 %v2478
    %v2874 = vunpack.c.h.b16 %v2478
    %v2875 = vunpack.c.l.b16 %v2479
    %v2876 = vunpack.c.h.b16 %v2479
    %v2877 = vunpack.c.l.b16 %v2480
    %v2878 = vunpack.c.h.b16 %v2480
    %v2879 = vunpack.c.l.b16 %v2481
    %v2880 = vunpack.c.h.b16 %v2481
    %v2881 = vunpack.c.l.b16 %v2482
    %v2882 = vunpack.c.h.b16 %v2482
    %v2883 = vunpack.c.l.b16 %v2483
    %v2884 = vunpack.c.h.b16 %v2483
    %v2885 = vunpack.c.l.b16 %v2484
    %v2886 = vunpack.c.h.b16 %v2484
    %v2887 = vunpack.c.l.b16 %v2485
    %v2888 = vunpack.c.h.b16 %v2485
    %v2889 = vunpack.c.l.b16 %v2486
    %v2890 = vunpack.c.h.b16 %v2486
    %v2891 = vunpack.c.l.b16 %v2487
    %v2892 = vunpack.c.h.b16 %v2487
    %v2893 = vunpack.c.l.b16 %v2488
    %v2894 = vunpack.c.h.b16 %v2488
    %v2895 = vunpack.c.l.b16 %v2489
    %v2896 = vunpack.c.h.b16 %v2489
    %v2897 = vunpack.c.l.b16 %v2490
    %v2898 = vunpack.c.h.b16 %v2490
    %v2899 = vunpack.c.l.b16 %v2491
    %v2900 = vunpack.c.h.b16 %v2491
    %v2901 = vunpack.c.l.b16 %v2492
    %v2902 = vunpack.c.h.b16 %v2492
    %v2903 = vunpack.c.l.b16 %v2493
    %v2904 = vunpack.c.h.b16 %v2493
    %v2905 = vunpack.c.l.b16 %v2494
    %v2906 = vunpack.c.h.b16 %v2494
    %v2907 = vunpack.c.l.b16 %v2495
    %v2908 = vunpack.c.h.b16 %v2495
    %v2909 = vunpack.c.l.b16 %v2496
    %v2910 = vunpack.c.h.b16 %v2496
    %v2911 = vunpack.c.l.b16 %v2497
    %v2912 = vunpack.c.h.b16 %v2497
    %v2913 = vunpack.c.l.b16 %v2498
    %v2914 = vunpack.c.h.b16 %v2498
    %v2915 = vunpack.c.l.b16 %v2499
    %v2916 = vunpack.c.h.b16 %v2499
    %v2917 = vunpack.c.l.b16 %v2500
    %v2918 = vunpack.c.h.b16 %v2500
    %v2919 = vunpack.c.l.b16 %v2501
    %v2920 = vunpack.c.h.b16 %v2501
    %v2921 = vunpack.c.l.b16 %v2502
    %v2922 = vunpack.c.h.b16 %v2502
    %v2923 = vunpack.c.l.b16 %v2503
    %v2924 = vunpack.c.h.b16 %v2503
    %v2925 = vunpack.c.l.b16 %v2504
    %v2926 = vunpack.c.h.b16 %v2504
    %v2927 = vunpack.c.l.b16 %v2505
    %v2928 = vunpack.c.h.b16 %v2505
    %v2929 = vunpack.c.l.b16 %v2506
    %v2930 = vunpack.c.h.b16 %v2506
    %v2931 = vunpack.c.l.b16 %v2507
    %v2932 = vunpack.c.h.b16 %v2507
    %v2933 = vunpack.c.l.b16 %v2508
    %v2934 = vunpack.c.h.b16 %v2508
    %v2935 = vunpack.c.l.b16 %v2509
    %v2936 = vunpack.c.h.b16 %v2509
    %v2937 = vunpack.c.l.b16 %v2510
    %v2938 = vunpack.c.h.b16 %v2510
    %v2939 = vunpack.c.l.b16 %v2511
    %v2940 = vunpack.c.h.b16 %v2511
    %v2941 = vunpack.c.l.b16 %v2512
    %v2942 = vunpack.c.h.b16 %v2512
    %v2943 = vunpack.c.l.b16 %v2513
    %v2944 = vunpack.c.h.b16 %v2513
    %v2945 = vunpack.c.l.b16 %v2514
    %v2946 = vunpack.c.h.b16 %v2514
    %v2947 = vunpack.c.l.b16 %v2515
    %v2948 = vunpack.c.h.b16 %v2515
    %v2949 = vunpack.c.l.b16 %v2516
    %v2950 = vunpack.c.h.b16 %v2516
    %v2951 = vunpack.c.l.b16 %v2517
    %v2952 = vunpack.c.h.b16 %v2517
    %v2953 = vunpack.c.l.b16 %v2518
    %v2954 = vunpack.c.h.b16 %v2518
    %v2955 = vunpack.c.l.b16 %v2519
    %v2956 = vunpack.c.h.b16 %v2519
    %v2957 = vunpack.c.l.b16 %v2520
    %v2958 = vunpack.c.h.b16 %v2520
    %v2959 = vunpack.c.l.b16 %v2521
    %v2960 = vunpack.c.h.b16 %v2521
    %v2961 = vunpack.c.l.b16 %v2522
    %v2962 = vunpack.c.h.b16 %v2522
    %v2963 = vunpack.c.l.b16 %v2523
    %v2964 = vunpack.c.h.b16 %v2523
    %v2965 = vunpack.c.l.b16 %v2524
    %v2966 = vunpack.c.h.b16 %v2524
    %v2967 = vunpack.c.l.b16 %v2525
    %v2968 = vunpack.c.h.b16 %v2525
    %v2969 = vunpack.c.l.b16 %v2526
    %v2970 = vunpack.c.h.b16 %v2526
    %v2971 = vpack.c.b16 %v2685, %v2683
    %v2972 = vpack.c.b16 %v2686, %v2684
    %v2973 = vpack.c.b16 %v2689, %v2687
    %v2974 = vpack.c.b16 %v2690, %v2688
    %v2975 = vpack.c.b16 %v2693, %v2691
    %v2976 = vpack.c.b16 %v2694, %v2692
    %v2977 = vpack.c.b16 %v2697, %v2695
    %v2978 = vpack.c.b16 %v2698, %v2696
    %v2979 = vpack.c.b16 %v2701, %v2699
    %v2980 = vpack.c.b16 %v2702, %v2700
    %v2981 = vpack.c.b16 %v2705, %v2703
    %v2982 = vpack.c.b16 %v2706, %v2704
    %v2983 = vpack.c.b16 %v2709, %v2707
    %v2984 = vpack.c.b16 %v2710, %v2708
    %v2985 = vpack.c.b16 %v2713, %v2711
    %v2986 = vpack.c.b16 %v2714, %v2712
    %v2987 = vpack.c.b16 %v2717, %v2715
    %v2988 = vpack.c.b16 %v2718, %v2716
    %v2989 = vpack.c.b16 %v2721, %v2719
    %v2990 = vpack.c.b16 %v2722, %v2720
    %v2991 = vpack.c.b16 %v2725, %v2723
    %v2992 = vpack.c.b16 %v2726, %v2724
    %v2993 = vpack.c.b16 %v2729, %v2727
    %v2994 = vpack.c.b16 %v2730, %v2728
    %v2995 = vpack.c.b16 %v2733, %v2731
    %v2996 = vpack.c.b16 %v2734, %v2732
    %v2997 = vpack.c.b16 %v2737, %v2735
    %v2998 = vpack.c.b16 %v2738, %v2736
    %v2999 = vpack.c.b16 %v2741, %v2739
    %v3000 = vpack.c.b16 %v2742, %v2740
    %v3001 = vpack.c.b16 %v2745, %v2743
    %v3002 = vpack.c.b16 %v2746, %v2744
    %v3003 = vpack.c.b16 %v2749, %v2747
    %v3004 = vpack.c.b16 %v2750, %v2748
    %v3005 = vpack.c.b16 %v2753, %v2751
    %v3006 = vpack.c.b16 %v2754, %v2752
    %v3007 = vpack.c.b16 %v2757, %v2755
    %v3008 = vpack.c.b16 %v2758, %v2756
    %v3009 = vpack.c.b16 %v2761, %v2759
    %v3010 = vpack.c.b16 %v2762, %v2760
    %v3011 = vpack.c.b16 %v2765, %v2763
    %v3012 = vpack.c.b16 %v2766, %v2764
    %v3013 = vpack.c.b16 %v2769, %v2767
    %v3014 = vpack.c.b16 %v2770, %v2768
    %v3015 = vpack.c.b16 %v2773, %v2771
    %v3016 = vpack.c.b16 %v2774, %v2772
    %v3017 = vpack.c.b16 %v2777, %v2775
    %v3018 = vpack.c.b16 %v2778, %v2776
    %v3019 = vpack.c.b16 %v2781, %v2779
    %v3020 = vpack.c.b16 %v2782, %v2780
    %v3021 = vpack.c.b16 %v2785, %v2783
    %v3022 = vpack.c.b16 %v2786, %v2784
    %v3023 = vpack.c.b16 %v2789, %v2787
    %v3024 = vpack.c.b16 %v2790, %v2788
    %v3025 = vpack.c.b16 %v2793, %v2791
    %v3026 = vpack.c.b16 %v2794, %v2792
    %v3027 = vpack.c.b16 %v2797, %v2795
    %v3028 = vpack.c.b16 %v2798, %v2796
    %v3029 = vpack.c.b16 %v2801, %v2799
    %v3030 = vpack.c.b16 %v2802, %v2800
    %v3031 = vpack.c.b16 %v2805, %v2803
    %v3032 = vpack.c.b16 %v2806, %v2804
    %v3033 = vpack.c.b16 %v2809, %v2807
    %v3034 = vpack.c.b16 %v2810, %v2808
    %v3035 = vpack.c.b16 %v2813, %v2811
    %v3036 = vpack.c.b16 %v2814, %v2812
    %v3037 = vpack.c.b16 %v2817, %v2815
    %v3038 = vpack.c.b16 %v2818, %v2816
    %v3039 = vpack.c.b16 %v2821, %v2819
    %v3040 = vpack.c.b16 %v2822, %v2820
    %v3041 = vpack.c.b16 %v2825, %v2823
    %v3042 = vpack.c.b16 %v2826, %v2824
    %v3043 = vpack.c.b16 %v2829, %v2827
    %v3044 = vpack.c.b16 %v2830, %v2828
    %v3045 = vpack.c.b16 %v2833, %v2831
    %v3046 = vpack.c.b16 %v2834, %v2832
    %v3047 = vpack.c.b16 %v2837, %v2835
    %v3048 = vpack.c.b16 %v2838, %v2836
    %v3049 = vpack.c.b16 %v2841, %v2839
    %v3050 = vpack.c.b16 %v2842, %v2840
    %v3051 = vpack.c.b16 %v2845, %v2843
    %v3052 = vpack.c.b16 %v2846, %v2844
    %v3053 = vpack.c.b16 %v2849, %v2847
    %v3054 = vpack.c.b16 %v2850, %v2848
    %v3055 = vpack.c.b16 %v2853, %v2851
    %v3056 = vpack.c.b16 %v2854, %v2852
    %v3057 = vpack.c.b16 %v2857, %v2855
    %v3058 = vpack.c.b16 %v2858, %v2856
    %v3059 = vpack.c.b16 %v2861, %v2859
    %v3060 = vpack.c.b16 %v2862, %v2860
    %v3061 = vpack.c.b16 %v2865, %v2863
    %v3062 = vpack.c.b16 %v2866, %v2864
    %v3063 = vpack.c.b16 %v2869, %v2867
    %v3064 = vpack.c.b16 %v2870, %v2868
    %v3065 = vpack.c.b16 %v2873, %v2871
    %v3066 = vpack.c.b16 %v2874, %v2872
    %v3067 = vpack.c.b16 %v2877, %v2875
    %v3068 = vpack.c.b16 %v2878, %v2876
    %v3069 = vpack.c.b16 %v2881, %v2879
    %v3070 = vpack.c.b16 %v2882, %v2880
    %v3071 = vpack.c.b16 %v2885, %v2883
    %v3072 = vpack.c.b16 %v2886, %v2884
    %v3073 = vpack.c.b16 %v2889, %v2887
    %v3074 = vpack.c.b16 %v2890, %v2888
    %v3075 = vpack.c.b16 %v2893, %v2891
    %v3076 = vpack.c.b16 %v2894, %v2892
    %v3077 = vpack.c.b16 %v2897, %v2895
    %v3078 = vpack.c.b16 %v2898, %v2896
    %v3079 = vpack.c.b16 %v2901, %v2899
    %v3080 = vpack.c.b16 %v2902, %v2900
    %v3081 = vpack.c.b16 %v2905, %v2903
    %v3082 = vpack.c.b16 %v2906, %v2904
    %v3083 = vpack.c.b16 %v2909, %v2907
    %v3084 = vpack.c.b16 %v2910, %v2908
    %v3085 = vpack.c.b16 %v2913, %v2911
    %v3086 = vpack.c.b16 %v2914, %v2912
    %v3087 = vpack.c.b16 %v2917, %v2915
    %v3088 = vpack.c.b16 %v2918, %v2916
    %v3089 = vpack.c.b16 %v2921, %v2919
    %v3090 = vpack.c.b16 %v2922, %v2920
    %v3091 = vpack.c.b16 %v2925, %v2923
    %v3092 = vpack.c.b16 %v2926, %v2924
    %v3093 = vpack.c.b16 %v2929, %v2927
    %v3094 = vpack.c.b16 %v2930, %v2928
    %v3095 = vpack.c.b16 %v2933, %v2931
    %v3096 = vpack.c.b16 %v2934, %v2932
    %v3097 = vpack.c.b16 %v2937, %v2935
    %v3098 = vpack.c.b16 %v2938, %v2936
    %v3099 = vpack.c.b16 %v2941, %v2939
    %v3100 = vpack.c.b16 %v2942, %v2940
    %v3101 = vpack.c.b16 %v2945, %v2943
    %v3102 = vpack.c.b16 %v2946, %v2944
    %v3103 = vpack.c.b16 %v2949, %v2947
    %v3104 = vpack.c.b16 %v2950, %v2948
    %v3105 = vpack.c.b16 %v2953, %v2951
    %v3106 = vpack.c.b16 %v2954, %v2952
    %v3107 = vpack.c.b16 %v2957, %v2955
    %v3108 = vpack.c.b16 %v2958, %v2956
    %v3109 = vpack.c.b16 %v2961, %v2959
    %v3110 = vpack.c.b16 %v2962, %v2960
    %v3111 = vpack.c.b16 %v2965, %v2963
    %v3112 = vpack.c.b16 %v2966, %v2964
    %v3113 = vpack.c.b16 %v2969, %v2967
    %v3114 = vpack.c.b16 %v2970, %v2968
    %3259 = vmatprep.subr.bf16.mxu0 %v2972
    %3260 = vmatpush1.bf16.msra.mxu0 %v2971
    %3261 = vmatprep.subr.bf16.mxu0 %v2974
    %3262 = vmatpush1.bf16.msra.mxu0 %v2973
    %3263 = vmatprep.subr.bf16.mxu0 %v2976
    %3264 = vmatpush1.bf16.msra.mxu0 %v2975
    %3265 = vmatprep.subr.bf16.mxu0 %v2978
    %3266 = vmatpush1.bf16.msra.mxu0 %v2977
    %3267 = vmatprep.subr.bf16.mxu0 %v2980
    %3268 = vmatpush1.bf16.msra.mxu0 %v2979
    %3269 = vmatprep.subr.bf16.mxu0 %v2982
    %3270 = vmatpush1.bf16.msra.mxu0 %v2981
    %3271 = vmatprep.subr.bf16.mxu0 %v2984
    %3272 = vmatpush1.bf16.msra.mxu0 %v2983
    %3273 = vmatprep.subr.bf16.mxu0 %v2986
    %3274 = vmatpush1.bf16.msra.mxu0 %v2985
    %3275 = vmatprep.subr.bf16.mxu0 %v2988
    %3276 = vmatpush1.bf16.msra.mxu0 %v2987
    %3277 = vmatprep.subr.bf16.mxu0 %v2990
    %3278 = vmatpush1.bf16.msra.mxu0 %v2989
    %3279 = vmatprep.subr.bf16.mxu0 %v2992
    %3280 = vmatpush1.bf16.msra.mxu0 %v2991
    %3281 = vmatprep.subr.bf16.mxu0 %v2994
    %3282 = vmatpush1.bf16.msra.mxu0 %v2993
    %3283 = vmatprep.subr.bf16.mxu0 %v2996
    %3284 = vmatpush1.bf16.msra.mxu0 %v2995
    %3285 = vmatprep.subr.bf16.mxu0 %v2998
    %3286 = vmatpush1.bf16.msra.mxu0 %v2997
    %3287 = vmatprep.subr.bf16.mxu0 %v3000
    %3288 = vmatpush1.bf16.msra.mxu0 %v2999
    %3289 = vmatprep.subr.bf16.mxu0 %v3002
    %3290 = vmatpush1.bf16.msra.mxu0 %v3001
    %3291 = vmatprep.mubr.bf16.mxu0 %v2375
    %3292 = vmatmul.mubr.bf16.gmra.mrb[0].mxu0 %v2374
    %v3293 = vpop.f32.mrb[0].mxu0
    %v3294 = vadd.f32 %v2532, %v3293
    %v3295 = vpop.f32.mrb[0].mxu0
    %v3296 = vadd.f32 %v2536, %v3295
    %v3297 = vpop.f32.mrb[0].mxu0
    %v3298 = vpop.f32.mrb[0].mxu0
    %3299 = vdwg.mxu0
    %3300 = vmatprep.subr.bf16.mxu0 %v3004
    %3301 = vmatpush1.bf16.msra.mxu0 %v3003
    %3302 = vmatprep.subr.bf16.mxu0 %v3006
    %3303 = vmatpush1.bf16.msra.mxu0 %v3005
    %3304 = vmatprep.subr.bf16.mxu0 %v3008
    %3305 = vmatpush1.bf16.msra.mxu0 %v3007
    %3306 = vmatprep.subr.bf16.mxu0 %v3010
    %3307 = vmatpush1.bf16.msra.mxu0 %v3009
    %3308 = vmatprep.subr.bf16.mxu0 %v3012
    %3309 = vmatpush1.bf16.msra.mxu0 %v3011
    %3310 = vmatprep.subr.bf16.mxu0 %v3014
    %3311 = vmatpush1.bf16.msra.mxu0 %v3013
    %3312 = vmatprep.subr.bf16.mxu0 %v3016
    %3313 = vmatpush1.bf16.msra.mxu0 %v3015
    %3314 = vmatprep.subr.bf16.mxu0 %v3018
    %3315 = vmatpush1.bf16.msra.mxu0 %v3017
    %3316 = vmatprep.subr.bf16.mxu0 %v3020
    %3317 = vmatpush1.bf16.msra.mxu0 %v3019
    %3318 = vmatprep.subr.bf16.mxu0 %v3022
    %3319 = vmatpush1.bf16.msra.mxu0 %v3021
    %3320 = vmatprep.subr.bf16.mxu0 %v3024
    %3321 = vmatpush1.bf16.msra.mxu0 %v3023
    %3322 = vmatprep.subr.bf16.mxu0 %v3026
    %3323 = vmatpush1.bf16.msra.mxu0 %v3025
    %3324 = vmatprep.subr.bf16.mxu0 %v3028
    %3325 = vmatpush1.bf16.msra.mxu0 %v3027
    %3326 = vmatprep.subr.bf16.mxu0 %v3030
    %3327 = vmatpush1.bf16.msra.mxu0 %v3029
    %3328 = vmatprep.subr.bf16.mxu0 %v3032
    %3329 = vmatpush1.bf16.msra.mxu0 %v3031
    %3330 = vmatprep.subr.bf16.mxu0 %v3034
    %3331 = vmatpush1.bf16.msra.mxu0 %v3033
    %3332 = vmatprep.mubr.bf16.mxu0 %v2377
    %3333 = vmatmul.mubr.bf16.gmra.mrb[0].mxu0 %v2376
    %v3334 = vpop.f32.mrb[0].mxu0
    %v3335 = vadd.f32 %v3294, %v3334
    %v3336 = vpop.f32.mrb[0].mxu0
    %v3337 = vadd.f32 %v3296, %v3336
    %v3338 = vpop.f32.mrb[0].mxu0
    %v3339 = vpop.f32.mrb[0].mxu0
    %3340 = vdwg.mxu0
    %3341 = vmatprep.subr.bf16.mxu0 %v3036
    %3342 = vmatpush1.bf16.msra.mxu0 %v3035
    %3343 = vmatprep.subr.bf16.mxu0 %v3038
    %3344 = vmatpush1.bf16.msra.mxu0 %v3037
    %3345 = vmatprep.subr.bf16.mxu0 %v3040
    %3346 = vmatpush1.bf16.msra.mxu0 %v3039
    %3347 = vmatprep.subr.bf16.mxu0 %v3042
    %3348 = vmatpush1.bf16.msra.mxu0 %v3041
    %3349 = vmatprep.subr.bf16.mxu0 %v3044
    %3350 = vmatpush1.bf16.msra.mxu0 %v3043
    %3351 = vmatprep.subr.bf16.mxu0 %v3046
    %3352 = vmatpush1.bf16.msra.mxu0 %v3045
    %3353 = vmatprep.subr.bf16.mxu0 %v3048
    %3354 = vmatpush1.bf16.msra.mxu0 %v3047
    %3355 = vmatprep.subr.bf16.mxu0 %v3050
    %3356 = vmatpush1.bf16.msra.mxu0 %v3049
    %3357 = vmatprep.subr.bf16.mxu0 %v3052
    %3358 = vmatpush1.bf16.msra.mxu0 %v3051
    %3359 = vmatprep.subr.bf16.mxu0 %v3054
    %3360 = vmatpush1.bf16.msra.mxu0 %v3053
    %3361 = vmatprep.subr.bf16.mxu0 %v3056
    %3362 = vmatpush1.bf16.msra.mxu0 %v3055
    %3363 = vmatprep.subr.bf16.mxu0 %v3058
    %3364 = vmatpush1.bf16.msra.mxu0 %v3057
    %3365 = vmatprep.subr.bf16.mxu0 %v3060
    %3366 = vmatpush1.bf16.msra.mxu0 %v3059
    %3367 = vmatprep.subr.bf16.mxu0 %v3062
    %3368 = vmatpush1.bf16.msra.mxu0 %v3061
    %3369 = vmatprep.subr.bf16.mxu0 %v3064
    %3370 = vmatpush1.bf16.msra.mxu0 %v3063
    %3371 = vmatprep.subr.bf16.mxu0 %v3066
    %3372 = vmatpush1.bf16.msra.mxu0 %v3065
    %3373 = vmatprep.mubr.bf16.mxu0 %v2379
    %3374 = vmatmul.mubr.bf16.gmra.mrb[0].mxu0 %v2378
    %v3375 = vpop.f32.mrb[0].mxu0
    %v3376 = vadd.f32 %v3335, %v3375
    %v3377 = vpop.f32.mrb[0].mxu0
    %v3378 = vadd.f32 %v3337, %v3377
    %v3379 = vpop.f32.mrb[0].mxu0
    %v3380 = vpop.f32.mrb[0].mxu0
    %3381 = vdwg.mxu0
    %3382 = vmatprep.subr.bf16.mxu0 %v3068
    %3383 = vmatpush1.bf16.msra.mxu0 %v3067
    %3384 = vmatprep.subr.bf16.mxu0 %v3070
    %3385 = vmatpush1.bf16.msra.mxu0 %v3069
    %3386 = vmatprep.subr.bf16.mxu0 %v3072
    %3387 = vmatpush1.bf16.msra.mxu0 %v3071
    %3388 = vmatprep.subr.bf16.mxu0 %v3074
    %3389 = vmatpush1.bf16.msra.mxu0 %v3073
    %3390 = vmatprep.subr.bf16.mxu0 %v3076
    %3391 = vmatpush1.bf16.msra.mxu0 %v3075
    %3392 = vmatprep.subr.bf16.mxu0 %v3078
    %3393 = vmatpush1.bf16.msra.mxu0 %v3077
    %3394 = vmatprep.subr.bf16.mxu0 %v3080
    %3395 = vmatpush1.bf16.msra.mxu0 %v3079
    %3396 = vmatprep.subr.bf16.mxu0 %v3082
    %3397 = vmatpush1.bf16.msra.mxu0 %v3081
    %3398 = vmatprep.subr.bf16.mxu0 %v3084
    %3399 = vmatpush1.bf16.msra.mxu0 %v3083
    %3400 = vmatprep.subr.bf16.mxu0 %v3086
    %3401 = vmatpush1.bf16.msra.mxu0 %v3085
    %3402 = vmatprep.subr.bf16.mxu0 %v3088
    %3403 = vmatpush1.bf16.msra.mxu0 %v3087
    %3404 = vmatprep.subr.bf16.mxu0 %v3090
    %3405 = vmatpush1.bf16.msra.mxu0 %v3089
    %3406 = vmatprep.subr.bf16.mxu0 %v3092
    %3407 = vmatpush1.bf16.msra.mxu0 %v3091
    %3408 = vmatprep.subr.bf16.mxu0 %v3094
    %3409 = vmatpush1.bf16.msra.mxu0 %v3093
    %3410 = vmatprep.subr.bf16.mxu0 %v3096
    %3411 = vmatpush1.bf16.msra.mxu0 %v3095
    %3412 = vmatprep.subr.bf16.mxu0 %v3098
    %3413 = vmatpush1.bf16.msra.mxu0 %v3097
    %3414 = vmatprep.mubr.bf16.mxu0 %v2381
    %3415 = vmatmul.mubr.bf16.gmra.mrb[0].mxu0 %v2380
    %v3416 = vpop.f32.mrb[0].mxu0
    %v3417 = vadd.f32 %v3376, %v3416
    %v3418 = vpop.f32.mrb[0].mxu0
    %v3419 = vadd.f32 %v3378, %v3418
    %v3420 = vpop.f32.mrb[0].mxu0
    %v3421 = vpop.f32.mrb[0].mxu0
    %3422 = vdwg.mxu0
    %3423 = vmatprep.subr.bf16.mxu0 %v3100
    %3424 = vmatpush1.bf16.msra.mxu0 %v3099
    %3425 = vmatprep.subr.bf16.mxu0 %v3102
    %3426 = vmatpush1.bf16.msra.mxu0 %v3101
    %3427 = vmatprep.subr.bf16.mxu0 %v3104
    %3428 = vmatpush1.bf16.msra.mxu0 %v3103
    %3429 = vmatprep.subr.bf16.mxu0 %v3106
    %3430 = vmatpush1.bf16.msra.mxu0 %v3105
    %3431 = vmatprep.subr.bf16.mxu0 %v3108
    %3432 = vmatpush1.bf16.msra.mxu0 %v3107
    %3433 = vmatprep.subr.bf16.mxu0 %v3110
    %3434 = vmatpush1.bf16.msra.mxu0 %v3109
    %3435 = vmatprep.subr.bf16.mxu0 %v3112
    %3436 = vmatpush1.bf16.msra.mxu0 %v3111
    %3437 = vmatprep.subr.bf16.mxu0 %v3114
    %3438 = vmatpush1.bf16.msra.mxu0 %v3113
    %3439 = vmatprep.subr.bf16.mxu0 0
    %3440 = vmatpush1.bf16.msra.mxu0 0
    %3441 = vmatprep.subr.bf16.mxu0 0
    %3442 = vmatpush1.bf16.msra.mxu0 0
    %3443 = vmatprep.subr.bf16.mxu0 0
    %3444 = vmatpush1.bf16.msra.mxu0 0
    %3445 = vmatprep.subr.bf16.mxu0 0
    %3446 = vmatpush1.bf16.msra.mxu0 0
    %3447 = vmatprep.subr.bf16.mxu0 0
    %3448 = vmatpush1.bf16.msra.mxu0 0
    %3449 = vmatprep.subr.bf16.mxu0 0
    %3450 = vmatpush1.bf16.msra.mxu0 0
    %3451 = vmatprep.subr.bf16.mxu0 0
    %3452 = vmatpush1.bf16.msra.mxu0 0
    %3453 = vmatprep.subr.bf16.mxu0 0
    %3454 = vmatpush1.bf16.msra.mxu0 0
    %3455 = vmatprep.mubr.bf16.mxu0 0
    %3456 = vmatmul.mubr.bf16.gmra.mrb[0].mxu0 %v2382
    %v3457 = vpop.f32.mrb[0].mxu0
    %v3458 = vadd.f32 %v3417, %v3457
    %v3459 = vpop.f32.mrb[0].mxu0
    %v3460 = vadd.f32 %v3419, %v3459
    %v3461 = vpop.f32.mrb[0].mxu0
    %v3462 = vpop.f32.mrb[0].mxu0
    %3463 = vdwg.mxu0
    %v3464 = vmul.f32 %v3458, 0.01
    %v3465 = vmul.f32 %v3460, 0.01
    %v3466 = vmax.f32 %v3458, %v3464
    %v3467 = vmax.f32 %v3460, %v3465
    %v3468 = vpack.c.bf16 %v3466, %v3466
    %v3469 = vpack.c.bf16 %v3467, %v3467
    %v3470 = vld [vmem:[%s16] sm:$0xff]
    %v3471 = vld [vmem:[%s16 + $0x8] sm:$0xff]
    %v3472 = vld [vmem:[%s16 + $0x10] sm:$0xff]
    %v3473 = vld [vmem:[%s16 + $0x18] sm:$0xff]
    %v3474 = vld [vmem:[%s16 + $0x20] sm:$0xff]
    %v3475 = vld [vmem:[%s16 + $0x28] sm:$0xff]
    %v3476 = vld [vmem:[%s16 + $0x30] sm:$0xff]
    %v3477 = vld [vmem:[%s16 + $0x38] sm:$0xff]
    %v3478 = vld [vmem:[%s16 + $0x40] sm:$0xff]
    %v3479 = vld [vmem:[%s16 + $0x48] sm:$0xff]
    %v3480 = vld [vmem:[%s16 + $0x50] sm:$0xff]
    %v3481 = vld [vmem:[%s16 + $0x58] sm:$0xff]
    %v3482 = vld [vmem:[%s16 + $0x60] sm:$0xff]
    %v3483 = vld [vmem:[%s16 + $0x68] sm:$0xff]
    %v3484 = vld [vmem:[%s16 + $0x70] sm:$0xff]
    %v3485 = vld [vmem:[%s16 + $0x78] sm:$0xff]
    %v3486 = vld [vmem:[%s16 + $0x80] sm:$0xff]
    %v3487 = vld [vmem:[%s16 + $0x88] sm:$0xff]
    %v3488 = vld [vmem:[%s16 + $0x90] sm:$0xff]
    %v3489 = vld [vmem:[%s16 + $0x98] sm:$0xff]
    %v3490 = vld [vmem:[%s16 + $0xa0] sm:$0xff]
    %v3491 = vld [vmem:[%s16 + $0xa8] sm:$0xff]
    %v3492 = vld [vmem:[%s16 + $0xb0] sm:$0xff]
    %v3493 = vld [vmem:[%s16 + $0xb8] sm:$0xff]
    %v3494 = vld [vmem:[%s16 + $0xc0] sm:$0xff]
    %v3495 = vld [vmem:[%s16 + $0xc8] sm:$0xff]
    %v3496 = vld [vmem:[%s16 + $0xd0] sm:$0xff]
    %v3497 = vld [vmem:[%s16 + $0xd8] sm:$0xff]
    %v3498 = vld [vmem:[%s16 + $0xe0] sm:$0xff]
    %v3499 = vld [vmem:[%s16 + $0xe8] sm:$0xff]
    %v3500 = vld [vmem:[%s16 + $0xf0] sm:$0xff]
    %v3501 = vld [vmem:[%s16 + $0xf8] sm:$0xff]
    %v3502 = vld [vmem:[%s17] sm:$0xff]
    %v3503 = vld [vmem:[%s17 + $0x8] sm:$0xff]
    %v3504 = vld [vmem:[%s17 + $0x10] sm:$0xff]
    %v3505 = vld [vmem:[%s17 + $0x18] sm:$0xff]
    %v3506 = vld [vmem:[%s17 + $0x20] sm:$0xff]
    %v3507 = vld [vmem:[%s17 + $0x28] sm:$0xff]
    %v3508 = vld [vmem:[%s17 + $0x30] sm:$0xff]
    %v3509 = vld [vmem:[%s17 + $0x38] sm:$0xff]
    %v3510 = vld [vmem:[%s17 + $0x40] sm:$0xff]
    %v3511 = vld [vmem:[%s17 + $0x48] sm:$0xff]
    %v3512 = vld [vmem:[%s17 + $0x50] sm:$0xff]
    %v3513 = vld [vmem:[%s17 + $0x58] sm:$0xff]
    %v3514 = vld [vmem:[%s17 + $0x60] sm:$0xff]
    %v3515 = vld [vmem:[%s17 + $0x68] sm:$0xff]
    %v3516 = vld [vmem:[%s17 + $0x70] sm:$0xff]
    %v3517 = vld [vmem:[%s17 + $0x78] sm:$0xff]
    %v3518 = vld [vmem:[%s17 + $0x80] sm:$0xff]
    %v3519 = vld [vmem:[%s17 + $0x88] sm:$0xff]
    %v3520 = vld [vmem:[%s17 + $0x90] sm:$0xff]
    %v3521 = vld [vmem:[%s17 + $0x98] sm:$0xff]
    %v3522 = vld [vmem:[%s17 + $0xa0] sm:$0xff]
    %v3523 = vld [vmem:[%s17 + $0xa8] sm:$0xff]
    %v3524 = vld [vmem:[%s17 + $0xb0] sm:$0xff]
    %v3525 = vld [vmem:[%s17 + $0xb8] sm:$0xff]
    %v3526 = vld [vmem:[%s17 + $0xc0] sm:$0xff]
    %v3527 = vld [vmem:[%s17 + $0xc8] sm:$0xff]
    %v3528 = vld [vmem:[%s17 + $0xd0] sm:$0xff]
    %v3529 = vld [vmem:[%s17 + $0xd8] sm:$0xff]
    %v3530 = vld [vmem:[%s17 + $0xe0] sm:$0xff]
    %v3531 = vld [vmem:[%s17 + $0xe8] sm:$0xff]
    %v3532 = vld [vmem:[%s17 + $0xf0] sm:$0xff]
    %v3533 = vld [vmem:[%s17 + $0xf8] sm:$0xff]
    %v3566 = vunpack.c.l.b16 %v3502
    %v3567 = vunpack.c.h.b16 %v3502
    %v3568 = vunpack.c.l.b16 %v3503
    %v3569 = vunpack.c.h.b16 %v3503
    %v3570 = vunpack.c.l.b16 %v3504
    %v3571 = vunpack.c.h.b16 %v3504
    %v3572 = vunpack.c.l.b16 %v3505
    %v3573 = vunpack.c.h.b16 %v3505
    %v3574 = vunpack.c.l.b16 %v3506
    %v3575 = vunpack.c.h.b16 %v3506
    %v3576 = vunpack.c.l.b16 %v3507
    %v3577 = vunpack.c.h.b16 %v3507
    %v3578 = vunpack.c.l.b16 %v3508
    %v3579 = vunpack.c.h.b16 %v3508
    %v3580 = vunpack.c.l.b16 %v3509
    %v3581 = vunpack.c.h.b16 %v3509
    %v3582 = vunpack.c.l.b16 %v3510
    %v3583 = vunpack.c.h.b16 %v3510
    %v3584 = vunpack.c.l.b16 %v3511
    %v3585 = vunpack.c.h.b16 %v3511
    %v3586 = vunpack.c.l.b16 %v3512
    %v3587 = vunpack.c.h.b16 %v3512
    %v3588 = vunpack.c.l.b16 %v3513
    %v3589 = vunpack.c.h.b16 %v3513
    %v3590 = vunpack.c.l.b16 %v3514
    %v3591 = vunpack.c.h.b16 %v3514
    %v3592 = vunpack.c.l.b16 %v3515
    %v3593 = vunpack.c.h.b16 %v3515
    %v3594 = vunpack.c.l.b16 %v3516
    %v3595 = vunpack.c.h.b16 %v3516
    %v3596 = vunpack.c.l.b16 %v3517
    %v3597 = vunpack.c.h.b16 %v3517
    %v3598 = vunpack.c.l.b16 %v3518
    %v3599 = vunpack.c.h.b16 %v3518
    %v3600 = vunpack.c.l.b16 %v3519
    %v3601 = vunpack.c.h.b16 %v3519
    %v3602 = vunpack.c.l.b16 %v3520
    %v3603 = vunpack.c.h.b16 %v3520
    %v3604 = vunpack.c.l.b16 %v3521
    %v3605 = vunpack.c.h.b16 %v3521
    %v3606 = vunpack.c.l.b16 %v3522
    %v3607 = vunpack.c.h.b16 %v3522
    %v3608 = vunpack.c.l.b16 %v3523
    %v3609 = vunpack.c.h.b16 %v3523
    %v3610 = vunpack.c.l.b16 %v3524
    %v3611 = vunpack.c.h.b16 %v3524
    %v3612 = vunpack.c.l.b16 %v3525
    %v3613 = vunpack.c.h.b16 %v3525
    %v3614 = vunpack.c.l.b16 %v3526
    %v3615 = vunpack.c.h.b16 %v3526
    %v3616 = vunpack.c.l.b16 %v3527
    %v3617 = vunpack.c.h.b16 %v3527
    %v3618 = vunpack.c.l.b16 %v3528
    %v3619 = vunpack.c.h.b16 %v3528
    %v3620 = vunpack.c.l.b16 %v3529
    %v3621 = vunpack.c.h.b16 %v3529
    %v3622 = vunpack.c.l.b16 %v3530
    %v3623 = vunpack.c.h.b16 %v3530
    %v3624 = vunpack.c.l.b16 %v3531
    %v3625 = vunpack.c.h.b16 %v3531
    %v3626 = vunpack.c.l.b16 %v3532
    %v3627 = vunpack.c.h.b16 %v3532
    %v3628 = vunpack.c.l.b16 %v3533
    %v3629 = vunpack.c.h.b16 %v3533
    %v3630 = vpack.c.b16 %v3568, %v3566
    %v3631 = vpack.c.b16 %v3569, %v3567
    %v3632 = vpack.c.b16 %v3572, %v3570
    %v3633 = vpack.c.b16 %v3573, %v3571
    %v3634 = vpack.c.b16 %v3576, %v3574
    %v3635 = vpack.c.b16 %v3577, %v3575
    %v3636 = vpack.c.b16 %v3580, %v3578
    %v3637 = vpack.c.b16 %v3581, %v3579
    %v3638 = vpack.c.b16 %v3584, %v3582
    %v3639 = vpack.c.b16 %v3585, %v3583
    %v3640 = vpack.c.b16 %v3588, %v3586
    %v3641 = vpack.c.b16 %v3589, %v3587
    %v3642 = vpack.c.b16 %v3592, %v3590
    %v3643 = vpack.c.b16 %v3593, %v3591
    %v3644 = vpack.c.b16 %v3596, %v3594
    %v3645 = vpack.c.b16 %v3597, %v3595
    %v3646 = vpack.c.b16 %v3600, %v3598
    %v3647 = vpack.c.b16 %v3601, %v3599
    %v3648 = vpack.c.b16 %v3604, %v3602
    %v3649 = vpack.c.b16 %v3605, %v3603
    %v3650 = vpack.c.b16 %v3608, %v3606
    %v3651 = vpack.c.b16 %v3609, %v3607
    %v3652 = vpack.c.b16 %v3612, %v3610
    %v3653 = vpack.c.b16 %v3613, %v3611
    %v3654 = vpack.c.b16 %v3616, %v3614
    %v3655 = vpack.c.b16 %v3617, %v3615
    %v3656 = vpack.c.b16 %v3620, %v3618
    %v3657 = vpack.c.b16 %v3621, %v3619
    %v3658 = vpack.c.b16 %v3624, %v3622
    %v3659 = vpack.c.b16 %v3625, %v3623
    %v3660 = vpack.c.b16 %v3628, %v3626
    %v3661 = vpack.c.b16 %v3629, %v3627
    %3694 = vmatprep.subr.bf16.mxu0 %v3631
    %3695 = vmatpush1.bf16.msra.mxu0 %v3630
    %3696 = vmatprep.subr.bf16.mxu0 %v3633
    %3697 = vmatpush1.bf16.msra.mxu0 %v3632
    %3698 = vmatprep.subr.bf16.mxu0 %v3635
    %3699 = vmatpush1.bf16.msra.mxu0 %v3634
    %3700 = vmatprep.subr.bf16.mxu0 %v3637
    %3701 = vmatpush1.bf16.msra.mxu0 %v3636
    %3702 = vmatprep.subr.bf16.mxu0 %v3639
    %3703 = vmatpush1.bf16.msra.mxu0 %v3638
    %3704 = vmatprep.subr.bf16.mxu0 %v3641
    %3705 = vmatpush1.bf16.msra.mxu0 %v3640
    %3706 = vmatprep.subr.bf16.mxu0 %v3643
    %3707 = vmatpush1.bf16.msra.mxu0 %v3642
    %3708 = vmatprep.subr.bf16.mxu0 %v3645
    %3709 = vmatpush1.bf16.msra.mxu0 %v3644
    %3710 = vmatprep.subr.bf16.mxu0 %v3647
    %3711 = vmatpush1.bf16.msra.mxu0 %v3646
    %3712 = vmatprep.subr.bf16.mxu0 %v3649
    %3713 = vmatpush1.bf16.msra.mxu0 %v3648
    %3714 = vmatprep.subr.bf16.mxu0 %v3651
    %3715 = vmatpush1.bf16.msra.mxu0 %v3650
    %3716 = vmatprep.subr.bf16.mxu0 %v3653
    %3717 = vmatpush1.bf16.msra.mxu0 %v3652
    %3718 = vmatprep.subr.bf16.mxu0 %v3655
    %3719 = vmatpush1.bf16.msra.mxu0 %v3654
    %3720 = vmatprep.subr.bf16.mxu0 %v3657
    %3721 = vmatpush1.bf16.msra.mxu0 %v3656
    %3722 = vmatprep.subr.bf16.mxu0 %v3659
    %3723 = vmatpush1.bf16.msra.mxu0 %v3658
    %3724 = vmatprep.subr.bf16.mxu0 %v3661
    %3725 = vmatpush1.bf16.msra.mxu0 %v3660
    %3726 = vmatprep.mubr.bf16.mxu0 %v332
    %3727 = vmatmul.mubr.bf16.gmra.mrb[0].mxu0 %v331
    %v3728 = vpop.f32.mrb[0].mxu0
    %v3729 = vadd.f32 0.0, %v3728
    %v3730 = vpop.f32.mrb[0].mxu0
    %v3731 = vadd.f32 0.0, %v3730
    %v3732 = vpop.f32.mrb[0].mxu0
    %v3733 = vpop.f32.mrb[0].mxu0
    %3734 = vdwg.mxu0
    %v3767 = vunpack.c.l.b16 %v3470
    %v3768 = vunpack.c.h.b16 %v3470
    %v3769 = vunpack.c.l.b16 %v3471
    %v3770 = vunpack.c.h.b16 %v3471
    %v3771 = vunpack.c.l.b16 %v3472
    %v3772 = vunpack.c.h.b16 %v3472
    %v3773 = vunpack.c.l.b16 %v3473
    %v3774 = vunpack.c.h.b16 %v3473
    %v3775 = vunpack.c.l.b16 %v3474
    %v3776 = vunpack.c.h.b16 %v3474
    %v3777 = vunpack.c.l.b16 %v3475
    %v3778 = vunpack.c.h.b16 %v3475
    %v3779 = vunpack.c.l.b16 %v3476
    %v3780 = vunpack.c.h.b16 %v3476
    %v3781 = vunpack.c.l.b16 %v3477
    %v3782 = vunpack.c.h.b16 %v3477
    %v3783 = vunpack.c.l.b16 %v3478
    %v3784 = vunpack.c.h.b16 %v3478
    %v3785 = vunpack.c.l.b16 %v3479
    %v3786 = vunpack.c.h.b16 %v3479
    %v3787 = vunpack.c.l.b16 %v3480
    %v3788 = vunpack.c.h.b16 %v3480
    %v3789 = vunpack.c.l.b16 %v3481
    %v3790 = vunpack.c.h.b16 %v3481
    %v3791 = vunpack.c.l.b16 %v3482
    %v3792 = vunpack.c.h.b16 %v3482
    %v3793 = vunpack.c.l.b16 %v3483
    %v3794 = vunpack.c.h.b16 %v3483
    %v3795 = vunpack.c.l.b16 %v3484
    %v3796 = vunpack.c.h.b16 %v3484
    %v3797 = vunpack.c.l.b16 %v3485
    %v3798 = vunpack.c.h.b16 %v3485
    %v3799 = vunpack.c.l.b16 %v3486
    %v3800 = vunpack.c.h.b16 %v3486
    %v3801 = vunpack.c.l.b16 %v3487
    %v3802 = vunpack.c.h.b16 %v3487
    %v3803 = vunpack.c.l.b16 %v3488
    %v3804 = vunpack.c.h.b16 %v3488
    %v3805 = vunpack.c.l.b16 %v3489
    %v3806 = vunpack.c.h.b16 %v3489
    %v3807 = vunpack.c.l.b16 %v3490
    %v3808 = vunpack.c.h.b16 %v3490
    %v3809 = vunpack.c.l.b16 %v3491
    %v3810 = vunpack.c.h.b16 %v3491
    %v3811 = vunpack.c.l.b16 %v3492
    %v3812 = vunpack.c.h.b16 %v3492
    %v3813 = vunpack.c.l.b16 %v3493
    %v3814 = vunpack.c.h.b16 %v3493
    %v3815 = vunpack.c.l.b16 %v3494
    %v3816 = vunpack.c.h.b16 %v3494
    %v3817 = vunpack.c.l.b16 %v3495
    %v3818 = vunpack.c.h.b16 %v3495
    %v3819 = vunpack.c.l.b16 %v3496
    %v3820 = vunpack.c.h.b16 %v3496
    %v3821 = vunpack.c.l.b16 %v3497
    %v3822 = vunpack.c.h.b16 %v3497
    %v3823 = vunpack.c.l.b16 %v3498
    %v3824 = vunpack.c.h.b16 %v3498
    %v3825 = vunpack.c.l.b16 %v3499
    %v3826 = vunpack.c.h.b16 %v3499
    %v3827 = vunpack.c.l.b16 %v3500
    %v3828 = vunpack.c.h.b16 %v3500
    %v3829 = vunpack.c.l.b16 %v3501
    %v3830 = vunpack.c.h.b16 %v3501
    %v3831 = vpack.c.b16 %v3769, %v3767
    %v3832 = vpack.c.b16 %v3770, %v3768
    %v3833 = vpack.c.b16 %v3773, %v3771
    %v3834 = vpack.c.b16 %v3774, %v3772
    %v3835 = vpack.c.b16 %v3777, %v3775
    %v3836 = vpack.c.b16 %v3778, %v3776
    %v3837 = vpack.c.b16 %v3781, %v3779
    %v3838 = vpack.c.b16 %v3782, %v3780
    %v3839 = vpack.c.b16 %v3785, %v3783
    %v3840 = vpack.c.b16 %v3786, %v3784
    %v3841 = vpack.c.b16 %v3789, %v3787
    %v3842 = vpack.c.b16 %v3790, %v3788
    %v3843 = vpack.c.b16 %v3793, %v3791
    %v3844 = vpack.c.b16 %v3794, %v3792
    %v3845 = vpack.c.b16 %v3797, %v3795
    %v3846 = vpack.c.b16 %v3798, %v3796
    %v3847 = vpack.c.b16 %v3801, %v3799
    %v3848 = vpack.c.b16 %v3802, %v3800
    %v3849 = vpack.c.b16 %v3805, %v3803
    %v3850 = vpack.c.b16 %v3806, %v3804
    %v3851 = vpack.c.b16 %v3809, %v3807
    %v3852 = vpack.c.b16 %v3810, %v3808
    %v3853 = vpack.c.b16 %v3813, %v3811
    %v3854 = vpack.c.b16 %v3814, %v3812
    %v3855 = vpack.c.b16 %v3817, %v3815
    %v3856 = vpack.c.b16 %v3818, %v3816
    %v3857 = vpack.c.b16 %v3821, %v3819
    %v3858 = vpack.c.b16 %v3822, %v3820
    %v3859 = vpack.c.b16 %v3825, %v3823
    %v3860 = vpack.c.b16 %v3826, %v3824
    %v3861 = vpack.c.b16 %v3829, %v3827
    %v3862 = vpack.c.b16 %v3830, %v3828
    %3895 = vmatprep.subr.bf16.mxu0 %v3832
    %3896 = vmatpush1.bf16.msra.mxu0 %v3831
    %3897 = vmatprep.subr.bf16.mxu0 %v3834
    %3898 = vmatpush1.bf16.msra.mxu0 %v3833
    %3899 = vmatprep.subr.bf16.mxu0 %v3836
    %3900 = vmatpush1.bf16.msra.mxu0 %v3835
    %3901 = vmatprep.subr.bf16.mxu0 %v3838
    %3902 = vmatpush1.bf16.msra.mxu0 %v3837
    %3903 = vmatprep.subr.bf16.mxu0 %v3840
    %3904 = vmatpush1.bf16.msra.mxu0 %v3839
    %3905 = vmatprep.subr.bf16.mxu0 %v3842
    %3906 = vmatpush1.bf16.msra.mxu0 %v3841
    %3907 = vmatprep.subr.bf16.mxu0 %v3844
    %3908 = vmatpush1.bf16.msra.mxu0 %v3843
    %3909 = vmatprep.subr.bf16.mxu0 %v3846
    %3910 = vmatpush1.bf16.msra.mxu0 %v3845
    %3911 = vmatprep.subr.bf16.mxu0 %v3848
    %3912 = vmatpush1.bf16.msra.mxu0 %v3847
    %3913 = vmatprep.subr.bf16.mxu0 %v3850
    %3914 = vmatpush1.bf16.msra.mxu0 %v3849
    %3915 = vmatprep.subr.bf16.mxu0 %v3852
    %3916 = vmatpush1.bf16.msra.mxu0 %v3851
    %3917 = vmatprep.subr.bf16.mxu0 %v3854
    %3918 = vmatpush1.bf16.msra.mxu0 %v3853
    %3919 = vmatprep.subr.bf16.mxu0 %v3856
    %3920 = vmatpush1.bf16.msra.mxu0 %v3855
    %3921 = vmatprep.subr.bf16.mxu0 %v3858
    %3922 = vmatpush1.bf16.msra.mxu0 %v3857
    %3923 = vmatprep.subr.bf16.mxu0 %v3860
    %3924 = vmatpush1.bf16.msra.mxu0 %v3859
    %3925 = vmatprep.subr.bf16.mxu0 %v3862
    %3926 = vmatpush1.bf16.msra.mxu0 %v3861
    %3927 = vmatprep.mubr.bf16.mxu0 %v3469
    %3928 = vmatmul.mubr.bf16.gmra.mrb[0].mxu0 %v3468
    %v3929 = vpop.f32.mrb[0].mxu0
    %v3930 = vadd.f32 %v3729, %v3929
    %v3931 = vpop.f32.mrb[0].mxu0
    %v3932 = vadd.f32 %v3731, %v3931
    %v3933 = vpop.f32.mrb[0].mxu0
    %v3934 = vpop.f32.mrb[0].mxu0
    %3935 = vdwg.mxu0
    %v3936 = vld [vmem:[%s18] sm:$0x3]
    %v3938 = vlaneseq
    %v3939 = vshrl.u32 %v3938, 7
    %v3940 = vsub.s32 0, %v3939
    %v3941 = vrot.slane %v3936, %v3940
    %v3942 = vlaneseq
    %v3943 = vshrl.u32 %v3942, 7
    %v3944 = vsub.s32 1, %v3943
    %v3945 = vrot.slane %v3936, %v3944
    %v3948 = vadd.f32 %v3930, %v3941
    %v3949 = vadd.f32 %v3932, %v3945
    %v3950 = vmax.f32 %v3948, 0.0
    %v3951 = vmax.f32 %v3949, 0.0
    %v3952 = vpack.c.bf16 %v3950, %v3950
    %v3953 = vpack.c.bf16 %v3951, %v3951
    %v3954 = vld [vmem:[%s19] sm:$0xf]
    %v3955 = vld [vmem:[%s19 + $0x4] sm:$0xf]
    %v3956 = vld [vmem:[%s19 + $0x8] sm:$0xf]
    %v3957 = vld [vmem:[%s19 + $0xc] sm:$0xf]
    %v3958 = vld [vmem:[%s19 + $0x10] sm:$0xf]
    %v3959 = vld [vmem:[%s19 + $0x14] sm:$0xf]
    %v3960 = vld [vmem:[%s19 + $0x18] sm:$0xf]
    %v3961 = vld [vmem:[%s19 + $0x1c] sm:$0xf]
    %v3962 = vld [vmem:[%s19 + $0x20] sm:$0xf]
    %v3963 = vld [vmem:[%s19 + $0x24] sm:$0xf]
    %v3964 = vld [vmem:[%s19 + $0x28] sm:$0xf]
    %v3965 = vld [vmem:[%s19 + $0x2c] sm:$0xf]
    %v3966 = vld [vmem:[%s19 + $0x30] sm:$0xf]
    %v3967 = vld [vmem:[%s19 + $0x34] sm:$0xf]
    %v3968 = vld [vmem:[%s19 + $0x38] sm:$0xf]
    %v3969 = vld [vmem:[%s19 + $0x3c] sm:$0xf]
    %v3970 = vld [vmem:[%s19 + $0x40] sm:$0xf]
    %v3971 = vld [vmem:[%s19 + $0x44] sm:$0xf]
    %v3972 = vld [vmem:[%s19 + $0x48] sm:$0xf]
    %v3973 = vld [vmem:[%s19 + $0x4c] sm:$0xf]
    %v3974 = vld [vmem:[%s19 + $0x50] sm:$0xf]
    %v3975 = vld [vmem:[%s19 + $0x54] sm:$0xf]
    %v3976 = vld [vmem:[%s19 + $0x58] sm:$0xf]
    %v3977 = vld [vmem:[%s19 + $0x5c] sm:$0xf]
    %v3978 = vld [vmem:[%s19 + $0x60] sm:$0xf]
    %v3979 = vld [vmem:[%s19 + $0x64] sm:$0xf]
    %v3980 = vld [vmem:[%s19 + $0x68] sm:$0xf]
    %v3981 = vld [vmem:[%s19 + $0x6c] sm:$0xf]
    %v3982 = vld [vmem:[%s19 + $0x70] sm:$0xf]
    %v3983 = vld [vmem:[%s19 + $0x74] sm:$0xf]
    %v3984 = vld [vmem:[%s19 + $0x78] sm:$0xf]
    %v3985 = vld [vmem:[%s19 + $0x7c] sm:$0xf]
    %v3986 = vld [vmem:[%s20] sm:$0x1]
    %v3988 = vlaneseq
    %v3989 = vshrl.u32 %v3988, 7
    %v3990 = vsub.s32 0, %v3989
    %v3991 = vrot.slane %v3986, %v3990
    %v4025 = vunpack.c.l.b16 %v3954
    %v4026 = vunpack.c.l.b16 %v3955
    %v4027 = vunpack.c.l.b16 %v3956
    %v4028 = vunpack.c.l.b16 %v3957
    %v4029 = vunpack.c.l.b16 %v3958
    %v4030 = vunpack.c.l.b16 %v3959
    %v4031 = vunpack.c.l.b16 %v3960
    %v4032 = vunpack.c.l.b16 %v3961
    %v4033 = vunpack.c.l.b16 %v3962
    %v4034 = vunpack.c.l.b16 %v3963
    %v4035 = vunpack.c.l.b16 %v3964
    %v4036 = vunpack.c.l.b16 %v3965
    %v4037 = vunpack.c.l.b16 %v3966
    %v4038 = vunpack.c.l.b16 %v3967
    %v4039 = vunpack.c.l.b16 %v3968
    %v4040 = vunpack.c.l.b16 %v3969
    %v4041 = vunpack.c.l.b16 %v3970
    %v4042 = vunpack.c.l.b16 %v3971
    %v4043 = vunpack.c.l.b16 %v3972
    %v4044 = vunpack.c.l.b16 %v3973
    %v4045 = vunpack.c.l.b16 %v3974
    %v4046 = vunpack.c.l.b16 %v3975
    %v4047 = vunpack.c.l.b16 %v3976
    %v4048 = vunpack.c.l.b16 %v3977
    %v4049 = vunpack.c.l.b16 %v3978
    %v4050 = vunpack.c.l.b16 %v3979
    %v4051 = vunpack.c.l.b16 %v3980
    %v4052 = vunpack.c.l.b16 %v3981
    %v4053 = vunpack.c.l.b16 %v3982
    %v4054 = vunpack.c.l.b16 %v3983
    %v4055 = vunpack.c.l.b16 %v3984
    %v4056 = vunpack.c.l.b16 %v3985
    %v4057 = vpack.c.b16 %v4026, %v4025
    %v4058 = vpack.c.b16 %v4028, %v4027
    %v4059 = vpack.c.b16 %v4030, %v4029
    %v4060 = vpack.c.b16 %v4032, %v4031
    %v4061 = vpack.c.b16 %v4034, %v4033
    %v4062 = vpack.c.b16 %v4036, %v4035
    %v4063 = vpack.c.b16 %v4038, %v4037
    %v4064 = vpack.c.b16 %v4040, %v4039
    %v4065 = vpack.c.b16 %v4042, %v4041
    %v4066 = vpack.c.b16 %v4044, %v4043
    %v4067 = vpack.c.b16 %v4046, %v4045
    %v4068 = vpack.c.b16 %v4048, %v4047
    %v4069 = vpack.c.b16 %v4050, %v4049
    %v4070 = vpack.c.b16 %v4052, %v4051
    %v4071 = vpack.c.b16 %v4054, %v4053
    %v4072 = vpack.c.b16 %v4056, %v4055
    %4089 = vmatprep.subr.bf16.mxu0 0
    %4090 = vmatpush1.bf16.msra.mxu0 %v4057
    %4091 = vmatprep.subr.bf16.mxu0 0
    %4092 = vmatpush1.bf16.msra.mxu0 %v4058
    %4093 = vmatprep.subr.bf16.mxu0 0
    %4094 = vmatpush1.bf16.msra.mxu0 %v4059
    %4095 = vmatprep.subr.bf16.mxu0 0
    %4096 = vmatpush1.bf16.msra.mxu0 %v4060
    %4097 = vmatprep.subr.bf16.mxu0 0
    %4098 = vmatpush1.bf16.msra.mxu0 %v4061
    %4099 = vmatprep.subr.bf16.mxu0 0
    %4100 = vmatpush1.bf16.msra.mxu0 %v4062
    %4101 = vmatprep.subr.bf16.mxu0 0
    %4102 = vmatpush1.bf16.msra.mxu0 %v4063
    %4103 = vmatprep.subr.bf16.mxu0 0
    %4104 = vmatpush1.bf16.msra.mxu0 %v4064
    %4105 = vmatprep.subr.bf16.mxu0 0
    %4106 = vmatpush1.bf16.msra.mxu0 %v4065
    %4107 = vmatprep.subr.bf16.mxu0 0
    %4108 = vmatpush1.bf16.msra.mxu0 %v4066
    %4109 = vmatprep.subr.bf16.mxu0 0
    %4110 = vmatpush1.bf16.msra.mxu0 %v4067
    %4111 = vmatprep.subr.bf16.mxu0 0
    %4112 = vmatpush1.bf16.msra.mxu0 %v4068
    %4113 = vmatprep.subr.bf16.mxu0 0
    %4114 = vmatpush1.bf16.msra.mxu0 %v4069
    %4115 = vmatprep.subr.bf16.mxu0 0
    %4116 = vmatpush1.bf16.msra.mxu0 %v4070
    %4117 = vmatprep.subr.bf16.mxu0 0
    %4118 = vmatpush1.bf16.msra.mxu0 %v4071
    %4119 = vmatprep.subr.bf16.mxu0 0
    %4120 = vmatpush1.bf16.msra.mxu0 %v4072
    %4121 = vmatprep.mubr.bf16.mxu0 %v3953
    %4122 = vmatmul.mubr.bf16.gmra.mrb[0].mxu0 %v3952
    %v4123 = vpop.f32.mrb[0].mxu0
    %v4124 = vadd.f32 %v3991, %v4123
    %v4125 = vpop.f32.mrb[0].mxu0
    %v4126 = vpop.f32.mrb[0].mxu0
    %v4127 = vpop.f32.mrb[0].mxu0
    %4128 = vdwg.mxu0
    %vm4129 = vcmask 74752
    %4130 = vst.msk [vmem:[#allocation7] sm:$0x3] %vm4129, %v4124
    // Predicated region
    $region86: #{discriminator_forward.1} parent=1 // pred_check
      _
    $region87: #{discriminator_forward.1} parent=1 // pred_check_branch
      %4132 = sbr.rel (0) target = $region89
    $region88: #{discriminator_forward.1} parent=1 // pred_region
      %s4134 = ssub.s32 32, 32
      %4135 = vsyncadd [#allocation8], %s4134
      %s4137 = sshll.u32 [#allocation7], 4
      %s4138 = int_to_ptr.vmem [resolvable:$true] %s4137
      %4140 = dma.vmem_to_hbm [thread:$0]  %s4138, 32, %s21, [#allocation8]
    $region89: #{discriminator_forward.1} parent=1 // pred_fallthru
      _
    // Predicated region
    $region90: #{discriminator_forward.1} parent=1 // pred_check
      _
    $region91: #{discriminator_forward.1} parent=1 // pred_check_branch
      %4142 = sbr.rel (0) target = $region93
    $region92: #{discriminator_forward.1} parent=1 // pred_region
      %4143 = dma.done [#allocation8], 32
    $region93: #{discriminator_forward.1} parent=1 // pred_fallthru
      _
    %4144 = vsyncpa [#allocation8], 1

</llo_original>
